<compile_context>
chip_gen: v5e
topology: v5e:2x2
jax: 0.10.0
libtpu: 0.0.40
codegen_flags: <defaults>
</compile_context>

<pallas_src>
import functools
import numpy as np

import jax
import jax.numpy as jnp
from jax.experimental import pallas as pl
from jax.experimental.pallas import tpu as pltpu

# ----------------------------- config (small demo sizes) -----------------------------
B = 2                        # minibatch
S = 8                        # tweet sequence length
H = 60                       # bertweet hidden_size (scaled down from 768)
VOCAB = 64
BT_LAYERS, BT_HEADS = 2, 4
BT_FF = 4 * H                # 240
BT_HD = H // BT_HEADS        # 15 = logical per-head dim
BT_HD_PAD = 16               # per-head dim zero-padded to 16 (lane aligned) inside attention
D_MODEL = 2 * H + 8          # 128, downstream transformer d_model (as in the module)
TF_LAYERS, TF_HEADS = 2, 8   # num_layers=2, nhead=8 (as in the module)
TF_HD = D_MODEL // TF_HEADS  # 16 (already aligned)
TF_FF = 256                  # PyTorch default dim_feedforward=2048; scaled for the demo
LN_EPS = 1e-5

assert D_MODEL % TF_HEADS == 0

LAYER_KEYS = ("wqkv", "bqkv", "wo", "bo", "ln1_g", "ln1_b",
              "w1", "b1", "w2", "b2", "ln2_g", "ln2_b")

# ----------------------------- in-kernel helpers -----------------------------


def _layer_norm(x, g, b):
    mu = jnp.mean(x, axis=-1, keepdims=True)
    xc = x - mu
    var = jnp.mean(xc * xc, axis=-1, keepdims=True)
    return xc * jax.lax.rsqrt(var + LN_EPS) * g + b


def _mha(x, add_mask, wqkv, bqkv, wo, bo, *, nb, seq, n_heads, hd):
    """Self-attention over nb packed sequences; x: [nb*seq, d].

    wqkv [d, 3*nh*hd] bf16 (lane-dense fused QKV, 1/sqrt(hd) folded into Q),
    bqkv [1, 3*nh*hd] f32, wo [nh*hd, d] bf16, bo [1, d] f32,
    add_mask: additive key-padding mask [nb, seq] or None.
    """
    n, d = x.shape
    dh = n_heads * hd
    # one lane-dense fused QKV matmul (bf16 operands, f32 accumulation)
    qkv = jnp.dot(x.astype(jnp.bfloat16), wqkv,
                  preferred_element_type=jnp.float32) + bqkv           # [n, 3*dh]
    am = None if add_mask is None else add_mask[:, None, :]            # [nb, 1, seq]

    ctxs = []
    for hi in range(n_heads):                       # static unroll over heads (batched over nb)
        q = qkv[:, hi * hd:(hi + 1) * hd].reshape(nb, seq, hd)
        k = qkv[:, dh + hi * hd:dh + (hi + 1) * hd].reshape(nb, seq, hd)
        v = qkv[:, 2 * dh + hi * hd:2 * dh + (hi + 1) * hd].reshape(nb, seq, hd)
        s = jnp.einsum("bqf,bkf->bqk", q.astype(jnp.bfloat16), k.astype(jnp.bfloat16),
                       preferred_element_type=jnp.float32)             # [nb, seq, seq]
        if am is not None:
            s = s + am
        s = s - jnp.max(s, axis=-1, keepdims=True)
        p = jnp.exp(s)
        p = p * pl.reciprocal(jnp.sum(p, axis=-1, keepdims=True), approx=True)
        ctx = jnp.einsum("bqk,bkf->bqf", p.astype(jnp.bfloat16), v.astype(jnp.bfloat16),
                         preferred_element_type=jnp.float32)           # [nb, seq, hd]
        ctxs.append(ctx.reshape(n, hd))
    ctx_all = jnp.concatenate(ctxs, axis=1)                            # [n, nh*hd]
    # single full-K output projection (head-sum folded into the matmul)
    return jnp.dot(ctx_all.astype(jnp.bfloat16), wo,
                   preferred_element_type=jnp.float32) + bo


def _encoder_layer(x, add_mask, w, *, nb, seq, n_heads, hd, activation):
    """Post-LN (norm_first=False) transformer encoder layer on packed x [nb*seq, d]."""
    attn = _mha(x, add_mask, w["wqkv"], w["bqkv"], w["wo"], w["bo"],
                nb=nb, seq=seq, n_heads=n_heads, hd=hd)
    h1 = _layer_norm(x + attn, w["ln1_g"], w["ln1_b"])
    ff = jnp.dot(h1.astype(jnp.bfloat16), w["w1"],
                 preferred_element_type=jnp.float32) + w["b1"]
    # TODO(synk): HF RoBERTa uses exact erf GELU; tanh approximation kept for lowering safety.
    ff = jax.nn.gelu(ff) if activation == "gelu" else jnp.maximum(ff, 0.0)
    ff = jnp.dot(ff.astype(jnp.bfloat16), w["w2"],
                 preferred_element_type=jnp.float32) + w["b2"]
    return _layer_norm(h1 + ff, w["ln2_g"], w["ln2_b"])


# ----------------------------- single fused Pallas kernel -----------------------------


def _fused_forward_kernel(*refs, nb, seq, mb):
    """Whole forward in one kernel: gather -> bertweet stack -> pooler -> x0 ->
    downstream stack -> fused classifier."""
    (ids_ref, mask_ref, fh_ref, ft_ref, itn_ref,
     tok_emb_ref, pos_emb_ref, emb_g_ref, emb_b_ref) = refs[:9]
    bt = dict(zip(LAYER_KEYS, refs[9:21]))
    pool_w_ref, pool_b_ref = refs[21:23]
    tf = dict(zip(LAYER_KEYS, refs[23:35]))
    cls_w_ref, cls_b_ref = refs[35:37]
    o_ref = refs[37]

    # ---- embeddings: one-hot gather on the MXU (tok_emb resident in VMEM) ----
    ids = ids_ref[...]                                                 # [nb*seq, 1] int32
    onehot = (ids == jax.lax.broadcasted_iota(jnp.int32, (nb * seq, VOCAB), 1)
              ).astype(jnp.float32)
    x = jnp.dot(onehot, tok_emb_ref[...], preferred_element_type=jnp.float32)   # [n, H]
    # position embedding (token_type row 0 pre-folded into pos_emb at init)
    x = (x.reshape(nb, seq, H) + pos_emb_ref[...][None, :, :]).reshape(nb * seq, H)
    x = _layer_norm(x, emb_g_ref[...], emb_b_ref[...])

    # additive key-padding mask, built in-kernel
    add_mask = jnp.where(mask_ref[...] > 0, 0.0, -1e9).astype(jnp.float32)      # [nb, seq]

    # ---- bertweet encoder stack (post-LN, GELU) ----
    for li in range(BT_LAYERS):                                        # static unroll
        w = {k: bt[k][li] for k in LAYER_KEYS}
        x = _encoder_layer(x, add_mask, w, nb=nb, seq=seq,
                           n_heads=BT_HEADS, hd=BT_HD_PAD, activation="gelu")

    # ---- tanh pooler over each sequence's CLS token ----
    cls = x.reshape(nb, seq, H)[:, 0, :]                               # [nb, H]
    pooled = jnp.tanh(jnp.dot(cls.astype(jnp.bfloat16), pool_w_ref[...],
                              preferred_element_type=jnp.float32) + pool_b_ref[...])

    # ---- x0 = [pooled_h | pooled_t | followers_h | followers_t | int_type | 0*5] ----
    pooled_h = pooled[:mb]
    pooled_t = pooled[mb:]
    x0 = jnp.concatenate([pooled_h, pooled_t, fh_ref[...], ft_ref[...], itn_ref[...],
                          jnp.zeros((mb, 5), jnp.float32)], axis=1)    # [mb, D_MODEL]

    # ---- downstream transformer: one sequence of mb tokens (attends across minibatch) ----
    for li in range(TF_LAYERS):
        w = {k: tf[k][li] for k in LAYER_KEYS}
        x0 = _encoder_layer(x0, None, w, nb=1, seq=mb,
                            n_heads=TF_HEADS, hd=TF_HD, activation="relu")

    # ---- fused [D_MODEL, 4+2] classifier (stance + viral heads) ----
    logits = jnp.dot(x0, cls_w_ref[...], preferred_element_type=jnp.float32) + cls_b_ref[...]
    o_ref[...] = logits.astype(o_ref.dtype)


def fused_forward(ids_flat, masks, fh, ft, itn, p):
    nb, seq = masks.shape
    mb = nb // 2
    args = [ids_flat, masks, fh, ft, itn,
            p["tok_emb"], p["pos_emb"], p["emb_ln_g"], p["emb_ln_b"]]
    args += [p["bt_stack"][k] for k in LAYER_KEYS]
    args += [p["pool_w"], p["pool_b"]]
    args += [p["tf_stack"][k] for k in LAYER_KEYS]
    args += [p["cls_w"], p["cls_b"]]
    return pl.pallas_call(
        functools.partial(_fused_forward_kernel, nb=nb, seq=seq, mb=mb),
        out_shape=jax.ShapeDtypeStruct((mb, 4 + 2), jnp.float32),
        compiler_params=pltpu.CompilerParams(vmem_limit_bytes=32 * 1024 * 1024),
    )(*args)


# ----------------------------- parameter init (deterministic) -----------------------------


def _dense(key, din, dout, scale=0.02):
    return scale * jax.random.normal(key, (din, dout), jnp.float32)


def _pad_head_cols(w, n_heads, hd_pad):
    """[din, nh*hd] -> [din, nh*hd_pad], zero-padding each head block's columns."""
    hd = w.shape[1] // n_heads
    if hd == hd_pad:
        return w
    blocks = [jnp.pad(w[:, i * hd:(i + 1) * hd], ((0, 0), (0, hd_pad - hd)))
              for i in range(n_heads)]
    return jnp.concatenate(blocks, axis=1)


def _pad_head_rows(w, n_heads, hd_pad):
    """[nh*hd, dout] -> [nh*hd_pad, dout], zero-padding each head block's rows."""
    hd = w.shape[0] // n_heads
    if hd == hd_pad:
        return w
    blocks = [jnp.pad(w[i * hd:(i + 1) * hd, :], ((0, hd_pad - hd), (0, 0)))
              for i in range(n_heads)]
    return jnp.concatenate(blocks, axis=0)


def _init_encoder_layer(key, d, d_ff, n_heads, hd_pad):
    ks = jax.random.split(key, 6)
    hd = d // n_heads
    scale = 1.0 / np.sqrt(hd)              # attention score scale, folded into Q weights/bias
    z = lambda n: jnp.zeros((1, n), jnp.float32)
    o = lambda n: jnp.ones((1, n), jnp.float32)
    wq = _dense(ks[0], d, d) * scale
    wk = _dense(ks[1], d, d)
    wv = _dense(ks[2], d, d)
    wo = _dense(ks[3], d, d)
    bq, bk, bv = z(d) * scale, z(d), z(d)
    wqkv = jnp.concatenate([_pad_head_cols(w, n_heads, hd_pad) for w in (wq, wk, wv)], axis=1)
    bqkv = jnp.concatenate([_pad_head_cols(b, n_heads, hd_pad) for b in (bq, bk, bv)], axis=1)
    return dict(
        wqkv=wqkv.astype(jnp.bfloat16), bqkv=bqkv,
        wo=_pad_head_rows(wo, n_heads, hd_pad).astype(jnp.bfloat16), bo=z(d),
        ln1_g=o(d), ln1_b=z(d),
        w1=_dense(ks[4], d, d_ff).astype(jnp.bfloat16), b1=z(d_ff),
        w2=_dense(ks[5], d_ff, d).astype(jnp.bfloat16), b2=z(d),
        ln2_g=o(d), ln2_b=z(d),
    )


def _stack_layers(layers):
    return {k: jnp.stack([lp[k] for lp in layers], axis=0) for k in LAYER_KEYS}


def init_params(key):
    kb, kt, kc0, kc1, ke = jax.random.split(key, 5)
    ke0, ke1, ke2, kp = jax.random.split(ke, 4)
    bt_layers = [_init_encoder_layer(k, H, BT_FF, BT_HEADS, BT_HD_PAD)
                 for k in jax.random.split(kb, BT_LAYERS)]
    tf_layers = [_init_encoder_layer(k, D_MODEL, TF_FF, TF_HEADS, TF_HD)
                 for k in jax.random.split(kt, TF_LAYERS)]
    cls0_w, cls0_b = _dense(kc0, D_MODEL, 4), jnp.zeros((1, 4), jnp.float32)
    cls1_w, cls1_b = _dense(kc1, D_MODEL, 2), jnp.zeros((1, 2), jnp.float32)
    tok_emb = 0.02 * jax.random.normal(ke0, (VOCAB, H), jnp.float32)
    pos_emb = 0.02 * jax.random.normal(ke1, (S, H), jnp.float32)
    type_emb = 0.02 * jax.random.normal(ke2, (2, H), jnp.float32)
    return dict(
        tok_emb=tok_emb,
        pos_emb=pos_emb + type_emb[0][None, :],      # token_type_ids == 0 folded in
        emb_ln_g=jnp.ones((1, H), jnp.float32),
        emb_ln_b=jnp.zeros((1, H), jnp.float32),
        bt_stack=_stack_layers(bt_layers),
        pool_w=_dense(kp, H, H).astype(jnp.bfloat16),
        pool_b=jnp.zeros((1, H), jnp.float32),
        tf_stack=_stack_layers(tf_layers),
        # both classifier heads folded into one [D_MODEL, 6] matmul; split on host
        cls_w=jnp.concatenate([cls0_w, cls1_w], axis=1),
        cls_b=jnp.concatenate([cls0_b, cls1_b], axis=1),
    )


# ----------------------------- model forward -----------------------------


@functools.partial(jax.jit, static_argnames=("task",))
def mtt_bertweet3_forward(params, input_ids_h, attention_mask_h, input_ids_t,
                          attention_mask_t, followers_head, followers_tail,
                          int_type_num, task="stance"):
    if task not in ("stance", "multi", "viral"):
        raise Exception("Task not found: " + task)
    # head + tail tweets share the bertweet encoder -> single fused pass over [2B, S]
    ids = jnp.concatenate([input_ids_h, input_ids_t], axis=0).astype(jnp.int32)
    masks = jnp.concatenate([attention_mask_h, attention_mask_t], axis=0).astype(jnp.int32)
    logits = fused_forward(ids.reshape(-1, 1), masks,
                           followers_head, followers_tail, int_type_num, params)   # [mb, 6]
    stance_logits = logits[:, :4] if task in ("stance", "multi") else None
    viral_logits = logits[:, 4:6] if task in ("viral", "multi") else None
    # outputs_h[2:] / outputs_t[2:] are empty (no hidden_states / attentions requested)
    return stance_logits, viral_logits


# ----------------------------- demo -----------------------------

if __name__ == "__main__":
    key = jax.random.PRNGKey(0)
    kp, k1, k2, k3, k4, k5 = jax.random.split(key, 6)

    params = init_params(kp)

    input_ids_h = jax.random.randint(k1, (B, S), 0, VOCAB)
    input_ids_t = jax.random.randint(k2, (B, S), 0, VOCAB)
    attention_mask_h = jnp.ones((B, S), jnp.int32).at[1, S - 2:].set(0)   # a little padding
    attention_mask_t = jnp.ones((B, S), jnp.int32).at[0, S - 3:].set(0)
    followers_head = jax.random.normal(k3, (B, 1), jnp.float32)
    followers_tail = jax.random.normal(k4, (B, 1), jnp.float32)
    int_type_num = jax.random.normal(k5, (B, 1), jnp.float32)

    stance_logits, viral_logits = mtt_bertweet3_forward(
        params, input_ids_h, attention_mask_h, input_ids_t, attention_mask_t,
        followers_head, followers_tail, int_type_num, task="multi")

    jax.block_until_ready((stance_logits, viral_logits))
    assert stance_logits.shape == (B, 4)
    assert viral_logits.shape == (B, 2)
    assert bool(jnp.all(jnp.isfinite(stance_logits)))
    assert bool(jnp.all(jnp.isfinite(viral_logits)))
    print("KERNEL_OK")
</pallas_src>

<mosaic_0001>
module attributes {stable_mosaic.version = 11 : i64} {
  func.func @_fused_forward_kernel(%arg0: memref<32x1xi32, #tpu.memory_space<vmem>>, %arg1: memref<4x8xi32, #tpu.memory_space<vmem>>, %arg2: memref<2x1xf32, #tpu.memory_space<vmem>>, %arg3: memref<2x1xf32, #tpu.memory_space<vmem>>, %arg4: memref<2x1xf32, #tpu.memory_space<vmem>>, %arg5: memref<64x60xf32, #tpu.memory_space<vmem>>, %arg6: memref<8x60xf32, #tpu.memory_space<vmem>>, %arg7: memref<1x60xf32, #tpu.memory_space<vmem>>, %arg8: memref<1x60xf32, #tpu.memory_space<vmem>>, %arg9: memref<2x60x192xbf16, #tpu.memory_space<vmem>>, %arg10: memref<2x1x192xf32, #tpu.memory_space<vmem>>, %arg11: memref<2x64x60xbf16, #tpu.memory_space<vmem>>, %arg12: memref<2x1x60xf32, #tpu.memory_space<vmem>>, %arg13: memref<2x1x60xf32, #tpu.memory_space<vmem>>, %arg14: memref<2x1x60xf32, #tpu.memory_space<vmem>>, %arg15: memref<2x60x240xbf16, #tpu.memory_space<vmem>>, %arg16: memref<2x1x240xf32, #tpu.memory_space<vmem>>, %arg17: memref<2x240x60xbf16, #tpu.memory_space<vmem>>, %arg18: memref<2x1x60xf32, #tpu.memory_space<vmem>>, %arg19: memref<2x1x60xf32, #tpu.memory_space<vmem>>, %arg20: memref<2x1x60xf32, #tpu.memory_space<vmem>>, %arg21: memref<60x60xbf16, #tpu.memory_space<vmem>>, %arg22: memref<1x60xf32, #tpu.memory_space<vmem>>, %arg23: memref<2x128x384xbf16, #tpu.memory_space<vmem>>, %arg24: memref<2x1x384xf32, #tpu.memory_space<vmem>>, %arg25: memref<2x128x128xbf16, #tpu.memory_space<vmem>>, %arg26: memref<2x1x128xf32, #tpu.memory_space<vmem>>, %arg27: memref<2x1x128xf32, #tpu.memory_space<vmem>>, %arg28: memref<2x1x128xf32, #tpu.memory_space<vmem>>, %arg29: memref<2x128x256xbf16, #tpu.memory_space<vmem>>, %arg30: memref<2x1x256xf32, #tpu.memory_space<vmem>>, %arg31: memref<2x256x128xbf16, #tpu.memory_space<vmem>>, %arg32: memref<2x1x128xf32, #tpu.memory_space<vmem>>, %arg33: memref<2x1x128xf32, #tpu.memory_space<vmem>>, %arg34: memref<2x1x128xf32, #tpu.memory_space<vmem>>, %arg35: memref<128x6xf32, #tpu.memory_space<vmem>>, %arg36: memref<1x6xf32, #tpu.memory_space<vmem>>, %arg37: memref<2x6xf32, #tpu.memory_space<vmem>>) attributes {dimension_semantics = [], scalar_prefetch = 0 : i64, scratch_operands = 0 : i64, tpu.core_type = #tpu.core_type<tc>} {
    %c0 = arith.constant 0 : index
    %c0_0 = arith.constant 0 : index
    %0 = vector.load %arg0[%c0, %c0_0] : memref<32x1xi32, #tpu.memory_space<vmem>>, vector<32x1xi32>
    %1 = tpu.iota {dimensions = array<i32: 1>} : vector<32x64xi32>
    %2 = vector.broadcast %0 : vector<32x1xi32> to vector<32x64xi32>
    %3 = arith.cmpi eq, %2, %1 : vector<32x64xi32>
    %4 = arith.extui %3 : vector<32x64xi1> to vector<32x64xi32>
    %5 = arith.sitofp %4 : vector<32x64xi32> to vector<32x64xf32>
    %c0_1 = arith.constant 0 : index
    %c0_2 = arith.constant 0 : index
    %6 = vector.load %arg5[%c0_1, %c0_2] : memref<64x60xf32, #tpu.memory_space<vmem>>, vector<64x60xf32>
    %cst = arith.constant dense<0.000000e+00> : vector<32x60xf32>
    %7 = tpu.matmul %5, %6, %cst {dimension_numbers = #tpu.dot_dimension_numbers<[1], [0], [0], [1], [0, 0, 1, 1], [], []>} : vector<32x64xf32>, vector<64x60xf32>, vector<32x60xf32> -> vector<32x60xf32>
    %8 = vector.shape_cast %7 : vector<32x60xf32> to vector<4x8x60xf32>
    %c0_3 = arith.constant 0 : index
    %c0_4 = arith.constant 0 : index
    %9 = vector.load %arg6[%c0_3, %c0_4] : memref<8x60xf32, #tpu.memory_space<vmem>>, vector<8x60xf32>
    %10 = vector.shape_cast %9 : vector<8x60xf32> to vector<1x8x60xf32>
    %11 = vector.broadcast %10 : vector<1x8x60xf32> to vector<4x8x60xf32>
    %12 = arith.addf %8, %11 : vector<4x8x60xf32>
    %13 = vector.shape_cast %12 : vector<4x8x60xf32> to vector<32x60xf32>
    %c0_5 = arith.constant 0 : index
    %c0_6 = arith.constant 0 : index
    %14 = vector.load %arg7[%c0_5, %c0_6] : memref<1x60xf32, #tpu.memory_space<vmem>>, vector<1x60xf32>
    %c0_7 = arith.constant 0 : index
    %c0_8 = arith.constant 0 : index
    %15 = vector.load %arg8[%c0_7, %c0_8] : memref<1x60xf32, #tpu.memory_space<vmem>>, vector<1x60xf32>
    %cst_9 = arith.constant dense<0.000000e+00> : vector<32xf32>
    %16 = vector.multi_reduction <add>, %13, %cst_9 [1] : vector<32x60xf32> to vector<32xf32>
    %17 = vector.shape_cast %16 : vector<32xf32> to vector<32x1xf32>
    %cst_10 = arith.constant 6.000000e+01 : f32
    %18 = vector.broadcast %cst_10 : f32 to vector<32x1xf32>
    %19 = arith.divf %17, %18 : vector<32x1xf32>
    %20 = vector.broadcast %19 : vector<32x1xf32> to vector<32x60xf32>
    %21 = arith.subf %13, %20 : vector<32x60xf32>
    %22 = arith.mulf %21, %21 : vector<32x60xf32>
    %cst_11 = arith.constant dense<0.000000e+00> : vector<32xf32>
    %23 = vector.multi_reduction <add>, %22, %cst_11 [1] : vector<32x60xf32> to vector<32xf32>
    %24 = vector.shape_cast %23 : vector<32xf32> to vector<32x1xf32>
    %cst_12 = arith.constant 6.000000e+01 : f32
    %25 = vector.broadcast %cst_12 : f32 to vector<32x1xf32>
    %26 = arith.divf %24, %25 : vector<32x1xf32>
    %cst_13 = arith.constant 9.99999974E-6 : f32
    %27 = vector.broadcast %cst_13 : f32 to vector<32x1xf32>
    %28 = arith.addf %26, %27 : vector<32x1xf32>
    %29 = math.rsqrt %28 : vector<32x1xf32>
    %30 = vector.broadcast %29 : vector<32x1xf32> to vector<32x60xf32>
    %31 = arith.mulf %21, %30 : vector<32x60xf32>
    %32 = vector.broadcast %14 : vector<1x60xf32> to vector<32x60xf32>
    %33 = arith.mulf %31, %32 : vector<32x60xf32>
    %34 = vector.broadcast %15 : vector<1x60xf32> to vector<32x60xf32>
    %35 = arith.addf %33, %34 : vector<32x60xf32>
    %c0_14 = arith.constant 0 : index
    %c0_15 = arith.constant 0 : index
    %36 = vector.load %arg1[%c0_14, %c0_15] : memref<4x8xi32, #tpu.memory_space<vmem>>, vector<4x8xi32>
    %c0_i32 = arith.constant 0 : i32
    %37 = vector.broadcast %c0_i32 : i32 to vector<4x8xi32>
    %38 = arith.cmpi sgt, %36, %37 : vector<4x8xi32>
    %cst_16 = arith.constant 0.000000e+00 : f32
    %cst_17 = arith.constant -1.000000e+09 : f32
    %39 = vector.broadcast %cst_16 : f32 to vector<4x8xf32>
    %40 = vector.broadcast %cst_17 : f32 to vector<4x8xf32>
    %41 = arith.select %38, %39, %40 : vector<4x8xi1>, vector<4x8xf32>
    %c0_18 = arith.constant 0 : index
    %c0_19 = arith.constant 0 : index
    %c0_20 = arith.constant 0 : index
    %42 = vector.load %arg9[%c0_18, %c0_19, %c0_20] : memref<2x60x192xbf16, #tpu.memory_space<vmem>>, vector<1x60x192xbf16>
    %43 = vector.shape_cast %42 : vector<1x60x192xbf16> to vector<60x192xbf16>
    %c0_21 = arith.constant 0 : index
    %c0_22 = arith.constant 0 : index
    %c0_23 = arith.constant 0 : index
    %44 = vector.load %arg10[%c0_21, %c0_22, %c0_23] : memref<2x1x192xf32, #tpu.memory_space<vmem>>, vector<1x1x192xf32>
    %45 = vector.shape_cast %44 : vector<1x1x192xf32> to vector<1x192xf32>
    %c0_24 = arith.constant 0 : index
    %c0_25 = arith.constant 0 : index
    %c0_26 = arith.constant 0 : index
    %46 = vector.load %arg11[%c0_24, %c0_25, %c0_26] : memref<2x64x60xbf16, #tpu.memory_space<vmem>>, vector<1x64x60xbf16>
    %47 = vector.shape_cast %46 : vector<1x64x60xbf16> to vector<64x60xbf16>
    %c0_27 = arith.constant 0 : index
    %c0_28 = arith.constant 0 : index
    %c0_29 = arith.constant 0 : index
    %48 = vector.load %arg12[%c0_27, %c0_28, %c0_29] : memref<2x1x60xf32, #tpu.memory_space<vmem>>, vector<1x1x60xf32>
    %49 = vector.shape_cast %48 : vector<1x1x60xf32> to vector<1x60xf32>
    %c0_30 = arith.constant 0 : index
    %c0_31 = arith.constant 0 : index
    %c0_32 = arith.constant 0 : index
    %50 = vector.load %arg13[%c0_30, %c0_31, %c0_32] : memref<2x1x60xf32, #tpu.memory_space<vmem>>, vector<1x1x60xf32>
    %51 = vector.shape_cast %50 : vector<1x1x60xf32> to vector<1x60xf32>
    %c0_33 = arith.constant 0 : index
    %c0_34 = arith.constant 0 : index
    %c0_35 = arith.constant 0 : index
    %52 = vector.load %arg14[%c0_33, %c0_34, %c0_35] : memref<2x1x60xf32, #tpu.memory_space<vmem>>, vector<1x1x60xf32>
    %53 = vector.shape_cast %52 : vector<1x1x60xf32> to vector<1x60xf32>
    %c0_36 = arith.constant 0 : index
    %c0_37 = arith.constant 0 : index
    %c0_38 = arith.constant 0 : index
    %54 = vector.load %arg15[%c0_36, %c0_37, %c0_38] : memref<2x60x240xbf16, #tpu.memory_space<vmem>>, vector<1x60x240xbf16>
    %55 = vector.shape_cast %54 : vector<1x60x240xbf16> to vector<60x240xbf16>
    %c0_39 = arith.constant 0 : index
    %c0_40 = arith.constant 0 : index
    %c0_41 = arith.constant 0 : index
    %56 = vector.load %arg16[%c0_39, %c0_40, %c0_41] : memref<2x1x240xf32, #tpu.memory_space<vmem>>, vector<1x1x240xf32>
    %57 = vector.shape_cast %56 : vector<1x1x240xf32> to vector<1x240xf32>
    %c0_42 = arith.constant 0 : index
    %c0_43 = arith.constant 0 : index
    %c0_44 = arith.constant 0 : index
    %58 = vector.load %arg17[%c0_42, %c0_43, %c0_44] : memref<2x240x60xbf16, #tpu.memory_space<vmem>>, vector<1x240x60xbf16>
    %59 = vector.shape_cast %58 : vector<1x240x60xbf16> to vector<240x60xbf16>
    %c0_45 = arith.constant 0 : index
    %c0_46 = arith.constant 0 : index
    %c0_47 = arith.constant 0 : index
    %60 = vector.load %arg18[%c0_45, %c0_46, %c0_47] : memref<2x1x60xf32, #tpu.memory_space<vmem>>, vector<1x1x60xf32>
    %61 = vector.shape_cast %60 : vector<1x1x60xf32> to vector<1x60xf32>
    %c0_48 = arith.constant 0 : index
    %c0_49 = arith.constant 0 : index
    %c0_50 = arith.constant 0 : index
    %62 = vector.load %arg19[%c0_48, %c0_49, %c0_50] : memref<2x1x60xf32, #tpu.memory_space<vmem>>, vector<1x1x60xf32>
    %63 = vector.shape_cast %62 : vector<1x1x60xf32> to vector<1x60xf32>
    %c0_51 = arith.constant 0 : index
    %c0_52 = arith.constant 0 : index
    %c0_53 = arith.constant 0 : index
    %64 = vector.load %arg20[%c0_51, %c0_52, %c0_53] : memref<2x1x60xf32, #tpu.memory_space<vmem>>, vector<1x1x60xf32>
    %65 = vector.shape_cast %64 : vector<1x1x60xf32> to vector<1x60xf32>
    %66 = arith.truncf %35 : vector<32x60xf32> to vector<32x60xbf16>
    %cst_54 = arith.constant dense<0.000000e+00> : vector<32x192xf32>
    %67 = tpu.matmul %66, %43, %cst_54 {dimension_numbers = #tpu.dot_dimension_numbers<[1], [0], [0], [1], [0, 0, 1, 1], [], []>} : vector<32x60xbf16>, vector<60x192xbf16>, vector<32x192xf32> -> vector<32x192xf32>
    %68 = vector.broadcast %45 : vector<1x192xf32> to vector<32x192xf32>
    %69 = arith.addf %67, %68 : vector<32x192xf32>
    %70 = vector.shape_cast %41 : vector<4x8xf32> to vector<4x1x8xf32>
    %71 = vector.extract_strided_slice %69 {offsets = [0, 0], sizes = [32, 16], strides = [1, 1]} : vector<32x192xf32> to vector<32x16xf32>
    %72 = vector.shape_cast %71 : vector<32x16xf32> to vector<4x8x16xf32>
    %73 = vector.extract_strided_slice %69 {offsets = [0, 64], sizes = [32, 16], strides = [1, 1]} : vector<32x192xf32> to vector<32x16xf32>
    %74 = vector.shape_cast %73 : vector<32x16xf32> to vector<4x8x16xf32>
    %75 = vector.extract_strided_slice %69 {offsets = [0, 128], sizes = [32, 16], strides = [1, 1]} : vector<32x192xf32> to vector<32x16xf32>
    %76 = vector.shape_cast %75 : vector<32x16xf32> to vector<4x8x16xf32>
    %77 = arith.truncf %72 : vector<4x8x16xf32> to vector<4x8x16xbf16>
    %78 = arith.truncf %74 : vector<4x8x16xf32> to vector<4x8x16xbf16>
    "tpu.trace_start"() <{level = 10 : i32, message = "bqf,bkf->bqk"}> : () -> ()
    %cst_55 = arith.constant dense<0.000000e+00> : vector<4x8x8xf32>
    %79 = tpu.matmul %77, %78, %cst_55 {dimension_numbers = #tpu.dot_dimension_numbers<[2], [2], [1], [1], [0, 0, 0, 1, 1, 1], [0], [0]>} : vector<4x8x16xbf16>, vector<4x8x16xbf16>, vector<4x8x8xf32> -> vector<4x8x8xf32>
    "tpu.trace_stop"() : () -> ()
    %80 = vector.broadcast %70 : vector<4x1x8xf32> to vector<4x8x8xf32>
    %81 = arith.addf %79, %80 : vector<4x8x8xf32>
    %cst_56 = arith.constant dense<0xFF800000> : vector<4x8xf32>
    %82 = vector.multi_reduction <maximumf>, %81, %cst_56 [2] : vector<4x8x8xf32> to vector<4x8xf32>
    %83 = vector.shape_cast %82 : vector<4x8xf32> to vector<4x8x1xf32>
    %84 = vector.broadcast %83 : vector<4x8x1xf32> to vector<4x8x8xf32>
    %85 = arith.subf %81, %84 : vector<4x8x8xf32>
    %86 = math.exp %85 : vector<4x8x8xf32>
    %cst_57 = arith.constant dense<0.000000e+00> : vector<4x8xf32>
    %87 = vector.multi_reduction <add>, %86, %cst_57 [2] : vector<4x8x8xf32> to vector<4x8xf32>
    %88 = vector.shape_cast %87 : vector<4x8xf32> to vector<4x8x1xf32>
    %89 = tpu.reciprocal %88 {approx = true} : vector<4x8x1xf32> -> vector<4x8x1xf32>
    %90 = vector.broadcast %89 : vector<4x8x1xf32> to vector<4x8x8xf32>
    %91 = arith.mulf %86, %90 : vector<4x8x8xf32>
    %92 = arith.truncf %91 : vector<4x8x8xf32> to vector<4x8x8xbf16>
    %93 = arith.truncf %76 : vector<4x8x16xf32> to vector<4x8x16xbf16>
    "tpu.trace_start"() <{level = 10 : i32, message = "bqk,bkf->bqf"}> : () -> ()
    %cst_58 = arith.constant dense<0.000000e+00> : vector<4x8x16xf32>
    %94 = tpu.matmul %92, %93, %cst_58 {dimension_numbers = #tpu.dot_dimension_numbers<[2], [1], [1], [2], [0, 0, 0, 1, 1, 2], [0], [0]>} : vector<4x8x8xbf16>, vector<4x8x16xbf16>, vector<4x8x16xf32> -> vector<4x8x16xf32>
    "tpu.trace_stop"() : () -> ()
    %95 = vector.shape_cast %94 : vector<4x8x16xf32> to vector<32x16xf32>
    %96 = vector.extract_strided_slice %69 {offsets = [0, 16], sizes = [32, 16], strides = [1, 1]} : vector<32x192xf32> to vector<32x16xf32>
    %97 = vector.shape_cast %96 : vector<32x16xf32> to vector<4x8x16xf32>
    %98 = vector.extract_strided_slice %69 {offsets = [0, 80], sizes = [32, 16], strides = [1, 1]} : vector<32x192xf32> to vector<32x16xf32>
    %99 = vector.shape_cast %98 : vector<32x16xf32> to vector<4x8x16xf32>
    %100 = vector.extract_strided_slice %69 {offsets = [0, 144], sizes = [32, 16], strides = [1, 1]} : vector<32x192xf32> to vector<32x16xf32>
    %101 = vector.shape_cast %100 : vector<32x16xf32> to vector<4x8x16xf32>
    %102 = arith.truncf %97 : vector<4x8x16xf32> to vector<4x8x16xbf16>
    %103 = arith.truncf %99 : vector<4x8x16xf32> to vector<4x8x16xbf16>
    "tpu.trace_start"() <{level = 10 : i32, message = "bqf,bkf->bqk"}> : () -> ()
    %cst_59 = arith.constant dense<0.000000e+00> : vector<4x8x8xf32>
    %104 = tpu.matmul %102, %103, %cst_59 {dimension_numbers = #tpu.dot_dimension_numbers<[2], [2], [1], [1], [0, 0, 0, 1, 1, 1], [0], [0]>} : vector<4x8x16xbf16>, vector<4x8x16xbf16>, vector<4x8x8xf32> -> vector<4x8x8xf32>
    "tpu.trace_stop"() : () -> ()
    %105 = vector.broadcast %70 : vector<4x1x8xf32> to vector<4x8x8xf32>
    %106 = arith.addf %104, %105 : vector<4x8x8xf32>
    %cst_60 = arith.constant dense<0xFF800000> : vector<4x8xf32>
    %107 = vector.multi_reduction <maximumf>, %106, %cst_60 [2] : vector<4x8x8xf32> to vector<4x8xf32>
    %108 = vector.shape_cast %107 : vector<4x8xf32> to vector<4x8x1xf32>
    %109 = vector.broadcast %108 : vector<4x8x1xf32> to vector<4x8x8xf32>
    %110 = arith.subf %106, %109 : vector<4x8x8xf32>
    %111 = math.exp %110 : vector<4x8x8xf32>
    %cst_61 = arith.constant dense<0.000000e+00> : vector<4x8xf32>
    %112 = vector.multi_reduction <add>, %111, %cst_61 [2] : vector<4x8x8xf32> to vector<4x8xf32>
    %113 = vector.shape_cast %112 : vector<4x8xf32> to vector<4x8x1xf32>
    %114 = tpu.reciprocal %113 {approx = true} : vector<4x8x1xf32> -> vector<4x8x1xf32>
    %115 = vector.broadcast %114 : vector<4x8x1xf32> to vector<4x8x8xf32>
    %116 = arith.mulf %111, %115 : vector<4x8x8xf32>
    %117 = arith.truncf %116 : vector<4x8x8xf32> to vector<4x8x8xbf16>
    %118 = arith.truncf %101 : vector<4x8x16xf32> to vector<4x8x16xbf16>
    "tpu.trace_start"() <{level = 10 : i32, message = "bqk,bkf->bqf"}> : () -> ()
    %cst_62 = arith.constant dense<0.000000e+00> : vector<4x8x16xf32>
    %119 = tpu.matmul %117, %118, %cst_62 {dimension_numbers = #tpu.dot_dimension_numbers<[2], [1], [1], [2], [0, 0, 0, 1, 1, 2], [0], [0]>} : vector<4x8x8xbf16>, vector<4x8x16xbf16>, vector<4x8x16xf32> -> vector<4x8x16xf32>
    "tpu.trace_stop"() : () -> ()
    %120 = vector.shape_cast %119 : vector<4x8x16xf32> to vector<32x16xf32>
    %121 = vector.extract_strided_slice %69 {offsets = [0, 32], sizes = [32, 16], strides = [1, 1]} : vector<32x192xf32> to vector<32x16xf32>
    %122 = vector.shape_cast %121 : vector<32x16xf32> to vector<4x8x16xf32>
    %123 = vector.extract_strided_slice %69 {offsets = [0, 96], sizes = [32, 16], strides = [1, 1]} : vector<32x192xf32> to vector<32x16xf32>
    %124 = vector.shape_cast %123 : vector<32x16xf32> to vector<4x8x16xf32>
    %125 = vector.extract_strided_slice %69 {offsets = [0, 160], sizes = [32, 16], strides = [1, 1]} : vector<32x192xf32> to vector<32x16xf32>
    %126 = vector.shape_cast %125 : vector<32x16xf32> to vector<4x8x16xf32>
    %127 = arith.truncf %122 : vector<4x8x16xf32> to vector<4x8x16xbf16>
    %128 = arith.truncf %124 : vector<4x8x16xf32> to vector<4x8x16xbf16>
    "tpu.trace_start"() <{level = 10 : i32, message = "bqf,bkf->bqk"}> : () -> ()
    %cst_63 = arith.constant dense<0.000000e+00> : vector<4x8x8xf32>
    %129 = tpu.matmul %127, %128, %cst_63 {dimension_numbers = #tpu.dot_dimension_numbers<[2], [2], [1], [1], [0, 0, 0, 1, 1, 1], [0], [0]>} : vector<4x8x16xbf16>, vector<4x8x16xbf16>, vector<4x8x8xf32> -> vector<4x8x8xf32>
    "tpu.trace_stop"() : () -> ()
    %130 = vector.broadcast %70 : vector<4x1x8xf32> to vector<4x8x8xf32>
    %131 = arith.addf %129, %130 : vector<4x8x8xf32>
    %cst_64 = arith.constant dense<0xFF800000> : vector<4x8xf32>
    %132 = vector.multi_reduction <maximumf>, %131, %cst_64 [2] : vector<4x8x8xf32> to vector<4x8xf32>
    %133 = vector.shape_cast %132 : vector<4x8xf32> to vector<4x8x1xf32>
    %134 = vector.broadcast %133 : vector<4x8x1xf32> to vector<4x8x8xf32>
    %135 = arith.subf %131, %134 : vector<4x8x8xf32>
    %136 = math.exp %135 : vector<4x8x8xf32>
    %cst_65 = arith.constant dense<0.000000e+00> : vector<4x8xf32>
    %137 = vector.multi_reduction <add>, %136, %cst_65 [2] : vector<4x8x8xf32> to vector<4x8xf32>
    %138 = vector.shape_cast %137 : vector<4x8xf32> to vector<4x8x1xf32>
    %139 = tpu.reciprocal %138 {approx = true} : vector<4x8x1xf32> -> vector<4x8x1xf32>
    %140 = vector.broadcast %139 : vector<4x8x1xf32> to vector<4x8x8xf32>
    %141 = arith.mulf %136, %140 : vector<4x8x8xf32>
    %142 = arith.truncf %141 : vector<4x8x8xf32> to vector<4x8x8xbf16>
    %143 = arith.truncf %126 : vector<4x8x16xf32> to vector<4x8x16xbf16>
    "tpu.trace_start"() <{level = 10 : i32, message = "bqk,bkf->bqf"}> : () -> ()
    %cst_66 = arith.constant dense<0.000000e+00> : vector<4x8x16xf32>
    %144 = tpu.matmul %142, %143, %cst_66 {dimension_numbers = #tpu.dot_dimension_numbers<[2], [1], [1], [2], [0, 0, 0, 1, 1, 2], [0], [0]>} : vector<4x8x8xbf16>, vector<4x8x16xbf16>, vector<4x8x16xf32> -> vector<4x8x16xf32>
    "tpu.trace_stop"() : () -> ()
    %145 = vector.shape_cast %144 : vector<4x8x16xf32> to vector<32x16xf32>
    %146 = vector.extract_strided_slice %69 {offsets = [0, 48], sizes = [32, 16], strides = [1, 1]} : vector<32x192xf32> to vector<32x16xf32>
    %147 = vector.shape_cast %146 : vector<32x16xf32> to vector<4x8x16xf32>
    %148 = vector.extract_strided_slice %69 {offsets = [0, 112], sizes = [32, 16], strides = [1, 1]} : vector<32x192xf32> to vector<32x16xf32>
    %149 = vector.shape_cast %148 : vector<32x16xf32> to vector<4x8x16xf32>
    %150 = vector.extract_strided_slice %69 {offsets = [0, 176], sizes = [32, 16], strides = [1, 1]} : vector<32x192xf32> to vector<32x16xf32>
    %151 = vector.shape_cast %150 : vector<32x16xf32> to vector<4x8x16xf32>
    %152 = arith.truncf %147 : vector<4x8x16xf32> to vector<4x8x16xbf16>
    %153 = arith.truncf %149 : vector<4x8x16xf32> to vector<4x8x16xbf16>
    "tpu.trace_start"() <{level = 10 : i32, message = "bqf,bkf->bqk"}> : () -> ()
    %cst_67 = arith.constant dense<0.000000e+00> : vector<4x8x8xf32>
    %154 = tpu.matmul %152, %153, %cst_67 {dimension_numbers = #tpu.dot_dimension_numbers<[2], [2], [1], [1], [0, 0, 0, 1, 1, 1], [0], [0]>} : vector<4x8x16xbf16>, vector<4x8x16xbf16>, vector<4x8x8xf32> -> vector<4x8x8xf32>
    "tpu.trace_stop"() : () -> ()
    %155 = vector.broadcast %70 : vector<4x1x8xf32> to vector<4x8x8xf32>
    %156 = arith.addf %154, %155 : vector<4x8x8xf32>
    %cst_68 = arith.constant dense<0xFF800000> : vector<4x8xf32>
    %157 = vector.multi_reduction <maximumf>, %156, %cst_68 [2] : vector<4x8x8xf32> to vector<4x8xf32>
    %158 = vector.shape_cast %157 : vector<4x8xf32> to vector<4x8x1xf32>
    %159 = vector.broadcast %158 : vector<4x8x1xf32> to vector<4x8x8xf32>
    %160 = arith.subf %156, %159 : vector<4x8x8xf32>
    %161 = math.exp %160 : vector<4x8x8xf32>
    %cst_69 = arith.constant dense<0.000000e+00> : vector<4x8xf32>
    %162 = vector.multi_reduction <add>, %161, %cst_69 [2] : vector<4x8x8xf32> to vector<4x8xf32>
    %163 = vector.shape_cast %162 : vector<4x8xf32> to vector<4x8x1xf32>
    %164 = tpu.reciprocal %163 {approx = true} : vector<4x8x1xf32> -> vector<4x8x1xf32>
    %165 = vector.broadcast %164 : vector<4x8x1xf32> to vector<4x8x8xf32>
    %166 = arith.mulf %161, %165 : vector<4x8x8xf32>
    %167 = arith.truncf %166 : vector<4x8x8xf32> to vector<4x8x8xbf16>
    %168 = arith.truncf %151 : vector<4x8x16xf32> to vector<4x8x16xbf16>
    "tpu.trace_start"() <{level = 10 : i32, message = "bqk,bkf->bqf"}> : () -> ()
    %cst_70 = arith.constant dense<0.000000e+00> : vector<4x8x16xf32>
    %169 = tpu.matmul %167, %168, %cst_70 {dimension_numbers = #tpu.dot_dimension_numbers<[2], [1], [1], [2], [0, 0, 0, 1, 1, 2], [0], [0]>} : vector<4x8x8xbf16>, vector<4x8x16xbf16>, vector<4x8x16xf32> -> vector<4x8x16xf32>
    "tpu.trace_stop"() : () -> ()
    %170 = vector.shape_cast %169 : vector<4x8x16xf32> to vector<32x16xf32>
    %171 = tpu.concatenate %95, %120, %145, %170 in 1 : vector<32x16xf32>, vector<32x16xf32>, vector<32x16xf32>, vector<32x16xf32> -> vector<32x64xf32>
    %172 = arith.truncf %171 : vector<32x64xf32> to vector<32x64xbf16>
    %cst_71 = arith.constant dense<0.000000e+00> : vector<32x60xf32>
    %173 = tpu.matmul %172, %47, %cst_71 {dimension_numbers = #tpu.dot_dimension_numbers<[1], [0], [0], [1], [0, 0, 1, 1], [], []>} : vector<32x64xbf16>, vector<64x60xbf16>, vector<32x60xf32> -> vector<32x60xf32>
    %174 = vector.broadcast %49 : vector<1x60xf32> to vector<32x60xf32>
    %175 = arith.addf %173, %174 : vector<32x60xf32>
    %176 = arith.addf %35, %175 : vector<32x60xf32>
    %cst_72 = arith.constant dense<0.000000e+00> : vector<32xf32>
    %177 = vector.multi_reduction <add>, %176, %cst_72 [1] : vector<32x60xf32> to vector<32xf32>
    %178 = vector.shape_cast %177 : vector<32xf32> to vector<32x1xf32>
    %cst_73 = arith.constant 6.000000e+01 : f32
    %179 = vector.broadcast %cst_73 : f32 to vector<32x1xf32>
    %180 = arith.divf %178, %179 : vector<32x1xf32>
    %181 = vector.broadcast %180 : vector<32x1xf32> to vector<32x60xf32>
    %182 = arith.subf %176, %181 : vector<32x60xf32>
    %183 = arith.mulf %182, %182 : vector<32x60xf32>
    %cst_74 = arith.constant dense<0.000000e+00> : vector<32xf32>
    %184 = vector.multi_reduction <add>, %183, %cst_74 [1] : vector<32x60xf32> to vector<32xf32>
    %185 = vector.shape_cast %184 : vector<32xf32> to vector<32x1xf32>
    %cst_75 = arith.constant 6.000000e+01 : f32
    %186 = vector.broadcast %cst_75 : f32 to vector<32x1xf32>
    %187 = arith.divf %185, %186 : vector<32x1xf32>
    %cst_76 = arith.constant 9.99999974E-6 : f32
    %188 = vector.broadcast %cst_76 : f32 to vector<32x1xf32>
    %189 = arith.addf %187, %188 : vector<32x1xf32>
    %190 = math.rsqrt %189 : vector<32x1xf32>
    %191 = vector.broadcast %190 : vector<32x1xf32> to vector<32x60xf32>
    %192 = arith.mulf %182, %191 : vector<32x60xf32>
    %193 = vector.broadcast %51 : vector<1x60xf32> to vector<32x60xf32>
    %194 = arith.mulf %192, %193 : vector<32x60xf32>
    %195 = vector.broadcast %53 : vector<1x60xf32> to vector<32x60xf32>
    %196 = arith.addf %194, %195 : vector<32x60xf32>
    %197 = arith.truncf %196 : vector<32x60xf32> to vector<32x60xbf16>
    %cst_77 = arith.constant dense<0.000000e+00> : vector<32x240xf32>
    %198 = tpu.matmul %197, %55, %cst_77 {dimension_numbers = #tpu.dot_dimension_numbers<[1], [0], [0], [1], [0, 0, 1, 1], [], []>} : vector<32x60xbf16>, vector<60x240xbf16>, vector<32x240xf32> -> vector<32x240xf32>
    %199 = vector.broadcast %57 : vector<1x240xf32> to vector<32x240xf32>
    %200 = arith.addf %198, %199 : vector<32x240xf32>
    %201 = arith.mulf %200, %200 : vector<32x240xf32>
    %202 = arith.mulf %200, %201 : vector<32x240xf32>
    %cst_78 = arith.constant 4.471500e-02 : f32
    %203 = vector.broadcast %cst_78 : f32 to vector<32x240xf32>
    %204 = arith.mulf %203, %202 : vector<32x240xf32>
    %205 = arith.addf %200, %204 : vector<32x240xf32>
    %cst_79 = arith.constant 0.797884583 : f32
    %206 = vector.broadcast %cst_79 : f32 to vector<32x240xf32>
    %207 = arith.mulf %206, %205 : vector<32x240xf32>
    %208 = math.tanh %207 : vector<32x240xf32>
    %cst_80 = arith.constant 1.000000e+00 : f32
    %209 = vector.broadcast %cst_80 : f32 to vector<32x240xf32>
    %210 = arith.addf %209, %208 : vector<32x240xf32>
    %cst_81 = arith.constant 5.000000e-01 : f32
    %211 = vector.broadcast %cst_81 : f32 to vector<32x240xf32>
    %212 = arith.mulf %211, %210 : vector<32x240xf32>
    %213 = arith.mulf %200, %212 : vector<32x240xf32>
    %214 = arith.truncf %213 : vector<32x240xf32> to vector<32x240xbf16>
    %cst_82 = arith.constant dense<0.000000e+00> : vector<32x60xf32>
    %215 = tpu.matmul %214, %59, %cst_82 {dimension_numbers = #tpu.dot_dimension_numbers<[1], [0], [0], [1], [0, 0, 1, 1], [], []>} : vector<32x240xbf16>, vector<240x60xbf16>, vector<32x60xf32> -> vector<32x60xf32>
    %216 = vector.broadcast %61 : vector<1x60xf32> to vector<32x60xf32>
    %217 = arith.addf %215, %216 : vector<32x60xf32>
    %218 = arith.addf %196, %217 : vector<32x60xf32>
    %cst_83 = arith.constant dense<0.000000e+00> : vector<32xf32>
    %219 = vector.multi_reduction <add>, %218, %cst_83 [1] : vector<32x60xf32> to vector<32xf32>
    %220 = vector.shape_cast %219 : vector<32xf32> to vector<32x1xf32>
    %cst_84 = arith.constant 6.000000e+01 : f32
    %221 = vector.broadcast %cst_84 : f32 to vector<32x1xf32>
    %222 = arith.divf %220, %221 : vector<32x1xf32>
    %223 = vector.broadcast %222 : vector<32x1xf32> to vector<32x60xf32>
    %224 = arith.subf %218, %223 : vector<32x60xf32>
    %225 = arith.mulf %224, %224 : vector<32x60xf32>
    %cst_85 = arith.constant dense<0.000000e+00> : vector<32xf32>
    %226 = vector.multi_reduction <add>, %225, %cst_85 [1] : vector<32x60xf32> to vector<32xf32>
    %227 = vector.shape_cast %226 : vector<32xf32> to vector<32x1xf32>
    %cst_86 = arith.constant 6.000000e+01 : f32
    %228 = vector.broadcast %cst_86 : f32 to vector<32x1xf32>
    %229 = arith.divf %227, %228 : vector<32x1xf32>
    %cst_87 = arith.constant 9.99999974E-6 : f32
    %230 = vector.broadcast %cst_87 : f32 to vector<32x1xf32>
    %231 = arith.addf %229, %230 : vector<32x1xf32>
    %232 = math.rsqrt %231 : vector<32x1xf32>
    %233 = vector.broadcast %232 : vector<32x1xf32> to vector<32x60xf32>
    %234 = arith.mulf %224, %233 : vector<32x60xf32>
    %235 = vector.broadcast %63 : vector<1x60xf32> to vector<32x60xf32>
    %236 = arith.mulf %234, %235 : vector<32x60xf32>
    %237 = vector.broadcast %65 : vector<1x60xf32> to vector<32x60xf32>
    %238 = arith.addf %236, %237 : vector<32x60xf32>
    %c1 = arith.constant 1 : index
    %c0_88 = arith.constant 0 : index
    %c0_89 = arith.constant 0 : index
    %239 = vector.load %arg9[%c1, %c0_88, %c0_89] : memref<2x60x192xbf16, #tpu.memory_space<vmem>>, vector<1x60x192xbf16>
    %240 = vector.shape_cast %239 : vector<1x60x192xbf16> to vector<60x192xbf16>
    %c1_90 = arith.constant 1 : index
    %c0_91 = arith.constant 0 : index
    %c0_92 = arith.constant 0 : index
    %241 = vector.load %arg10[%c1_90, %c0_91, %c0_92] : memref<2x1x192xf32, #tpu.memory_space<vmem>>, vector<1x1x192xf32>
    %242 = vector.shape_cast %241 : vector<1x1x192xf32> to vector<1x192xf32>
    %c1_93 = arith.constant 1 : index
    %c0_94 = arith.constant 0 : index
    %c0_95 = arith.constant 0 : index
    %243 = vector.load %arg11[%c1_93, %c0_94, %c0_95] : memref<2x64x60xbf16, #tpu.memory_space<vmem>>, vector<1x64x60xbf16>
    %244 = vector.shape_cast %243 : vector<1x64x60xbf16> to vector<64x60xbf16>
    %c1_96 = arith.constant 1 : index
    %c0_97 = arith.constant 0 : index
    %c0_98 = arith.constant 0 : index
    %245 = vector.load %arg12[%c1_96, %c0_97, %c0_98] : memref<2x1x60xf32, #tpu.memory_space<vmem>>, vector<1x1x60xf32>
    %246 = vector.shape_cast %245 : vector<1x1x60xf32> to vector<1x60xf32>
    %c1_99 = arith.constant 1 : index
    %c0_100 = arith.constant 0 : index
    %c0_101 = arith.constant 0 : index
    %247 = vector.load %arg13[%c1_99, %c0_100, %c0_101] : memref<2x1x60xf32, #tpu.memory_space<vmem>>, vector<1x1x60xf32>
    %248 = vector.shape_cast %247 : vector<1x1x60xf32> to vector<1x60xf32>
    %c1_102 = arith.constant 1 : index
    %c0_103 = arith.constant 0 : index
    %c0_104 = arith.constant 0 : index
    %249 = vector.load %arg14[%c1_102, %c0_103, %c0_104] : memref<2x1x60xf32, #tpu.memory_space<vmem>>, vector<1x1x60xf32>
    %250 = vector.shape_cast %249 : vector<1x1x60xf32> to vector<1x60xf32>
    %c1_105 = arith.constant 1 : index
    %c0_106 = arith.constant 0 : index
    %c0_107 = arith.constant 0 : index
    %251 = vector.load %arg15[%c1_105, %c0_106, %c0_107] : memref<2x60x240xbf16, #tpu.memory_space<vmem>>, vector<1x60x240xbf16>
    %252 = vector.shape_cast %251 : vector<1x60x240xbf16> to vector<60x240xbf16>
    %c1_108 = arith.constant 1 : index
    %c0_109 = arith.constant 0 : index
    %c0_110 = arith.constant 0 : index
    %253 = vector.load %arg16[%c1_108, %c0_109, %c0_110] : memref<2x1x240xf32, #tpu.memory_space<vmem>>, vector<1x1x240xf32>
    %254 = vector.shape_cast %253 : vector<1x1x240xf32> to vector<1x240xf32>
    %c1_111 = arith.constant 1 : index
    %c0_112 = arith.constant 0 : index
    %c0_113 = arith.constant 0 : index
    %255 = vector.load %arg17[%c1_111, %c0_112, %c0_113] : memref<2x240x60xbf16, #tpu.memory_space<vmem>>, vector<1x240x60xbf16>
    %256 = vector.shape_cast %255 : vector<1x240x60xbf16> to vector<240x60xbf16>
    %c1_114 = arith.constant 1 : index
    %c0_115 = arith.constant 0 : index
    %c0_116 = arith.constant 0 : index
    %257 = vector.load %arg18[%c1_114, %c0_115, %c0_116] : memref<2x1x60xf32, #tpu.memory_space<vmem>>, vector<1x1x60xf32>
    %258 = vector.shape_cast %257 : vector<1x1x60xf32> to vector<1x60xf32>
    %c1_117 = arith.constant 1 : index
    %c0_118 = arith.constant 0 : index
    %c0_119 = arith.constant 0 : index
    %259 = vector.load %arg19[%c1_117, %c0_118, %c0_119] : memref<2x1x60xf32, #tpu.memory_space<vmem>>, vector<1x1x60xf32>
    %260 = vector.shape_cast %259 : vector<1x1x60xf32> to vector<1x60xf32>
    %c1_120 = arith.constant 1 : index
    %c0_121 = arith.constant 0 : index
    %c0_122 = arith.constant 0 : index
    %261 = vector.load %arg20[%c1_120, %c0_121, %c0_122] : memref<2x1x60xf32, #tpu.memory_space<vmem>>, vector<1x1x60xf32>
    %262 = vector.shape_cast %261 : vector<1x1x60xf32> to vector<1x60xf32>
    %263 = arith.truncf %238 : vector<32x60xf32> to vector<32x60xbf16>
    %cst_123 = arith.constant dense<0.000000e+00> : vector<32x192xf32>
    %264 = tpu.matmul %263, %240, %cst_123 {dimension_numbers = #tpu.dot_dimension_numbers<[1], [0], [0], [1], [0, 0, 1, 1], [], []>} : vector<32x60xbf16>, vector<60x192xbf16>, vector<32x192xf32> -> vector<32x192xf32>
    %265 = vector.broadcast %242 : vector<1x192xf32> to vector<32x192xf32>
    %266 = arith.addf %264, %265 : vector<32x192xf32>
    %267 = vector.shape_cast %41 : vector<4x8xf32> to vector<4x1x8xf32>
    %268 = vector.extract_strided_slice %266 {offsets = [0, 0], sizes = [32, 16], strides = [1, 1]} : vector<32x192xf32> to vector<32x16xf32>
    %269 = vector.shape_cast %268 : vector<32x16xf32> to vector<4x8x16xf32>
    %270 = vector.extract_strided_slice %266 {offsets = [0, 64], sizes = [32, 16], strides = [1, 1]} : vector<32x192xf32> to vector<32x16xf32>
    %271 = vector.shape_cast %270 : vector<32x16xf32> to vector<4x8x16xf32>
    %272 = vector.extract_strided_slice %266 {offsets = [0, 128], sizes = [32, 16], strides = [1, 1]} : vector<32x192xf32> to vector<32x16xf32>
    %273 = vector.shape_cast %272 : vector<32x16xf32> to vector<4x8x16xf32>
    %274 = arith.truncf %269 : vector<4x8x16xf32> to vector<4x8x16xbf16>
    %275 = arith.truncf %271 : vector<4x8x16xf32> to vector<4x8x16xbf16>
    "tpu.trace_start"() <{level = 10 : i32, message = "bqf,bkf->bqk"}> : () -> ()
    %cst_124 = arith.constant dense<0.000000e+00> : vector<4x8x8xf32>
    %276 = tpu.matmul %274, %275, %cst_124 {dimension_numbers = #tpu.dot_dimension_numbers<[2], [2], [1], [1], [0, 0, 0, 1, 1, 1], [0], [0]>} : vector<4x8x16xbf16>, vector<4x8x16xbf16>, vector<4x8x8xf32> -> vector<4x8x8xf32>
    "tpu.trace_stop"() : () -> ()
    %277 = vector.broadcast %267 : vector<4x1x8xf32> to vector<4x8x8xf32>
    %278 = arith.addf %276, %277 : vector<4x8x8xf32>
    %cst_125 = arith.constant dense<0xFF800000> : vector<4x8xf32>
    %279 = vector.multi_reduction <maximumf>, %278, %cst_125 [2] : vector<4x8x8xf32> to vector<4x8xf32>
    %280 = vector.shape_cast %279 : vector<4x8xf32> to vector<4x8x1xf32>
    %281 = vector.broadcast %280 : vector<4x8x1xf32> to vector<4x8x8xf32>
    %282 = arith.subf %278, %281 : vector<4x8x8xf32>
    %283 = math.exp %282 : vector<4x8x8xf32>
    %cst_126 = arith.constant dense<0.000000e+00> : vector<4x8xf32>
    %284 = vector.multi_reduction <add>, %283, %cst_126 [2] : vector<4x8x8xf32> to vector<4x8xf32>
    %285 = vector.shape_cast %284 : vector<4x8xf32> to vector<4x8x1xf32>
    %286 = tpu.reciprocal %285 {approx = true} : vector<4x8x1xf32> -> vector<4x8x1xf32>
    %287 = vector.broadcast %286 : vector<4x8x1xf32> to vector<4x8x8xf32>
    %288 = arith.mulf %283, %287 : vector<4x8x8xf32>
    %289 = arith.truncf %288 : vector<4x8x8xf32> to vector<4x8x8xbf16>
    %290 = arith.truncf %273 : vector<4x8x16xf32> to vector<4x8x16xbf16>
    "tpu.trace_start"() <{level = 10 : i32, message = "bqk,bkf->bqf"}> : () -> ()
    %cst_127 = arith.constant dense<0.000000e+00> : vector<4x8x16xf32>
    %291 = tpu.matmul %289, %290, %cst_127 {dimension_numbers = #tpu.dot_dimension_numbers<[2], [1], [1], [2], [0, 0, 0, 1, 1, 2], [0], [0]>} : vector<4x8x8xbf16>, vector<4x8x16xbf16>, vector<4x8x16xf32> -> vector<4x8x16xf32>
    "tpu.trace_stop"() : () -> ()
    %292 = vector.shape_cast %291 : vector<4x8x16xf32> to vector<32x16xf32>
    %293 = vector.extract_strided_slice %266 {offsets = [0, 16], sizes = [32, 16], strides = [1, 1]} : vector<32x192xf32> to vector<32x16xf32>
    %294 = vector.shape_cast %293 : vector<32x16xf32> to vector<4x8x16xf32>
    %295 = vector.extract_strided_slice %266 {offsets = [0, 80], sizes = [32, 16], strides = [1, 1]} : vector<32x192xf32> to vector<32x16xf32>
    %296 = vector.shape_cast %295 : vector<32x16xf32> to vector<4x8x16xf32>
    %297 = vector.extract_strided_slice %266 {offsets = [0, 144], sizes = [32, 16], strides = [1, 1]} : vector<32x192xf32> to vector<32x16xf32>
    %298 = vector.shape_cast %297 : vector<32x16xf32> to vector<4x8x16xf32>
    %299 = arith.truncf %294 : vector<4x8x16xf32> to vector<4x8x16xbf16>
    %300 = arith.truncf %296 : vector<4x8x16xf32> to vector<4x8x16xbf16>
    "tpu.trace_start"() <{level = 10 : i32, message = "bqf,bkf->bqk"}> : () -> ()
    %cst_128 = arith.constant dense<0.000000e+00> : vector<4x8x8xf32>
    %301 = tpu.matmul %299, %300, %cst_128 {dimension_numbers = #tpu.dot_dimension_numbers<[2], [2], [1], [1], [0, 0, 0, 1, 1, 1], [0], [0]>} : vector<4x8x16xbf16>, vector<4x8x16xbf16>, vector<4x8x8xf32> -> vector<4x8x8xf32>
    "tpu.trace_stop"() : () -> ()
    %302 = vector.broadcast %267 : vector<4x1x8xf32> to vector<4x8x8xf32>
    %303 = arith.addf %301, %302 : vector<4x8x8xf32>
    %cst_129 = arith.constant dense<0xFF800000> : vector<4x8xf32>
    %304 = vector.multi_reduction <maximumf>, %303, %cst_129 [2] : vector<4x8x8xf32> to vector<4x8xf32>
    %305 = vector.shape_cast %304 : vector<4x8xf32> to vector<4x8x1xf32>
    %306 = vector.broadcast %305 : vector<4x8x1xf32> to vector<4x8x8xf32>
    %307 = arith.subf %303, %306 : vector<4x8x8xf32>
    %308 = math.exp %307 : vector<4x8x8xf32>
    %cst_130 = arith.constant dense<0.000000e+00> : vector<4x8xf32>
    %309 = vector.multi_reduction <add>, %308, %cst_130 [2] : vector<4x8x8xf32> to vector<4x8xf32>
    %310 = vector.shape_cast %309 : vector<4x8xf32> to vector<4x8x1xf32>
    %311 = tpu.reciprocal %310 {approx = true} : vector<4x8x1xf32> -> vector<4x8x1xf32>
    %312 = vector.broadcast %311 : vector<4x8x1xf32> to vector<4x8x8xf32>
    %313 = arith.mulf %308, %312 : vector<4x8x8xf32>
    %314 = arith.truncf %313 : vector<4x8x8xf32> to vector<4x8x8xbf16>
    %315 = arith.truncf %298 : vector<4x8x16xf32> to vector<4x8x16xbf16>
    "tpu.trace_start"() <{level = 10 : i32, message = "bqk,bkf->bqf"}> : () -> ()
    %cst_131 = arith.constant dense<0.000000e+00> : vector<4x8x16xf32>
    %316 = tpu.matmul %314, %315, %cst_131 {dimension_numbers = #tpu.dot_dimension_numbers<[2], [1], [1], [2], [0, 0, 0, 1, 1, 2], [0], [0]>} : vector<4x8x8xbf16>, vector<4x8x16xbf16>, vector<4x8x16xf32> -> vector<4x8x16xf32>
    "tpu.trace_stop"() : () -> ()
    %317 = vector.shape_cast %316 : vector<4x8x16xf32> to vector<32x16xf32>
    %318 = vector.extract_strided_slice %266 {offsets = [0, 32], sizes = [32, 16], strides = [1, 1]} : vector<32x192xf32> to vector<32x16xf32>
    %319 = vector.shape_cast %318 : vector<32x16xf32> to vector<4x8x16xf32>
    %320 = vector.extract_strided_slice %266 {offsets = [0, 96], sizes = [32, 16], strides = [1, 1]} : vector<32x192xf32> to vector<32x16xf32>
    %321 = vector.shape_cast %320 : vector<32x16xf32> to vector<4x8x16xf32>
    %322 = vector.extract_strided_slice %266 {offsets = [0, 160], sizes = [32, 16], strides = [1, 1]} : vector<32x192xf32> to vector<32x16xf32>
    %323 = vector.shape_cast %322 : vector<32x16xf32> to vector<4x8x16xf32>
    %324 = arith.truncf %319 : vector<4x8x16xf32> to vector<4x8x16xbf16>
    %325 = arith.truncf %321 : vector<4x8x16xf32> to vector<4x8x16xbf16>
    "tpu.trace_start"() <{level = 10 : i32, message = "bqf,bkf->bqk"}> : () -> ()
    %cst_132 = arith.constant dense<0.000000e+00> : vector<4x8x8xf32>
    %326 = tpu.matmul %324, %325, %cst_132 {dimension_numbers = #tpu.dot_dimension_numbers<[2], [2], [1], [1], [0, 0, 0, 1, 1, 1], [0], [0]>} : vector<4x8x16xbf16>, vector<4x8x16xbf16>, vector<4x8x8xf32> -> vector<4x8x8xf32>
    "tpu.trace_stop"() : () -> ()
    %327 = vector.broadcast %267 : vector<4x1x8xf32> to vector<4x8x8xf32>
    %328 = arith.addf %326, %327 : vector<4x8x8xf32>
    %cst_133 = arith.constant dense<0xFF800000> : vector<4x8xf32>
    %329 = vector.multi_reduction <maximumf>, %328, %cst_133 [2] : vector<4x8x8xf32> to vector<4x8xf32>
    %330 = vector.shape_cast %329 : vector<4x8xf32> to vector<4x8x1xf32>
    %331 = vector.broadcast %330 : vector<4x8x1xf32> to vector<4x8x8xf32>
    %332 = arith.subf %328, %331 : vector<4x8x8xf32>
    %333 = math.exp %332 : vector<4x8x8xf32>
    %cst_134 = arith.constant dense<0.000000e+00> : vector<4x8xf32>
    %334 = vector.multi_reduction <add>, %333, %cst_134 [2] : vector<4x8x8xf32> to vector<4x8xf32>
    %335 = vector.shape_cast %334 : vector<4x8xf32> to vector<4x8x1xf32>
    %336 = tpu.reciprocal %335 {approx = true} : vector<4x8x1xf32> -> vector<4x8x1xf32>
    %337 = vector.broadcast %336 : vector<4x8x1xf32> to vector<4x8x8xf32>
    %338 = arith.mulf %333, %337 : vector<4x8x8xf32>
    %339 = arith.truncf %338 : vector<4x8x8xf32> to vector<4x8x8xbf16>
    %340 = arith.truncf %323 : vector<4x8x16xf32> to vector<4x8x16xbf16>
    "tpu.trace_start"() <{level = 10 : i32, message = "bqk,bkf->bqf"}> : () -> ()
    %cst_135 = arith.constant dense<0.000000e+00> : vector<4x8x16xf32>
    %341 = tpu.matmul %339, %340, %cst_135 {dimension_numbers = #tpu.dot_dimension_numbers<[2], [1], [1], [2], [0, 0, 0, 1, 1, 2], [0], [0]>} : vector<4x8x8xbf16>, vector<4x8x16xbf16>, vector<4x8x16xf32> -> vector<4x8x16xf32>
    "tpu.trace_stop"() : () -> ()
    %342 = vector.shape_cast %341 : vector<4x8x16xf32> to vector<32x16xf32>
    %343 = vector.extract_strided_slice %266 {offsets = [0, 48], sizes = [32, 16], strides = [1, 1]} : vector<32x192xf32> to vector<32x16xf32>
    %344 = vector.shape_cast %343 : vector<32x16xf32> to vector<4x8x16xf32>
    %345 = vector.extract_strided_slice %266 {offsets = [0, 112], sizes = [32, 16], strides = [1, 1]} : vector<32x192xf32> to vector<32x16xf32>
    %346 = vector.shape_cast %345 : vector<32x16xf32> to vector<4x8x16xf32>
    %347 = vector.extract_strided_slice %266 {offsets = [0, 176], sizes = [32, 16], strides = [1, 1]} : vector<32x192xf32> to vector<32x16xf32>
    %348 = vector.shape_cast %347 : vector<32x16xf32> to vector<4x8x16xf32>
    %349 = arith.truncf %344 : vector<4x8x16xf32> to vector<4x8x16xbf16>
    %350 = arith.truncf %346 : vector<4x8x16xf32> to vector<4x8x16xbf16>
    "tpu.trace_start"() <{level = 10 : i32, message = "bqf,bkf->bqk"}> : () -> ()
    %cst_136 = arith.constant dense<0.000000e+00> : vector<4x8x8xf32>
    %351 = tpu.matmul %349, %350, %cst_136 {dimension_numbers = #tpu.dot_dimension_numbers<[2], [2], [1], [1], [0, 0, 0, 1, 1, 1], [0], [0]>} : vector<4x8x16xbf16>, vector<4x8x16xbf16>, vector<4x8x8xf32> -> vector<4x8x8xf32>
    "tpu.trace_stop"() : () -> ()
    %352 = vector.broadcast %267 : vector<4x1x8xf32> to vector<4x8x8xf32>
    %353 = arith.addf %351, %352 : vector<4x8x8xf32>
    %cst_137 = arith.constant dense<0xFF800000> : vector<4x8xf32>
    %354 = vector.multi_reduction <maximumf>, %353, %cst_137 [2] : vector<4x8x8xf32> to vector<4x8xf32>
    %355 = vector.shape_cast %354 : vector<4x8xf32> to vector<4x8x1xf32>
    %356 = vector.broadcast %355 : vector<4x8x1xf32> to vector<4x8x8xf32>
    %357 = arith.subf %353, %356 : vector<4x8x8xf32>
    %358 = math.exp %357 : vector<4x8x8xf32>
    %cst_138 = arith.constant dense<0.000000e+00> : vector<4x8xf32>
    %359 = vector.multi_reduction <add>, %358, %cst_138 [2] : vector<4x8x8xf32> to vector<4x8xf32>
    %360 = vector.shape_cast %359 : vector<4x8xf32> to vector<4x8x1xf32>
    %361 = tpu.reciprocal %360 {approx = true} : vector<4x8x1xf32> -> vector<4x8x1xf32>
    %362 = vector.broadcast %361 : vector<4x8x1xf32> to vector<4x8x8xf32>
    %363 = arith.mulf %358, %362 : vector<4x8x8xf32>
    %364 = arith.truncf %363 : vector<4x8x8xf32> to vector<4x8x8xbf16>
    %365 = arith.truncf %348 : vector<4x8x16xf32> to vector<4x8x16xbf16>
    "tpu.trace_start"() <{level = 10 : i32, message = "bqk,bkf->bqf"}> : () -> ()
    %cst_139 = arith.constant dense<0.000000e+00> : vector<4x8x16xf32>
    %366 = tpu.matmul %364, %365, %cst_139 {dimension_numbers = #tpu.dot_dimension_numbers<[2], [1], [1], [2], [0, 0, 0, 1, 1, 2], [0], [0]>} : vector<4x8x8xbf16>, vector<4x8x16xbf16>, vector<4x8x16xf32> -> vector<4x8x16xf32>
    "tpu.trace_stop"() : () -> ()
    %367 = vector.shape_cast %366 : vector<4x8x16xf32> to vector<32x16xf32>
    %368 = tpu.concatenate %292, %317, %342, %367 in 1 : vector<32x16xf32>, vector<32x16xf32>, vector<32x16xf32>, vector<32x16xf32> -> vector<32x64xf32>
    %369 = arith.truncf %368 : vector<32x64xf32> to vector<32x64xbf16>
    %cst_140 = arith.constant dense<0.000000e+00> : vector<32x60xf32>
    %370 = tpu.matmul %369, %244, %cst_140 {dimension_numbers = #tpu.dot_dimension_numbers<[1], [0], [0], [1], [0, 0, 1, 1], [], []>} : vector<32x64xbf16>, vector<64x60xbf16>, vector<32x60xf32> -> vector<32x60xf32>
    %371 = vector.broadcast %246 : vector<1x60xf32> to vector<32x60xf32>
    %372 = arith.addf %370, %371 : vector<32x60xf32>
    %373 = arith.addf %238, %372 : vector<32x60xf32>
    %cst_141 = arith.constant dense<0.000000e+00> : vector<32xf32>
    %374 = vector.multi_reduction <add>, %373, %cst_141 [1] : vector<32x60xf32> to vector<32xf32>
    %375 = vector.shape_cast %374 : vector<32xf32> to vector<32x1xf32>
    %cst_142 = arith.constant 6.000000e+01 : f32
    %376 = vector.broadcast %cst_142 : f32 to vector<32x1xf32>
    %377 = arith.divf %375, %376 : vector<32x1xf32>
    %378 = vector.broadcast %377 : vector<32x1xf32> to vector<32x60xf32>
    %379 = arith.subf %373, %378 : vector<32x60xf32>
    %380 = arith.mulf %379, %379 : vector<32x60xf32>
    %cst_143 = arith.constant dense<0.000000e+00> : vector<32xf32>
    %381 = vector.multi_reduction <add>, %380, %cst_143 [1] : vector<32x60xf32> to vector<32xf32>
    %382 = vector.shape_cast %381 : vector<32xf32> to vector<32x1xf32>
    %cst_144 = arith.constant 6.000000e+01 : f32
    %383 = vector.broadcast %cst_144 : f32 to vector<32x1xf32>
    %384 = arith.divf %382, %383 : vector<32x1xf32>
    %cst_145 = arith.constant 9.99999974E-6 : f32
    %385 = vector.broadcast %cst_145 : f32 to vector<32x1xf32>
    %386 = arith.addf %384, %385 : vector<32x1xf32>
    %387 = math.rsqrt %386 : vector<32x1xf32>
    %388 = vector.broadcast %387 : vector<32x1xf32> to vector<32x60xf32>
    %389 = arith.mulf %379, %388 : vector<32x60xf32>
    %390 = vector.broadcast %248 : vector<1x60xf32> to vector<32x60xf32>
    %391 = arith.mulf %389, %390 : vector<32x60xf32>
    %392 = vector.broadcast %250 : vector<1x60xf32> to vector<32x60xf32>
    %393 = arith.addf %391, %392 : vector<32x60xf32>
    %394 = arith.truncf %393 : vector<32x60xf32> to vector<32x60xbf16>
    %cst_146 = arith.constant dense<0.000000e+00> : vector<32x240xf32>
    %395 = tpu.matmul %394, %252, %cst_146 {dimension_numbers = #tpu.dot_dimension_numbers<[1], [0], [0], [1], [0, 0, 1, 1], [], []>} : vector<32x60xbf16>, vector<60x240xbf16>, vector<32x240xf32> -> vector<32x240xf32>
    %396 = vector.broadcast %254 : vector<1x240xf32> to vector<32x240xf32>
    %397 = arith.addf %395, %396 : vector<32x240xf32>
    %398 = arith.mulf %397, %397 : vector<32x240xf32>
    %399 = arith.mulf %397, %398 : vector<32x240xf32>
    %cst_147 = arith.constant 4.471500e-02 : f32
    %400 = vector.broadcast %cst_147 : f32 to vector<32x240xf32>
    %401 = arith.mulf %400, %399 : vector<32x240xf32>
    %402 = arith.addf %397, %401 : vector<32x240xf32>
    %cst_148 = arith.constant 0.797884583 : f32
    %403 = vector.broadcast %cst_148 : f32 to vector<32x240xf32>
    %404 = arith.mulf %403, %402 : vector<32x240xf32>
    %405 = math.tanh %404 : vector<32x240xf32>
    %cst_149 = arith.constant 1.000000e+00 : f32
    %406 = vector.broadcast %cst_149 : f32 to vector<32x240xf32>
    %407 = arith.addf %406, %405 : vector<32x240xf32>
    %cst_150 = arith.constant 5.000000e-01 : f32
    %408 = vector.broadcast %cst_150 : f32 to vector<32x240xf32>
    %409 = arith.mulf %408, %407 : vector<32x240xf32>
    %410 = arith.mulf %397, %409 : vector<32x240xf32>
    %411 = arith.truncf %410 : vector<32x240xf32> to vector<32x240xbf16>
    %cst_151 = arith.constant dense<0.000000e+00> : vector<32x60xf32>
    %412 = tpu.matmul %411, %256, %cst_151 {dimension_numbers = #tpu.dot_dimension_numbers<[1], [0], [0], [1], [0, 0, 1, 1], [], []>} : vector<32x240xbf16>, vector<240x60xbf16>, vector<32x60xf32> -> vector<32x60xf32>
    %413 = vector.broadcast %258 : vector<1x60xf32> to vector<32x60xf32>
    %414 = arith.addf %412, %413 : vector<32x60xf32>
    %415 = arith.addf %393, %414 : vector<32x60xf32>
    %cst_152 = arith.constant dense<0.000000e+00> : vector<32xf32>
    %416 = vector.multi_reduction <add>, %415, %cst_152 [1] : vector<32x60xf32> to vector<32xf32>
    %417 = vector.shape_cast %416 : vector<32xf32> to vector<32x1xf32>
    %cst_153 = arith.constant 6.000000e+01 : f32
    %418 = vector.broadcast %cst_153 : f32 to vector<32x1xf32>
    %419 = arith.divf %417, %418 : vector<32x1xf32>
    %420 = vector.broadcast %419 : vector<32x1xf32> to vector<32x60xf32>
    %421 = arith.subf %415, %420 : vector<32x60xf32>
    %422 = arith.mulf %421, %421 : vector<32x60xf32>
    %cst_154 = arith.constant dense<0.000000e+00> : vector<32xf32>
    %423 = vector.multi_reduction <add>, %422, %cst_154 [1] : vector<32x60xf32> to vector<32xf32>
    %424 = vector.shape_cast %423 : vector<32xf32> to vector<32x1xf32>
    %cst_155 = arith.constant 6.000000e+01 : f32
    %425 = vector.broadcast %cst_155 : f32 to vector<32x1xf32>
    %426 = arith.divf %424, %425 : vector<32x1xf32>
    %cst_156 = arith.constant 9.99999974E-6 : f32
    %427 = vector.broadcast %cst_156 : f32 to vector<32x1xf32>
    %428 = arith.addf %426, %427 : vector<32x1xf32>
    %429 = math.rsqrt %428 : vector<32x1xf32>
    %430 = vector.broadcast %429 : vector<32x1xf32> to vector<32x60xf32>
    %431 = arith.mulf %421, %430 : vector<32x60xf32>
    %432 = vector.broadcast %260 : vector<1x60xf32> to vector<32x60xf32>
    %433 = arith.mulf %431, %432 : vector<32x60xf32>
    %434 = vector.broadcast %262 : vector<1x60xf32> to vector<32x60xf32>
    %435 = arith.addf %433, %434 : vector<32x60xf32>
    %436 = vector.shape_cast %435 : vector<32x60xf32> to vector<4x8x60xf32>
    %437 = vector.extract_strided_slice %436 {offsets = [0, 0, 0], sizes = [4, 1, 60], strides = [1, 1, 1]} : vector<4x8x60xf32> to vector<4x1x60xf32>
    %438 = vector.shape_cast %437 : vector<4x1x60xf32> to vector<4x60xf32>
    %439 = arith.truncf %438 : vector<4x60xf32> to vector<4x60xbf16>
    %c0_157 = arith.constant 0 : index
    %c0_158 = arith.constant 0 : index
    %440 = vector.load %arg21[%c0_157, %c0_158] : memref<60x60xbf16, #tpu.memory_space<vmem>>, vector<60x60xbf16>
    %cst_159 = arith.constant dense<0.000000e+00> : vector<4x60xf32>
    %441 = tpu.matmul %439, %440, %cst_159 {dimension_numbers = #tpu.dot_dimension_numbers<[1], [0], [0], [1], [0, 0, 1, 1], [], []>} : vector<4x60xbf16>, vector<60x60xbf16>, vector<4x60xf32> -> vector<4x60xf32>
    %c0_160 = arith.constant 0 : index
    %c0_161 = arith.constant 0 : index
    %442 = vector.load %arg22[%c0_160, %c0_161] : memref<1x60xf32, #tpu.memory_space<vmem>>, vector<1x60xf32>
    %443 = vector.broadcast %442 : vector<1x60xf32> to vector<4x60xf32>
    %444 = arith.addf %441, %443 : vector<4x60xf32>
    %445 = math.tanh %444 : vector<4x60xf32>
    %446 = vector.extract_strided_slice %445 {offsets = [0, 0], sizes = [2, 60], strides = [1, 1]} : vector<4x60xf32> to vector<2x60xf32>
    %447 = vector.extract_strided_slice %445 {offsets = [2, 0], sizes = [2, 60], strides = [1, 1]} : vector<4x60xf32> to vector<2x60xf32>
    %c0_162 = arith.constant 0 : index
    %c0_163 = arith.constant 0 : index
    %448 = vector.load %arg2[%c0_162, %c0_163] : memref<2x1xf32, #tpu.memory_space<vmem>>, vector<2x1xf32>
    %c0_164 = arith.constant 0 : index
    %c0_165 = arith.constant 0 : index
    %449 = vector.load %arg3[%c0_164, %c0_165] : memref<2x1xf32, #tpu.memory_space<vmem>>, vector<2x1xf32>
    %c0_166 = arith.constant 0 : index
    %c0_167 = arith.constant 0 : index
    %450 = vector.load %arg4[%c0_166, %c0_167] : memref<2x1xf32, #tpu.memory_space<vmem>>, vector<2x1xf32>
    %cst_168 = arith.constant 0.000000e+00 : f32
    %451 = vector.broadcast %cst_168 : f32 to vector<2x5xf32>
    %452 = tpu.concatenate %446, %447, %448, %449, %450, %451 in 1 : vector<2x60xf32>, vector<2x60xf32>, vector<2x1xf32>, vector<2x1xf32>, vector<2x1xf32>, vector<2x5xf32> -> vector<2x128xf32>
    %c0_169 = arith.constant 0 : index
    %c0_170 = arith.constant 0 : index
    %c0_171 = arith.constant 0 : index
    %453 = vector.load %arg23[%c0_169, %c0_170, %c0_171] : memref<2x128x384xbf16, #tpu.memory_space<vmem>>, vector<1x128x384xbf16>
    %454 = vector.shape_cast %453 : vector<1x128x384xbf16> to vector<128x384xbf16>
    %c0_172 = arith.constant 0 : index
    %c0_173 = arith.constant 0 : index
    %c0_174 = arith.constant 0 : index
    %455 = vector.load %arg24[%c0_172, %c0_173, %c0_174] : memref<2x1x384xf32, #tpu.memory_space<vmem>>, vector<1x1x384xf32>
    %456 = vector.shape_cast %455 : vector<1x1x384xf32> to vector<1x384xf32>
    %c0_175 = arith.constant 0 : index
    %c0_176 = arith.constant 0 : index
    %c0_177 = arith.constant 0 : index
    %457 = vector.load %arg25[%c0_175, %c0_176, %c0_177] : memref<2x128x128xbf16, #tpu.memory_space<vmem>>, vector<1x128x128xbf16>
    %458 = vector.shape_cast %457 : vector<1x128x128xbf16> to vector<128x128xbf16>
    %c0_178 = arith.constant 0 : index
    %c0_179 = arith.constant 0 : index
    %c0_180 = arith.constant 0 : index
    %459 = vector.load %arg26[%c0_178, %c0_179, %c0_180] : memref<2x1x128xf32, #tpu.memory_space<vmem>>, vector<1x1x128xf32>
    %460 = vector.shape_cast %459 : vector<1x1x128xf32> to vector<1x128xf32>
    %c0_181 = arith.constant 0 : index
    %c0_182 = arith.constant 0 : index
    %c0_183 = arith.constant 0 : index
    %461 = vector.load %arg27[%c0_181, %c0_182, %c0_183] : memref<2x1x128xf32, #tpu.memory_space<vmem>>, vector<1x1x128xf32>
    %462 = vector.shape_cast %461 : vector<1x1x128xf32> to vector<1x128xf32>
    %c0_184 = arith.constant 0 : index
    %c0_185 = arith.constant 0 : index
    %c0_186 = arith.constant 0 : index
    %463 = vector.load %arg28[%c0_184, %c0_185, %c0_186] : memref<2x1x128xf32, #tpu.memory_space<vmem>>, vector<1x1x128xf32>
    %464 = vector.shape_cast %463 : vector<1x1x128xf32> to vector<1x128xf32>
    %c0_187 = arith.constant 0 : index
    %c0_188 = arith.constant 0 : index
    %c0_189 = arith.constant 0 : index
    %465 = vector.load %arg29[%c0_187, %c0_188, %c0_189] : memref<2x128x256xbf16, #tpu.memory_space<vmem>>, vector<1x128x256xbf16>
    %466 = vector.shape_cast %465 : vector<1x128x256xbf16> to vector<128x256xbf16>
    %c0_190 = arith.constant 0 : index
    %c0_191 = arith.constant 0 : index
    %c0_192 = arith.constant 0 : index
    %467 = vector.load %arg30[%c0_190, %c0_191, %c0_192] : memref<2x1x256xf32, #tpu.memory_space<vmem>>, vector<1x1x256xf32>
    %468 = vector.shape_cast %467 : vector<1x1x256xf32> to vector<1x256xf32>
    %c0_193 = arith.constant 0 : index
    %c0_194 = arith.constant 0 : index
    %c0_195 = arith.constant 0 : index
    %469 = vector.load %arg31[%c0_193, %c0_194, %c0_195] : memref<2x256x128xbf16, #tpu.memory_space<vmem>>, vector<1x256x128xbf16>
    %470 = vector.shape_cast %469 : vector<1x256x128xbf16> to vector<256x128xbf16>
    %c0_196 = arith.constant 0 : index
    %c0_197 = arith.constant 0 : index
    %c0_198 = arith.constant 0 : index
    %471 = vector.load %arg32[%c0_196, %c0_197, %c0_198] : memref<2x1x128xf32, #tpu.memory_space<vmem>>, vector<1x1x128xf32>
    %472 = vector.shape_cast %471 : vector<1x1x128xf32> to vector<1x128xf32>
    %c0_199 = arith.constant 0 : index
    %c0_200 = arith.constant 0 : index
    %c0_201 = arith.constant 0 : index
    %473 = vector.load %arg33[%c0_199, %c0_200, %c0_201] : memref<2x1x128xf32, #tpu.memory_space<vmem>>, vector<1x1x128xf32>
    %474 = vector.shape_cast %473 : vector<1x1x128xf32> to vector<1x128xf32>
    %c0_202 = arith.constant 0 : index
    %c0_203 = arith.constant 0 : index
    %c0_204 = arith.constant 0 : index
    %475 = vector.load %arg34[%c0_202, %c0_203, %c0_204] : memref<2x1x128xf32, #tpu.memory_space<vmem>>, vector<1x1x128xf32>
    %476 = vector.shape_cast %475 : vector<1x1x128xf32> to vector<1x128xf32>
    %477 = arith.truncf %452 : vector<2x128xf32> to vector<2x128xbf16>
    %cst_205 = arith.constant dense<0.000000e+00> : vector<2x384xf32>
    %478 = tpu.matmul %477, %454, %cst_205 {dimension_numbers = #tpu.dot_dimension_numbers<[1], [0], [0], [1], [0, 0, 1, 1], [], []>} : vector<2x128xbf16>, vector<128x384xbf16>, vector<2x384xf32> -> vector<2x384xf32>
    %479 = vector.broadcast %456 : vector<1x384xf32> to vector<2x384xf32>
    %480 = arith.addf %478, %479 : vector<2x384xf32>
    %481 = vector.extract_strided_slice %480 {offsets = [0, 0], sizes = [2, 16], strides = [1, 1]} : vector<2x384xf32> to vector<2x16xf32>
    %482 = vector.shape_cast %481 : vector<2x16xf32> to vector<1x2x16xf32>
    %483 = vector.extract_strided_slice %480 {offsets = [0, 128], sizes = [2, 16], strides = [1, 1]} : vector<2x384xf32> to vector<2x16xf32>
    %484 = vector.shape_cast %483 : vector<2x16xf32> to vector<1x2x16xf32>
    %485 = vector.extract_strided_slice %480 {offsets = [0, 256], sizes = [2, 16], strides = [1, 1]} : vector<2x384xf32> to vector<2x16xf32>
    %486 = vector.shape_cast %485 : vector<2x16xf32> to vector<1x2x16xf32>
    %487 = arith.truncf %482 : vector<1x2x16xf32> to vector<1x2x16xbf16>
    %488 = arith.truncf %484 : vector<1x2x16xf32> to vector<1x2x16xbf16>
    "tpu.trace_start"() <{level = 10 : i32, message = "bqf,bkf->bqk"}> : () -> ()
    %cst_206 = arith.constant dense<0.000000e+00> : vector<1x2x2xf32>
    %489 = tpu.matmul %487, %488, %cst_206 {dimension_numbers = #tpu.dot_dimension_numbers<[2], [2], [1], [1], [0, 0, 0, 1, 1, 1], [0], [0]>} : vector<1x2x16xbf16>, vector<1x2x16xbf16>, vector<1x2x2xf32> -> vector<1x2x2xf32>
    "tpu.trace_stop"() : () -> ()
    %cst_207 = arith.constant dense<0xFF800000> : vector<1x2xf32>
    %490 = vector.multi_reduction <maximumf>, %489, %cst_207 [2] : vector<1x2x2xf32> to vector<1x2xf32>
    %491 = vector.shape_cast %490 : vector<1x2xf32> to vector<1x2x1xf32>
    %492 = vector.broadcast %491 : vector<1x2x1xf32> to vector<1x2x2xf32>
    %493 = arith.subf %489, %492 : vector<1x2x2xf32>
    %494 = math.exp %493 : vector<1x2x2xf32>
    %cst_208 = arith.constant dense<0.000000e+00> : vector<1x2xf32>
    %495 = vector.multi_reduction <add>, %494, %cst_208 [2] : vector<1x2x2xf32> to vector<1x2xf32>
    %496 = vector.shape_cast %495 : vector<1x2xf32> to vector<1x2x1xf32>
    %497 = tpu.reciprocal %496 {approx = true} : vector<1x2x1xf32> -> vector<1x2x1xf32>
    %498 = vector.broadcast %497 : vector<1x2x1xf32> to vector<1x2x2xf32>
    %499 = arith.mulf %494, %498 : vector<1x2x2xf32>
    %500 = arith.truncf %499 : vector<1x2x2xf32> to vector<1x2x2xbf16>
    %501 = arith.truncf %486 : vector<1x2x16xf32> to vector<1x2x16xbf16>
    "tpu.trace_start"() <{level = 10 : i32, message = "bqk,bkf->bqf"}> : () -> ()
    %cst_209 = arith.constant dense<0.000000e+00> : vector<1x2x16xf32>
    %502 = tpu.matmul %500, %501, %cst_209 {dimension_numbers = #tpu.dot_dimension_numbers<[2], [1], [1], [2], [0, 0, 0, 1, 1, 2], [0], [0]>} : vector<1x2x2xbf16>, vector<1x2x16xbf16>, vector<1x2x16xf32> -> vector<1x2x16xf32>
    "tpu.trace_stop"() : () -> ()
    %503 = vector.shape_cast %502 : vector<1x2x16xf32> to vector<2x16xf32>
    %504 = vector.extract_strided_slice %480 {offsets = [0, 16], sizes = [2, 16], strides = [1, 1]} : vector<2x384xf32> to vector<2x16xf32>
    %505 = vector.shape_cast %504 : vector<2x16xf32> to vector<1x2x16xf32>
    %506 = vector.extract_strided_slice %480 {offsets = [0, 144], sizes = [2, 16], strides = [1, 1]} : vector<2x384xf32> to vector<2x16xf32>
    %507 = vector.shape_cast %506 : vector<2x16xf32> to vector<1x2x16xf32>
    %508 = vector.extract_strided_slice %480 {offsets = [0, 272], sizes = [2, 16], strides = [1, 1]} : vector<2x384xf32> to vector<2x16xf32>
    %509 = vector.shape_cast %508 : vector<2x16xf32> to vector<1x2x16xf32>
    %510 = arith.truncf %505 : vector<1x2x16xf32> to vector<1x2x16xbf16>
    %511 = arith.truncf %507 : vector<1x2x16xf32> to vector<1x2x16xbf16>
    "tpu.trace_start"() <{level = 10 : i32, message = "bqf,bkf->bqk"}> : () -> ()
    %cst_210 = arith.constant dense<0.000000e+00> : vector<1x2x2xf32>
    %512 = tpu.matmul %510, %511, %cst_210 {dimension_numbers = #tpu.dot_dimension_numbers<[2], [2], [1], [1], [0, 0, 0, 1, 1, 1], [0], [0]>} : vector<1x2x16xbf16>, vector<1x2x16xbf16>, vector<1x2x2xf32> -> vector<1x2x2xf32>
    "tpu.trace_stop"() : () -> ()
    %cst_211 = arith.constant dense<0xFF800000> : vector<1x2xf32>
    %513 = vector.multi_reduction <maximumf>, %512, %cst_211 [2] : vector<1x2x2xf32> to vector<1x2xf32>
    %514 = vector.shape_cast %513 : vector<1x2xf32> to vector<1x2x1xf32>
    %515 = vector.broadcast %514 : vector<1x2x1xf32> to vector<1x2x2xf32>
    %516 = arith.subf %512, %515 : vector<1x2x2xf32>
    %517 = math.exp %516 : vector<1x2x2xf32>
    %cst_212 = arith.constant dense<0.000000e+00> : vector<1x2xf32>
    %518 = vector.multi_reduction <add>, %517, %cst_212 [2] : vector<1x2x2xf32> to vector<1x2xf32>
    %519 = vector.shape_cast %518 : vector<1x2xf32> to vector<1x2x1xf32>
    %520 = tpu.reciprocal %519 {approx = true} : vector<1x2x1xf32> -> vector<1x2x1xf32>
    %521 = vector.broadcast %520 : vector<1x2x1xf32> to vector<1x2x2xf32>
    %522 = arith.mulf %517, %521 : vector<1x2x2xf32>
    %523 = arith.truncf %522 : vector<1x2x2xf32> to vector<1x2x2xbf16>
    %524 = arith.truncf %509 : vector<1x2x16xf32> to vector<1x2x16xbf16>
    "tpu.trace_start"() <{level = 10 : i32, message = "bqk,bkf->bqf"}> : () -> ()
    %cst_213 = arith.constant dense<0.000000e+00> : vector<1x2x16xf32>
    %525 = tpu.matmul %523, %524, %cst_213 {dimension_numbers = #tpu.dot_dimension_numbers<[2], [1], [1], [2], [0, 0, 0, 1, 1, 2], [0], [0]>} : vector<1x2x2xbf16>, vector<1x2x16xbf16>, vector<1x2x16xf32> -> vector<1x2x16xf32>
    "tpu.trace_stop"() : () -> ()
    %526 = vector.shape_cast %525 : vector<1x2x16xf32> to vector<2x16xf32>
    %527 = vector.extract_strided_slice %480 {offsets = [0, 32], sizes = [2, 16], strides = [1, 1]} : vector<2x384xf32> to vector<2x16xf32>
    %528 = vector.shape_cast %527 : vector<2x16xf32> to vector<1x2x16xf32>
    %529 = vector.extract_strided_slice %480 {offsets = [0, 160], sizes = [2, 16], strides = [1, 1]} : vector<2x384xf32> to vector<2x16xf32>
    %530 = vector.shape_cast %529 : vector<2x16xf32> to vector<1x2x16xf32>
    %531 = vector.extract_strided_slice %480 {offsets = [0, 288], sizes = [2, 16], strides = [1, 1]} : vector<2x384xf32> to vector<2x16xf32>
    %532 = vector.shape_cast %531 : vector<2x16xf32> to vector<1x2x16xf32>
    %533 = arith.truncf %528 : vector<1x2x16xf32> to vector<1x2x16xbf16>
    %534 = arith.truncf %530 : vector<1x2x16xf32> to vector<1x2x16xbf16>
    "tpu.trace_start"() <{level = 10 : i32, message = "bqf,bkf->bqk"}> : () -> ()
    %cst_214 = arith.constant dense<0.000000e+00> : vector<1x2x2xf32>
    %535 = tpu.matmul %533, %534, %cst_214 {dimension_numbers = #tpu.dot_dimension_numbers<[2], [2], [1], [1], [0, 0, 0, 1, 1, 1], [0], [0]>} : vector<1x2x16xbf16>, vector<1x2x16xbf16>, vector<1x2x2xf32> -> vector<1x2x2xf32>
    "tpu.trace_stop"() : () -> ()
    %cst_215 = arith.constant dense<0xFF800000> : vector<1x2xf32>
    %536 = vector.multi_reduction <maximumf>, %535, %cst_215 [2] : vector<1x2x2xf32> to vector<1x2xf32>
    %537 = vector.shape_cast %536 : vector<1x2xf32> to vector<1x2x1xf32>
    %538 = vector.broadcast %537 : vector<1x2x1xf32> to vector<1x2x2xf32>
    %539 = arith.subf %535, %538 : vector<1x2x2xf32>
    %540 = math.exp %539 : vector<1x2x2xf32>
    %cst_216 = arith.constant dense<0.000000e+00> : vector<1x2xf32>
    %541 = vector.multi_reduction <add>, %540, %cst_216 [2] : vector<1x2x2xf32> to vector<1x2xf32>
    %542 = vector.shape_cast %541 : vector<1x2xf32> to vector<1x2x1xf32>
    %543 = tpu.reciprocal %542 {approx = true} : vector<1x2x1xf32> -> vector<1x2x1xf32>
    %544 = vector.broadcast %543 : vector<1x2x1xf32> to vector<1x2x2xf32>
    %545 = arith.mulf %540, %544 : vector<1x2x2xf32>
    %546 = arith.truncf %545 : vector<1x2x2xf32> to vector<1x2x2xbf16>
    %547 = arith.truncf %532 : vector<1x2x16xf32> to vector<1x2x16xbf16>
    "tpu.trace_start"() <{level = 10 : i32, message = "bqk,bkf->bqf"}> : () -> ()
    %cst_217 = arith.constant dense<0.000000e+00> : vector<1x2x16xf32>
    %548 = tpu.matmul %546, %547, %cst_217 {dimension_numbers = #tpu.dot_dimension_numbers<[2], [1], [1], [2], [0, 0, 0, 1, 1, 2], [0], [0]>} : vector<1x2x2xbf16>, vector<1x2x16xbf16>, vector<1x2x16xf32> -> vector<1x2x16xf32>
    "tpu.trace_stop"() : () -> ()
    %549 = vector.shape_cast %548 : vector<1x2x16xf32> to vector<2x16xf32>
    %550 = vector.extract_strided_slice %480 {offsets = [0, 48], sizes = [2, 16], strides = [1, 1]} : vector<2x384xf32> to vector<2x16xf32>
    %551 = vector.shape_cast %550 : vector<2x16xf32> to vector<1x2x16xf32>
    %552 = vector.extract_strided_slice %480 {offsets = [0, 176], sizes = [2, 16], strides = [1, 1]} : vector<2x384xf32> to vector<2x16xf32>
    %553 = vector.shape_cast %552 : vector<2x16xf32> to vector<1x2x16xf32>
    %554 = vector.extract_strided_slice %480 {offsets = [0, 304], sizes = [2, 16], strides = [1, 1]} : vector<2x384xf32> to vector<2x16xf32>
    %555 = vector.shape_cast %554 : vector<2x16xf32> to vector<1x2x16xf32>
    %556 = arith.truncf %551 : vector<1x2x16xf32> to vector<1x2x16xbf16>
    %557 = arith.truncf %553 : vector<1x2x16xf32> to vector<1x2x16xbf16>
    "tpu.trace_start"() <{level = 10 : i32, message = "bqf,bkf->bqk"}> : () -> ()
    %cst_218 = arith.constant dense<0.000000e+00> : vector<1x2x2xf32>
    %558 = tpu.matmul %556, %557, %cst_218 {dimension_numbers = #tpu.dot_dimension_numbers<[2], [2], [1], [1], [0, 0, 0, 1, 1, 1], [0], [0]>} : vector<1x2x16xbf16>, vector<1x2x16xbf16>, vector<1x2x2xf32> -> vector<1x2x2xf32>
    "tpu.trace_stop"() : () -> ()
    %cst_219 = arith.constant dense<0xFF800000> : vector<1x2xf32>
    %559 = vector.multi_reduction <maximumf>, %558, %cst_219 [2] : vector<1x2x2xf32> to vector<1x2xf32>
    %560 = vector.shape_cast %559 : vector<1x2xf32> to vector<1x2x1xf32>
    %561 = vector.broadcast %560 : vector<1x2x1xf32> to vector<1x2x2xf32>
    %562 = arith.subf %558, %561 : vector<1x2x2xf32>
    %563 = math.exp %562 : vector<1x2x2xf32>
    %cst_220 = arith.constant dense<0.000000e+00> : vector<1x2xf32>
    %564 = vector.multi_reduction <add>, %563, %cst_220 [2] : vector<1x2x2xf32> to vector<1x2xf32>
    %565 = vector.shape_cast %564 : vector<1x2xf32> to vector<1x2x1xf32>
    %566 = tpu.reciprocal %565 {approx = true} : vector<1x2x1xf32> -> vector<1x2x1xf32>
    %567 = vector.broadcast %566 : vector<1x2x1xf32> to vector<1x2x2xf32>
    %568 = arith.mulf %563, %567 : vector<1x2x2xf32>
    %569 = arith.truncf %568 : vector<1x2x2xf32> to vector<1x2x2xbf16>
    %570 = arith.truncf %555 : vector<1x2x16xf32> to vector<1x2x16xbf16>
    "tpu.trace_start"() <{level = 10 : i32, message = "bqk,bkf->bqf"}> : () -> ()
    %cst_221 = arith.constant dense<0.000000e+00> : vector<1x2x16xf32>
    %571 = tpu.matmul %569, %570, %cst_221 {dimension_numbers = #tpu.dot_dimension_numbers<[2], [1], [1], [2], [0, 0, 0, 1, 1, 2], [0], [0]>} : vector<1x2x2xbf16>, vector<1x2x16xbf16>, vector<1x2x16xf32> -> vector<1x2x16xf32>
    "tpu.trace_stop"() : () -> ()
    %572 = vector.shape_cast %571 : vector<1x2x16xf32> to vector<2x16xf32>
    %573 = vector.extract_strided_slice %480 {offsets = [0, 64], sizes = [2, 16], strides = [1, 1]} : vector<2x384xf32> to vector<2x16xf32>
    %574 = vector.shape_cast %573 : vector<2x16xf32> to vector<1x2x16xf32>
    %575 = vector.extract_strided_slice %480 {offsets = [0, 192], sizes = [2, 16], strides = [1, 1]} : vector<2x384xf32> to vector<2x16xf32>
    %576 = vector.shape_cast %575 : vector<2x16xf32> to vector<1x2x16xf32>
    %577 = vector.extract_strided_slice %480 {offsets = [0, 320], sizes = [2, 16], strides = [1, 1]} : vector<2x384xf32> to vector<2x16xf32>
    %578 = vector.shape_cast %577 : vector<2x16xf32> to vector<1x2x16xf32>
    %579 = arith.truncf %574 : vector<1x2x16xf32> to vector<1x2x16xbf16>
    %580 = arith.truncf %576 : vector<1x2x16xf32> to vector<1x2x16xbf16>
    "tpu.trace_start"() <{level = 10 : i32, message = "bqf,bkf->bqk"}> : () -> ()
    %cst_222 = arith.constant dense<0.000000e+00> : vector<1x2x2xf32>
    %581 = tpu.matmul %579, %580, %cst_222 {dimension_numbers = #tpu.dot_dimension_numbers<[2], [2], [1], [1], [0, 0, 0, 1, 1, 1], [0], [0]>} : vector<1x2x16xbf16>, vector<1x2x16xbf16>, vector<1x2x2xf32> -> vector<1x2x2xf32>
    "tpu.trace_stop"() : () -> ()
    %cst_223 = arith.constant dense<0xFF800000> : vector<1x2xf32>
    %582 = vector.multi_reduction <maximumf>, %581, %cst_223 [2] : vector<1x2x2xf32> to vector<1x2xf32>
    %583 = vector.shape_cast %582 : vector<1x2xf32> to vector<1x2x1xf32>
    %584 = vector.broadcast %583 : vector<1x2x1xf32> to vector<1x2x2xf32>
    %585 = arith.subf %581, %584 : vector<1x2x2xf32>
    %586 = math.exp %585 : vector<1x2x2xf32>
    %cst_224 = arith.constant dense<0.000000e+00> : vector<1x2xf32>
    %587 = vector.multi_reduction <add>, %586, %cst_224 [2] : vector<1x2x2xf32> to vector<1x2xf32>
    %588 = vector.shape_cast %587 : vector<1x2xf32> to vector<1x2x1xf32>
    %589 = tpu.reciprocal %588 {approx = true} : vector<1x2x1xf32> -> vector<1x2x1xf32>
    %590 = vector.broadcast %589 : vector<1x2x1xf32> to vector<1x2x2xf32>
    %591 = arith.mulf %586, %590 : vector<1x2x2xf32>
    %592 = arith.truncf %591 : vector<1x2x2xf32> to vector<1x2x2xbf16>
    %593 = arith.truncf %578 : vector<1x2x16xf32> to vector<1x2x16xbf16>
    "tpu.trace_start"() <{level = 10 : i32, message = "bqk,bkf->bqf"}> : () -> ()
    %cst_225 = arith.constant dense<0.000000e+00> : vector<1x2x16xf32>
    %594 = tpu.matmul %592, %593, %cst_225 {dimension_numbers = #tpu.dot_dimension_numbers<[2], [1], [1], [2], [0, 0, 0, 1, 1, 2], [0], [0]>} : vector<1x2x2xbf16>, vector<1x2x16xbf16>, vector<1x2x16xf32> -> vector<1x2x16xf32>
    "tpu.trace_stop"() : () -> ()
    %595 = vector.shape_cast %594 : vector<1x2x16xf32> to vector<2x16xf32>
    %596 = vector.extract_strided_slice %480 {offsets = [0, 80], sizes = [2, 16], strides = [1, 1]} : vector<2x384xf32> to vector<2x16xf32>
    %597 = vector.shape_cast %596 : vector<2x16xf32> to vector<1x2x16xf32>
    %598 = vector.extract_strided_slice %480 {offsets = [0, 208], sizes = [2, 16], strides = [1, 1]} : vector<2x384xf32> to vector<2x16xf32>
    %599 = vector.shape_cast %598 : vector<2x16xf32> to vector<1x2x16xf32>
    %600 = vector.extract_strided_slice %480 {offsets = [0, 336], sizes = [2, 16], strides = [1, 1]} : vector<2x384xf32> to vector<2x16xf32>
    %601 = vector.shape_cast %600 : vector<2x16xf32> to vector<1x2x16xf32>
    %602 = arith.truncf %597 : vector<1x2x16xf32> to vector<1x2x16xbf16>
    %603 = arith.truncf %599 : vector<1x2x16xf32> to vector<1x2x16xbf16>
    "tpu.trace_start"() <{level = 10 : i32, message = "bqf,bkf->bqk"}> : () -> ()
    %cst_226 = arith.constant dense<0.000000e+00> : vector<1x2x2xf32>
    %604 = tpu.matmul %602, %603, %cst_226 {dimension_numbers = #tpu.dot_dimension_numbers<[2], [2], [1], [1], [0, 0, 0, 1, 1, 1], [0], [0]>} : vector<1x2x16xbf16>, vector<1x2x16xbf16>, vector<1x2x2xf32> -> vector<1x2x2xf32>
    "tpu.trace_stop"() : () -> ()
    %cst_227 = arith.constant dense<0xFF800000> : vector<1x2xf32>
    %605 = vector.multi_reduction <maximumf>, %604, %cst_227 [2] : vector<1x2x2xf32> to vector<1x2xf32>
    %606 = vector.shape_cast %605 : vector<1x2xf32> to vector<1x2x1xf32>
    %607 = vector.broadcast %606 : vector<1x2x1xf32> to vector<1x2x2xf32>
    %608 = arith.subf %604, %607 : vector<1x2x2xf32>
    %609 = math.exp %608 : vector<1x2x2xf32>
    %cst_228 = arith.constant dense<0.000000e+00> : vector<1x2xf32>
    %610 = vector.multi_reduction <add>, %609, %cst_228 [2] : vector<1x2x2xf32> to vector<1x2xf32>
    %611 = vector.shape_cast %610 : vector<1x2xf32> to vector<1x2x1xf32>
    %612 = tpu.reciprocal %611 {approx = true} : vector<1x2x1xf32> -> vector<1x2x1xf32>
    %613 = vector.broadcast %612 : vector<1x2x1xf32> to vector<1x2x2xf32>
    %614 = arith.mulf %609, %613 : vector<1x2x2xf32>
    %615 = arith.truncf %614 : vector<1x2x2xf32> to vector<1x2x2xbf16>
    %616 = arith.truncf %601 : vector<1x2x16xf32> to vector<1x2x16xbf16>
    "tpu.trace_start"() <{level = 10 : i32, message = "bqk,bkf->bqf"}> : () -> ()
    %cst_229 = arith.constant dense<0.000000e+00> : vector<1x2x16xf32>
    %617 = tpu.matmul %615, %616, %cst_229 {dimension_numbers = #tpu.dot_dimension_numbers<[2], [1], [1], [2], [0, 0, 0, 1, 1, 2], [0], [0]>} : vector<1x2x2xbf16>, vector<1x2x16xbf16>, vector<1x2x16xf32> -> vector<1x2x16xf32>
    "tpu.trace_stop"() : () -> ()
    %618 = vector.shape_cast %617 : vector<1x2x16xf32> to vector<2x16xf32>
    %619 = vector.extract_strided_slice %480 {offsets = [0, 96], sizes = [2, 16], strides = [1, 1]} : vector<2x384xf32> to vector<2x16xf32>
    %620 = vector.shape_cast %619 : vector<2x16xf32> to vector<1x2x16xf32>
    %621 = vector.extract_strided_slice %480 {offsets = [0, 224], sizes = [2, 16], strides = [1, 1]} : vector<2x384xf32> to vector<2x16xf32>
    %622 = vector.shape_cast %621 : vector<2x16xf32> to vector<1x2x16xf32>
    %623 = vector.extract_strided_slice %480 {offsets = [0, 352], sizes = [2, 16], strides = [1, 1]} : vector<2x384xf32> to vector<2x16xf32>
    %624 = vector.shape_cast %623 : vector<2x16xf32> to vector<1x2x16xf32>
    %625 = arith.truncf %620 : vector<1x2x16xf32> to vector<1x2x16xbf16>
    %626 = arith.truncf %622 : vector<1x2x16xf32> to vector<1x2x16xbf16>
    "tpu.trace_start"() <{level = 10 : i32, message = "bqf,bkf->bqk"}> : () -> ()
    %cst_230 = arith.constant dense<0.000000e+00> : vector<1x2x2xf32>
    %627 = tpu.matmul %625, %626, %cst_230 {dimension_numbers = #tpu.dot_dimension_numbers<[2], [2], [1], [1], [0, 0, 0, 1, 1, 1], [0], [0]>} : vector<1x2x16xbf16>, vector<1x2x16xbf16>, vector<1x2x2xf32> -> vector<1x2x2xf32>
    "tpu.trace_stop"() : () -> ()
    %cst_231 = arith.constant dense<0xFF800000> : vector<1x2xf32>
    %628 = vector.multi_reduction <maximumf>, %627, %cst_231 [2] : vector<1x2x2xf32> to vector<1x2xf32>
    %629 = vector.shape_cast %628 : vector<1x2xf32> to vector<1x2x1xf32>
    %630 = vector.broadcast %629 : vector<1x2x1xf32> to vector<1x2x2xf32>
    %631 = arith.subf %627, %630 : vector<1x2x2xf32>
    %632 = math.exp %631 : vector<1x2x2xf32>
    %cst_232 = arith.constant dense<0.000000e+00> : vector<1x2xf32>
    %633 = vector.multi_reduction <add>, %632, %cst_232 [2] : vector<1x2x2xf32> to vector<1x2xf32>
    %634 = vector.shape_cast %633 : vector<1x2xf32> to vector<1x2x1xf32>
    %635 = tpu.reciprocal %634 {approx = true} : vector<1x2x1xf32> -> vector<1x2x1xf32>
    %636 = vector.broadcast %635 : vector<1x2x1xf32> to vector<1x2x2xf32>
    %637 = arith.mulf %632, %636 : vector<1x2x2xf32>
    %638 = arith.truncf %637 : vector<1x2x2xf32> to vector<1x2x2xbf16>
    %639 = arith.truncf %624 : vector<1x2x16xf32> to vector<1x2x16xbf16>
    "tpu.trace_start"() <{level = 10 : i32, message = "bqk,bkf->bqf"}> : () -> ()
    %cst_233 = arith.constant dense<0.000000e+00> : vector<1x2x16xf32>
    %640 = tpu.matmul %638, %639, %cst_233 {dimension_numbers = #tpu.dot_dimension_numbers<[2], [1], [1], [2], [0, 0, 0, 1, 1, 2], [0], [0]>} : vector<1x2x2xbf16>, vector<1x2x16xbf16>, vector<1x2x16xf32> -> vector<1x2x16xf32>
    "tpu.trace_stop"() : () -> ()
    %641 = vector.shape_cast %640 : vector<1x2x16xf32> to vector<2x16xf32>
    %642 = vector.extract_strided_slice %480 {offsets = [0, 112], sizes = [2, 16], strides = [1, 1]} : vector<2x384xf32> to vector<2x16xf32>
    %643 = vector.shape_cast %642 : vector<2x16xf32> to vector<1x2x16xf32>
    %644 = vector.extract_strided_slice %480 {offsets = [0, 240], sizes = [2, 16], strides = [1, 1]} : vector<2x384xf32> to vector<2x16xf32>
    %645 = vector.shape_cast %644 : vector<2x16xf32> to vector<1x2x16xf32>
    %646 = vector.extract_strided_slice %480 {offsets = [0, 368], sizes = [2, 16], strides = [1, 1]} : vector<2x384xf32> to vector<2x16xf32>
    %647 = vector.shape_cast %646 : vector<2x16xf32> to vector<1x2x16xf32>
    %648 = arith.truncf %643 : vector<1x2x16xf32> to vector<1x2x16xbf16>
    %649 = arith.truncf %645 : vector<1x2x16xf32> to vector<1x2x16xbf16>
    "tpu.trace_start"() <{level = 10 : i32, message = "bqf,bkf->bqk"}> : () -> ()
    %cst_234 = arith.constant dense<0.000000e+00> : vector<1x2x2xf32>
    %650 = tpu.matmul %648, %649, %cst_234 {dimension_numbers = #tpu.dot_dimension_numbers<[2], [2], [1], [1], [0, 0, 0, 1, 1, 1], [0], [0]>} : vector<1x2x16xbf16>, vector<1x2x16xbf16>, vector<1x2x2xf32> -> vector<1x2x2xf32>
    "tpu.trace_stop"() : () -> ()
    %cst_235 = arith.constant dense<0xFF800000> : vector<1x2xf32>
    %651 = vector.multi_reduction <maximumf>, %650, %cst_235 [2] : vector<1x2x2xf32> to vector<1x2xf32>
    %652 = vector.shape_cast %651 : vector<1x2xf32> to vector<1x2x1xf32>
    %653 = vector.broadcast %652 : vector<1x2x1xf32> to vector<1x2x2xf32>
    %654 = arith.subf %650, %653 : vector<1x2x2xf32>
    %655 = math.exp %654 : vector<1x2x2xf32>
    %cst_236 = arith.constant dense<0.000000e+00> : vector<1x2xf32>
    %656 = vector.multi_reduction <add>, %655, %cst_236 [2] : vector<1x2x2xf32> to vector<1x2xf32>
    %657 = vector.shape_cast %656 : vector<1x2xf32> to vector<1x2x1xf32>
    %658 = tpu.reciprocal %657 {approx = true} : vector<1x2x1xf32> -> vector<1x2x1xf32>
    %659 = vector.broadcast %658 : vector<1x2x1xf32> to vector<1x2x2xf32>
    %660 = arith.mulf %655, %659 : vector<1x2x2xf32>
    %661 = arith.truncf %660 : vector<1x2x2xf32> to vector<1x2x2xbf16>
    %662 = arith.truncf %647 : vector<1x2x16xf32> to vector<1x2x16xbf16>
    "tpu.trace_start"() <{level = 10 : i32, message = "bqk,bkf->bqf"}> : () -> ()
    %cst_237 = arith.constant dense<0.000000e+00> : vector<1x2x16xf32>
    %663 = tpu.matmul %661, %662, %cst_237 {dimension_numbers = #tpu.dot_dimension_numbers<[2], [1], [1], [2], [0, 0, 0, 1, 1, 2], [0], [0]>} : vector<1x2x2xbf16>, vector<1x2x16xbf16>, vector<1x2x16xf32> -> vector<1x2x16xf32>
    "tpu.trace_stop"() : () -> ()
    %664 = vector.shape_cast %663 : vector<1x2x16xf32> to vector<2x16xf32>
    %665 = tpu.concatenate %503, %526, %549, %572, %595, %618, %641, %664 in 1 : vector<2x16xf32>, vector<2x16xf32>, vector<2x16xf32>, vector<2x16xf32>, vector<2x16xf32>, vector<2x16xf32>, vector<2x16xf32>, vector<2x16xf32> -> vector<2x128xf32>
    %666 = arith.truncf %665 : vector<2x128xf32> to vector<2x128xbf16>
    %cst_238 = arith.constant dense<0.000000e+00> : vector<2x128xf32>
    %667 = tpu.matmul %666, %458, %cst_238 {dimension_numbers = #tpu.dot_dimension_numbers<[1], [0], [0], [1], [0, 0, 1, 1], [], []>} : vector<2x128xbf16>, vector<128x128xbf16>, vector<2x128xf32> -> vector<2x128xf32>
    %668 = vector.broadcast %460 : vector<1x128xf32> to vector<2x128xf32>
    %669 = arith.addf %667, %668 : vector<2x128xf32>
    %670 = arith.addf %452, %669 : vector<2x128xf32>
    %cst_239 = arith.constant dense<0.000000e+00> : vector<2xf32>
    %671 = vector.multi_reduction <add>, %670, %cst_239 [1] : vector<2x128xf32> to vector<2xf32>
    %672 = vector.shape_cast %671 : vector<2xf32> to vector<2x1xf32>
    %cst_240 = arith.constant 1.280000e+02 : f32
    %673 = vector.broadcast %cst_240 : f32 to vector<2x1xf32>
    %674 = arith.divf %672, %673 : vector<2x1xf32>
    %675 = vector.broadcast %674 : vector<2x1xf32> to vector<2x128xf32>
    %676 = arith.subf %670, %675 : vector<2x128xf32>
    %677 = arith.mulf %676, %676 : vector<2x128xf32>
    %cst_241 = arith.constant dense<0.000000e+00> : vector<2xf32>
    %678 = vector.multi_reduction <add>, %677, %cst_241 [1] : vector<2x128xf32> to vector<2xf32>
    %679 = vector.shape_cast %678 : vector<2xf32> to vector<2x1xf32>
    %cst_242 = arith.constant 1.280000e+02 : f32
    %680 = vector.broadcast %cst_242 : f32 to vector<2x1xf32>
    %681 = arith.divf %679, %680 : vector<2x1xf32>
    %cst_243 = arith.constant 9.99999974E-6 : f32
    %682 = vector.broadcast %cst_243 : f32 to vector<2x1xf32>
    %683 = arith.addf %681, %682 : vector<2x1xf32>
    %684 = math.rsqrt %683 : vector<2x1xf32>
    %685 = vector.broadcast %684 : vector<2x1xf32> to vector<2x128xf32>
    %686 = arith.mulf %676, %685 : vector<2x128xf32>
    %687 = vector.broadcast %462 : vector<1x128xf32> to vector<2x128xf32>
    %688 = arith.mulf %686, %687 : vector<2x128xf32>
    %689 = vector.broadcast %464 : vector<1x128xf32> to vector<2x128xf32>
    %690 = arith.addf %688, %689 : vector<2x128xf32>
    %691 = arith.truncf %690 : vector<2x128xf32> to vector<2x128xbf16>
    %cst_244 = arith.constant dense<0.000000e+00> : vector<2x256xf32>
    %692 = tpu.matmul %691, %466, %cst_244 {dimension_numbers = #tpu.dot_dimension_numbers<[1], [0], [0], [1], [0, 0, 1, 1], [], []>} : vector<2x128xbf16>, vector<128x256xbf16>, vector<2x256xf32> -> vector<2x256xf32>
    %693 = vector.broadcast %468 : vector<1x256xf32> to vector<2x256xf32>
    %694 = arith.addf %692, %693 : vector<2x256xf32>
    %cst_245 = arith.constant 0.000000e+00 : f32
    %695 = vector.broadcast %cst_245 : f32 to vector<2x256xf32>
    %696 = arith.maximumf %694, %695 : vector<2x256xf32>
    %697 = arith.truncf %696 : vector<2x256xf32> to vector<2x256xbf16>
    %cst_246 = arith.constant dense<0.000000e+00> : vector<2x128xf32>
    %698 = tpu.matmul %697, %470, %cst_246 {dimension_numbers = #tpu.dot_dimension_numbers<[1], [0], [0], [1], [0, 0, 1, 1], [], []>} : vector<2x256xbf16>, vector<256x128xbf16>, vector<2x128xf32> -> vector<2x128xf32>
    %699 = vector.broadcast %472 : vector<1x128xf32> to vector<2x128xf32>
    %700 = arith.addf %698, %699 : vector<2x128xf32>
    %701 = arith.addf %690, %700 : vector<2x128xf32>
    %cst_247 = arith.constant dense<0.000000e+00> : vector<2xf32>
    %702 = vector.multi_reduction <add>, %701, %cst_247 [1] : vector<2x128xf32> to vector<2xf32>
    %703 = vector.shape_cast %702 : vector<2xf32> to vector<2x1xf32>
    %cst_248 = arith.constant 1.280000e+02 : f32
    %704 = vector.broadcast %cst_248 : f32 to vector<2x1xf32>
    %705 = arith.divf %703, %704 : vector<2x1xf32>
    %706 = vector.broadcast %705 : vector<2x1xf32> to vector<2x128xf32>
    %707 = arith.subf %701, %706 : vector<2x128xf32>
    %708 = arith.mulf %707, %707 : vector<2x128xf32>
    %cst_249 = arith.constant dense<0.000000e+00> : vector<2xf32>
    %709 = vector.multi_reduction <add>, %708, %cst_249 [1] : vector<2x128xf32> to vector<2xf32>
    %710 = vector.shape_cast %709 : vector<2xf32> to vector<2x1xf32>
    %cst_250 = arith.constant 1.280000e+02 : f32
    %711 = vector.broadcast %cst_250 : f32 to vector<2x1xf32>
    %712 = arith.divf %710, %711 : vector<2x1xf32>
    %cst_251 = arith.constant 9.99999974E-6 : f32
    %713 = vector.broadcast %cst_251 : f32 to vector<2x1xf32>
    %714 = arith.addf %712, %713 : vector<2x1xf32>
    %715 = math.rsqrt %714 : vector<2x1xf32>
    %716 = vector.broadcast %715 : vector<2x1xf32> to vector<2x128xf32>
    %717 = arith.mulf %707, %716 : vector<2x128xf32>
    %718 = vector.broadcast %474 : vector<1x128xf32> to vector<2x128xf32>
    %719 = arith.mulf %717, %718 : vector<2x128xf32>
    %720 = vector.broadcast %476 : vector<1x128xf32> to vector<2x128xf32>
    %721 = arith.addf %719, %720 : vector<2x128xf32>
    %c1_252 = arith.constant 1 : index
    %c0_253 = arith.constant 0 : index
    %c0_254 = arith.constant 0 : index
    %722 = vector.load %arg23[%c1_252, %c0_253, %c0_254] : memref<2x128x384xbf16, #tpu.memory_space<vmem>>, vector<1x128x384xbf16>
    %723 = vector.shape_cast %722 : vector<1x128x384xbf16> to vector<128x384xbf16>
    %c1_255 = arith.constant 1 : index
    %c0_256 = arith.constant 0 : index
    %c0_257 = arith.constant 0 : index
    %724 = vector.load %arg24[%c1_255, %c0_256, %c0_257] : memref<2x1x384xf32, #tpu.memory_space<vmem>>, vector<1x1x384xf32>
    %725 = vector.shape_cast %724 : vector<1x1x384xf32> to vector<1x384xf32>
    %c1_258 = arith.constant 1 : index
    %c0_259 = arith.constant 0 : index
    %c0_260 = arith.constant 0 : index
    %726 = vector.load %arg25[%c1_258, %c0_259, %c0_260] : memref<2x128x128xbf16, #tpu.memory_space<vmem>>, vector<1x128x128xbf16>
    %727 = vector.shape_cast %726 : vector<1x128x128xbf16> to vector<128x128xbf16>
    %c1_261 = arith.constant 1 : index
    %c0_262 = arith.constant 0 : index
    %c0_263 = arith.constant 0 : index
    %728 = vector.load %arg26[%c1_261, %c0_262, %c0_263] : memref<2x1x128xf32, #tpu.memory_space<vmem>>, vector<1x1x128xf32>
    %729 = vector.shape_cast %728 : vector<1x1x128xf32> to vector<1x128xf32>
    %c1_264 = arith.constant 1 : index
    %c0_265 = arith.constant 0 : index
    %c0_266 = arith.constant 0 : index
    %730 = vector.load %arg27[%c1_264, %c0_265, %c0_266] : memref<2x1x128xf32, #tpu.memory_space<vmem>>, vector<1x1x128xf32>
    %731 = vector.shape_cast %730 : vector<1x1x128xf32> to vector<1x128xf32>
    %c1_267 = arith.constant 1 : index
    %c0_268 = arith.constant 0 : index
    %c0_269 = arith.constant 0 : index
    %732 = vector.load %arg28[%c1_267, %c0_268, %c0_269] : memref<2x1x128xf32, #tpu.memory_space<vmem>>, vector<1x1x128xf32>
    %733 = vector.shape_cast %732 : vector<1x1x128xf32> to vector<1x128xf32>
    %c1_270 = arith.constant 1 : index
    %c0_271 = arith.constant 0 : index
    %c0_272 = arith.constant 0 : index
    %734 = vector.load %arg29[%c1_270, %c0_271, %c0_272] : memref<2x128x256xbf16, #tpu.memory_space<vmem>>, vector<1x128x256xbf16>
    %735 = vector.shape_cast %734 : vector<1x128x256xbf16> to vector<128x256xbf16>
    %c1_273 = arith.constant 1 : index
    %c0_274 = arith.constant 0 : index
    %c0_275 = arith.constant 0 : index
    %736 = vector.load %arg30[%c1_273, %c0_274, %c0_275] : memref<2x1x256xf32, #tpu.memory_space<vmem>>, vector<1x1x256xf32>
    %737 = vector.shape_cast %736 : vector<1x1x256xf32> to vector<1x256xf32>
    %c1_276 = arith.constant 1 : index
    %c0_277 = arith.constant 0 : index
    %c0_278 = arith.constant 0 : index
    %738 = vector.load %arg31[%c1_276, %c0_277, %c0_278] : memref<2x256x128xbf16, #tpu.memory_space<vmem>>, vector<1x256x128xbf16>
    %739 = vector.shape_cast %738 : vector<1x256x128xbf16> to vector<256x128xbf16>
    %c1_279 = arith.constant 1 : index
    %c0_280 = arith.constant 0 : index
    %c0_281 = arith.constant 0 : index
    %740 = vector.load %arg32[%c1_279, %c0_280, %c0_281] : memref<2x1x128xf32, #tpu.memory_space<vmem>>, vector<1x1x128xf32>
    %741 = vector.shape_cast %740 : vector<1x1x128xf32> to vector<1x128xf32>
    %c1_282 = arith.constant 1 : index
    %c0_283 = arith.constant 0 : index
    %c0_284 = arith.constant 0 : index
    %742 = vector.load %arg33[%c1_282, %c0_283, %c0_284] : memref<2x1x128xf32, #tpu.memory_space<vmem>>, vector<1x1x128xf32>
    %743 = vector.shape_cast %742 : vector<1x1x128xf32> to vector<1x128xf32>
    %c1_285 = arith.constant 1 : index
    %c0_286 = arith.constant 0 : index
    %c0_287 = arith.constant 0 : index
    %744 = vector.load %arg34[%c1_285, %c0_286, %c0_287] : memref<2x1x128xf32, #tpu.memory_space<vmem>>, vector<1x1x128xf32>
    %745 = vector.shape_cast %744 : vector<1x1x128xf32> to vector<1x128xf32>
    %746 = arith.truncf %721 : vector<2x128xf32> to vector<2x128xbf16>
    %cst_288 = arith.constant dense<0.000000e+00> : vector<2x384xf32>
    %747 = tpu.matmul %746, %723, %cst_288 {dimension_numbers = #tpu.dot_dimension_numbers<[1], [0], [0], [1], [0, 0, 1, 1], [], []>} : vector<2x128xbf16>, vector<128x384xbf16>, vector<2x384xf32> -> vector<2x384xf32>
    %748 = vector.broadcast %725 : vector<1x384xf32> to vector<2x384xf32>
    %749 = arith.addf %747, %748 : vector<2x384xf32>
    %750 = vector.extract_strided_slice %749 {offsets = [0, 0], sizes = [2, 16], strides = [1, 1]} : vector<2x384xf32> to vector<2x16xf32>
    %751 = vector.shape_cast %750 : vector<2x16xf32> to vector<1x2x16xf32>
    %752 = vector.extract_strided_slice %749 {offsets = [0, 128], sizes = [2, 16], strides = [1, 1]} : vector<2x384xf32> to vector<2x16xf32>
    %753 = vector.shape_cast %752 : vector<2x16xf32> to vector<1x2x16xf32>
    %754 = vector.extract_strided_slice %749 {offsets = [0, 256], sizes = [2, 16], strides = [1, 1]} : vector<2x384xf32> to vector<2x16xf32>
    %755 = vector.shape_cast %754 : vector<2x16xf32> to vector<1x2x16xf32>
    %756 = arith.truncf %751 : vector<1x2x16xf32> to vector<1x2x16xbf16>
    %757 = arith.truncf %753 : vector<1x2x16xf32> to vector<1x2x16xbf16>
    "tpu.trace_start"() <{level = 10 : i32, message = "bqf,bkf->bqk"}> : () -> ()
    %cst_289 = arith.constant dense<0.000000e+00> : vector<1x2x2xf32>
    %758 = tpu.matmul %756, %757, %cst_289 {dimension_numbers = #tpu.dot_dimension_numbers<[2], [2], [1], [1], [0, 0, 0, 1, 1, 1], [0], [0]>} : vector<1x2x16xbf16>, vector<1x2x16xbf16>, vector<1x2x2xf32> -> vector<1x2x2xf32>
    "tpu.trace_stop"() : () -> ()
    %cst_290 = arith.constant dense<0xFF800000> : vector<1x2xf32>
    %759 = vector.multi_reduction <maximumf>, %758, %cst_290 [2] : vector<1x2x2xf32> to vector<1x2xf32>
    %760 = vector.shape_cast %759 : vector<1x2xf32> to vector<1x2x1xf32>
    %761 = vector.broadcast %760 : vector<1x2x1xf32> to vector<1x2x2xf32>
    %762 = arith.subf %758, %761 : vector<1x2x2xf32>
    %763 = math.exp %762 : vector<1x2x2xf32>
    %cst_291 = arith.constant dense<0.000000e+00> : vector<1x2xf32>
    %764 = vector.multi_reduction <add>, %763, %cst_291 [2] : vector<1x2x2xf32> to vector<1x2xf32>
    %765 = vector.shape_cast %764 : vector<1x2xf32> to vector<1x2x1xf32>
    %766 = tpu.reciprocal %765 {approx = true} : vector<1x2x1xf32> -> vector<1x2x1xf32>
    %767 = vector.broadcast %766 : vector<1x2x1xf32> to vector<1x2x2xf32>
    %768 = arith.mulf %763, %767 : vector<1x2x2xf32>
    %769 = arith.truncf %768 : vector<1x2x2xf32> to vector<1x2x2xbf16>
    %770 = arith.truncf %755 : vector<1x2x16xf32> to vector<1x2x16xbf16>
    "tpu.trace_start"() <{level = 10 : i32, message = "bqk,bkf->bqf"}> : () -> ()
    %cst_292 = arith.constant dense<0.000000e+00> : vector<1x2x16xf32>
    %771 = tpu.matmul %769, %770, %cst_292 {dimension_numbers = #tpu.dot_dimension_numbers<[2], [1], [1], [2], [0, 0, 0, 1, 1, 2], [0], [0]>} : vector<1x2x2xbf16>, vector<1x2x16xbf16>, vector<1x2x16xf32> -> vector<1x2x16xf32>
    "tpu.trace_stop"() : () -> ()
    %772 = vector.shape_cast %771 : vector<1x2x16xf32> to vector<2x16xf32>
    %773 = vector.extract_strided_slice %749 {offsets = [0, 16], sizes = [2, 16], strides = [1, 1]} : vector<2x384xf32> to vector<2x16xf32>
    %774 = vector.shape_cast %773 : vector<2x16xf32> to vector<1x2x16xf32>
    %775 = vector.extract_strided_slice %749 {offsets = [0, 144], sizes = [2, 16], strides = [1, 1]} : vector<2x384xf32> to vector<2x16xf32>
    %776 = vector.shape_cast %775 : vector<2x16xf32> to vector<1x2x16xf32>
    %777 = vector.extract_strided_slice %749 {offsets = [0, 272], sizes = [2, 16], strides = [1, 1]} : vector<2x384xf32> to vector<2x16xf32>
    %778 = vector.shape_cast %777 : vector<2x16xf32> to vector<1x2x16xf32>
    %779 = arith.truncf %774 : vector<1x2x16xf32> to vector<1x2x16xbf16>
    %780 = arith.truncf %776 : vector<1x2x16xf32> to vector<1x2x16xbf16>
    "tpu.trace_start"() <{level = 10 : i32, message = "bqf,bkf->bqk"}> : () -> ()
    %cst_293 = arith.constant dense<0.000000e+00> : vector<1x2x2xf32>
    %781 = tpu.matmul %779, %780, %cst_293 {dimension_numbers = #tpu.dot_dimension_numbers<[2], [2], [1], [1], [0, 0, 0, 1, 1, 1], [0], [0]>} : vector<1x2x16xbf16>, vector<1x2x16xbf16>, vector<1x2x2xf32> -> vector<1x2x2xf32>
    "tpu.trace_stop"() : () -> ()
    %cst_294 = arith.constant dense<0xFF800000> : vector<1x2xf32>
    %782 = vector.multi_reduction <maximumf>, %781, %cst_294 [2] : vector<1x2x2xf32> to vector<1x2xf32>
    %783 = vector.shape_cast %782 : vector<1x2xf32> to vector<1x2x1xf32>
    %784 = vector.broadcast %783 : vector<1x2x1xf32> to vector<1x2x2xf32>
    %785 = arith.subf %781, %784 : vector<1x2x2xf32>
    %786 = math.exp %785 : vector<1x2x2xf32>
    %cst_295 = arith.constant dense<0.000000e+00> : vector<1x2xf32>
    %787 = vector.multi_reduction <add>, %786, %cst_295 [2] : vector<1x2x2xf32> to vector<1x2xf32>
    %788 = vector.shape_cast %787 : vector<1x2xf32> to vector<1x2x1xf32>
    %789 = tpu.reciprocal %788 {approx = true} : vector<1x2x1xf32> -> vector<1x2x1xf32>
    %790 = vector.broadcast %789 : vector<1x2x1xf32> to vector<1x2x2xf32>
    %791 = arith.mulf %786, %790 : vector<1x2x2xf32>
    %792 = arith.truncf %791 : vector<1x2x2xf32> to vector<1x2x2xbf16>
    %793 = arith.truncf %778 : vector<1x2x16xf32> to vector<1x2x16xbf16>
    "tpu.trace_start"() <{level = 10 : i32, message = "bqk,bkf->bqf"}> : () -> ()
    %cst_296 = arith.constant dense<0.000000e+00> : vector<1x2x16xf32>
    %794 = tpu.matmul %792, %793, %cst_296 {dimension_numbers = #tpu.dot_dimension_numbers<[2], [1], [1], [2], [0, 0, 0, 1, 1, 2], [0], [0]>} : vector<1x2x2xbf16>, vector<1x2x16xbf16>, vector<1x2x16xf32> -> vector<1x2x16xf32>
    "tpu.trace_stop"() : () -> ()
    %795 = vector.shape_cast %794 : vector<1x2x16xf32> to vector<2x16xf32>
    %796 = vector.extract_strided_slice %749 {offsets = [0, 32], sizes = [2, 16], strides = [1, 1]} : vector<2x384xf32> to vector<2x16xf32>
    %797 = vector.shape_cast %796 : vector<2x16xf32> to vector<1x2x16xf32>
    %798 = vector.extract_strided_slice %749 {offsets = [0, 160], sizes = [2, 16], strides = [1, 1]} : vector<2x384xf32> to vector<2x16xf32>
    %799 = vector.shape_cast %798 : vector<2x16xf32> to vector<1x2x16xf32>
    %800 = vector.extract_strided_slice %749 {offsets = [0, 288], sizes = [2, 16], strides = [1, 1]} : vector<2x384xf32> to vector<2x16xf32>
    %801 = vector.shape_cast %800 : vector<2x16xf32> to vector<1x2x16xf32>
    %802 = arith.truncf %797 : vector<1x2x16xf32> to vector<1x2x16xbf16>
    %803 = arith.truncf %799 : vector<1x2x16xf32> to vector<1x2x16xbf16>
    "tpu.trace_start"() <{level = 10 : i32, message = "bqf,bkf->bqk"}> : () -> ()
    %cst_297 = arith.constant dense<0.000000e+00> : vector<1x2x2xf32>
    %804 = tpu.matmul %802, %803, %cst_297 {dimension_numbers = #tpu.dot_dimension_numbers<[2], [2], [1], [1], [0, 0, 0, 1, 1, 1], [0], [0]>} : vector<1x2x16xbf16>, vector<1x2x16xbf16>, vector<1x2x2xf32> -> vector<1x2x2xf32>
    "tpu.trace_stop"() : () -> ()
    %cst_298 = arith.constant dense<0xFF800000> : vector<1x2xf32>
    %805 = vector.multi_reduction <maximumf>, %804, %cst_298 [2] : vector<1x2x2xf32> to vector<1x2xf32>
    %806 = vector.shape_cast %805 : vector<1x2xf32> to vector<1x2x1xf32>
    %807 = vector.broadcast %806 : vector<1x2x1xf32> to vector<1x2x2xf32>
    %808 = arith.subf %804, %807 : vector<1x2x2xf32>
    %809 = math.exp %808 : vector<1x2x2xf32>
    %cst_299 = arith.constant dense<0.000000e+00> : vector<1x2xf32>
    %810 = vector.multi_reduction <add>, %809, %cst_299 [2] : vector<1x2x2xf32> to vector<1x2xf32>
    %811 = vector.shape_cast %810 : vector<1x2xf32> to vector<1x2x1xf32>
    %812 = tpu.reciprocal %811 {approx = true} : vector<1x2x1xf32> -> vector<1x2x1xf32>
    %813 = vector.broadcast %812 : vector<1x2x1xf32> to vector<1x2x2xf32>
    %814 = arith.mulf %809, %813 : vector<1x2x2xf32>
    %815 = arith.truncf %814 : vector<1x2x2xf32> to vector<1x2x2xbf16>
    %816 = arith.truncf %801 : vector<1x2x16xf32> to vector<1x2x16xbf16>
    "tpu.trace_start"() <{level = 10 : i32, message = "bqk,bkf->bqf"}> : () -> ()
    %cst_300 = arith.constant dense<0.000000e+00> : vector<1x2x16xf32>
    %817 = tpu.matmul %815, %816, %cst_300 {dimension_numbers = #tpu.dot_dimension_numbers<[2], [1], [1], [2], [0, 0, 0, 1, 1, 2], [0], [0]>} : vector<1x2x2xbf16>, vector<1x2x16xbf16>, vector<1x2x16xf32> -> vector<1x2x16xf32>
    "tpu.trace_stop"() : () -> ()
    %818 = vector.shape_cast %817 : vector<1x2x16xf32> to vector<2x16xf32>
    %819 = vector.extract_strided_slice %749 {offsets = [0, 48], sizes = [2, 16], strides = [1, 1]} : vector<2x384xf32> to vector<2x16xf32>
    %820 = vector.shape_cast %819 : vector<2x16xf32> to vector<1x2x16xf32>
    %821 = vector.extract_strided_slice %749 {offsets = [0, 176], sizes = [2, 16], strides = [1, 1]} : vector<2x384xf32> to vector<2x16xf32>
    %822 = vector.shape_cast %821 : vector<2x16xf32> to vector<1x2x16xf32>
    %823 = vector.extract_strided_slice %749 {offsets = [0, 304], sizes = [2, 16], strides = [1, 1]} : vector<2x384xf32> to vector<2x16xf32>
    %824 = vector.shape_cast %823 : vector<2x16xf32> to vector<1x2x16xf32>
    %825 = arith.truncf %820 : vector<1x2x16xf32> to vector<1x2x16xbf16>
    %826 = arith.truncf %822 : vector<1x2x16xf32> to vector<1x2x16xbf16>
    "tpu.trace_start"() <{level = 10 : i32, message = "bqf,bkf->bqk"}> : () -> ()
    %cst_301 = arith.constant dense<0.000000e+00> : vector<1x2x2xf32>
    %827 = tpu.matmul %825, %826, %cst_301 {dimension_numbers = #tpu.dot_dimension_numbers<[2], [2], [1], [1], [0, 0, 0, 1, 1, 1], [0], [0]>} : vector<1x2x16xbf16>, vector<1x2x16xbf16>, vector<1x2x2xf32> -> vector<1x2x2xf32>
    "tpu.trace_stop"() : () -> ()
    %cst_302 = arith.constant dense<0xFF800000> : vector<1x2xf32>
    %828 = vector.multi_reduction <maximumf>, %827, %cst_302 [2] : vector<1x2x2xf32> to vector<1x2xf32>
    %829 = vector.shape_cast %828 : vector<1x2xf32> to vector<1x2x1xf32>
    %830 = vector.broadcast %829 : vector<1x2x1xf32> to vector<1x2x2xf32>
    %831 = arith.subf %827, %830 : vector<1x2x2xf32>
    %832 = math.exp %831 : vector<1x2x2xf32>
    %cst_303 = arith.constant dense<0.000000e+00> : vector<1x2xf32>
    %833 = vector.multi_reduction <add>, %832, %cst_303 [2] : vector<1x2x2xf32> to vector<1x2xf32>
    %834 = vector.shape_cast %833 : vector<1x2xf32> to vector<1x2x1xf32>
    %835 = tpu.reciprocal %834 {approx = true} : vector<1x2x1xf32> -> vector<1x2x1xf32>
    %836 = vector.broadcast %835 : vector<1x2x1xf32> to vector<1x2x2xf32>
    %837 = arith.mulf %832, %836 : vector<1x2x2xf32>
    %838 = arith.truncf %837 : vector<1x2x2xf32> to vector<1x2x2xbf16>
    %839 = arith.truncf %824 : vector<1x2x16xf32> to vector<1x2x16xbf16>
    "tpu.trace_start"() <{level = 10 : i32, message = "bqk,bkf->bqf"}> : () -> ()
    %cst_304 = arith.constant dense<0.000000e+00> : vector<1x2x16xf32>
    %840 = tpu.matmul %838, %839, %cst_304 {dimension_numbers = #tpu.dot_dimension_numbers<[2], [1], [1], [2], [0, 0, 0, 1, 1, 2], [0], [0]>} : vector<1x2x2xbf16>, vector<1x2x16xbf16>, vector<1x2x16xf32> -> vector<1x2x16xf32>
    "tpu.trace_stop"() : () -> ()
    %841 = vector.shape_cast %840 : vector<1x2x16xf32> to vector<2x16xf32>
    %842 = vector.extract_strided_slice %749 {offsets = [0, 64], sizes = [2, 16], strides = [1, 1]} : vector<2x384xf32> to vector<2x16xf32>
    %843 = vector.shape_cast %842 : vector<2x16xf32> to vector<1x2x16xf32>
    %844 = vector.extract_strided_slice %749 {offsets = [0, 192], sizes = [2, 16], strides = [1, 1]} : vector<2x384xf32> to vector<2x16xf32>
    %845 = vector.shape_cast %844 : vector<2x16xf32> to vector<1x2x16xf32>
    %846 = vector.extract_strided_slice %749 {offsets = [0, 320], sizes = [2, 16], strides = [1, 1]} : vector<2x384xf32> to vector<2x16xf32>
    %847 = vector.shape_cast %846 : vector<2x16xf32> to vector<1x2x16xf32>
    %848 = arith.truncf %843 : vector<1x2x16xf32> to vector<1x2x16xbf16>
    %849 = arith.truncf %845 : vector<1x2x16xf32> to vector<1x2x16xbf16>
    "tpu.trace_start"() <{level = 10 : i32, message = "bqf,bkf->bqk"}> : () -> ()
    %cst_305 = arith.constant dense<0.000000e+00> : vector<1x2x2xf32>
    %850 = tpu.matmul %848, %849, %cst_305 {dimension_numbers = #tpu.dot_dimension_numbers<[2], [2], [1], [1], [0, 0, 0, 1, 1, 1], [0], [0]>} : vector<1x2x16xbf16>, vector<1x2x16xbf16>, vector<1x2x2xf32> -> vector<1x2x2xf32>
    "tpu.trace_stop"() : () -> ()
    %cst_306 = arith.constant dense<0xFF800000> : vector<1x2xf32>
    %851 = vector.multi_reduction <maximumf>, %850, %cst_306 [2] : vector<1x2x2xf32> to vector<1x2xf32>
    %852 = vector.shape_cast %851 : vector<1x2xf32> to vector<1x2x1xf32>
    %853 = vector.broadcast %852 : vector<1x2x1xf32> to vector<1x2x2xf32>
    %854 = arith.subf %850, %853 : vector<1x2x2xf32>
    %855 = math.exp %854 : vector<1x2x2xf32>
    %cst_307 = arith.constant dense<0.000000e+00> : vector<1x2xf32>
    %856 = vector.multi_reduction <add>, %855, %cst_307 [2] : vector<1x2x2xf32> to vector<1x2xf32>
    %857 = vector.shape_cast %856 : vector<1x2xf32> to vector<1x2x1xf32>
    %858 = tpu.reciprocal %857 {approx = true} : vector<1x2x1xf32> -> vector<1x2x1xf32>
    %859 = vector.broadcast %858 : vector<1x2x1xf32> to vector<1x2x2xf32>
    %860 = arith.mulf %855, %859 : vector<1x2x2xf32>
    %861 = arith.truncf %860 : vector<1x2x2xf32> to vector<1x2x2xbf16>
    %862 = arith.truncf %847 : vector<1x2x16xf32> to vector<1x2x16xbf16>
    "tpu.trace_start"() <{level = 10 : i32, message = "bqk,bkf->bqf"}> : () -> ()
    %cst_308 = arith.constant dense<0.000000e+00> : vector<1x2x16xf32>
    %863 = tpu.matmul %861, %862, %cst_308 {dimension_numbers = #tpu.dot_dimension_numbers<[2], [1], [1], [2], [0, 0, 0, 1, 1, 2], [0], [0]>} : vector<1x2x2xbf16>, vector<1x2x16xbf16>, vector<1x2x16xf32> -> vector<1x2x16xf32>
    "tpu.trace_stop"() : () -> ()
    %864 = vector.shape_cast %863 : vector<1x2x16xf32> to vector<2x16xf32>
    %865 = vector.extract_strided_slice %749 {offsets = [0, 80], sizes = [2, 16], strides = [1, 1]} : vector<2x384xf32> to vector<2x16xf32>
    %866 = vector.shape_cast %865 : vector<2x16xf32> to vector<1x2x16xf32>
    %867 = vector.extract_strided_slice %749 {offsets = [0, 208], sizes = [2, 16], strides = [1, 1]} : vector<2x384xf32> to vector<2x16xf32>
    %868 = vector.shape_cast %867 : vector<2x16xf32> to vector<1x2x16xf32>
    %869 = vector.extract_strided_slice %749 {offsets = [0, 336], sizes = [2, 16], strides = [1, 1]} : vector<2x384xf32> to vector<2x16xf32>
    %870 = vector.shape_cast %869 : vector<2x16xf32> to vector<1x2x16xf32>
    %871 = arith.truncf %866 : vector<1x2x16xf32> to vector<1x2x16xbf16>
    %872 = arith.truncf %868 : vector<1x2x16xf32> to vector<1x2x16xbf16>
    "tpu.trace_start"() <{level = 10 : i32, message = "bqf,bkf->bqk"}> : () -> ()
    %cst_309 = arith.constant dense<0.000000e+00> : vector<1x2x2xf32>
    %873 = tpu.matmul %871, %872, %cst_309 {dimension_numbers = #tpu.dot_dimension_numbers<[2], [2], [1], [1], [0, 0, 0, 1, 1, 1], [0], [0]>} : vector<1x2x16xbf16>, vector<1x2x16xbf16>, vector<1x2x2xf32> -> vector<1x2x2xf32>
    "tpu.trace_stop"() : () -> ()
    %cst_310 = arith.constant dense<0xFF800000> : vector<1x2xf32>
    %874 = vector.multi_reduction <maximumf>, %873, %cst_310 [2] : vector<1x2x2xf32> to vector<1x2xf32>
    %875 = vector.shape_cast %874 : vector<1x2xf32> to vector<1x2x1xf32>
    %876 = vector.broadcast %875 : vector<1x2x1xf32> to vector<1x2x2xf32>
    %877 = arith.subf %873, %876 : vector<1x2x2xf32>
    %878 = math.exp %877 : vector<1x2x2xf32>
    %cst_311 = arith.constant dense<0.000000e+00> : vector<1x2xf32>
    %879 = vector.multi_reduction <add>, %878, %cst_311 [2] : vector<1x2x2xf32> to vector<1x2xf32>
    %880 = vector.shape_cast %879 : vector<1x2xf32> to vector<1x2x1xf32>
    %881 = tpu.reciprocal %880 {approx = true} : vector<1x2x1xf32> -> vector<1x2x1xf32>
    %882 = vector.broadcast %881 : vector<1x2x1xf32> to vector<1x2x2xf32>
    %883 = arith.mulf %878, %882 : vector<1x2x2xf32>
    %884 = arith.truncf %883 : vector<1x2x2xf32> to vector<1x2x2xbf16>
    %885 = arith.truncf %870 : vector<1x2x16xf32> to vector<1x2x16xbf16>
    "tpu.trace_start"() <{level = 10 : i32, message = "bqk,bkf->bqf"}> : () -> ()
    %cst_312 = arith.constant dense<0.000000e+00> : vector<1x2x16xf32>
    %886 = tpu.matmul %884, %885, %cst_312 {dimension_numbers = #tpu.dot_dimension_numbers<[2], [1], [1], [2], [0, 0, 0, 1, 1, 2], [0], [0]>} : vector<1x2x2xbf16>, vector<1x2x16xbf16>, vector<1x2x16xf32> -> vector<1x2x16xf32>
    "tpu.trace_stop"() : () -> ()
    %887 = vector.shape_cast %886 : vector<1x2x16xf32> to vector<2x16xf32>
    %888 = vector.extract_strided_slice %749 {offsets = [0, 96], sizes = [2, 16], strides = [1, 1]} : vector<2x384xf32> to vector<2x16xf32>
    %889 = vector.shape_cast %888 : vector<2x16xf32> to vector<1x2x16xf32>
    %890 = vector.extract_strided_slice %749 {offsets = [0, 224], sizes = [2, 16], strides = [1, 1]} : vector<2x384xf32> to vector<2x16xf32>
    %891 = vector.shape_cast %890 : vector<2x16xf32> to vector<1x2x16xf32>
    %892 = vector.extract_strided_slice %749 {offsets = [0, 352], sizes = [2, 16], strides = [1, 1]} : vector<2x384xf32> to vector<2x16xf32>
    %893 = vector.shape_cast %892 : vector<2x16xf32> to vector<1x2x16xf32>
    %894 = arith.truncf %889 : vector<1x2x16xf32> to vector<1x2x16xbf16>
    %895 = arith.truncf %891 : vector<1x2x16xf32> to vector<1x2x16xbf16>
    "tpu.trace_start"() <{level = 10 : i32, message = "bqf,bkf->bqk"}> : () -> ()
    %cst_313 = arith.constant dense<0.000000e+00> : vector<1x2x2xf32>
    %896 = tpu.matmul %894, %895, %cst_313 {dimension_numbers = #tpu.dot_dimension_numbers<[2], [2], [1], [1], [0, 0, 0, 1, 1, 1], [0], [0]>} : vector<1x2x16xbf16>, vector<1x2x16xbf16>, vector<1x2x2xf32> -> vector<1x2x2xf32>
    "tpu.trace_stop"() : () -> ()
    %cst_314 = arith.constant dense<0xFF800000> : vector<1x2xf32>
    %897 = vector.multi_reduction <maximumf>, %896, %cst_314 [2] : vector<1x2x2xf32> to vector<1x2xf32>
    %898 = vector.shape_cast %897 : vector<1x2xf32> to vector<1x2x1xf32>
    %899 = vector.broadcast %898 : vector<1x2x1xf32> to vector<1x2x2xf32>
    %900 = arith.subf %896, %899 : vector<1x2x2xf32>
    %901 = math.exp %900 : vector<1x2x2xf32>
    %cst_315 = arith.constant dense<0.000000e+00> : vector<1x2xf32>
    %902 = vector.multi_reduction <add>, %901, %cst_315 [2] : vector<1x2x2xf32> to vector<1x2xf32>
    %903 = vector.shape_cast %902 : vector<1x2xf32> to vector<1x2x1xf32>
    %904 = tpu.reciprocal %903 {approx = true} : vector<1x2x1xf32> -> vector<1x2x1xf32>
    %905 = vector.broadcast %904 : vector<1x2x1xf32> to vector<1x2x2xf32>
    %906 = arith.mulf %901, %905 : vector<1x2x2xf32>
    %907 = arith.truncf %906 : vector<1x2x2xf32> to vector<1x2x2xbf16>
    %908 = arith.truncf %893 : vector<1x2x16xf32> to vector<1x2x16xbf16>
    "tpu.trace_start"() <{level = 10 : i32, message = "bqk,bkf->bqf"}> : () -> ()
    %cst_316 = arith.constant dense<0.000000e+00> : vector<1x2x16xf32>
    %909 = tpu.matmul %907, %908, %cst_316 {dimension_numbers = #tpu.dot_dimension_numbers<[2], [1], [1], [2], [0, 0, 0, 1, 1, 2], [0], [0]>} : vector<1x2x2xbf16>, vector<1x2x16xbf16>, vector<1x2x16xf32> -> vector<1x2x16xf32>
    "tpu.trace_stop"() : () -> ()
    %910 = vector.shape_cast %909 : vector<1x2x16xf32> to vector<2x16xf32>
    %911 = vector.extract_strided_slice %749 {offsets = [0, 112], sizes = [2, 16], strides = [1, 1]} : vector<2x384xf32> to vector<2x16xf32>
    %912 = vector.shape_cast %911 : vector<2x16xf32> to vector<1x2x16xf32>
    %913 = vector.extract_strided_slice %749 {offsets = [0, 240], sizes = [2, 16], strides = [1, 1]} : vector<2x384xf32> to vector<2x16xf32>
    %914 = vector.shape_cast %913 : vector<2x16xf32> to vector<1x2x16xf32>
    %915 = vector.extract_strided_slice %749 {offsets = [0, 368], sizes = [2, 16], strides = [1, 1]} : vector<2x384xf32> to vector<2x16xf32>
    %916 = vector.shape_cast %915 : vector<2x16xf32> to vector<1x2x16xf32>
    %917 = arith.truncf %912 : vector<1x2x16xf32> to vector<1x2x16xbf16>
    %918 = arith.truncf %914 : vector<1x2x16xf32> to vector<1x2x16xbf16>
    "tpu.trace_start"() <{level = 10 : i32, message = "bqf,bkf->bqk"}> : () -> ()
    %cst_317 = arith.constant dense<0.000000e+00> : vector<1x2x2xf32>
    %919 = tpu.matmul %917, %918, %cst_317 {dimension_numbers = #tpu.dot_dimension_numbers<[2], [2], [1], [1], [0, 0, 0, 1, 1, 1], [0], [0]>} : vector<1x2x16xbf16>, vector<1x2x16xbf16>, vector<1x2x2xf32> -> vector<1x2x2xf32>
    "tpu.trace_stop"() : () -> ()
    %cst_318 = arith.constant dense<0xFF800000> : vector<1x2xf32>
    %920 = vector.multi_reduction <maximumf>, %919, %cst_318 [2] : vector<1x2x2xf32> to vector<1x2xf32>
    %921 = vector.shape_cast %920 : vector<1x2xf32> to vector<1x2x1xf32>
    %922 = vector.broadcast %921 : vector<1x2x1xf32> to vector<1x2x2xf32>
    %923 = arith.subf %919, %922 : vector<1x2x2xf32>
    %924 = math.exp %923 : vector<1x2x2xf32>
    %cst_319 = arith.constant dense<0.000000e+00> : vector<1x2xf32>
    %925 = vector.multi_reduction <add>, %924, %cst_319 [2] : vector<1x2x2xf32> to vector<1x2xf32>
    %926 = vector.shape_cast %925 : vector<1x2xf32> to vector<1x2x1xf32>
    %927 = tpu.reciprocal %926 {approx = true} : vector<1x2x1xf32> -> vector<1x2x1xf32>
    %928 = vector.broadcast %927 : vector<1x2x1xf32> to vector<1x2x2xf32>
    %929 = arith.mulf %924, %928 : vector<1x2x2xf32>
    %930 = arith.truncf %929 : vector<1x2x2xf32> to vector<1x2x2xbf16>
    %931 = arith.truncf %916 : vector<1x2x16xf32> to vector<1x2x16xbf16>
    "tpu.trace_start"() <{level = 10 : i32, message = "bqk,bkf->bqf"}> : () -> ()
    %cst_320 = arith.constant dense<0.000000e+00> : vector<1x2x16xf32>
    %932 = tpu.matmul %930, %931, %cst_320 {dimension_numbers = #tpu.dot_dimension_numbers<[2], [1], [1], [2], [0, 0, 0, 1, 1, 2], [0], [0]>} : vector<1x2x2xbf16>, vector<1x2x16xbf16>, vector<1x2x16xf32> -> vector<1x2x16xf32>
    "tpu.trace_stop"() : () -> ()
    %933 = vector.shape_cast %932 : vector<1x2x16xf32> to vector<2x16xf32>
    %934 = tpu.concatenate %772, %795, %818, %841, %864, %887, %910, %933 in 1 : vector<2x16xf32>, vector<2x16xf32>, vector<2x16xf32>, vector<2x16xf32>, vector<2x16xf32>, vector<2x16xf32>, vector<2x16xf32>, vector<2x16xf32> -> vector<2x128xf32>
    %935 = arith.truncf %934 : vector<2x128xf32> to vector<2x128xbf16>
    %cst_321 = arith.constant dense<0.000000e+00> : vector<2x128xf32>
    %936 = tpu.matmul %935, %727, %cst_321 {dimension_numbers = #tpu.dot_dimension_numbers<[1], [0], [0], [1], [0, 0, 1, 1], [], []>} : vector<2x128xbf16>, vector<128x128xbf16>, vector<2x128xf32> -> vector<2x128xf32>
    %937 = vector.broadcast %729 : vector<1x128xf32> to vector<2x128xf32>
    %938 = arith.addf %936, %937 : vector<2x128xf32>
    %939 = arith.addf %721, %938 : vector<2x128xf32>
    %cst_322 = arith.constant dense<0.000000e+00> : vector<2xf32>
    %940 = vector.multi_reduction <add>, %939, %cst_322 [1] : vector<2x128xf32> to vector<2xf32>
    %941 = vector.shape_cast %940 : vector<2xf32> to vector<2x1xf32>
    %cst_323 = arith.constant 1.280000e+02 : f32
    %942 = vector.broadcast %cst_323 : f32 to vector<2x1xf32>
    %943 = arith.divf %941, %942 : vector<2x1xf32>
    %944 = vector.broadcast %943 : vector<2x1xf32> to vector<2x128xf32>
    %945 = arith.subf %939, %944 : vector<2x128xf32>
    %946 = arith.mulf %945, %945 : vector<2x128xf32>
    %cst_324 = arith.constant dense<0.000000e+00> : vector<2xf32>
    %947 = vector.multi_reduction <add>, %946, %cst_324 [1] : vector<2x128xf32> to vector<2xf32>
    %948 = vector.shape_cast %947 : vector<2xf32> to vector<2x1xf32>
    %cst_325 = arith.constant 1.280000e+02 : f32
    %949 = vector.broadcast %cst_325 : f32 to vector<2x1xf32>
    %950 = arith.divf %948, %949 : vector<2x1xf32>
    %cst_326 = arith.constant 9.99999974E-6 : f32
    %951 = vector.broadcast %cst_326 : f32 to vector<2x1xf32>
    %952 = arith.addf %950, %951 : vector<2x1xf32>
    %953 = math.rsqrt %952 : vector<2x1xf32>
    %954 = vector.broadcast %953 : vector<2x1xf32> to vector<2x128xf32>
    %955 = arith.mulf %945, %954 : vector<2x128xf32>
    %956 = vector.broadcast %731 : vector<1x128xf32> to vector<2x128xf32>
    %957 = arith.mulf %955, %956 : vector<2x128xf32>
    %958 = vector.broadcast %733 : vector<1x128xf32> to vector<2x128xf32>
    %959 = arith.addf %957, %958 : vector<2x128xf32>
    %960 = arith.truncf %959 : vector<2x128xf32> to vector<2x128xbf16>
    %cst_327 = arith.constant dense<0.000000e+00> : vector<2x256xf32>
    %961 = tpu.matmul %960, %735, %cst_327 {dimension_numbers = #tpu.dot_dimension_numbers<[1], [0], [0], [1], [0, 0, 1, 1], [], []>} : vector<2x128xbf16>, vector<128x256xbf16>, vector<2x256xf32> -> vector<2x256xf32>
    %962 = vector.broadcast %737 : vector<1x256xf32> to vector<2x256xf32>
    %963 = arith.addf %961, %962 : vector<2x256xf32>
    %cst_328 = arith.constant 0.000000e+00 : f32
    %964 = vector.broadcast %cst_328 : f32 to vector<2x256xf32>
    %965 = arith.maximumf %963, %964 : vector<2x256xf32>
    %966 = arith.truncf %965 : vector<2x256xf32> to vector<2x256xbf16>
    %cst_329 = arith.constant dense<0.000000e+00> : vector<2x128xf32>
    %967 = tpu.matmul %966, %739, %cst_329 {dimension_numbers = #tpu.dot_dimension_numbers<[1], [0], [0], [1], [0, 0, 1, 1], [], []>} : vector<2x256xbf16>, vector<256x128xbf16>, vector<2x128xf32> -> vector<2x128xf32>
    %968 = vector.broadcast %741 : vector<1x128xf32> to vector<2x128xf32>
    %969 = arith.addf %967, %968 : vector<2x128xf32>
    %970 = arith.addf %959, %969 : vector<2x128xf32>
    %cst_330 = arith.constant dense<0.000000e+00> : vector<2xf32>
    %971 = vector.multi_reduction <add>, %970, %cst_330 [1] : vector<2x128xf32> to vector<2xf32>
    %972 = vector.shape_cast %971 : vector<2xf32> to vector<2x1xf32>
    %cst_331 = arith.constant 1.280000e+02 : f32
    %973 = vector.broadcast %cst_331 : f32 to vector<2x1xf32>
    %974 = arith.divf %972, %973 : vector<2x1xf32>
    %975 = vector.broadcast %974 : vector<2x1xf32> to vector<2x128xf32>
    %976 = arith.subf %970, %975 : vector<2x128xf32>
    %977 = arith.mulf %976, %976 : vector<2x128xf32>
    %cst_332 = arith.constant dense<0.000000e+00> : vector<2xf32>
    %978 = vector.multi_reduction <add>, %977, %cst_332 [1] : vector<2x128xf32> to vector<2xf32>
    %979 = vector.shape_cast %978 : vector<2xf32> to vector<2x1xf32>
    %cst_333 = arith.constant 1.280000e+02 : f32
    %980 = vector.broadcast %cst_333 : f32 to vector<2x1xf32>
    %981 = arith.divf %979, %980 : vector<2x1xf32>
    %cst_334 = arith.constant 9.99999974E-6 : f32
    %982 = vector.broadcast %cst_334 : f32 to vector<2x1xf32>
    %983 = arith.addf %981, %982 : vector<2x1xf32>
    %984 = math.rsqrt %983 : vector<2x1xf32>
    %985 = vector.broadcast %984 : vector<2x1xf32> to vector<2x128xf32>
    %986 = arith.mulf %976, %985 : vector<2x128xf32>
    %987 = vector.broadcast %743 : vector<1x128xf32> to vector<2x128xf32>
    %988 = arith.mulf %986, %987 : vector<2x128xf32>
    %989 = vector.broadcast %745 : vector<1x128xf32> to vector<2x128xf32>
    %990 = arith.addf %988, %989 : vector<2x128xf32>
    %c0_335 = arith.constant 0 : index
    %c0_336 = arith.constant 0 : index
    %991 = vector.load %arg35[%c0_335, %c0_336] : memref<128x6xf32, #tpu.memory_space<vmem>>, vector<128x6xf32>
    %cst_337 = arith.constant dense<0.000000e+00> : vector<2x6xf32>
    %992 = tpu.matmul %990, %991, %cst_337 {dimension_numbers = #tpu.dot_dimension_numbers<[1], [0], [0], [1], [0, 0, 1, 1], [], []>} : vector<2x128xf32>, vector<128x6xf32>, vector<2x6xf32> -> vector<2x6xf32>
    %c0_338 = arith.constant 0 : index
    %c0_339 = arith.constant 0 : index
    %993 = vector.load %arg36[%c0_338, %c0_339] : memref<1x6xf32, #tpu.memory_space<vmem>>, vector<1x6xf32>
    %994 = vector.broadcast %993 : vector<1x6xf32> to vector<2x6xf32>
    %995 = arith.addf %992, %994 : vector<2x6xf32>
    %c0_340 = arith.constant 0 : index
    %c0_341 = arith.constant 0 : index
    %996 = vector.load %arg37[%c0_340, %c0_341] : memref<2x6xf32, #tpu.memory_space<vmem>>, vector<2x6xf32>
    tpu.vector_store %arg37[%c0_340, %c0_341], %995 {strides = array<i32>} : memref<2x6xf32, #tpu.memory_space<vmem>>, vector<2x6xf32>,
    return
  }
}

</mosaic_0001>

<llo_original>
// kernel: mtt_bertweet3_forward.1
$region0: #{mtt_bertweet3_forward.1}
  #allocation0 [shape = 'u32[]', space=smem, size = 0x4, offset = 0x4, fixed_abs, tag = 'smem constant byte address 0x4 - core index']
  #allocation1 [shape = 'u32[72,128]{1,0:T(1,128)}', space=vmem, size = 0x9000, scoped, tag = 'internal scratch']
  %s0 = inlined_call_operand.smem [shape: u32[38], index: -1, kind: input, shape index: {}]
  %s1 = sld [smem:[%s0]]
  %s2 = scalar_lea.smem %s0, 1
  %s3 = sld [smem:[%s2]]
  %s4 = scalar_lea.smem %s0, 2
  %s5 = sld [smem:[%s4]]
  %s6 = scalar_lea.smem %s0, 3
  %s7 = sld [smem:[%s6]]
  %s8 = scalar_lea.smem %s0, 4
  %s9 = sld [smem:[%s8]]
  %s10 = scalar_lea.smem %s0, 5
  %s11 = sld [smem:[%s10]]
  %s12 = scalar_lea.smem %s0, 6
  %s13 = sld [smem:[%s12]]
  %s14 = scalar_lea.smem %s0, 7
  %s15 = sld [smem:[%s14]]
  %s16 = scalar_lea.smem %s0, 8
  %s17 = sld [smem:[%s16]]
  %s18 = scalar_lea.smem %s0, 9
  %s19 = sld [smem:[%s18]]
  %s20 = scalar_lea.smem %s0, 10
  %s21 = sld [smem:[%s20]]
  %s22 = scalar_lea.smem %s0, 11
  %s23 = sld [smem:[%s22]]
  %s24 = scalar_lea.smem %s0, 12
  %s25 = sld [smem:[%s24]]
  %s26 = scalar_lea.smem %s0, 13
  %s27 = sld [smem:[%s26]]
  %s28 = scalar_lea.smem %s0, 14
  %s29 = sld [smem:[%s28]]
  %s30 = scalar_lea.smem %s0, 15
  %s31 = sld [smem:[%s30]]
  %s32 = scalar_lea.smem %s0, 16
  %s33 = sld [smem:[%s32]]
  %s34 = scalar_lea.smem %s0, 17
  %s35 = sld [smem:[%s34]]
  %s36 = scalar_lea.smem %s0, 18
  %s37 = sld [smem:[%s36]]
  %s38 = scalar_lea.smem %s0, 19
  %s39 = sld [smem:[%s38]]
  %s40 = scalar_lea.smem %s0, 20
  %s41 = sld [smem:[%s40]]
  %s42 = scalar_lea.smem %s0, 21
  %s43 = sld [smem:[%s42]]
  %s44 = scalar_lea.smem %s0, 22
  %s45 = sld [smem:[%s44]]
  %s46 = scalar_lea.smem %s0, 23
  %s47 = sld [smem:[%s46]]
  %s48 = scalar_lea.smem %s0, 24
  %s49 = sld [smem:[%s48]]
  %s50 = scalar_lea.smem %s0, 25
  %s51 = sld [smem:[%s50]]
  %s52 = scalar_lea.smem %s0, 26
  %s53 = sld [smem:[%s52]]
  %s54 = scalar_lea.smem %s0, 27
  %s55 = sld [smem:[%s54]]
  %s56 = scalar_lea.smem %s0, 28
  %s57 = sld [smem:[%s56]]
  %s58 = scalar_lea.smem %s0, 29
  %s59 = sld [smem:[%s58]]
  %s60 = scalar_lea.smem %s0, 30
  %s61 = sld [smem:[%s60]]
  %s62 = scalar_lea.smem %s0, 31
  %s63 = sld [smem:[%s62]]
  %s64 = scalar_lea.smem %s0, 32
  %s65 = sld [smem:[%s64]]
  %s66 = scalar_lea.smem %s0, 33
  %s67 = sld [smem:[%s66]]
  %s68 = scalar_lea.smem %s0, 34
  %s69 = sld [smem:[%s68]]
  %s70 = scalar_lea.smem %s0, 35
  %s71 = sld [smem:[%s70]]
  %s72 = scalar_lea.smem %s0, 36
  %s73 = sld [smem:[%s72]]
  %s74 = scalar_lea.smem %s0, 37
  %s75 = sld [smem:[%s74]]
  %s76 = sld [smem:[#allocation0]]
  $region234: #{mtt_bertweet3_forward.1} parent=0
    _
  %s78 = ssub.s32 1, %s76
  %s79 = scalar_select 0, %s78, %s76
  $region1: #{mtt_bertweet3_forward.1} parent=0
    #allocation2 [shape = 'u8[512]{0}', space=vmem, size = 0x400, scoped, tag = 'input window, operand 7, single buffered']
    #allocation3 [shape = 's32[1]{0}', space=sflag, size = 0x4, scoped, tag = 'scoped memory for mtt_bertweet3_forward.1']
    #allocation4 [shape = 'u8[512]{0}', space=vmem, size = 0x400, scoped, tag = 'input window, operand 8, single buffered']
    #allocation5 [shape = 's32[1]{0}', space=sflag, size = 0x4, scoped, tag = 'scoped memory for mtt_bertweet3_forward.1']
    #allocation6 [shape = 'u8[1024]{0}', space=vmem, size = 0x400, scoped, tag = 'input window, operand 12, single buffered']
    #allocation7 [shape = 'u8[1024]{0}', space=vmem, size = 0x400, scoped, tag = 'input window, operand 13, single buffered']
    #allocation8 [shape = 's32[1]{0}', space=sflag, size = 0x4, scoped, tag = 'scoped memory for mtt_bertweet3_forward.1']
    #allocation9 [shape = 'u8[1024]{0}', space=vmem, size = 0x400, scoped, tag = 'input window, operand 14, single buffered']
    #allocation10 [shape = 'u8[2048]{0}', space=vmem, size = 0x800, scoped, tag = 'input window, operand 16, single buffered']
    #allocation11 [shape = 's32[1]{0}', space=sflag, size = 0x4, scoped, tag = 'scoped memory for mtt_bertweet3_forward.1']
    #allocation12 [shape = 'u8[1024]{0}', space=vmem, size = 0x400, scoped, tag = 'input window, operand 18, single buffered']
    #allocation13 [shape = 'u8[1024]{0}', space=vmem, size = 0x400, scoped, tag = 'input window, operand 19, single buffered']
    #allocation14 [shape = 's32[1]{0}', space=sflag, size = 0x4, scoped, tag = 'scoped memory for mtt_bertweet3_forward.1']
    #allocation15 [shape = 'u8[1024]{0}', space=vmem, size = 0x400, scoped, tag = 'input window, operand 20, single buffered']
    #allocation16 [shape = 'u8[512]{0}', space=vmem, size = 0x400, scoped, tag = 'input window, operand 22, single buffered']
    #allocation17 [shape = 's32[1]{0}', space=sflag, size = 0x4, scoped, tag = 'scoped memory for mtt_bertweet3_forward.1']
    #allocation18 [shape = 'u8[196608]{0}', space=vmem, size = 0x30000, scoped, tag = 'input window, operand 23, single buffered']
    #allocation19 [shape = 'u8[1024]{0}', space=vmem, size = 0x400, scoped, tag = 'input window, operand 26, single buffered']
    #allocation20 [shape = 's32[1]{0}', space=sflag, size = 0x4, scoped, tag = 'scoped memory for mtt_bertweet3_forward.1']
    #allocation21 [shape = 'u8[1024]{0}', space=vmem, size = 0x400, scoped, tag = 'input window, operand 27, single buffered']
    #allocation22 [shape = 'u8[1024]{0}', space=vmem, size = 0x400, scoped, tag = 'input window, operand 28, single buffered']
    #allocation23 [shape = 's32[1]{0}', space=sflag, size = 0x4, scoped, tag = 'scoped memory for mtt_bertweet3_forward.1']
    #allocation24 [shape = 'u8[2048]{0}', space=vmem, size = 0x800, scoped, tag = 'input window, operand 30, single buffered']
    #allocation25 [shape = 'u8[1024]{0}', space=vmem, size = 0x400, scoped, tag = 'input window, operand 32, single buffered']
    #allocation26 [shape = 's32[1]{0}', space=sflag, size = 0x4, scoped, tag = 'scoped memory for mtt_bertweet3_forward.1']
    #allocation27 [shape = 'u8[1024]{0}', space=vmem, size = 0x400, scoped, tag = 'input window, operand 33, single buffered']
    #allocation28 [shape = 'u8[1024]{0}', space=vmem, size = 0x400, scoped, tag = 'input window, operand 34, single buffered']
    #allocation29 [shape = 's32[1]{0}', space=sflag, size = 0x4, scoped, tag = 'scoped memory for mtt_bertweet3_forward.1']
    #allocation30 [shape = 'u8[512]{0}', space=vmem, size = 0x400, scoped, tag = 'input window, operand 36, single buffered']
    %80 = vsyncpa [#allocation3], 0
    %81 = vsyncpa [#allocation5], 0
    %82 = vsyncpa [#allocation8], 0
    %83 = vsyncpa [#allocation11], 0
    %84 = vsyncpa [#allocation14], 0
    %85 = vsyncpa [#allocation17], 0
    %86 = vsyncpa [#allocation20], 0
    %87 = vsyncpa [#allocation23], 0
    %88 = vsyncpa [#allocation26], 0
    %89 = vsyncpa [#allocation29], 0
    // Predicated region
    $region2: #{mtt_bertweet3_forward.1} parent=1 // pred_check
      _
    $region3: #{mtt_bertweet3_forward.1} parent=1 // pred_check_branch
      %91 = sbr.rel (0) target = $region5
    $region4: #{mtt_bertweet3_forward.1} parent=1 // pred_region
      _
    $region5: #{mtt_bertweet3_forward.1} parent=1 // pred_fallthru
      _
    // Predicated region
    $region6: #{mtt_bertweet3_forward.1} parent=1 // pred_check
      _
    $region7: #{mtt_bertweet3_forward.1} parent=1 // pred_check_branch
      %93 = sbr.rel (0) target = $region9
    $region8: #{mtt_bertweet3_forward.1} parent=1 // pred_region
      _
    $region9: #{mtt_bertweet3_forward.1} parent=1 // pred_fallthru
      _
    // Predicated region
    $region10: #{mtt_bertweet3_forward.1} parent=1 // pred_check
      _
    $region11: #{mtt_bertweet3_forward.1} parent=1 // pred_check_branch
      %95 = sbr.rel (0) target = $region13
    $region12: #{mtt_bertweet3_forward.1} parent=1 // pred_region
      _
    $region13: #{mtt_bertweet3_forward.1} parent=1 // pred_fallthru
      _
    // Predicated region
    $region14: #{mtt_bertweet3_forward.1} parent=1 // pred_check
      _
    $region15: #{mtt_bertweet3_forward.1} parent=1 // pred_check_branch
      %97 = sbr.rel (0) target = $region17
    $region16: #{mtt_bertweet3_forward.1} parent=1 // pred_region
      _
    $region17: #{mtt_bertweet3_forward.1} parent=1 // pred_fallthru
      _
    // Predicated region
    $region18: #{mtt_bertweet3_forward.1} parent=1 // pred_check
      _
    $region19: #{mtt_bertweet3_forward.1} parent=1 // pred_check_branch
      %99 = sbr.rel (0) target = $region21
    $region20: #{mtt_bertweet3_forward.1} parent=1 // pred_region
      _
    $region21: #{mtt_bertweet3_forward.1} parent=1 // pred_fallthru
      _
    // Predicated region
    $region22: #{mtt_bertweet3_forward.1} parent=1 // pred_check
      _
    $region23: #{mtt_bertweet3_forward.1} parent=1 // pred_check_branch
      %101 = sbr.rel (0) target = $region25
    $region24: #{mtt_bertweet3_forward.1} parent=1 // pred_region
      _
    $region25: #{mtt_bertweet3_forward.1} parent=1 // pred_fallthru
      _
    // Predicated region
    $region26: #{mtt_bertweet3_forward.1} parent=1 // pred_check
      _
    $region27: #{mtt_bertweet3_forward.1} parent=1 // pred_check_branch
      %103 = sbr.rel (0) target = $region29
    $region28: #{mtt_bertweet3_forward.1} parent=1 // pred_region
      _
    $region29: #{mtt_bertweet3_forward.1} parent=1 // pred_fallthru
      _
    // Predicated region
    $region30: #{mtt_bertweet3_forward.1} parent=1 // pred_check
      _
    $region31: #{mtt_bertweet3_forward.1} parent=1 // pred_check_branch
      %105 = sbr.rel (0) target = $region33
    $region32: #{mtt_bertweet3_forward.1} parent=1 // pred_region
      %107 = vsyncadd [#allocation3], 0
      %s109 = sshll.u32 %s15, 4
      %s110 = int_to_ptr.hbm [resolvable:$true] %s109
      %s111 = sshll.u32 [#allocation2], 4
      %s112 = int_to_ptr.vmem [resolvable:$true] %s111
      %114 = dma.hbm_to_vmem [thread:$0]  %s110, 16, %s112, [#allocation3]
    $region33: #{mtt_bertweet3_forward.1} parent=1 // pred_fallthru
      _
    // Predicated region
    $region34: #{mtt_bertweet3_forward.1} parent=1 // pred_check
      _
    $region35: #{mtt_bertweet3_forward.1} parent=1 // pred_check_branch
      %116 = sbr.rel (0) target = $region37
    $region36: #{mtt_bertweet3_forward.1} parent=1 // pred_region
      %118 = vsyncadd [#allocation5], 0
      %s120 = sshll.u32 %s17, 4
      %s121 = int_to_ptr.hbm [resolvable:$true] %s120
      %s122 = sshll.u32 [#allocation4], 4
      %s123 = int_to_ptr.vmem [resolvable:$true] %s122
      %125 = dma.hbm_to_vmem [thread:$0]  %s121, 16, %s123, [#allocation5]
    $region37: #{mtt_bertweet3_forward.1} parent=1 // pred_fallthru
      _
    // Predicated region
    $region38: #{mtt_bertweet3_forward.1} parent=1 // pred_check
      _
    $region39: #{mtt_bertweet3_forward.1} parent=1 // pred_check_branch
      %127 = sbr.rel (0) target = $region41
    $region40: #{mtt_bertweet3_forward.1} parent=1 // pred_region
      _
    $region41: #{mtt_bertweet3_forward.1} parent=1 // pred_fallthru
      _
    // Predicated region
    $region42: #{mtt_bertweet3_forward.1} parent=1 // pred_check
      _
    $region43: #{mtt_bertweet3_forward.1} parent=1 // pred_check_branch
      %129 = sbr.rel (0) target = $region45
    $region44: #{mtt_bertweet3_forward.1} parent=1 // pred_region
      _
    $region45: #{mtt_bertweet3_forward.1} parent=1 // pred_fallthru
      _
    // Predicated region
    $region46: #{mtt_bertweet3_forward.1} parent=1 // pred_check
      _
    $region47: #{mtt_bertweet3_forward.1} parent=1 // pred_check_branch
      %131 = sbr.rel (0) target = $region49
    $region48: #{mtt_bertweet3_forward.1} parent=1 // pred_region
      _
    $region49: #{mtt_bertweet3_forward.1} parent=1 // pred_fallthru
      _
    // Predicated region
    $region50: #{mtt_bertweet3_forward.1} parent=1 // pred_check
      _
    $region51: #{mtt_bertweet3_forward.1} parent=1 // pred_check_branch
      %133 = sbr.rel (0) target = $region53
    $region52: #{mtt_bertweet3_forward.1} parent=1 // pred_region
      %135 = vsyncadd [#allocation5], 0
      %s136 = sshll.u32 %s25, 4
      %s137 = int_to_ptr.hbm [resolvable:$true] %s136
      %s138 = sshll.u32 [#allocation6], 4
      %s139 = int_to_ptr.vmem [resolvable:$true] %s138
      %144 = dma.hbm_to_vmem [thread:$0]  %s137, 32, %s139, [#allocation5], 16, 16, 1
    $region53: #{mtt_bertweet3_forward.1} parent=1 // pred_fallthru
      _
    // Predicated region
    $region54: #{mtt_bertweet3_forward.1} parent=1 // pred_check
      _
    $region55: #{mtt_bertweet3_forward.1} parent=1 // pred_check_branch
      %146 = sbr.rel (0) target = $region57
    $region56: #{mtt_bertweet3_forward.1} parent=1 // pred_region
      %148 = vsyncadd [#allocation8], 0
      %s149 = sshll.u32 %s27, 4
      %s150 = int_to_ptr.hbm [resolvable:$true] %s149
      %s151 = sshll.u32 [#allocation7], 4
      %s152 = int_to_ptr.vmem [resolvable:$true] %s151
      %157 = dma.hbm_to_vmem [thread:$0]  %s150, 32, %s152, [#allocation8], 16, 16, 1
    $region57: #{mtt_bertweet3_forward.1} parent=1 // pred_fallthru
      _
    // Predicated region
    $region58: #{mtt_bertweet3_forward.1} parent=1 // pred_check
      _
    $region59: #{mtt_bertweet3_forward.1} parent=1 // pred_check_branch
      %159 = sbr.rel (0) target = $region61
    $region60: #{mtt_bertweet3_forward.1} parent=1 // pred_region
      %161 = vsyncadd [#allocation8], 0
      %s162 = sshll.u32 %s29, 4
      %s163 = int_to_ptr.hbm [resolvable:$true] %s162
      %s164 = sshll.u32 [#allocation9], 4
      %s165 = int_to_ptr.vmem [resolvable:$true] %s164
      %170 = dma.hbm_to_vmem [thread:$0]  %s163, 32, %s165, [#allocation8], 16, 16, 1
    $region61: #{mtt_bertweet3_forward.1} parent=1 // pred_fallthru
      _
    // Predicated region
    $region62: #{mtt_bertweet3_forward.1} parent=1 // pred_check
      _
    $region63: #{mtt_bertweet3_forward.1} parent=1 // pred_check_branch
      %172 = sbr.rel (0) target = $region65
    $region64: #{mtt_bertweet3_forward.1} parent=1 // pred_region
      _
    $region65: #{mtt_bertweet3_forward.1} parent=1 // pred_fallthru
      _
    // Predicated region
    $region66: #{mtt_bertweet3_forward.1} parent=1 // pred_check
      _
    $region67: #{mtt_bertweet3_forward.1} parent=1 // pred_check_branch
      %174 = sbr.rel (0) target = $region69
    $region68: #{mtt_bertweet3_forward.1} parent=1 // pred_region
      %176 = vsyncadd [#allocation11], 0
      %s177 = sshll.u32 %s33, 4
      %s178 = int_to_ptr.hbm [resolvable:$true] %s177
      %s179 = sshll.u32 [#allocation10], 4
      %s180 = int_to_ptr.vmem [resolvable:$true] %s179
      %185 = dma.hbm_to_vmem [thread:$0]  %s178, 64, %s180, [#allocation11], 32, 32, 2
    $region69: #{mtt_bertweet3_forward.1} parent=1 // pred_fallthru
      _
    // Predicated region
    $region70: #{mtt_bertweet3_forward.1} parent=1 // pred_check
      _
    $region71: #{mtt_bertweet3_forward.1} parent=1 // pred_check_branch
      %187 = sbr.rel (0) target = $region73
    $region72: #{mtt_bertweet3_forward.1} parent=1 // pred_region
      _
    $region73: #{mtt_bertweet3_forward.1} parent=1 // pred_fallthru
      _
    // Predicated region
    $region74: #{mtt_bertweet3_forward.1} parent=1 // pred_check
      _
    $region75: #{mtt_bertweet3_forward.1} parent=1 // pred_check_branch
      %189 = sbr.rel (0) target = $region77
    $region76: #{mtt_bertweet3_forward.1} parent=1 // pred_region
      %191 = vsyncadd [#allocation11], 0
      %s192 = sshll.u32 %s37, 4
      %s193 = int_to_ptr.hbm [resolvable:$true] %s192
      %s194 = sshll.u32 [#allocation12], 4
      %s195 = int_to_ptr.vmem [resolvable:$true] %s194
      %200 = dma.hbm_to_vmem [thread:$0]  %s193, 32, %s195, [#allocation11], 16, 16, 1
    $region77: #{mtt_bertweet3_forward.1} parent=1 // pred_fallthru
      _
    // Predicated region
    $region78: #{mtt_bertweet3_forward.1} parent=1 // pred_check
      _
    $region79: #{mtt_bertweet3_forward.1} parent=1 // pred_check_branch
      %202 = sbr.rel (0) target = $region81
    $region80: #{mtt_bertweet3_forward.1} parent=1 // pred_region
      %204 = vsyncadd [#allocation14], 0
      %s205 = sshll.u32 %s39, 4
      %s206 = int_to_ptr.hbm [resolvable:$true] %s205
      %s207 = sshll.u32 [#allocation13], 4
      %s208 = int_to_ptr.vmem [resolvable:$true] %s207
      %213 = dma.hbm_to_vmem [thread:$0]  %s206, 32, %s208, [#allocation14], 16, 16, 1
    $region81: #{mtt_bertweet3_forward.1} parent=1 // pred_fallthru
      _
    // Predicated region
    $region82: #{mtt_bertweet3_forward.1} parent=1 // pred_check
      _
    $region83: #{mtt_bertweet3_forward.1} parent=1 // pred_check_branch
      %215 = sbr.rel (0) target = $region85
    $region84: #{mtt_bertweet3_forward.1} parent=1 // pred_region
      %217 = vsyncadd [#allocation14], 0
      %s218 = sshll.u32 %s41, 4
      %s219 = int_to_ptr.hbm [resolvable:$true] %s218
      %s220 = sshll.u32 [#allocation15], 4
      %s221 = int_to_ptr.vmem [resolvable:$true] %s220
      %226 = dma.hbm_to_vmem [thread:$0]  %s219, 32, %s221, [#allocation14], 16, 16, 1
    $region85: #{mtt_bertweet3_forward.1} parent=1 // pred_fallthru
      _
    // Predicated region
    $region86: #{mtt_bertweet3_forward.1} parent=1 // pred_check
      _
    $region87: #{mtt_bertweet3_forward.1} parent=1 // pred_check_branch
      %228 = sbr.rel (0) target = $region89
    $region88: #{mtt_bertweet3_forward.1} parent=1 // pred_region
      _
    $region89: #{mtt_bertweet3_forward.1} parent=1 // pred_fallthru
      _
    // Predicated region
    $region90: #{mtt_bertweet3_forward.1} parent=1 // pred_check
      _
    $region91: #{mtt_bertweet3_forward.1} parent=1 // pred_check_branch
      %230 = sbr.rel (0) target = $region93
    $region92: #{mtt_bertweet3_forward.1} parent=1 // pred_region
      %232 = vsyncadd [#allocation17], 0
      %s234 = sshll.u32 %s45, 4
      %s235 = int_to_ptr.hbm [resolvable:$true] %s234
      %s236 = sshll.u32 [#allocation16], 4
      %s237 = int_to_ptr.vmem [resolvable:$true] %s236
      %239 = dma.hbm_to_vmem [thread:$0]  %s235, 16, %s237, [#allocation17]
    $region93: #{mtt_bertweet3_forward.1} parent=1 // pred_fallthru
      _
    // Predicated region
    $region94: #{mtt_bertweet3_forward.1} parent=1 // pred_check
      _
    $region95: #{mtt_bertweet3_forward.1} parent=1 // pred_check_branch
      %241 = sbr.rel (0) target = $region97
    $region96: #{mtt_bertweet3_forward.1} parent=1 // pred_region
      %243 = vsyncadd [#allocation17], 0
      %s244 = sshll.u32 %s47, 4
      %s245 = int_to_ptr.hbm [resolvable:$true] %s244
      %s246 = sshll.u32 [#allocation18], 4
      %s247 = int_to_ptr.vmem [resolvable:$true] %s246
      %252 = dma.hbm_to_vmem [thread:$0]  %s245, 6144, %s247, [#allocation17], 192, 192, 12
    $region97: #{mtt_bertweet3_forward.1} parent=1 // pred_fallthru
      _
    // Predicated region
    $region98: #{mtt_bertweet3_forward.1} parent=1 // pred_check
      _
    $region99: #{mtt_bertweet3_forward.1} parent=1 // pred_check_branch
      %254 = sbr.rel (0) target = $region101
    $region100: #{mtt_bertweet3_forward.1} parent=1 // pred_region
      _
    $region101: #{mtt_bertweet3_forward.1} parent=1 // pred_fallthru
      _
    // Predicated region
    $region102: #{mtt_bertweet3_forward.1} parent=1 // pred_check
      _
    $region103: #{mtt_bertweet3_forward.1} parent=1 // pred_check_branch
      %256 = sbr.rel (0) target = $region105
    $region104: #{mtt_bertweet3_forward.1} parent=1 // pred_region
      _
    $region105: #{mtt_bertweet3_forward.1} parent=1 // pred_fallthru
      _
    // Predicated region
    $region106: #{mtt_bertweet3_forward.1} parent=1 // pred_check
      _
    $region107: #{mtt_bertweet3_forward.1} parent=1 // pred_check_branch
      %258 = sbr.rel (0) target = $region109
    $region108: #{mtt_bertweet3_forward.1} parent=1 // pred_region
      %260 = vsyncadd [#allocation20], 0
      %s261 = sshll.u32 %s53, 4
      %s262 = int_to_ptr.hbm [resolvable:$true] %s261
      %s263 = sshll.u32 [#allocation19], 4
      %s264 = int_to_ptr.vmem [resolvable:$true] %s263
      %269 = dma.hbm_to_vmem [thread:$0]  %s262, 32, %s264, [#allocation20], 16, 16, 1
    $region109: #{mtt_bertweet3_forward.1} parent=1 // pred_fallthru
      _
    // Predicated region
    $region110: #{mtt_bertweet3_forward.1} parent=1 // pred_check
      _
    $region111: #{mtt_bertweet3_forward.1} parent=1 // pred_check_branch
      %271 = sbr.rel (0) target = $region113
    $region112: #{mtt_bertweet3_forward.1} parent=1 // pred_region
      %273 = vsyncadd [#allocation20], 0
      %s274 = sshll.u32 %s55, 4
      %s275 = int_to_ptr.hbm [resolvable:$true] %s274
      %s276 = sshll.u32 [#allocation21], 4
      %s277 = int_to_ptr.vmem [resolvable:$true] %s276
      %282 = dma.hbm_to_vmem [thread:$0]  %s275, 32, %s277, [#allocation20], 16, 16, 1
    $region113: #{mtt_bertweet3_forward.1} parent=1 // pred_fallthru
      _
    // Predicated region
    $region114: #{mtt_bertweet3_forward.1} parent=1 // pred_check
      _
    $region115: #{mtt_bertweet3_forward.1} parent=1 // pred_check_branch
      %284 = sbr.rel (0) target = $region117
    $region116: #{mtt_bertweet3_forward.1} parent=1 // pred_region
      %286 = vsyncadd [#allocation23], 0
      %s287 = sshll.u32 %s57, 4
      %s288 = int_to_ptr.hbm [resolvable:$true] %s287
      %s289 = sshll.u32 [#allocation22], 4
      %s290 = int_to_ptr.vmem [resolvable:$true] %s289
      %295 = dma.hbm_to_vmem [thread:$0]  %s288, 32, %s290, [#allocation23], 16, 16, 1
    $region117: #{mtt_bertweet3_forward.1} parent=1 // pred_fallthru
      _
    // Predicated region
    $region118: #{mtt_bertweet3_forward.1} parent=1 // pred_check
      _
    $region119: #{mtt_bertweet3_forward.1} parent=1 // pred_check_branch
      %297 = sbr.rel (0) target = $region121
    $region120: #{mtt_bertweet3_forward.1} parent=1 // pred_region
      _
    $region121: #{mtt_bertweet3_forward.1} parent=1 // pred_fallthru
      _
    // Predicated region
    $region122: #{mtt_bertweet3_forward.1} parent=1 // pred_check
      _
    $region123: #{mtt_bertweet3_forward.1} parent=1 // pred_check_branch
      %299 = sbr.rel (0) target = $region125
    $region124: #{mtt_bertweet3_forward.1} parent=1 // pred_region
      %301 = vsyncadd [#allocation23], 0
      %s302 = sshll.u32 %s61, 4
      %s303 = int_to_ptr.hbm [resolvable:$true] %s302
      %s304 = sshll.u32 [#allocation24], 4
      %s305 = int_to_ptr.vmem [resolvable:$true] %s304
      %310 = dma.hbm_to_vmem [thread:$0]  %s303, 64, %s305, [#allocation23], 32, 32, 2
    $region125: #{mtt_bertweet3_forward.1} parent=1 // pred_fallthru
      _
    // Predicated region
    $region126: #{mtt_bertweet3_forward.1} parent=1 // pred_check
      _
    $region127: #{mtt_bertweet3_forward.1} parent=1 // pred_check_branch
      %312 = sbr.rel (0) target = $region129
    $region128: #{mtt_bertweet3_forward.1} parent=1 // pred_region
      _
    $region129: #{mtt_bertweet3_forward.1} parent=1 // pred_fallthru
      _
    // Predicated region
    $region130: #{mtt_bertweet3_forward.1} parent=1 // pred_check
      _
    $region131: #{mtt_bertweet3_forward.1} parent=1 // pred_check_branch
      %314 = sbr.rel (0) target = $region133
    $region132: #{mtt_bertweet3_forward.1} parent=1 // pred_region
      %316 = vsyncadd [#allocation26], 0
      %s317 = sshll.u32 %s65, 4
      %s318 = int_to_ptr.hbm [resolvable:$true] %s317
      %s319 = sshll.u32 [#allocation25], 4
      %s320 = int_to_ptr.vmem [resolvable:$true] %s319
      %325 = dma.hbm_to_vmem [thread:$0]  %s318, 32, %s320, [#allocation26], 16, 16, 1
    $region133: #{mtt_bertweet3_forward.1} parent=1 // pred_fallthru
      _
    // Predicated region
    $region134: #{mtt_bertweet3_forward.1} parent=1 // pred_check
      _
    $region135: #{mtt_bertweet3_forward.1} parent=1 // pred_check_branch
      %327 = sbr.rel (0) target = $region137
    $region136: #{mtt_bertweet3_forward.1} parent=1 // pred_region
      %329 = vsyncadd [#allocation26], 0
      %s330 = sshll.u32 %s67, 4
      %s331 = int_to_ptr.hbm [resolvable:$true] %s330
      %s332 = sshll.u32 [#allocation27], 4
      %s333 = int_to_ptr.vmem [resolvable:$true] %s332
      %338 = dma.hbm_to_vmem [thread:$0]  %s331, 32, %s333, [#allocation26], 16, 16, 1
    $region137: #{mtt_bertweet3_forward.1} parent=1 // pred_fallthru
      _
    // Predicated region
    $region138: #{mtt_bertweet3_forward.1} parent=1 // pred_check
      _
    $region139: #{mtt_bertweet3_forward.1} parent=1 // pred_check_branch
      %340 = sbr.rel (0) target = $region141
    $region140: #{mtt_bertweet3_forward.1} parent=1 // pred_region
      %342 = vsyncadd [#allocation29], 0
      %s343 = sshll.u32 %s69, 4
      %s344 = int_to_ptr.hbm [resolvable:$true] %s343
      %s345 = sshll.u32 [#allocation28], 4
      %s346 = int_to_ptr.vmem [resolvable:$true] %s345
      %351 = dma.hbm_to_vmem [thread:$0]  %s344, 32, %s346, [#allocation29], 16, 16, 1
    $region141: #{mtt_bertweet3_forward.1} parent=1 // pred_fallthru
      _
    // Predicated region
    $region142: #{mtt_bertweet3_forward.1} parent=1 // pred_check
      _
    $region143: #{mtt_bertweet3_forward.1} parent=1 // pred_check_branch
      %353 = sbr.rel (0) target = $region145
    $region144: #{mtt_bertweet3_forward.1} parent=1 // pred_region
      _
    $region145: #{mtt_bertweet3_forward.1} parent=1 // pred_fallthru
      _
    // Predicated region
    $region146: #{mtt_bertweet3_forward.1} parent=1 // pred_check
      _
    $region147: #{mtt_bertweet3_forward.1} parent=1 // pred_check_branch
      %355 = sbr.rel (0) target = $region149
    $region148: #{mtt_bertweet3_forward.1} parent=1 // pred_region
      %357 = vsyncadd [#allocation29], 0
      %s359 = sshll.u32 %s73, 4
      %s360 = int_to_ptr.hbm [resolvable:$true] %s359
      %s361 = sshll.u32 [#allocation30], 4
      %s362 = int_to_ptr.vmem [resolvable:$true] %s361
      %364 = dma.hbm_to_vmem [thread:$0]  %s360, 16, %s362, [#allocation29]
    $region149: #{mtt_bertweet3_forward.1} parent=1 // pred_fallthru
      _
    // Predicated region
    $region150: #{mtt_bertweet3_forward.1} parent=1 // pred_check
      _
    $region151: #{mtt_bertweet3_forward.1} parent=1 // pred_check_branch
      %366 = sbr.rel (0) target = $region153
    $region152: #{mtt_bertweet3_forward.1} parent=1 // pred_region
      %368 = dma.done [#allocation3], 16
    $region153: #{mtt_bertweet3_forward.1} parent=1 // pred_fallthru
      _
    // Predicated region
    $region154: #{mtt_bertweet3_forward.1} parent=1 // pred_check
      _
    $region155: #{mtt_bertweet3_forward.1} parent=1 // pred_check_branch
      %370 = sbr.rel (0) target = $region157
    $region156: #{mtt_bertweet3_forward.1} parent=1 // pred_region
      %372 = dma.done [#allocation5], 16
    $region157: #{mtt_bertweet3_forward.1} parent=1 // pred_fallthru
      _
    // Predicated region
    $region158: #{mtt_bertweet3_forward.1} parent=1 // pred_check
      _
    $region159: #{mtt_bertweet3_forward.1} parent=1 // pred_check_branch
      %374 = sbr.rel (0) target = $region161
    $region160: #{mtt_bertweet3_forward.1} parent=1 // pred_region
      %376 = dma.done [#allocation5], 32
    $region161: #{mtt_bertweet3_forward.1} parent=1 // pred_fallthru
      _
    // Predicated region
    $region162: #{mtt_bertweet3_forward.1} parent=1 // pred_check
      _
    $region163: #{mtt_bertweet3_forward.1} parent=1 // pred_check_branch
      %378 = sbr.rel (0) target = $region165
    $region164: #{mtt_bertweet3_forward.1} parent=1 // pred_region
      %380 = dma.done [#allocation8], 32
    $region165: #{mtt_bertweet3_forward.1} parent=1 // pred_fallthru
      _
    // Predicated region
    $region166: #{mtt_bertweet3_forward.1} parent=1 // pred_check
      _
    $region167: #{mtt_bertweet3_forward.1} parent=1 // pred_check_branch
      %382 = sbr.rel (0) target = $region169
    $region168: #{mtt_bertweet3_forward.1} parent=1 // pred_region
      %384 = dma.done [#allocation8], 32
    $region169: #{mtt_bertweet3_forward.1} parent=1 // pred_fallthru
      _
    // Predicated region
    $region170: #{mtt_bertweet3_forward.1} parent=1 // pred_check
      _
    $region171: #{mtt_bertweet3_forward.1} parent=1 // pred_check_branch
      %386 = sbr.rel (0) target = $region173
    $region172: #{mtt_bertweet3_forward.1} parent=1 // pred_region
      %388 = dma.done [#allocation11], 64
    $region173: #{mtt_bertweet3_forward.1} parent=1 // pred_fallthru
      _
    // Predicated region
    $region174: #{mtt_bertweet3_forward.1} parent=1 // pred_check
      _
    $region175: #{mtt_bertweet3_forward.1} parent=1 // pred_check_branch
      %390 = sbr.rel (0) target = $region177
    $region176: #{mtt_bertweet3_forward.1} parent=1 // pred_region
      %392 = dma.done [#allocation11], 32
    $region177: #{mtt_bertweet3_forward.1} parent=1 // pred_fallthru
      _
    // Predicated region
    $region178: #{mtt_bertweet3_forward.1} parent=1 // pred_check
      _
    $region179: #{mtt_bertweet3_forward.1} parent=1 // pred_check_branch
      %394 = sbr.rel (0) target = $region181
    $region180: #{mtt_bertweet3_forward.1} parent=1 // pred_region
      %396 = dma.done [#allocation14], 32
    $region181: #{mtt_bertweet3_forward.1} parent=1 // pred_fallthru
      _
    // Predicated region
    $region182: #{mtt_bertweet3_forward.1} parent=1 // pred_check
      _
    $region183: #{mtt_bertweet3_forward.1} parent=1 // pred_check_branch
      %398 = sbr.rel (0) target = $region185
    $region184: #{mtt_bertweet3_forward.1} parent=1 // pred_region
      %400 = dma.done [#allocation14], 32
    $region185: #{mtt_bertweet3_forward.1} parent=1 // pred_fallthru
      _
    // Predicated region
    $region186: #{mtt_bertweet3_forward.1} parent=1 // pred_check
      _
    $region187: #{mtt_bertweet3_forward.1} parent=1 // pred_check_branch
      %402 = sbr.rel (0) target = $region189
    $region188: #{mtt_bertweet3_forward.1} parent=1 // pred_region
      %404 = dma.done [#allocation17], 16
    $region189: #{mtt_bertweet3_forward.1} parent=1 // pred_fallthru
      _
    // Predicated region
    $region190: #{mtt_bertweet3_forward.1} parent=1 // pred_check
      _
    $region191: #{mtt_bertweet3_forward.1} parent=1 // pred_check_branch
      %406 = sbr.rel (0) target = $region193
    $region192: #{mtt_bertweet3_forward.1} parent=1 // pred_region
      %408 = dma.done [#allocation17], 6144
    $region193: #{mtt_bertweet3_forward.1} parent=1 // pred_fallthru
      _
    // Predicated region
    $region194: #{mtt_bertweet3_forward.1} parent=1 // pred_check
      _
    $region195: #{mtt_bertweet3_forward.1} parent=1 // pred_check_branch
      %410 = sbr.rel (0) target = $region197
    $region196: #{mtt_bertweet3_forward.1} parent=1 // pred_region
      %412 = dma.done [#allocation20], 32
    $region197: #{mtt_bertweet3_forward.1} parent=1 // pred_fallthru
      _
    // Predicated region
    $region198: #{mtt_bertweet3_forward.1} parent=1 // pred_check
      _
    $region199: #{mtt_bertweet3_forward.1} parent=1 // pred_check_branch
      %414 = sbr.rel (0) target = $region201
    $region200: #{mtt_bertweet3_forward.1} parent=1 // pred_region
      %416 = dma.done [#allocation20], 32
    $region201: #{mtt_bertweet3_forward.1} parent=1 // pred_fallthru
      _
    // Predicated region
    $region202: #{mtt_bertweet3_forward.1} parent=1 // pred_check
      _
    $region203: #{mtt_bertweet3_forward.1} parent=1 // pred_check_branch
      %418 = sbr.rel (0) target = $region205
    $region204: #{mtt_bertweet3_forward.1} parent=1 // pred_region
      %420 = dma.done [#allocation23], 32
    $region205: #{mtt_bertweet3_forward.1} parent=1 // pred_fallthru
      _
    // Predicated region
    $region206: #{mtt_bertweet3_forward.1} parent=1 // pred_check
      _
    $region207: #{mtt_bertweet3_forward.1} parent=1 // pred_check_branch
      %422 = sbr.rel (0) target = $region209
    $region208: #{mtt_bertweet3_forward.1} parent=1 // pred_region
      %424 = dma.done [#allocation23], 64
    $region209: #{mtt_bertweet3_forward.1} parent=1 // pred_fallthru
      _
    // Predicated region
    $region210: #{mtt_bertweet3_forward.1} parent=1 // pred_check
      _
    $region211: #{mtt_bertweet3_forward.1} parent=1 // pred_check_branch
      %426 = sbr.rel (0) target = $region213
    $region212: #{mtt_bertweet3_forward.1} parent=1 // pred_region
      %428 = dma.done [#allocation26], 32
    $region213: #{mtt_bertweet3_forward.1} parent=1 // pred_fallthru
      _
    // Predicated region
    $region214: #{mtt_bertweet3_forward.1} parent=1 // pred_check
      _
    $region215: #{mtt_bertweet3_forward.1} parent=1 // pred_check_branch
      %430 = sbr.rel (0) target = $region217
    $region216: #{mtt_bertweet3_forward.1} parent=1 // pred_region
      %432 = dma.done [#allocation26], 32
    $region217: #{mtt_bertweet3_forward.1} parent=1 // pred_fallthru
      _
    // Predicated region
    $region218: #{mtt_bertweet3_forward.1} parent=1 // pred_check
      _
    $region219: #{mtt_bertweet3_forward.1} parent=1 // pred_check_branch
      %434 = sbr.rel (0) target = $region221
    $region220: #{mtt_bertweet3_forward.1} parent=1 // pred_region
      %436 = dma.done [#allocation29], 32
    $region221: #{mtt_bertweet3_forward.1} parent=1 // pred_fallthru
      _
    // Predicated region
    $region222: #{mtt_bertweet3_forward.1} parent=1 // pred_check
      _
    $region223: #{mtt_bertweet3_forward.1} parent=1 // pred_check_branch
      %438 = sbr.rel (0) target = $region225
    $region224: #{mtt_bertweet3_forward.1} parent=1 // pred_region
      %440 = dma.done [#allocation29], 16
    $region225: #{mtt_bertweet3_forward.1} parent=1 // pred_fallthru
      _
    %v442 = vld [vmem:[%s1] sm:$0xff]
    %v443 = vld [vmem:[%s1 + $0x8] sm:$0xff]
    %v444 = vld [vmem:[%s1 + $0x10] sm:$0xff]
    %v445 = vld [vmem:[%s1 + $0x18] sm:$0xff]
    %v446 = vlaneseq
    %v447 = vand.u32 %v446, 127
    %448 = vset.pattern.permute.xlu0 0
    %449 = vperm.xlu0 %448, %v442
    %v450 = vpop.permute.xlu0 %449
    %451 = vset.pattern.permute.xlu0 0
    %452 = vperm.xlu0 %451, %v443
    %v453 = vpop.permute.xlu0 %452
    %454 = vset.pattern.permute.xlu0 0
    %455 = vperm.xlu0 %454, %v444
    %v456 = vpop.permute.xlu0 %455
    %457 = vset.pattern.permute.xlu0 0
    %458 = vperm.xlu0 %457, %v445
    %v459 = vpop.permute.xlu0 %458
    %vm460 = vcmp.eq.s32.totalorder %v450, %v447
    %vm461 = vcmp.eq.s32.totalorder %v453, %v447
    %vm462 = vcmp.eq.s32.totalorder %v456, %v447
    %vm463 = vcmp.eq.s32.totalorder %v459, %v447
    %v464 = vsel %vm460, 1, 0
    %v465 = vsel %vm461, 1, 0
    %v466 = vsel %vm462, 1, 0
    %v467 = vsel %vm463, 1, 0
    %v468 = vcvt.s32.f32 %v464
    %v469 = vcvt.s32.f32 %v465
    %v470 = vcvt.s32.f32 %v466
    %v471 = vcvt.s32.f32 %v467
    %v472 = vld [vmem:[%s11] sm:$0xff]
    %v473 = vld [vmem:[%s11 + $0x8] sm:$0xff]
    %v474 = vld [vmem:[%s11 + $0x10] sm:$0xff]
    %v475 = vld [vmem:[%s11 + $0x18] sm:$0xff]
    %v476 = vld [vmem:[%s11 + $0x20] sm:$0xff]
    %v477 = vld [vmem:[%s11 + $0x28] sm:$0xff]
    %v478 = vld [vmem:[%s11 + $0x30] sm:$0xff]
    %v479 = vld [vmem:[%s11 + $0x38] sm:$0xff]
    %vm480 = vcmask 523264
    %v482 = vsel %vm480, %v468, 0
    %v485 = vsel %vm480, %v469, 0
    %v488 = vsel %vm480, %v470, 0
    %v491 = vsel %vm480, %v471, 0
    %493 = vmatpush.msra.mxu0 0.0
    %494 = vmatpush.msra.mxu0 0.0
    %495 = vmatpush.msra.mxu0 0.0
    %496 = vmatpush.msra.mxu0 0.0
    %497 = vmatpush.msra.mxu0 0.0
    %498 = vmatpush.msra.mxu0 0.0
    %499 = vmatpush.msra.mxu0 0.0
    %500 = vmatpush.msra.mxu0 0.0
    %501 = vmatpush.msra.mxu0 %v479
    %502 = vmatpush.msra.mxu0 %v478
    %503 = vmatpush.msra.mxu0 %v477
    %504 = vmatpush.msra.mxu0 %v476
    %505 = vmatpush.msra.mxu0 %v475
    %506 = vmatpush.msra.mxu0 %v474
    %507 = vmatpush.msra.mxu0 %v473
    %508 = vmatpush.msra.mxu0 %v472
    %509 = vmatmul.f32.gmra.mxu0 %v482
    %v510 = vpop.f32.mrf.mxu0
    %v511 = vadd.f32 0.0, %v510
    %512 = vmatmul.f32.gmra.mxu0 %v485
    %v513 = vpop.f32.mrf.mxu0
    %v514 = vadd.f32 0.0, %v513
    %515 = vmatmul.f32.gmra.mxu0 %v488
    %v516 = vpop.f32.mrf.mxu0
    %v517 = vadd.f32 0.0, %v516
    %518 = vmatmul.f32.gmra.mxu0 %v491
    %v519 = vpop.f32.mrf.mxu0
    %v520 = vadd.f32 0.0, %v519
    %521 = vdwg.mxu0
    %v522 = vld [vmem:[%s13] sm:$0xff]
    %v523 = vadd.f32 %v511, %v522
    %v524 = vadd.f32 %v514, %v522
    %v525 = vadd.f32 %v517, %v522
    %v526 = vadd.f32 %v520, %v522
    %v527 = vld [vmem:[#allocation2] sm:$0x1]
    %v528 = vld [vmem:[#allocation4] sm:$0x1]
    %vm529 = vcmask 490496
    %v530 = vsel %vm529, %v523, 0.0
    %531 = vadd.xlane.f32.xlu0 %v530
    %v532 = vpop.xlane.xlu0 %531
    %v533 = vsel %vm529, %v524, 0.0
    %534 = vadd.xlane.f32.xlu0 %v533
    %v535 = vpop.xlane.xlu0 %534
    %v536 = vsel %vm529, %v525, 0.0
    %537 = vadd.xlane.f32.xlu0 %v536
    %v538 = vpop.xlane.xlu0 %537
    %v539 = vsel %vm529, %v526, 0.0
    %540 = vadd.xlane.f32.xlu0 %v539
    %v541 = vpop.xlane.xlu0 %540
    %v542 = vrcp.pop 60.0
    %v543 = vmul.f32 60.0, %v542
    %v544 = vsub.f32 1.0, %v543
    %v545 = vmul.f32 %v542, %v544
    %v546 = vadd.f32 %v542, %v545
    %vm547 = vweird.f32 %v542
    %v548 = vsel %vm547, %v542, %v546
    %v549 = vmul.f32 %v532, %v548
    %v550 = vmul.f32 %v535, %v548
    %v551 = vmul.f32 %v538, %v548
    %v552 = vmul.f32 %v541, %v548
    %v553 = vsub.f32 %v523, %v549
    %v554 = vsub.f32 %v524, %v550
    %v555 = vsub.f32 %v525, %v551
    %v556 = vsub.f32 %v526, %v552
    %v557 = vmul.f32 %v553, %v553
    %v558 = vmul.f32 %v554, %v554
    %v559 = vmul.f32 %v555, %v555
    %v560 = vmul.f32 %v556, %v556
    %v561 = vsel %vm529, %v557, 0.0
    %562 = vadd.xlane.f32.xlu0 %v561
    %v563 = vpop.xlane.xlu0 %562
    %v564 = vsel %vm529, %v558, 0.0
    %565 = vadd.xlane.f32.xlu0 %v564
    %v566 = vpop.xlane.xlu0 %565
    %v567 = vsel %vm529, %v559, 0.0
    %568 = vadd.xlane.f32.xlu0 %v567
    %v569 = vpop.xlane.xlu0 %568
    %v570 = vsel %vm529, %v560, 0.0
    %571 = vadd.xlane.f32.xlu0 %v570
    %v572 = vpop.xlane.xlu0 %571
    %v573 = vmul.f32 %v563, %v548
    %v574 = vmul.f32 %v566, %v548
    %v575 = vmul.f32 %v569, %v548
    %v576 = vmul.f32 %v572, %v548
    %v577 = vadd.f32 %v573, 1e-05
    %v578 = vadd.f32 %v574, 1e-05
    %v579 = vadd.f32 %v575, 1e-05
    %v580 = vadd.f32 %v576, 1e-05
    %v581 = vrsqrt.pop %v577
    %v582 = vmul.f32 %v581, %v577
    %v583 = vmul.f32 %v582, %v581
    %v584 = vmul.f32 0.5, %v583
    %v585 = vsub.f32 1.5, %v584
    %v586 = vmul.f32 %v581, %v585
    %vm587 = vweird.f32 %v577
    %vm588 = vweird.f32 %v581
    %vm589 = vmor %vm587, %vm588
    %v590 = vsel %vm589, %v581, %v586
    %v591 = vrsqrt.pop %v578
    %v592 = vmul.f32 %v591, %v578
    %v593 = vmul.f32 %v592, %v591
    %v594 = vmul.f32 0.5, %v593
    %v595 = vsub.f32 1.5, %v594
    %v596 = vmul.f32 %v591, %v595
    %vm597 = vweird.f32 %v578
    %vm598 = vweird.f32 %v591
    %vm599 = vmor %vm597, %vm598
    %v600 = vsel %vm599, %v591, %v596
    %v601 = vrsqrt.pop %v579
    %v602 = vmul.f32 %v601, %v579
    %v603 = vmul.f32 %v602, %v601
    %v604 = vmul.f32 0.5, %v603
    %v605 = vsub.f32 1.5, %v604
    %v606 = vmul.f32 %v601, %v605
    %vm607 = vweird.f32 %v579
    %vm608 = vweird.f32 %v601
    %vm609 = vmor %vm607, %vm608
    %v610 = vsel %vm609, %v601, %v606
    %v611 = vrsqrt.pop %v580
    %v612 = vmul.f32 %v611, %v580
    %v613 = vmul.f32 %v612, %v611
    %v614 = vmul.f32 0.5, %v613
    %v615 = vsub.f32 1.5, %v614
    %v616 = vmul.f32 %v611, %v615
    %vm617 = vweird.f32 %v580
    %vm618 = vweird.f32 %v611
    %vm619 = vmor %vm617, %vm618
    %v620 = vsel %vm619, %v611, %v616
    %v621 = vmul.f32 %v553, %v590
    %v622 = vmul.f32 %v554, %v600
    %v623 = vmul.f32 %v555, %v610
    %v624 = vmul.f32 %v556, %v620
    %v626 = vperm.slane %v527, 0
    %v628 = vmul.f32 %v621, %v626
    %v629 = vmul.f32 %v622, %v626
    %v630 = vmul.f32 %v623, %v626
    %v631 = vmul.f32 %v624, %v626
    %v633 = vperm.slane %v528, 0
    %v635 = vadd.f32 %v628, %v633
    %v636 = vadd.f32 %v629, %v633
    %v637 = vadd.f32 %v630, %v633
    %v638 = vadd.f32 %v631, %v633
    %v639 = vld [vmem:[%s3] sm:$0xf]
    %vm640 = vcmp.gt.s32.totalorder %v639, 0
    %v641 = vsel %vm640, 0.0, -1e+09
    %v642 = vld [vmem:[%s19] sm:$0xff]
    %v643 = vld [vmem:[%s19 + $0x8] sm:$0xff]
    %v644 = vld [vmem:[%s19 + $0x10] sm:$0xff]
    %v645 = vld [vmem:[%s19 + $0x18] sm:$0xff]
    %v646 = vld [vmem:[%s19 + $0x20] sm:$0xff]
    %v647 = vld [vmem:[%s19 + $0x28] sm:$0xff]
    %v648 = vld [vmem:[%s19 + $0x30] sm:$0xff]
    %v649 = vld [vmem:[%s19 + $0x38] sm:$0x33]
    %v650 = vld [vmem:[%s21] sm:$0x3]
    %v651 = vld [vmem:[%s23] sm:$0xf]
    %v652 = vld [vmem:[%s23 + $0x4] sm:$0xf]
    %v653 = vld [vmem:[%s23 + $0x8] sm:$0xf]
    %v654 = vld [vmem:[%s23 + $0xc] sm:$0xf]
    %v655 = vld [vmem:[%s23 + $0x10] sm:$0xf]
    %v656 = vld [vmem:[%s23 + $0x14] sm:$0xf]
    %v657 = vld [vmem:[%s23 + $0x18] sm:$0xf]
    %v658 = vld [vmem:[%s23 + $0x1c] sm:$0xf]
    %v659 = vld [vmem:[#allocation6] sm:$0x1]
    %v660 = vld [vmem:[#allocation7] sm:$0x1]
    %v661 = vld [vmem:[#allocation9] sm:$0x1]
    %v662 = vld [vmem:[%s31] sm:$0xff]
    %v663 = vld [vmem:[%s31 + $0x8] sm:$0xff]
    %v664 = vld [vmem:[%s31 + $0x10] sm:$0xff]
    %v665 = vld [vmem:[%s31 + $0x18] sm:$0xff]
    %v666 = vld [vmem:[%s31 + $0x20] sm:$0xff]
    %v667 = vld [vmem:[%s31 + $0x28] sm:$0xff]
    %v668 = vld [vmem:[%s31 + $0x30] sm:$0xff]
    %v669 = vld [vmem:[%s31 + $0x38] sm:$0x33]
    %v670 = vld [vmem:[#allocation10] sm:$0x3]
    %v671 = vld [vmem:[%s35] sm:$0xf]
    %v672 = vld [vmem:[%s35 + $0x4] sm:$0xf]
    %v673 = vld [vmem:[%s35 + $0x8] sm:$0xf]
    %v674 = vld [vmem:[%s35 + $0xc] sm:$0xf]
    %v675 = vld [vmem:[%s35 + $0x10] sm:$0xf]
    %v676 = vld [vmem:[%s35 + $0x14] sm:$0xf]
    %v677 = vld [vmem:[%s35 + $0x18] sm:$0xf]
    %v678 = vld [vmem:[%s35 + $0x1c] sm:$0xf]
    %v679 = vld [vmem:[%s35 + $0x20] sm:$0xf]
    %v680 = vld [vmem:[%s35 + $0x24] sm:$0xf]
    %v681 = vld [vmem:[%s35 + $0x28] sm:$0xf]
    %v682 = vld [vmem:[%s35 + $0x2c] sm:$0xf]
    %v683 = vld [vmem:[%s35 + $0x30] sm:$0xf]
    %v684 = vld [vmem:[%s35 + $0x34] sm:$0xf]
    %v685 = vld [vmem:[%s35 + $0x38] sm:$0xf]
    %v686 = vld [vmem:[%s35 + $0x3c] sm:$0xf]
    %v687 = vld [vmem:[%s35 + $0x40] sm:$0xf]
    %v688 = vld [vmem:[%s35 + $0x44] sm:$0xf]
    %v689 = vld [vmem:[%s35 + $0x48] sm:$0xf]
    %v690 = vld [vmem:[%s35 + $0x4c] sm:$0xf]
    %v691 = vld [vmem:[%s35 + $0x50] sm:$0xf]
    %v692 = vld [vmem:[%s35 + $0x54] sm:$0xf]
    %v693 = vld [vmem:[%s35 + $0x58] sm:$0xf]
    %v694 = vld [vmem:[%s35 + $0x5c] sm:$0xf]
    %v695 = vld [vmem:[%s35 + $0x60] sm:$0xf]
    %v696 = vld [vmem:[%s35 + $0x64] sm:$0xf]
    %v697 = vld [vmem:[%s35 + $0x68] sm:$0xf]
    %v698 = vld [vmem:[%s35 + $0x6c] sm:$0xf]
    %v699 = vld [vmem:[%s35 + $0x70] sm:$0xf]
    %v700 = vld [vmem:[%s35 + $0x74] sm:$0xf]
    %v701 = vld [vmem:[#allocation12] sm:$0x1]
    %v702 = vld [vmem:[#allocation13] sm:$0x1]
    %v703 = vld [vmem:[#allocation15] sm:$0x1]
    %v704 = vpack.c.bf16 %v636, %v635
    %v705 = vpack.c.bf16 %v638, %v637
    %v707 = vperm.slane %v650, 0
    %v708 = vperm.slane %v650, 1
    %v719 = vunpack.c.l.b16 %v642
    %v720 = vunpack.c.h.b16 %v642
    %v721 = vunpack.c.l.b16 %v643
    %v722 = vunpack.c.h.b16 %v643
    %v723 = vunpack.c.l.b16 %v644
    %v724 = vunpack.c.h.b16 %v644
    %v725 = vunpack.c.l.b16 %v645
    %v726 = vunpack.c.h.b16 %v645
    %v727 = vunpack.c.l.b16 %v646
    %v728 = vunpack.c.h.b16 %v646
    %v729 = vunpack.c.l.b16 %v647
    %v730 = vunpack.c.h.b16 %v647
    %v731 = vunpack.c.l.b16 %v648
    %v732 = vunpack.c.h.b16 %v648
    %v733 = vunpack.c.l.b16 %v649
    %v734 = vunpack.c.h.b16 %v649
    %v735 = vpack.c.b16 %v721, %v719
    %v736 = vpack.c.b16 %v722, %v720
    %v737 = vpack.c.b16 %v725, %v723
    %v738 = vpack.c.b16 %v726, %v724
    %v739 = vpack.c.b16 %v729, %v727
    %v740 = vpack.c.b16 %v730, %v728
    %v741 = vpack.c.b16 %v733, %v731
    %v742 = vpack.c.b16 %v734, %v732
    %v750 = vsel %vm529, %v704, 0
    %v753 = vsel %vm529, %v705, 0
    %vm755 = vcmask 1045504
    %v757 = vsel %vm755, %v741, 0
    %v760 = vsel %vm755, %v742, 0
    %762 = vmatpush.bf16.msra.mxu0 0
    %763 = vmatpush.bf16.msra.mxu0 0
    %764 = vmatpush.bf16.msra.mxu0 0
    %765 = vmatpush.bf16.msra.mxu0 0
    %766 = vmatpush.bf16.msra.mxu0 %v757
    %767 = vmatpush.bf16.msra.mxu0 %v739
    %768 = vmatpush.bf16.msra.mxu0 %v737
    %769 = vmatpush.bf16.msra.mxu0 %v735
    %770 = vmatmul.bf16.gmra.mxu0 %v750
    %v771 = vpop.f32.mrf.mxu0
    %v772 = vadd.f32 %v707, %v771
    %v773 = vpop.f32.mrf.mxu0
    %v774 = vadd.f32 %v707, %v773
    %775 = vmatmul.bf16.gmra.mxu0 %v753
    %v776 = vpop.f32.mrf.mxu0
    %v777 = vadd.f32 %v707, %v776
    %v778 = vpop.f32.mrf.mxu0
    %v779 = vadd.f32 %v707, %v778
    %780 = vdwg.mxu0
    %781 = vmatpush.bf16.msra.mxu0 0
    %782 = vmatpush.bf16.msra.mxu0 0
    %783 = vmatpush.bf16.msra.mxu0 0
    %784 = vmatpush.bf16.msra.mxu0 0
    %785 = vmatpush.bf16.msra.mxu0 %v760
    %786 = vmatpush.bf16.msra.mxu0 %v740
    %787 = vmatpush.bf16.msra.mxu0 %v738
    %788 = vmatpush.bf16.msra.mxu0 %v736
    %789 = vmatmul.bf16.gmra.mxu0 %v750
    %v790 = vpop.f32.mrf.mxu0
    %v791 = vadd.f32 %v708, %v790
    %v792 = vpop.f32.mrf.mxu0
    %v793 = vadd.f32 %v708, %v792
    %794 = vmatmul.bf16.gmra.mxu0 %v753
    %v795 = vpop.f32.mrf.mxu0
    %v796 = vadd.f32 %v708, %v795
    %v797 = vpop.f32.mrf.mxu0
    %v798 = vadd.f32 %v708, %v797
    %799 = vdwg.mxu0
    %v801 = vrot.slane %v641, 1
    %v802 = vrot.slane %v641, 2
    %v803 = vrot.slane %v641, 3
    %v804 = vpack.c.bf16 %v772, %v772
    %v805 = vpack.c.bf16 %v774, %v774
    %v806 = vpack.c.bf16 %v777, %v777
    %v807 = vpack.c.bf16 %v779, %v779
    %v808 = vperm.slane %v641, 0
    %v809 = vperm.slane %v801, 0
    %v810 = vperm.slane %v802, 0
    %v811 = vperm.slane %v803, 0
    %v817 = vunpack.c.l.b16 %v804
    %v818 = vpack.c.b16 %v817, %v817
    %819 = vrot.lane.b32.xlu0 %v818, 64
    %v820 = vpop.permute.xlu0 %819
    %vm821 = vcmask 130048
    %v823 = vsel %vm821, %v804, 0
    %v826 = vsel %vm821, %v820, 0
    %828 = vmatpush.bf16.xpose.msra.mxu0 0
    %829 = vmatpush.bf16.xpose.msra.mxu0 0
    %830 = vmatpush.bf16.xpose.msra.mxu0 0
    %831 = vmatpush.bf16.xpose.msra.mxu0 0
    %832 = vmatpush.bf16.xpose.msra.mxu0 0
    %833 = vmatpush.bf16.xpose.msra.mxu0 0
    %834 = vmatpush.bf16.xpose.msra.mxu0 0
    %835 = vmatpush.bf16.xpose.msra.mxu0 %v826
    %836 = vmatmul.bf16.gmra.mxu0 %v823
    %v837 = vpop.f32.mrf.mxu0
    %v838 = vadd.f32 %v808, %v837
    %v839 = vpop.f32.mrf.mxu0
    %840 = vdwg.mxu0
    %v842 = vunpack.c.l.b16 %v805
    %v843 = vpack.c.b16 %v842, %v842
    %844 = vrot.lane.b32.xlu0 %v843, 64
    %v845 = vpop.permute.xlu0 %844
    %v847 = vsel %vm821, %v805, 0
    %v850 = vsel %vm821, %v845, 0
    %852 = vmatpush.bf16.xpose.msra.mxu0 0
    %853 = vmatpush.bf16.xpose.msra.mxu0 0
    %854 = vmatpush.bf16.xpose.msra.mxu0 0
    %855 = vmatpush.bf16.xpose.msra.mxu0 0
    %856 = vmatpush.bf16.xpose.msra.mxu0 0
    %857 = vmatpush.bf16.xpose.msra.mxu0 0
    %858 = vmatpush.bf16.xpose.msra.mxu0 0
    %859 = vmatpush.bf16.xpose.msra.mxu0 %v850
    %860 = vmatmul.bf16.gmra.mxu0 %v847
    %v861 = vpop.f32.mrf.mxu0
    %v862 = vadd.f32 %v809, %v861
    %v863 = vpop.f32.mrf.mxu0
    %864 = vdwg.mxu0
    %v866 = vunpack.c.l.b16 %v806
    %v867 = vpack.c.b16 %v866, %v866
    %868 = vrot.lane.b32.xlu0 %v867, 64
    %v869 = vpop.permute.xlu0 %868
    %v871 = vsel %vm821, %v806, 0
    %v874 = vsel %vm821, %v869, 0
    %876 = vmatpush.bf16.xpose.msra.mxu0 0
    %877 = vmatpush.bf16.xpose.msra.mxu0 0
    %878 = vmatpush.bf16.xpose.msra.mxu0 0
    %879 = vmatpush.bf16.xpose.msra.mxu0 0
    %880 = vmatpush.bf16.xpose.msra.mxu0 0
    %881 = vmatpush.bf16.xpose.msra.mxu0 0
    %882 = vmatpush.bf16.xpose.msra.mxu0 0
    %883 = vmatpush.bf16.xpose.msra.mxu0 %v874
    %884 = vmatmul.bf16.gmra.mxu0 %v871
    %v885 = vpop.f32.mrf.mxu0
    %v886 = vadd.f32 %v810, %v885
    %v887 = vpop.f32.mrf.mxu0
    %888 = vdwg.mxu0
    %v890 = vunpack.c.l.b16 %v807
    %v891 = vpack.c.b16 %v890, %v890
    %892 = vrot.lane.b32.xlu0 %v891, 64
    %v893 = vpop.permute.xlu0 %892
    %v895 = vsel %vm821, %v807, 0
    %v898 = vsel %vm821, %v893, 0
    %900 = vmatpush.bf16.xpose.msra.mxu0 0
    %901 = vmatpush.bf16.xpose.msra.mxu0 0
    %902 = vmatpush.bf16.xpose.msra.mxu0 0
    %903 = vmatpush.bf16.xpose.msra.mxu0 0
    %904 = vmatpush.bf16.xpose.msra.mxu0 0
    %905 = vmatpush.bf16.xpose.msra.mxu0 0
    %906 = vmatpush.bf16.xpose.msra.mxu0 0
    %907 = vmatpush.bf16.xpose.msra.mxu0 %v898
    %908 = vmatmul.bf16.gmra.mxu0 %v895
    %v909 = vpop.f32.mrf.mxu0
    %v910 = vadd.f32 %v811, %v909
    %v911 = vpop.f32.mrf.mxu0
    %912 = vdwg.mxu0
    %vm913 = vcmask 64512
    %v914 = vsel %vm913, %v838, -inf
    %915 = vmax.xlane.f32.xlu0 %v914
    %v916 = vpop.xlane.xlu0 %915
    %v917 = vsel %vm913, %v862, -inf
    %918 = vmax.xlane.f32.xlu0 %v917
    %v919 = vpop.xlane.xlu0 %918
    %v920 = vsel %vm913, %v886, -inf
    %921 = vmax.xlane.f32.xlu0 %v920
    %v922 = vpop.xlane.xlu0 %921
    %v923 = vsel %vm913, %v910, -inf
    %924 = vmax.xlane.f32.xlu0 %v923
    %v925 = vpop.xlane.xlu0 %924
    %v926 = vsub.f32 %v838, %v916
    %v927 = vsub.f32 %v862, %v919
    %v928 = vsub.f32 %v886, %v922
    %v929 = vsub.f32 %v910, %v925
    %v930 = vmul.f32 %v926, 1.442695
    %v931 = vpow.pop %v930
    %v932 = vmul.f32 %v927, 1.442695
    %v933 = vpow.pop %v932
    %v934 = vmul.f32 %v928, 1.442695
    %v935 = vpow.pop %v934
    %v936 = vmul.f32 %v929, 1.442695
    %v937 = vpow.pop %v936
    %v938 = vsel %vm913, %v931, 0.0
    %939 = vadd.xlane.f32.xlu0 %v938
    %v940 = vpop.xlane.xlu0 %939
    %v941 = vsel %vm913, %v933, 0.0
    %942 = vadd.xlane.f32.xlu0 %v941
    %v943 = vpop.xlane.xlu0 %942
    %v944 = vsel %vm913, %v935, 0.0
    %945 = vadd.xlane.f32.xlu0 %v944
    %v946 = vpop.xlane.xlu0 %945
    %v947 = vsel %vm913, %v937, 0.0
    %948 = vadd.xlane.f32.xlu0 %v947
    %v949 = vpop.xlane.xlu0 %948
    %v950 = vrcp.pop %v940
    %v951 = vrcp.pop %v943
    %v952 = vrcp.pop %v946
    %v953 = vrcp.pop %v949
    %v954 = vmul.f32 %v931, %v950
    %v955 = vmul.f32 %v933, %v951
    %v956 = vmul.f32 %v935, %v952
    %v957 = vmul.f32 %v937, %v953
    %v958 = vpack.c.bf16 %v954, %v954
    %v959 = vpack.c.bf16 %v955, %v955
    %v960 = vpack.c.bf16 %v956, %v956
    %v961 = vpack.c.bf16 %v957, %v957
    %v962 = vpack.c.bf16 %v791, %v791
    %v963 = vpack.c.bf16 %v793, %v793
    %v964 = vpack.c.bf16 %v796, %v796
    %v965 = vpack.c.bf16 %v798, %v798
    %v967 = vsel %vm913, %v958, 0
    %vm969 = vcmask 1043456
    %v971 = vsel %vm969, %v962, 0
    %973 = vmatpush.bf16.msra.mxu0 0
    %974 = vmatpush.bf16.msra.mxu0 0
    %975 = vmatpush.bf16.msra.mxu0 0
    %976 = vmatpush.bf16.msra.mxu0 0
    %977 = vmatpush.bf16.msra.mxu0 0
    %978 = vmatpush.bf16.msra.mxu0 0
    %979 = vmatpush.bf16.msra.mxu0 0
    %980 = vmatpush.bf16.msra.mxu0 %v971
    %981 = vmatmul.bf16.gmra.mxu0 %v967
    %v982 = vpop.f32.mrf.mxu0
    %v983 = vadd.f32 0.0, %v982
    %v984 = vpop.f32.mrf.mxu0
    %985 = vdwg.mxu0
    %v987 = vsel %vm913, %v959, 0
    %v990 = vsel %vm969, %v963, 0
    %992 = vmatpush.bf16.msra.mxu0 0
    %993 = vmatpush.bf16.msra.mxu0 0
    %994 = vmatpush.bf16.msra.mxu0 0
    %995 = vmatpush.bf16.msra.mxu0 0
    %996 = vmatpush.bf16.msra.mxu0 0
    %997 = vmatpush.bf16.msra.mxu0 0
    %998 = vmatpush.bf16.msra.mxu0 0
    %999 = vmatpush.bf16.msra.mxu0 %v990
    %1000 = vmatmul.bf16.gmra.mxu0 %v987
    %v1001 = vpop.f32.mrf.mxu0
    %v1002 = vadd.f32 0.0, %v1001
    %v1003 = vpop.f32.mrf.mxu0
    %1004 = vdwg.mxu0
    %v1006 = vsel %vm913, %v960, 0
    %v1009 = vsel %vm969, %v964, 0
    %1011 = vmatpush.bf16.msra.mxu0 0
    %1012 = vmatpush.bf16.msra.mxu0 0
    %1013 = vmatpush.bf16.msra.mxu0 0
    %1014 = vmatpush.bf16.msra.mxu0 0
    %1015 = vmatpush.bf16.msra.mxu0 0
    %1016 = vmatpush.bf16.msra.mxu0 0
    %1017 = vmatpush.bf16.msra.mxu0 0
    %1018 = vmatpush.bf16.msra.mxu0 %v1009
    %1019 = vmatmul.bf16.gmra.mxu0 %v1006
    %v1020 = vpop.f32.mrf.mxu0
    %v1021 = vadd.f32 0.0, %v1020
    %v1022 = vpop.f32.mrf.mxu0
    %1023 = vdwg.mxu0
    %v1025 = vsel %vm913, %v961, 0
    %v1028 = vsel %vm969, %v965, 0
    %1030 = vmatpush.bf16.msra.mxu0 0
    %1031 = vmatpush.bf16.msra.mxu0 0
    %1032 = vmatpush.bf16.msra.mxu0 0
    %1033 = vmatpush.bf16.msra.mxu0 0
    %1034 = vmatpush.bf16.msra.mxu0 0
    %1035 = vmatpush.bf16.msra.mxu0 0
    %1036 = vmatpush.bf16.msra.mxu0 0
    %1037 = vmatpush.bf16.msra.mxu0 %v1028
    %1038 = vmatmul.bf16.gmra.mxu0 %v1025
    %v1039 = vpop.f32.mrf.mxu0
    %v1040 = vadd.f32 0.0, %v1039
    %v1041 = vpop.f32.mrf.mxu0
    %1042 = vdwg.mxu0
    %1043 = vrot.lane.b32.xlu0 %v818, 112
    %v1044 = vpop.permute.xlu0 %1043
    %1045 = vrot.lane.b32.xlu0 %v818, 48
    %v1046 = vpop.permute.xlu0 %1045
    %v1048 = vsel %vm821, %v1044, 0
    %v1051 = vsel %vm821, %v1046, 0
    %1053 = vmatpush.bf16.xpose.msra.mxu0 0
    %1054 = vmatpush.bf16.xpose.msra.mxu0 0
    %1055 = vmatpush.bf16.xpose.msra.mxu0 0
    %1056 = vmatpush.bf16.xpose.msra.mxu0 0
    %1057 = vmatpush.bf16.xpose.msra.mxu0 0
    %1058 = vmatpush.bf16.xpose.msra.mxu0 0
    %1059 = vmatpush.bf16.xpose.msra.mxu0 0
    %1060 = vmatpush.bf16.xpose.msra.mxu0 %v1051
    %1061 = vmatmul.bf16.gmra.mxu0 %v1048
    %v1062 = vpop.f32.mrf.mxu0
    %v1063 = vadd.f32 %v808, %v1062
    %v1064 = vpop.f32.mrf.mxu0
    %1065 = vdwg.mxu0
    %1066 = vrot.lane.b32.xlu0 %v843, 112
    %v1067 = vpop.permute.xlu0 %1066
    %1068 = vrot.lane.b32.xlu0 %v843, 48
    %v1069 = vpop.permute.xlu0 %1068
    %v1071 = vsel %vm821, %v1067, 0
    %v1074 = vsel %vm821, %v1069, 0
    %1076 = vmatpush.bf16.xpose.msra.mxu0 0
    %1077 = vmatpush.bf16.xpose.msra.mxu0 0
    %1078 = vmatpush.bf16.xpose.msra.mxu0 0
    %1079 = vmatpush.bf16.xpose.msra.mxu0 0
    %1080 = vmatpush.bf16.xpose.msra.mxu0 0
    %1081 = vmatpush.bf16.xpose.msra.mxu0 0
    %1082 = vmatpush.bf16.xpose.msra.mxu0 0
    %1083 = vmatpush.bf16.xpose.msra.mxu0 %v1074
    %1084 = vmatmul.bf16.gmra.mxu0 %v1071
    %v1085 = vpop.f32.mrf.mxu0
    %v1086 = vadd.f32 %v809, %v1085
    %v1087 = vpop.f32.mrf.mxu0
    %1088 = vdwg.mxu0
    %1089 = vrot.lane.b32.xlu0 %v867, 112
    %v1090 = vpop.permute.xlu0 %1089
    %1091 = vrot.lane.b32.xlu0 %v867, 48
    %v1092 = vpop.permute.xlu0 %1091
    %v1094 = vsel %vm821, %v1090, 0
    %v1097 = vsel %vm821, %v1092, 0
    %1099 = vmatpush.bf16.xpose.msra.mxu0 0
    %1100 = vmatpush.bf16.xpose.msra.mxu0 0
    %1101 = vmatpush.bf16.xpose.msra.mxu0 0
    %1102 = vmatpush.bf16.xpose.msra.mxu0 0
    %1103 = vmatpush.bf16.xpose.msra.mxu0 0
    %1104 = vmatpush.bf16.xpose.msra.mxu0 0
    %1105 = vmatpush.bf16.xpose.msra.mxu0 0
    %1106 = vmatpush.bf16.xpose.msra.mxu0 %v1097
    %1107 = vmatmul.bf16.gmra.mxu0 %v1094
    %v1108 = vpop.f32.mrf.mxu0
    %v1109 = vadd.f32 %v810, %v1108
    %v1110 = vpop.f32.mrf.mxu0
    %1111 = vdwg.mxu0
    %1112 = vrot.lane.b32.xlu0 %v891, 112
    %v1113 = vpop.permute.xlu0 %1112
    %1114 = vrot.lane.b32.xlu0 %v891, 48
    %v1115 = vpop.permute.xlu0 %1114
    %v1117 = vsel %vm821, %v1113, 0
    %v1120 = vsel %vm821, %v1115, 0
    %1122 = vmatpush.bf16.xpose.msra.mxu0 0
    %1123 = vmatpush.bf16.xpose.msra.mxu0 0
    %1124 = vmatpush.bf16.xpose.msra.mxu0 0
    %1125 = vmatpush.bf16.xpose.msra.mxu0 0
    %1126 = vmatpush.bf16.xpose.msra.mxu0 0
    %1127 = vmatpush.bf16.xpose.msra.mxu0 0
    %1128 = vmatpush.bf16.xpose.msra.mxu0 0
    %1129 = vmatpush.bf16.xpose.msra.mxu0 %v1120
    %1130 = vmatmul.bf16.gmra.mxu0 %v1117
    %v1131 = vpop.f32.mrf.mxu0
    %v1132 = vadd.f32 %v811, %v1131
    %v1133 = vpop.f32.mrf.mxu0
    %1134 = vdwg.mxu0
    %v1135 = vsel %vm913, %v1063, -inf
    %1136 = vmax.xlane.f32.xlu0 %v1135
    %v1137 = vpop.xlane.xlu0 %1136
    %v1138 = vsel %vm913, %v1086, -inf
    %1139 = vmax.xlane.f32.xlu0 %v1138
    %v1140 = vpop.xlane.xlu0 %1139
    %v1141 = vsel %vm913, %v1109, -inf
    %1142 = vmax.xlane.f32.xlu0 %v1141
    %v1143 = vpop.xlane.xlu0 %1142
    %v1144 = vsel %vm913, %v1132, -inf
    %1145 = vmax.xlane.f32.xlu0 %v1144
    %v1146 = vpop.xlane.xlu0 %1145
    %v1147 = vsub.f32 %v1063, %v1137
    %v1148 = vsub.f32 %v1086, %v1140
    %v1149 = vsub.f32 %v1109, %v1143
    %v1150 = vsub.f32 %v1132, %v1146
    %v1151 = vmul.f32 %v1147, 1.442695
    %v1152 = vpow.pop %v1151
    %v1153 = vmul.f32 %v1148, 1.442695
    %v1154 = vpow.pop %v1153
    %v1155 = vmul.f32 %v1149, 1.442695
    %v1156 = vpow.pop %v1155
    %v1157 = vmul.f32 %v1150, 1.442695
    %v1158 = vpow.pop %v1157
    %v1159 = vsel %vm913, %v1152, 0.0
    %1160 = vadd.xlane.f32.xlu0 %v1159
    %v1161 = vpop.xlane.xlu0 %1160
    %v1162 = vsel %vm913, %v1154, 0.0
    %1163 = vadd.xlane.f32.xlu0 %v1162
    %v1164 = vpop.xlane.xlu0 %1163
    %v1165 = vsel %vm913, %v1156, 0.0
    %1166 = vadd.xlane.f32.xlu0 %v1165
    %v1167 = vpop.xlane.xlu0 %1166
    %v1168 = vsel %vm913, %v1158, 0.0
    %1169 = vadd.xlane.f32.xlu0 %v1168
    %v1170 = vpop.xlane.xlu0 %1169
    %v1171 = vrcp.pop %v1161
    %v1172 = vrcp.pop %v1164
    %v1173 = vrcp.pop %v1167
    %v1174 = vrcp.pop %v1170
    %v1175 = vmul.f32 %v1152, %v1171
    %v1176 = vmul.f32 %v1154, %v1172
    %v1177 = vmul.f32 %v1156, %v1173
    %v1178 = vmul.f32 %v1158, %v1174
    %v1179 = vpack.c.bf16 %v1175, %v1175
    %v1180 = vpack.c.bf16 %v1176, %v1176
    %v1181 = vpack.c.bf16 %v1177, %v1177
    %v1182 = vpack.c.bf16 %v1178, %v1178
    %v1184 = vunpack.c.l.b16 %v962
    %v1185 = vpack.c.b16 %v1184, %v1184
    %1186 = vrot.lane.b32.xlu0 %v1185, 112
    %v1187 = vpop.permute.xlu0 %1186
    %v1189 = vsel %vm913, %v1179, 0
    %v1192 = vsel %vm969, %v1187, 0
    %1194 = vmatpush.bf16.msra.mxu0 0
    %1195 = vmatpush.bf16.msra.mxu0 0
    %1196 = vmatpush.bf16.msra.mxu0 0
    %1197 = vmatpush.bf16.msra.mxu0 0
    %1198 = vmatpush.bf16.msra.mxu0 0
    %1199 = vmatpush.bf16.msra.mxu0 0
    %1200 = vmatpush.bf16.msra.mxu0 0
    %1201 = vmatpush.bf16.msra.mxu0 %v1192
    %1202 = vmatmul.bf16.gmra.mxu0 %v1189
    %v1203 = vpop.f32.mrf.mxu0
    %v1204 = vadd.f32 0.0, %v1203
    %v1205 = vpop.f32.mrf.mxu0
    %1206 = vdwg.mxu0
    %v1208 = vunpack.c.l.b16 %v963
    %v1209 = vpack.c.b16 %v1208, %v1208
    %1210 = vrot.lane.b32.xlu0 %v1209, 112
    %v1211 = vpop.permute.xlu0 %1210
    %v1213 = vsel %vm913, %v1180, 0
    %v1216 = vsel %vm969, %v1211, 0
    %1218 = vmatpush.bf16.msra.mxu0 0
    %1219 = vmatpush.bf16.msra.mxu0 0
    %1220 = vmatpush.bf16.msra.mxu0 0
    %1221 = vmatpush.bf16.msra.mxu0 0
    %1222 = vmatpush.bf16.msra.mxu0 0
    %1223 = vmatpush.bf16.msra.mxu0 0
    %1224 = vmatpush.bf16.msra.mxu0 0
    %1225 = vmatpush.bf16.msra.mxu0 %v1216
    %1226 = vmatmul.bf16.gmra.mxu0 %v1213
    %v1227 = vpop.f32.mrf.mxu0
    %v1228 = vadd.f32 0.0, %v1227
    %v1229 = vpop.f32.mrf.mxu0
    %1230 = vdwg.mxu0
    %v1232 = vunpack.c.l.b16 %v964
    %v1233 = vpack.c.b16 %v1232, %v1232
    %1234 = vrot.lane.b32.xlu0 %v1233, 112
    %v1235 = vpop.permute.xlu0 %1234
    %v1237 = vsel %vm913, %v1181, 0
    %v1240 = vsel %vm969, %v1235, 0
    %1242 = vmatpush.bf16.msra.mxu0 0
    %1243 = vmatpush.bf16.msra.mxu0 0
    %1244 = vmatpush.bf16.msra.mxu0 0
    %1245 = vmatpush.bf16.msra.mxu0 0
    %1246 = vmatpush.bf16.msra.mxu0 0
    %1247 = vmatpush.bf16.msra.mxu0 0
    %1248 = vmatpush.bf16.msra.mxu0 0
    %1249 = vmatpush.bf16.msra.mxu0 %v1240
    %1250 = vmatmul.bf16.gmra.mxu0 %v1237
    %v1251 = vpop.f32.mrf.mxu0
    %v1252 = vadd.f32 0.0, %v1251
    %v1253 = vpop.f32.mrf.mxu0
    %1254 = vdwg.mxu0
    %v1256 = vunpack.c.l.b16 %v965
    %v1257 = vpack.c.b16 %v1256, %v1256
    %1258 = vrot.lane.b32.xlu0 %v1257, 112
    %v1259 = vpop.permute.xlu0 %1258
    %v1261 = vsel %vm913, %v1182, 0
    %v1264 = vsel %vm969, %v1259, 0
    %1266 = vmatpush.bf16.msra.mxu0 0
    %1267 = vmatpush.bf16.msra.mxu0 0
    %1268 = vmatpush.bf16.msra.mxu0 0
    %1269 = vmatpush.bf16.msra.mxu0 0
    %1270 = vmatpush.bf16.msra.mxu0 0
    %1271 = vmatpush.bf16.msra.mxu0 0
    %1272 = vmatpush.bf16.msra.mxu0 0
    %1273 = vmatpush.bf16.msra.mxu0 %v1264
    %1274 = vmatmul.bf16.gmra.mxu0 %v1261
    %v1275 = vpop.f32.mrf.mxu0
    %v1276 = vadd.f32 0.0, %v1275
    %v1277 = vpop.f32.mrf.mxu0
    %1278 = vdwg.mxu0
    %1279 = vrot.lane.b32.xlu0 %v818, 96
    %v1280 = vpop.permute.xlu0 %1279
    %1281 = vrot.lane.b32.xlu0 %v818, 32
    %v1282 = vpop.permute.xlu0 %1281
    %v1284 = vsel %vm821, %v1280, 0
    %v1287 = vsel %vm821, %v1282, 0
    %1289 = vmatpush.bf16.xpose.msra.mxu0 0
    %1290 = vmatpush.bf16.xpose.msra.mxu0 0
    %1291 = vmatpush.bf16.xpose.msra.mxu0 0
    %1292 = vmatpush.bf16.xpose.msra.mxu0 0
    %1293 = vmatpush.bf16.xpose.msra.mxu0 0
    %1294 = vmatpush.bf16.xpose.msra.mxu0 0
    %1295 = vmatpush.bf16.xpose.msra.mxu0 0
    %1296 = vmatpush.bf16.xpose.msra.mxu0 %v1287
    %1297 = vmatmul.bf16.gmra.mxu0 %v1284
    %v1298 = vpop.f32.mrf.mxu0
    %v1299 = vadd.f32 %v808, %v1298
    %v1300 = vpop.f32.mrf.mxu0
    %1301 = vdwg.mxu0
    %1302 = vrot.lane.b32.xlu0 %v843, 96
    %v1303 = vpop.permute.xlu0 %1302
    %1304 = vrot.lane.b32.xlu0 %v843, 32
    %v1305 = vpop.permute.xlu0 %1304
    %v1307 = vsel %vm821, %v1303, 0
    %v1310 = vsel %vm821, %v1305, 0
    %1312 = vmatpush.bf16.xpose.msra.mxu0 0
    %1313 = vmatpush.bf16.xpose.msra.mxu0 0
    %1314 = vmatpush.bf16.xpose.msra.mxu0 0
    %1315 = vmatpush.bf16.xpose.msra.mxu0 0
    %1316 = vmatpush.bf16.xpose.msra.mxu0 0
    %1317 = vmatpush.bf16.xpose.msra.mxu0 0
    %1318 = vmatpush.bf16.xpose.msra.mxu0 0
    %1319 = vmatpush.bf16.xpose.msra.mxu0 %v1310
    %1320 = vmatmul.bf16.gmra.mxu0 %v1307
    %v1321 = vpop.f32.mrf.mxu0
    %v1322 = vadd.f32 %v809, %v1321
    %v1323 = vpop.f32.mrf.mxu0
    %1324 = vdwg.mxu0
    %1325 = vrot.lane.b32.xlu0 %v867, 96
    %v1326 = vpop.permute.xlu0 %1325
    %1327 = vrot.lane.b32.xlu0 %v867, 32
    %v1328 = vpop.permute.xlu0 %1327
    %v1330 = vsel %vm821, %v1326, 0
    %v1333 = vsel %vm821, %v1328, 0
    %1335 = vmatpush.bf16.xpose.msra.mxu0 0
    %1336 = vmatpush.bf16.xpose.msra.mxu0 0
    %1337 = vmatpush.bf16.xpose.msra.mxu0 0
    %1338 = vmatpush.bf16.xpose.msra.mxu0 0
    %1339 = vmatpush.bf16.xpose.msra.mxu0 0
    %1340 = vmatpush.bf16.xpose.msra.mxu0 0
    %1341 = vmatpush.bf16.xpose.msra.mxu0 0
    %1342 = vmatpush.bf16.xpose.msra.mxu0 %v1333
    %1343 = vmatmul.bf16.gmra.mxu0 %v1330
    %v1344 = vpop.f32.mrf.mxu0
    %v1345 = vadd.f32 %v810, %v1344
    %v1346 = vpop.f32.mrf.mxu0
    %1347 = vdwg.mxu0
    %1348 = vrot.lane.b32.xlu0 %v891, 96
    %v1349 = vpop.permute.xlu0 %1348
    %1350 = vrot.lane.b32.xlu0 %v891, 32
    %v1351 = vpop.permute.xlu0 %1350
    %v1353 = vsel %vm821, %v1349, 0
    %v1356 = vsel %vm821, %v1351, 0
    %1358 = vmatpush.bf16.xpose.msra.mxu0 0
    %1359 = vmatpush.bf16.xpose.msra.mxu0 0
    %1360 = vmatpush.bf16.xpose.msra.mxu0 0
    %1361 = vmatpush.bf16.xpose.msra.mxu0 0
    %1362 = vmatpush.bf16.xpose.msra.mxu0 0
    %1363 = vmatpush.bf16.xpose.msra.mxu0 0
    %1364 = vmatpush.bf16.xpose.msra.mxu0 0
    %1365 = vmatpush.bf16.xpose.msra.mxu0 %v1356
    %1366 = vmatmul.bf16.gmra.mxu0 %v1353
    %v1367 = vpop.f32.mrf.mxu0
    %v1368 = vadd.f32 %v811, %v1367
    %v1369 = vpop.f32.mrf.mxu0
    %1370 = vdwg.mxu0
    %v1371 = vsel %vm913, %v1299, -inf
    %1372 = vmax.xlane.f32.xlu0 %v1371
    %v1373 = vpop.xlane.xlu0 %1372
    %v1374 = vsel %vm913, %v1322, -inf
    %1375 = vmax.xlane.f32.xlu0 %v1374
    %v1376 = vpop.xlane.xlu0 %1375
    %v1377 = vsel %vm913, %v1345, -inf
    %1378 = vmax.xlane.f32.xlu0 %v1377
    %v1379 = vpop.xlane.xlu0 %1378
    %v1380 = vsel %vm913, %v1368, -inf
    %1381 = vmax.xlane.f32.xlu0 %v1380
    %v1382 = vpop.xlane.xlu0 %1381
    %v1383 = vsub.f32 %v1299, %v1373
    %v1384 = vsub.f32 %v1322, %v1376
    %v1385 = vsub.f32 %v1345, %v1379
    %v1386 = vsub.f32 %v1368, %v1382
    %v1387 = vmul.f32 %v1383, 1.442695
    %v1388 = vpow.pop %v1387
    %v1389 = vmul.f32 %v1384, 1.442695
    %v1390 = vpow.pop %v1389
    %v1391 = vmul.f32 %v1385, 1.442695
    %v1392 = vpow.pop %v1391
    %v1393 = vmul.f32 %v1386, 1.442695
    %v1394 = vpow.pop %v1393
    %v1395 = vsel %vm913, %v1388, 0.0
    %1396 = vadd.xlane.f32.xlu0 %v1395
    %v1397 = vpop.xlane.xlu0 %1396
    %v1398 = vsel %vm913, %v1390, 0.0
    %1399 = vadd.xlane.f32.xlu0 %v1398
    %v1400 = vpop.xlane.xlu0 %1399
    %v1401 = vsel %vm913, %v1392, 0.0
    %1402 = vadd.xlane.f32.xlu0 %v1401
    %v1403 = vpop.xlane.xlu0 %1402
    %v1404 = vsel %vm913, %v1394, 0.0
    %1405 = vadd.xlane.f32.xlu0 %v1404
    %v1406 = vpop.xlane.xlu0 %1405
    %v1407 = vrcp.pop %v1397
    %v1408 = vrcp.pop %v1400
    %v1409 = vrcp.pop %v1403
    %v1410 = vrcp.pop %v1406
    %v1411 = vmul.f32 %v1388, %v1407
    %v1412 = vmul.f32 %v1390, %v1408
    %v1413 = vmul.f32 %v1392, %v1409
    %v1414 = vmul.f32 %v1394, %v1410
    %v1415 = vpack.c.bf16 %v1411, %v1411
    %v1416 = vpack.c.bf16 %v1412, %v1412
    %v1417 = vpack.c.bf16 %v1413, %v1413
    %v1418 = vpack.c.bf16 %v1414, %v1414
    %1419 = vrot.lane.b32.xlu0 %v1185, 96
    %v1420 = vpop.permute.xlu0 %1419
    %v1422 = vsel %vm913, %v1415, 0
    %v1425 = vsel %vm969, %v1420, 0
    %1427 = vmatpush.bf16.msra.mxu0 0
    %1428 = vmatpush.bf16.msra.mxu0 0
    %1429 = vmatpush.bf16.msra.mxu0 0
    %1430 = vmatpush.bf16.msra.mxu0 0
    %1431 = vmatpush.bf16.msra.mxu0 0
    %1432 = vmatpush.bf16.msra.mxu0 0
    %1433 = vmatpush.bf16.msra.mxu0 0
    %1434 = vmatpush.bf16.msra.mxu0 %v1425
    %1435 = vmatmul.bf16.gmra.mxu0 %v1422
    %v1436 = vpop.f32.mrf.mxu0
    %v1437 = vadd.f32 0.0, %v1436
    %v1438 = vpop.f32.mrf.mxu0
    %1439 = vdwg.mxu0
    %1440 = vrot.lane.b32.xlu0 %v1209, 96
    %v1441 = vpop.permute.xlu0 %1440
    %v1443 = vsel %vm913, %v1416, 0
    %v1446 = vsel %vm969, %v1441, 0
    %1448 = vmatpush.bf16.msra.mxu0 0
    %1449 = vmatpush.bf16.msra.mxu0 0
    %1450 = vmatpush.bf16.msra.mxu0 0
    %1451 = vmatpush.bf16.msra.mxu0 0
    %1452 = vmatpush.bf16.msra.mxu0 0
    %1453 = vmatpush.bf16.msra.mxu0 0
    %1454 = vmatpush.bf16.msra.mxu0 0
    %1455 = vmatpush.bf16.msra.mxu0 %v1446
    %1456 = vmatmul.bf16.gmra.mxu0 %v1443
    %v1457 = vpop.f32.mrf.mxu0
    %v1458 = vadd.f32 0.0, %v1457
    %v1459 = vpop.f32.mrf.mxu0
    %1460 = vdwg.mxu0
    %1461 = vrot.lane.b32.xlu0 %v1233, 96
    %v1462 = vpop.permute.xlu0 %1461
    %v1464 = vsel %vm913, %v1417, 0
    %v1467 = vsel %vm969, %v1462, 0
    %1469 = vmatpush.bf16.msra.mxu0 0
    %1470 = vmatpush.bf16.msra.mxu0 0
    %1471 = vmatpush.bf16.msra.mxu0 0
    %1472 = vmatpush.bf16.msra.mxu0 0
    %1473 = vmatpush.bf16.msra.mxu0 0
    %1474 = vmatpush.bf16.msra.mxu0 0
    %1475 = vmatpush.bf16.msra.mxu0 0
    %1476 = vmatpush.bf16.msra.mxu0 %v1467
    %1477 = vmatmul.bf16.gmra.mxu0 %v1464
    %v1478 = vpop.f32.mrf.mxu0
    %v1479 = vadd.f32 0.0, %v1478
    %v1480 = vpop.f32.mrf.mxu0
    %1481 = vdwg.mxu0
    %1482 = vrot.lane.b32.xlu0 %v1257, 96
    %v1483 = vpop.permute.xlu0 %1482
    %v1485 = vsel %vm913, %v1418, 0
    %v1488 = vsel %vm969, %v1483, 0
    %1490 = vmatpush.bf16.msra.mxu0 0
    %1491 = vmatpush.bf16.msra.mxu0 0
    %1492 = vmatpush.bf16.msra.mxu0 0
    %1493 = vmatpush.bf16.msra.mxu0 0
    %1494 = vmatpush.bf16.msra.mxu0 0
    %1495 = vmatpush.bf16.msra.mxu0 0
    %1496 = vmatpush.bf16.msra.mxu0 0
    %1497 = vmatpush.bf16.msra.mxu0 %v1488
    %1498 = vmatmul.bf16.gmra.mxu0 %v1485
    %v1499 = vpop.f32.mrf.mxu0
    %v1500 = vadd.f32 0.0, %v1499
    %v1501 = vpop.f32.mrf.mxu0
    %1502 = vdwg.mxu0
    %1503 = vrot.lane.b32.xlu0 %v818, 80
    %v1504 = vpop.permute.xlu0 %1503
    %1505 = vrot.lane.b32.xlu0 %v818, 16
    %v1506 = vpop.permute.xlu0 %1505
    %v1508 = vsel %vm821, %v1504, 0
    %v1511 = vsel %vm821, %v1506, 0
    %1513 = vmatpush.bf16.xpose.msra.mxu0 0
    %1514 = vmatpush.bf16.xpose.msra.mxu0 0
    %1515 = vmatpush.bf16.xpose.msra.mxu0 0
    %1516 = vmatpush.bf16.xpose.msra.mxu0 0
    %1517 = vmatpush.bf16.xpose.msra.mxu0 0
    %1518 = vmatpush.bf16.xpose.msra.mxu0 0
    %1519 = vmatpush.bf16.xpose.msra.mxu0 0
    %1520 = vmatpush.bf16.xpose.msra.mxu0 %v1511
    %1521 = vmatmul.bf16.gmra.mxu0 %v1508
    %v1522 = vpop.f32.mrf.mxu0
    %v1523 = vadd.f32 %v808, %v1522
    %v1524 = vpop.f32.mrf.mxu0
    %1525 = vdwg.mxu0
    %1526 = vrot.lane.b32.xlu0 %v843, 80
    %v1527 = vpop.permute.xlu0 %1526
    %1528 = vrot.lane.b32.xlu0 %v843, 16
    %v1529 = vpop.permute.xlu0 %1528
    %v1531 = vsel %vm821, %v1527, 0
    %v1534 = vsel %vm821, %v1529, 0
    %1536 = vmatpush.bf16.xpose.msra.mxu0 0
    %1537 = vmatpush.bf16.xpose.msra.mxu0 0
    %1538 = vmatpush.bf16.xpose.msra.mxu0 0
    %1539 = vmatpush.bf16.xpose.msra.mxu0 0
    %1540 = vmatpush.bf16.xpose.msra.mxu0 0
    %1541 = vmatpush.bf16.xpose.msra.mxu0 0
    %1542 = vmatpush.bf16.xpose.msra.mxu0 0
    %1543 = vmatpush.bf16.xpose.msra.mxu0 %v1534
    %1544 = vmatmul.bf16.gmra.mxu0 %v1531
    %v1545 = vpop.f32.mrf.mxu0
    %v1546 = vadd.f32 %v809, %v1545
    %v1547 = vpop.f32.mrf.mxu0
    %1548 = vdwg.mxu0
    %1549 = vrot.lane.b32.xlu0 %v867, 80
    %v1550 = vpop.permute.xlu0 %1549
    %1551 = vrot.lane.b32.xlu0 %v867, 16
    %v1552 = vpop.permute.xlu0 %1551
    %v1554 = vsel %vm821, %v1550, 0
    %v1557 = vsel %vm821, %v1552, 0
    %1559 = vmatpush.bf16.xpose.msra.mxu0 0
    %1560 = vmatpush.bf16.xpose.msra.mxu0 0
    %1561 = vmatpush.bf16.xpose.msra.mxu0 0
    %1562 = vmatpush.bf16.xpose.msra.mxu0 0
    %1563 = vmatpush.bf16.xpose.msra.mxu0 0
    %1564 = vmatpush.bf16.xpose.msra.mxu0 0
    %1565 = vmatpush.bf16.xpose.msra.mxu0 0
    %1566 = vmatpush.bf16.xpose.msra.mxu0 %v1557
    %1567 = vmatmul.bf16.gmra.mxu0 %v1554
    %v1568 = vpop.f32.mrf.mxu0
    %v1569 = vadd.f32 %v810, %v1568
    %v1570 = vpop.f32.mrf.mxu0
    %1571 = vdwg.mxu0
    %1572 = vrot.lane.b32.xlu0 %v891, 80
    %v1573 = vpop.permute.xlu0 %1572
    %1574 = vrot.lane.b32.xlu0 %v891, 16
    %v1575 = vpop.permute.xlu0 %1574
    %v1577 = vsel %vm821, %v1573, 0
    %v1580 = vsel %vm821, %v1575, 0
    %1582 = vmatpush.bf16.xpose.msra.mxu0 0
    %1583 = vmatpush.bf16.xpose.msra.mxu0 0
    %1584 = vmatpush.bf16.xpose.msra.mxu0 0
    %1585 = vmatpush.bf16.xpose.msra.mxu0 0
    %1586 = vmatpush.bf16.xpose.msra.mxu0 0
    %1587 = vmatpush.bf16.xpose.msra.mxu0 0
    %1588 = vmatpush.bf16.xpose.msra.mxu0 0
    %1589 = vmatpush.bf16.xpose.msra.mxu0 %v1580
    %1590 = vmatmul.bf16.gmra.mxu0 %v1577
    %v1591 = vpop.f32.mrf.mxu0
    %v1592 = vadd.f32 %v811, %v1591
    %v1593 = vpop.f32.mrf.mxu0
    %1594 = vdwg.mxu0
    %v1595 = vsel %vm913, %v1523, -inf
    %1596 = vmax.xlane.f32.xlu0 %v1595
    %v1597 = vpop.xlane.xlu0 %1596
    %v1598 = vsel %vm913, %v1546, -inf
    %1599 = vmax.xlane.f32.xlu0 %v1598
    %v1600 = vpop.xlane.xlu0 %1599
    %v1601 = vsel %vm913, %v1569, -inf
    %1602 = vmax.xlane.f32.xlu0 %v1601
    %v1603 = vpop.xlane.xlu0 %1602
    %v1604 = vsel %vm913, %v1592, -inf
    %1605 = vmax.xlane.f32.xlu0 %v1604
    %v1606 = vpop.xlane.xlu0 %1605
    %v1607 = vsub.f32 %v1523, %v1597
    %v1608 = vsub.f32 %v1546, %v1600
    %v1609 = vsub.f32 %v1569, %v1603
    %v1610 = vsub.f32 %v1592, %v1606
    %v1611 = vmul.f32 %v1607, 1.442695
    %v1612 = vpow.pop %v1611
    %v1613 = vmul.f32 %v1608, 1.442695
    %v1614 = vpow.pop %v1613
    %v1615 = vmul.f32 %v1609, 1.442695
    %v1616 = vpow.pop %v1615
    %v1617 = vmul.f32 %v1610, 1.442695
    %v1618 = vpow.pop %v1617
    %v1619 = vsel %vm913, %v1612, 0.0
    %1620 = vadd.xlane.f32.xlu0 %v1619
    %v1621 = vpop.xlane.xlu0 %1620
    %v1622 = vsel %vm913, %v1614, 0.0
    %1623 = vadd.xlane.f32.xlu0 %v1622
    %v1624 = vpop.xlane.xlu0 %1623
    %v1625 = vsel %vm913, %v1616, 0.0
    %1626 = vadd.xlane.f32.xlu0 %v1625
    %v1627 = vpop.xlane.xlu0 %1626
    %v1628 = vsel %vm913, %v1618, 0.0
    %1629 = vadd.xlane.f32.xlu0 %v1628
    %v1630 = vpop.xlane.xlu0 %1629
    %v1631 = vrcp.pop %v1621
    %v1632 = vrcp.pop %v1624
    %v1633 = vrcp.pop %v1627
    %v1634 = vrcp.pop %v1630
    %v1635 = vmul.f32 %v1612, %v1631
    %v1636 = vmul.f32 %v1614, %v1632
    %v1637 = vmul.f32 %v1616, %v1633
    %v1638 = vmul.f32 %v1618, %v1634
    %v1639 = vpack.c.bf16 %v1635, %v1635
    %v1640 = vpack.c.bf16 %v1636, %v1636
    %v1641 = vpack.c.bf16 %v1637, %v1637
    %v1642 = vpack.c.bf16 %v1638, %v1638
    %1643 = vrot.lane.b32.xlu0 %v1185, 80
    %v1644 = vpop.permute.xlu0 %1643
    %v1646 = vsel %vm913, %v1639, 0
    %v1649 = vsel %vm969, %v1644, 0
    %1651 = vmatpush.bf16.msra.mxu0 0
    %1652 = vmatpush.bf16.msra.mxu0 0
    %1653 = vmatpush.bf16.msra.mxu0 0
    %1654 = vmatpush.bf16.msra.mxu0 0
    %1655 = vmatpush.bf16.msra.mxu0 0
    %1656 = vmatpush.bf16.msra.mxu0 0
    %1657 = vmatpush.bf16.msra.mxu0 0
    %1658 = vmatpush.bf16.msra.mxu0 %v1649
    %1659 = vmatmul.bf16.gmra.mxu0 %v1646
    %v1660 = vpop.f32.mrf.mxu0
    %v1661 = vadd.f32 0.0, %v1660
    %v1662 = vpop.f32.mrf.mxu0
    %1663 = vdwg.mxu0
    %1664 = vrot.lane.b32.xlu0 %v1209, 80
    %v1665 = vpop.permute.xlu0 %1664
    %v1667 = vsel %vm913, %v1640, 0
    %v1670 = vsel %vm969, %v1665, 0
    %1672 = vmatpush.bf16.msra.mxu0 0
    %1673 = vmatpush.bf16.msra.mxu0 0
    %1674 = vmatpush.bf16.msra.mxu0 0
    %1675 = vmatpush.bf16.msra.mxu0 0
    %1676 = vmatpush.bf16.msra.mxu0 0
    %1677 = vmatpush.bf16.msra.mxu0 0
    %1678 = vmatpush.bf16.msra.mxu0 0
    %1679 = vmatpush.bf16.msra.mxu0 %v1670
    %1680 = vmatmul.bf16.gmra.mxu0 %v1667
    %v1681 = vpop.f32.mrf.mxu0
    %v1682 = vadd.f32 0.0, %v1681
    %v1683 = vpop.f32.mrf.mxu0
    %1684 = vdwg.mxu0
    %1685 = vrot.lane.b32.xlu0 %v1233, 80
    %v1686 = vpop.permute.xlu0 %1685
    %v1688 = vsel %vm913, %v1641, 0
    %v1691 = vsel %vm969, %v1686, 0
    %1693 = vmatpush.bf16.msra.mxu0 0
    %1694 = vmatpush.bf16.msra.mxu0 0
    %1695 = vmatpush.bf16.msra.mxu0 0
    %1696 = vmatpush.bf16.msra.mxu0 0
    %1697 = vmatpush.bf16.msra.mxu0 0
    %1698 = vmatpush.bf16.msra.mxu0 0
    %1699 = vmatpush.bf16.msra.mxu0 0
    %1700 = vmatpush.bf16.msra.mxu0 %v1691
    %1701 = vmatmul.bf16.gmra.mxu0 %v1688
    %v1702 = vpop.f32.mrf.mxu0
    %v1703 = vadd.f32 0.0, %v1702
    %v1704 = vpop.f32.mrf.mxu0
    %1705 = vdwg.mxu0
    %1706 = vrot.lane.b32.xlu0 %v1257, 80
    %v1707 = vpop.permute.xlu0 %1706
    %v1709 = vsel %vm913, %v1642, 0
    %v1712 = vsel %vm969, %v1707, 0
    %1714 = vmatpush.bf16.msra.mxu0 0
    %1715 = vmatpush.bf16.msra.mxu0 0
    %1716 = vmatpush.bf16.msra.mxu0 0
    %1717 = vmatpush.bf16.msra.mxu0 0
    %1718 = vmatpush.bf16.msra.mxu0 0
    %1719 = vmatpush.bf16.msra.mxu0 0
    %1720 = vmatpush.bf16.msra.mxu0 0
    %1721 = vmatpush.bf16.msra.mxu0 %v1712
    %1722 = vmatmul.bf16.gmra.mxu0 %v1709
    %v1723 = vpop.f32.mrf.mxu0
    %v1724 = vadd.f32 0.0, %v1723
    %v1725 = vpop.f32.mrf.mxu0
    %1726 = vdwg.mxu0
    %1731 = vrot.lane.b32.xlu0 %v1204, 16
    %v1732 = vpop.permute.xlu0 %1731
    %1733 = vrot.lane.b32.xlu0 %v1228, 16
    %v1734 = vpop.permute.xlu0 %1733
    %1735 = vrot.lane.b32.xlu0 %v1252, 16
    %v1736 = vpop.permute.xlu0 %1735
    %1737 = vrot.lane.b32.xlu0 %v1276, 16
    %v1738 = vpop.permute.xlu0 %1737
    %1747 = vrot.lane.b32.xlu0 %v1437, 32
    %v1748 = vpop.permute.xlu0 %1747
    %1749 = vrot.lane.b32.xlu0 %v1458, 32
    %v1750 = vpop.permute.xlu0 %1749
    %1751 = vrot.lane.b32.xlu0 %v1479, 32
    %v1752 = vpop.permute.xlu0 %1751
    %1753 = vrot.lane.b32.xlu0 %v1500, 32
    %v1754 = vpop.permute.xlu0 %1753
    %1763 = vrot.lane.b32.xlu0 %v1661, 48
    %v1764 = vpop.permute.xlu0 %1763
    %1765 = vrot.lane.b32.xlu0 %v1682, 48
    %v1766 = vpop.permute.xlu0 %1765
    %1767 = vrot.lane.b32.xlu0 %v1703, 48
    %v1768 = vpop.permute.xlu0 %1767
    %1769 = vrot.lane.b32.xlu0 %v1724, 48
    %v1770 = vpop.permute.xlu0 %1769
    %v1775 = vsel %vm821, %v983, %v1732
    %v1776 = vsel %vm821, %v1002, %v1734
    %v1777 = vsel %vm821, %v1021, %v1736
    %v1778 = vsel %vm821, %v1040, %v1738
    %vm1779 = vcmask 261120
    %v1780 = vsel %vm1779, %v1775, %v1748
    %v1781 = vsel %vm1779, %v1776, %v1750
    %v1782 = vsel %vm1779, %v1777, %v1752
    %v1783 = vsel %vm1779, %v1778, %v1754
    %vm1784 = vcmask 392192
    %v1785 = vsel %vm1784, %v1780, %v1764
    %v1786 = vsel %vm1784, %v1781, %v1766
    %v1787 = vsel %vm1784, %v1782, %v1768
    %v1788 = vsel %vm1784, %v1783, %v1770
    %v1789 = vpack.c.bf16 %v1786, %v1785
    %v1790 = vpack.c.bf16 %v1788, %v1787
    %v1792 = vperm.slane %v659, 0
    %v1802 = vunpack.c.l.b16 %v651
    %v1803 = vunpack.c.l.b16 %v652
    %v1804 = vunpack.c.l.b16 %v653
    %v1805 = vunpack.c.l.b16 %v654
    %v1806 = vunpack.c.l.b16 %v655
    %v1807 = vunpack.c.l.b16 %v656
    %v1808 = vunpack.c.l.b16 %v657
    %v1809 = vunpack.c.l.b16 %v658
    %v1810 = vpack.c.b16 %v1803, %v1802
    %v1811 = vpack.c.b16 %v1805, %v1804
    %v1812 = vpack.c.b16 %v1807, %v1806
    %v1813 = vpack.c.b16 %v1809, %v1808
    %v1819 = vsel %vm480, %v1789, 0
    %v1822 = vsel %vm480, %v1790, 0
    %1824 = vmatpush.bf16.msra.mxu0 0
    %1825 = vmatpush.bf16.msra.mxu0 0
    %1826 = vmatpush.bf16.msra.mxu0 0
    %1827 = vmatpush.bf16.msra.mxu0 0
    %1828 = vmatpush.bf16.msra.mxu0 %v1813
    %1829 = vmatpush.bf16.msra.mxu0 %v1812
    %1830 = vmatpush.bf16.msra.mxu0 %v1811
    %1831 = vmatpush.bf16.msra.mxu0 %v1810
    %1832 = vmatmul.bf16.gmra.mxu0 %v1819
    %v1833 = vpop.f32.mrf.mxu0
    %v1834 = vadd.f32 %v1792, %v1833
    %v1835 = vpop.f32.mrf.mxu0
    %v1836 = vadd.f32 %v1792, %v1835
    %1837 = vmatmul.bf16.gmra.mxu0 %v1822
    %v1838 = vpop.f32.mrf.mxu0
    %v1839 = vadd.f32 %v1792, %v1838
    %v1840 = vpop.f32.mrf.mxu0
    %v1841 = vadd.f32 %v1792, %v1840
    %1842 = vdwg.mxu0
    %v1843 = vadd.f32 %v635, %v1834
    %v1844 = vadd.f32 %v636, %v1836
    %v1845 = vadd.f32 %v637, %v1839
    %v1846 = vadd.f32 %v638, %v1841
    %v1847 = vsel %vm529, %v1843, 0.0
    %1848 = vadd.xlane.f32.xlu0 %v1847
    %v1849 = vpop.xlane.xlu0 %1848
    %v1850 = vsel %vm529, %v1844, 0.0
    %1851 = vadd.xlane.f32.xlu0 %v1850
    %v1852 = vpop.xlane.xlu0 %1851
    %v1853 = vsel %vm529, %v1845, 0.0
    %1854 = vadd.xlane.f32.xlu0 %v1853
    %v1855 = vpop.xlane.xlu0 %1854
    %v1856 = vsel %vm529, %v1846, 0.0
    %1857 = vadd.xlane.f32.xlu0 %v1856
    %v1858 = vpop.xlane.xlu0 %1857
    %v1859 = vmul.f32 %v1849, %v548
    %v1860 = vmul.f32 %v1852, %v548
    %v1861 = vmul.f32 %v1855, %v548
    %v1862 = vmul.f32 %v1858, %v548
    %v1863 = vsub.f32 %v1843, %v1859
    %v1864 = vsub.f32 %v1844, %v1860
    %v1865 = vsub.f32 %v1845, %v1861
    %v1866 = vsub.f32 %v1846, %v1862
    %v1867 = vmul.f32 %v1863, %v1863
    %v1868 = vmul.f32 %v1864, %v1864
    %v1869 = vmul.f32 %v1865, %v1865
    %v1870 = vmul.f32 %v1866, %v1866
    %v1871 = vsel %vm529, %v1867, 0.0
    %1872 = vadd.xlane.f32.xlu0 %v1871
    %v1873 = vpop.xlane.xlu0 %1872
    %v1874 = vsel %vm529, %v1868, 0.0
    %1875 = vadd.xlane.f32.xlu0 %v1874
    %v1876 = vpop.xlane.xlu0 %1875
    %v1877 = vsel %vm529, %v1869, 0.0
    %1878 = vadd.xlane.f32.xlu0 %v1877
    %v1879 = vpop.xlane.xlu0 %1878
    %v1880 = vsel %vm529, %v1870, 0.0
    %1881 = vadd.xlane.f32.xlu0 %v1880
    %v1882 = vpop.xlane.xlu0 %1881
    %v1883 = vmul.f32 %v1873, %v548
    %v1884 = vmul.f32 %v1876, %v548
    %v1885 = vmul.f32 %v1879, %v548
    %v1886 = vmul.f32 %v1882, %v548
    %v1887 = vadd.f32 %v1883, 1e-05
    %v1888 = vadd.f32 %v1884, 1e-05
    %v1889 = vadd.f32 %v1885, 1e-05
    %v1890 = vadd.f32 %v1886, 1e-05
    %v1891 = vrsqrt.pop %v1887
    %v1892 = vmul.f32 %v1891, %v1887
    %v1893 = vmul.f32 %v1892, %v1891
    %v1894 = vmul.f32 0.5, %v1893
    %v1895 = vsub.f32 1.5, %v1894
    %v1896 = vmul.f32 %v1891, %v1895
    %vm1897 = vweird.f32 %v1887
    %vm1898 = vweird.f32 %v1891
    %vm1899 = vmor %vm1897, %vm1898
    %v1900 = vsel %vm1899, %v1891, %v1896
    %v1901 = vrsqrt.pop %v1888
    %v1902 = vmul.f32 %v1901, %v1888
    %v1903 = vmul.f32 %v1902, %v1901
    %v1904 = vmul.f32 0.5, %v1903
    %v1905 = vsub.f32 1.5, %v1904
    %v1906 = vmul.f32 %v1901, %v1905
    %vm1907 = vweird.f32 %v1888
    %vm1908 = vweird.f32 %v1901
    %vm1909 = vmor %vm1907, %vm1908
    %v1910 = vsel %vm1909, %v1901, %v1906
    %v1911 = vrsqrt.pop %v1889
    %v1912 = vmul.f32 %v1911, %v1889
    %v1913 = vmul.f32 %v1912, %v1911
    %v1914 = vmul.f32 0.5, %v1913
    %v1915 = vsub.f32 1.5, %v1914
    %v1916 = vmul.f32 %v1911, %v1915
    %vm1917 = vweird.f32 %v1889
    %vm1918 = vweird.f32 %v1911
    %vm1919 = vmor %vm1917, %vm1918
    %v1920 = vsel %vm1919, %v1911, %v1916
    %v1921 = vrsqrt.pop %v1890
    %v1922 = vmul.f32 %v1921, %v1890
    %v1923 = vmul.f32 %v1922, %v1921
    %v1924 = vmul.f32 0.5, %v1923
    %v1925 = vsub.f32 1.5, %v1924
    %v1926 = vmul.f32 %v1921, %v1925
    %vm1927 = vweird.f32 %v1890
    %vm1928 = vweird.f32 %v1921
    %vm1929 = vmor %vm1927, %vm1928
    %v1930 = vsel %vm1929, %v1921, %v1926
    %v1931 = vmul.f32 %v1863, %v1900
    %v1932 = vmul.f32 %v1864, %v1910
    %v1933 = vmul.f32 %v1865, %v1920
    %v1934 = vmul.f32 %v1866, %v1930
    %v1936 = vperm.slane %v660, 0
    %v1938 = vmul.f32 %v1931, %v1936
    %v1939 = vmul.f32 %v1932, %v1936
    %v1940 = vmul.f32 %v1933, %v1936
    %v1941 = vmul.f32 %v1934, %v1936
    %v1943 = vperm.slane %v661, 0
    %v1945 = vadd.f32 %v1938, %v1943
    %v1946 = vadd.f32 %v1939, %v1943
    %v1947 = vadd.f32 %v1940, %v1943
    %v1948 = vadd.f32 %v1941, %v1943
    %v1949 = vpack.c.bf16 %v1946, %v1945
    %v1950 = vpack.c.bf16 %v1948, %v1947
    %v1952 = vperm.slane %v670, 0
    %v1953 = vperm.slane %v670, 1
    %v1964 = vunpack.c.l.b16 %v662
    %v1965 = vunpack.c.h.b16 %v662
    %v1966 = vunpack.c.l.b16 %v663
    %v1967 = vunpack.c.h.b16 %v663
    %v1968 = vunpack.c.l.b16 %v664
    %v1969 = vunpack.c.h.b16 %v664
    %v1970 = vunpack.c.l.b16 %v665
    %v1971 = vunpack.c.h.b16 %v665
    %v1972 = vunpack.c.l.b16 %v666
    %v1973 = vunpack.c.h.b16 %v666
    %v1974 = vunpack.c.l.b16 %v667
    %v1975 = vunpack.c.h.b16 %v667
    %v1976 = vunpack.c.l.b16 %v668
    %v1977 = vunpack.c.h.b16 %v668
    %v1978 = vunpack.c.l.b16 %v669
    %v1979 = vunpack.c.h.b16 %v669
    %v1980 = vpack.c.b16 %v1966, %v1964
    %v1981 = vpack.c.b16 %v1967, %v1965
    %v1982 = vpack.c.b16 %v1970, %v1968
    %v1983 = vpack.c.b16 %v1971, %v1969
    %v1984 = vpack.c.b16 %v1974, %v1972
    %v1985 = vpack.c.b16 %v1975, %v1973
    %v1986 = vpack.c.b16 %v1978, %v1976
    %v1987 = vpack.c.b16 %v1979, %v1977
    %v1995 = vsel %vm529, %v1949, 0
    %v1998 = vsel %vm529, %v1950, 0
    %v2001 = vsel %vm755, %v1986, 0
    %v2004 = vsel %vm755, %v1987, 0
    %2006 = vmatpush.bf16.msra.mxu0 0
    %2007 = vmatpush.bf16.msra.mxu0 0
    %2008 = vmatpush.bf16.msra.mxu0 0
    %2009 = vmatpush.bf16.msra.mxu0 0
    %2010 = vmatpush.bf16.msra.mxu0 %v2001
    %2011 = vmatpush.bf16.msra.mxu0 %v1984
    %2012 = vmatpush.bf16.msra.mxu0 %v1982
    %2013 = vmatpush.bf16.msra.mxu0 %v1980
    %2014 = vmatmul.bf16.gmra.mxu0 %v1995
    %v2015 = vpop.f32.mrf.mxu0
    %v2016 = vadd.f32 %v1952, %v2015
    %v2017 = vpop.f32.mrf.mxu0
    %v2018 = vadd.f32 %v1952, %v2017
    %2019 = vmatmul.bf16.gmra.mxu0 %v1998
    %v2020 = vpop.f32.mrf.mxu0
    %v2021 = vadd.f32 %v1952, %v2020
    %v2022 = vpop.f32.mrf.mxu0
    %v2023 = vadd.f32 %v1952, %v2022
    %2024 = vdwg.mxu0
    %2025 = vmatpush.bf16.msra.mxu0 0
    %2026 = vmatpush.bf16.msra.mxu0 0
    %2027 = vmatpush.bf16.msra.mxu0 0
    %2028 = vmatpush.bf16.msra.mxu0 0
    %2029 = vmatpush.bf16.msra.mxu0 %v2004
    %2030 = vmatpush.bf16.msra.mxu0 %v1985
    %2031 = vmatpush.bf16.msra.mxu0 %v1983
    %2032 = vmatpush.bf16.msra.mxu0 %v1981
    %2033 = vmatmul.bf16.gmra.mxu0 %v1995
    %v2034 = vpop.f32.mrf.mxu0
    %v2035 = vadd.f32 %v1953, %v2034
    %v2036 = vpop.f32.mrf.mxu0
    %v2037 = vadd.f32 %v1953, %v2036
    %2038 = vmatmul.bf16.gmra.mxu0 %v1998
    %v2039 = vpop.f32.mrf.mxu0
    %v2040 = vadd.f32 %v1953, %v2039
    %v2041 = vpop.f32.mrf.mxu0
    %v2042 = vadd.f32 %v1953, %v2041
    %2043 = vdwg.mxu0
    %v2044 = vmul.f32 %v2016, %v2016
    %v2045 = vmul.f32 %v2035, %v2035
    %v2046 = vmul.f32 %v2018, %v2018
    %v2047 = vmul.f32 %v2037, %v2037
    %v2048 = vmul.f32 %v2021, %v2021
    %v2049 = vmul.f32 %v2040, %v2040
    %v2050 = vmul.f32 %v2023, %v2023
    %v2051 = vmul.f32 %v2042, %v2042
    %v2052 = vmul.f32 %v2016, %v2044
    %v2053 = vmul.f32 %v2035, %v2045
    %v2054 = vmul.f32 %v2018, %v2046
    %v2055 = vmul.f32 %v2037, %v2047
    %v2056 = vmul.f32 %v2021, %v2048
    %v2057 = vmul.f32 %v2040, %v2049
    %v2058 = vmul.f32 %v2023, %v2050
    %v2059 = vmul.f32 %v2042, %v2051
    %v2060 = vmul.f32 %v2052, 0.044715
    %v2061 = vmul.f32 %v2053, 0.044715
    %v2062 = vmul.f32 %v2054, 0.044715
    %v2063 = vmul.f32 %v2055, 0.044715
    %v2064 = vmul.f32 %v2056, 0.044715
    %v2065 = vmul.f32 %v2057, 0.044715
    %v2066 = vmul.f32 %v2058, 0.044715
    %v2067 = vmul.f32 %v2059, 0.044715
    %v2068 = vadd.f32 %v2016, %v2060
    %v2069 = vadd.f32 %v2035, %v2061
    %v2070 = vadd.f32 %v2018, %v2062
    %v2071 = vadd.f32 %v2037, %v2063
    %v2072 = vadd.f32 %v2021, %v2064
    %v2073 = vadd.f32 %v2040, %v2065
    %v2074 = vadd.f32 %v2023, %v2066
    %v2075 = vadd.f32 %v2042, %v2067
    %v2076 = vmul.f32 %v2068, 0.7978846
    %v2077 = vmul.f32 %v2069, 0.7978846
    %v2078 = vmul.f32 %v2070, 0.7978846
    %v2079 = vmul.f32 %v2071, 0.7978846
    %v2080 = vmul.f32 %v2072, 0.7978846
    %v2081 = vmul.f32 %v2073, 0.7978846
    %v2082 = vmul.f32 %v2074, 0.7978846
    %v2083 = vmul.f32 %v2075, 0.7978846
    %v2084 = vtanh.pop %v2076
    %v2085 = vtanh.pop %v2077
    %v2086 = vtanh.pop %v2078
    %v2087 = vtanh.pop %v2079
    %v2088 = vtanh.pop %v2080
    %v2089 = vtanh.pop %v2081
    %v2090 = vtanh.pop %v2082
    %v2091 = vtanh.pop %v2083
    %v2092 = vadd.f32 %v2084, 1.0
    %v2093 = vadd.f32 %v2085, 1.0
    %v2094 = vadd.f32 %v2086, 1.0
    %v2095 = vadd.f32 %v2087, 1.0
    %v2096 = vadd.f32 %v2088, 1.0
    %v2097 = vadd.f32 %v2089, 1.0
    %v2098 = vadd.f32 %v2090, 1.0
    %v2099 = vadd.f32 %v2091, 1.0
    %v2100 = vmul.f32 %v2092, 0.5
    %v2101 = vmul.f32 %v2093, 0.5
    %v2102 = vmul.f32 %v2094, 0.5
    %v2103 = vmul.f32 %v2095, 0.5
    %v2104 = vmul.f32 %v2096, 0.5
    %v2105 = vmul.f32 %v2097, 0.5
    %v2106 = vmul.f32 %v2098, 0.5
    %v2107 = vmul.f32 %v2099, 0.5
    %v2108 = vmul.f32 %v2016, %v2100
    %v2109 = vmul.f32 %v2035, %v2101
    %v2110 = vmul.f32 %v2018, %v2102
    %v2111 = vmul.f32 %v2037, %v2103
    %v2112 = vmul.f32 %v2021, %v2104
    %v2113 = vmul.f32 %v2040, %v2105
    %v2114 = vmul.f32 %v2023, %v2106
    %v2115 = vmul.f32 %v2042, %v2107
    %v2116 = vpack.c.bf16 %v2110, %v2108
    %v2117 = vpack.c.bf16 %v2111, %v2109
    %v2118 = vpack.c.bf16 %v2114, %v2112
    %v2119 = vpack.c.bf16 %v2115, %v2113
    %v2121 = vperm.slane %v701, 0
    %v2153 = vunpack.c.l.b16 %v671
    %v2154 = vunpack.c.l.b16 %v672
    %v2155 = vunpack.c.l.b16 %v673
    %v2156 = vunpack.c.l.b16 %v674
    %v2157 = vunpack.c.l.b16 %v675
    %v2158 = vunpack.c.l.b16 %v676
    %v2159 = vunpack.c.l.b16 %v677
    %v2160 = vunpack.c.l.b16 %v678
    %v2161 = vunpack.c.l.b16 %v679
    %v2162 = vunpack.c.l.b16 %v680
    %v2163 = vunpack.c.l.b16 %v681
    %v2164 = vunpack.c.l.b16 %v682
    %v2165 = vunpack.c.l.b16 %v683
    %v2166 = vunpack.c.l.b16 %v684
    %v2167 = vunpack.c.l.b16 %v685
    %v2168 = vunpack.c.l.b16 %v686
    %v2169 = vunpack.c.l.b16 %v687
    %v2170 = vunpack.c.l.b16 %v688
    %v2171 = vunpack.c.l.b16 %v689
    %v2172 = vunpack.c.l.b16 %v690
    %v2173 = vunpack.c.l.b16 %v691
    %v2174 = vunpack.c.l.b16 %v692
    %v2175 = vunpack.c.l.b16 %v693
    %v2176 = vunpack.c.l.b16 %v694
    %v2177 = vunpack.c.l.b16 %v695
    %v2178 = vunpack.c.l.b16 %v696
    %v2179 = vunpack.c.l.b16 %v697
    %v2180 = vunpack.c.l.b16 %v698
    %v2181 = vunpack.c.l.b16 %v699
    %v2182 = vunpack.c.l.b16 %v700
    %v2183 = vpack.c.b16 %v2154, %v2153
    %v2184 = vpack.c.b16 %v2156, %v2155
    %v2185 = vpack.c.b16 %v2158, %v2157
    %v2186 = vpack.c.b16 %v2160, %v2159
    %v2187 = vpack.c.b16 %v2162, %v2161
    %v2188 = vpack.c.b16 %v2164, %v2163
    %v2189 = vpack.c.b16 %v2166, %v2165
    %v2190 = vpack.c.b16 %v2168, %v2167
    %v2191 = vpack.c.b16 %v2170, %v2169
    %v2192 = vpack.c.b16 %v2172, %v2171
    %v2193 = vpack.c.b16 %v2174, %v2173
    %v2194 = vpack.c.b16 %v2176, %v2175
    %v2195 = vpack.c.b16 %v2178, %v2177
    %v2196 = vpack.c.b16 %v2180, %v2179
    %v2197 = vpack.c.b16 %v2182, %v2181
    %vm2213 = vcmask 916480
    %v2215 = vsel %vm2213, %v2117, 0
    %v2218 = vsel %vm2213, %v2119, 0
    %2220 = vmatpush.bf16.msra.mxu0 %v2190
    %2221 = vmatpush.bf16.msra.mxu0 %v2189
    %2222 = vmatpush.bf16.msra.mxu0 %v2188
    %2223 = vmatpush.bf16.msra.mxu0 %v2187
    %2224 = vmatpush.bf16.msra.mxu0 %v2186
    %2225 = vmatpush.bf16.msra.mxu0 %v2185
    %2226 = vmatpush.bf16.msra.mxu0 %v2184
    %2227 = vmatpush.bf16.msra.mxu0 %v2183
    %2228 = vmatmul.bf16.gmra.mxu0 %v2116
    %v2229 = vpop.f32.mrf.mxu0
    %v2230 = vadd.f32 %v2121, %v2229
    %v2231 = vpop.f32.mrf.mxu0
    %v2232 = vadd.f32 %v2121, %v2231
    %2233 = vmatmul.bf16.gmra.mxu0 %v2118
    %v2234 = vpop.f32.mrf.mxu0
    %v2235 = vadd.f32 %v2121, %v2234
    %v2236 = vpop.f32.mrf.mxu0
    %v2237 = vadd.f32 %v2121, %v2236
    %2238 = vdwg.mxu0
    %2239 = vmatpush.bf16.msra.mxu0 0
    %2240 = vmatpush.bf16.msra.mxu0 %v2197
    %2241 = vmatpush.bf16.msra.mxu0 %v2196
    %2242 = vmatpush.bf16.msra.mxu0 %v2195
    %2243 = vmatpush.bf16.msra.mxu0 %v2194
    %2244 = vmatpush.bf16.msra.mxu0 %v2193
    %2245 = vmatpush.bf16.msra.mxu0 %v2192
    %2246 = vmatpush.bf16.msra.mxu0 %v2191
    %2247 = vmatmul.bf16.gmra.mxu0 %v2215
    %v2248 = vpop.f32.mrf.mxu0
    %v2249 = vadd.f32 %v2230, %v2248
    %v2250 = vpop.f32.mrf.mxu0
    %v2251 = vadd.f32 %v2232, %v2250
    %2252 = vmatmul.bf16.gmra.mxu0 %v2218
    %v2253 = vpop.f32.mrf.mxu0
    %v2254 = vadd.f32 %v2235, %v2253
    %v2255 = vpop.f32.mrf.mxu0
    %v2256 = vadd.f32 %v2237, %v2255
    %2257 = vdwg.mxu0
    %v2258 = vadd.f32 %v1945, %v2249
    %v2259 = vadd.f32 %v1946, %v2251
    %v2260 = vadd.f32 %v1947, %v2254
    %v2261 = vadd.f32 %v1948, %v2256
    %v2262 = vsel %vm529, %v2258, 0.0
    %2263 = vadd.xlane.f32.xlu0 %v2262
    %v2264 = vpop.xlane.xlu0 %2263
    %v2265 = vsel %vm529, %v2259, 0.0
    %2266 = vadd.xlane.f32.xlu0 %v2265
    %v2267 = vpop.xlane.xlu0 %2266
    %v2268 = vsel %vm529, %v2260, 0.0
    %2269 = vadd.xlane.f32.xlu0 %v2268
    %v2270 = vpop.xlane.xlu0 %2269
    %v2271 = vsel %vm529, %v2261, 0.0
    %2272 = vadd.xlane.f32.xlu0 %v2271
    %v2273 = vpop.xlane.xlu0 %2272
    %v2274 = vmul.f32 %v2264, %v548
    %v2275 = vmul.f32 %v2267, %v548
    %v2276 = vmul.f32 %v2270, %v548
    %v2277 = vmul.f32 %v2273, %v548
    %v2278 = vsub.f32 %v2258, %v2274
    %v2279 = vsub.f32 %v2259, %v2275
    %v2280 = vsub.f32 %v2260, %v2276
    %v2281 = vsub.f32 %v2261, %v2277
    %v2282 = vmul.f32 %v2278, %v2278
    %v2283 = vmul.f32 %v2279, %v2279
    %v2284 = vmul.f32 %v2280, %v2280
    %v2285 = vmul.f32 %v2281, %v2281
    %v2286 = vsel %vm529, %v2282, 0.0
    %2287 = vadd.xlane.f32.xlu0 %v2286
    %v2288 = vpop.xlane.xlu0 %2287
    %v2289 = vsel %vm529, %v2283, 0.0
    %2290 = vadd.xlane.f32.xlu0 %v2289
    %v2291 = vpop.xlane.xlu0 %2290
    %v2292 = vsel %vm529, %v2284, 0.0
    %2293 = vadd.xlane.f32.xlu0 %v2292
    %v2294 = vpop.xlane.xlu0 %2293
    %v2295 = vsel %vm529, %v2285, 0.0
    %2296 = vadd.xlane.f32.xlu0 %v2295
    %v2297 = vpop.xlane.xlu0 %2296
    %v2298 = vmul.f32 %v2288, %v548
    %v2299 = vmul.f32 %v2291, %v548
    %v2300 = vmul.f32 %v2294, %v548
    %v2301 = vmul.f32 %v2297, %v548
    %v2302 = vadd.f32 %v2298, 1e-05
    %v2303 = vadd.f32 %v2299, 1e-05
    %v2304 = vadd.f32 %v2300, 1e-05
    %v2305 = vadd.f32 %v2301, 1e-05
    %v2306 = vrsqrt.pop %v2302
    %v2307 = vmul.f32 %v2306, %v2302
    %v2308 = vmul.f32 %v2307, %v2306
    %v2309 = vmul.f32 0.5, %v2308
    %v2310 = vsub.f32 1.5, %v2309
    %v2311 = vmul.f32 %v2306, %v2310
    %vm2312 = vweird.f32 %v2302
    %vm2313 = vweird.f32 %v2306
    %vm2314 = vmor %vm2312, %vm2313
    %v2315 = vsel %vm2314, %v2306, %v2311
    %v2316 = vrsqrt.pop %v2303
    %v2317 = vmul.f32 %v2316, %v2303
    %v2318 = vmul.f32 %v2317, %v2316
    %v2319 = vmul.f32 0.5, %v2318
    %v2320 = vsub.f32 1.5, %v2319
    %v2321 = vmul.f32 %v2316, %v2320
    %vm2322 = vweird.f32 %v2303
    %vm2323 = vweird.f32 %v2316
    %vm2324 = vmor %vm2322, %vm2323
    %v2325 = vsel %vm2324, %v2316, %v2321
    %v2326 = vrsqrt.pop %v2304
    %v2327 = vmul.f32 %v2326, %v2304
    %v2328 = vmul.f32 %v2327, %v2326
    %v2329 = vmul.f32 0.5, %v2328
    %v2330 = vsub.f32 1.5, %v2329
    %v2331 = vmul.f32 %v2326, %v2330
    %vm2332 = vweird.f32 %v2304
    %vm2333 = vweird.f32 %v2326
    %vm2334 = vmor %vm2332, %vm2333
    %v2335 = vsel %vm2334, %v2326, %v2331
    %v2336 = vrsqrt.pop %v2305
    %v2337 = vmul.f32 %v2336, %v2305
    %v2338 = vmul.f32 %v2337, %v2336
    %v2339 = vmul.f32 0.5, %v2338
    %v2340 = vsub.f32 1.5, %v2339
    %v2341 = vmul.f32 %v2336, %v2340
    %vm2342 = vweird.f32 %v2305
    %vm2343 = vweird.f32 %v2336
    %vm2344 = vmor %vm2342, %vm2343
    %v2345 = vsel %vm2344, %v2336, %v2341
    %v2346 = vmul.f32 %v2278, %v2315
    %v2347 = vmul.f32 %v2279, %v2325
    %v2348 = vmul.f32 %v2280, %v2335
    %v2349 = vmul.f32 %v2281, %v2345
    %v2351 = vperm.slane %v702, 0
    %v2353 = vmul.f32 %v2346, %v2351
    %v2354 = vmul.f32 %v2347, %v2351
    %v2355 = vmul.f32 %v2348, %v2351
    %v2356 = vmul.f32 %v2349, %v2351
    %v2358 = vperm.slane %v703, 0
    %v2360 = vadd.f32 %v2353, %v2358
    %v2361 = vadd.f32 %v2354, %v2358
    %v2362 = vadd.f32 %v2355, %v2358
    %v2363 = vadd.f32 %v2356, %v2358
    %s2364 = scalar_lea.vmem %s19, 64
    %v2365 = vld [vmem:[%s2364] sm:$0xff]
    %v2366 = vld [vmem:[%s2364 + $0x8] sm:$0xff]
    %v2367 = vld [vmem:[%s2364 + $0x10] sm:$0xff]
    %v2368 = vld [vmem:[%s2364 + $0x18] sm:$0xff]
    %v2369 = vld [vmem:[%s2364 + $0x20] sm:$0xff]
    %v2370 = vld [vmem:[%s2364 + $0x28] sm:$0xff]
    %v2371 = vld [vmem:[%s2364 + $0x30] sm:$0xff]
    %v2372 = vld [vmem:[%s2364 + $0x38] sm:$0x33]
    %s2373 = scalar_lea.vmem %s21, 2
    %v2374 = vld [vmem:[%s2373] sm:$0x3]
    %s2375 = scalar_lea.vmem %s23, 32
    %v2376 = vld [vmem:[%s2375] sm:$0xf]
    %v2377 = vld [vmem:[%s2375 + $0x4] sm:$0xf]
    %v2378 = vld [vmem:[%s2375 + $0x8] sm:$0xf]
    %v2379 = vld [vmem:[%s2375 + $0xc] sm:$0xf]
    %v2380 = vld [vmem:[%s2375 + $0x10] sm:$0xf]
    %v2381 = vld [vmem:[%s2375 + $0x14] sm:$0xf]
    %v2382 = vld [vmem:[%s2375 + $0x18] sm:$0xf]
    %v2383 = vld [vmem:[%s2375 + $0x1c] sm:$0xf]
    %s2384 = scalar_lea.vmem [#allocation6], 1
    %v2385 = vld [vmem:[%s2384] sm:$0x1]
    %s2386 = scalar_lea.vmem [#allocation7], 1
    %v2387 = vld [vmem:[%s2386] sm:$0x1]
    %s2388 = scalar_lea.vmem [#allocation9], 1
    %v2389 = vld [vmem:[%s2388] sm:$0x1]
    %s2390 = scalar_lea.vmem %s31, 64
    %v2391 = vld [vmem:[%s2390] sm:$0xff]
    %v2392 = vld [vmem:[%s2390 + $0x8] sm:$0xff]
    %v2393 = vld [vmem:[%s2390 + $0x10] sm:$0xff]
    %v2394 = vld [vmem:[%s2390 + $0x18] sm:$0xff]
    %v2395 = vld [vmem:[%s2390 + $0x20] sm:$0xff]
    %v2396 = vld [vmem:[%s2390 + $0x28] sm:$0xff]
    %v2397 = vld [vmem:[%s2390 + $0x30] sm:$0xff]
    %v2398 = vld [vmem:[%s2390 + $0x38] sm:$0x33]
    %s2399 = scalar_lea.vmem [#allocation10], 2
    %v2400 = vld [vmem:[%s2399] sm:$0x3]
    %s2401 = scalar_lea.vmem %s35, 120
    %v2402 = vld [vmem:[%s2401] sm:$0xf]
    %v2403 = vld [vmem:[%s2401 + $0x4] sm:$0xf]
    %v2404 = vld [vmem:[%s2401 + $0x8] sm:$0xf]
    %v2405 = vld [vmem:[%s2401 + $0xc] sm:$0xf]
    %v2406 = vld [vmem:[%s2401 + $0x10] sm:$0xf]
    %v2407 = vld [vmem:[%s2401 + $0x14] sm:$0xf]
    %v2408 = vld [vmem:[%s2401 + $0x18] sm:$0xf]
    %v2409 = vld [vmem:[%s2401 + $0x1c] sm:$0xf]
    %v2410 = vld [vmem:[%s2401 + $0x20] sm:$0xf]
    %v2411 = vld [vmem:[%s2401 + $0x24] sm:$0xf]
    %v2412 = vld [vmem:[%s2401 + $0x28] sm:$0xf]
    %v2413 = vld [vmem:[%s2401 + $0x2c] sm:$0xf]
    %v2414 = vld [vmem:[%s2401 + $0x30] sm:$0xf]
    %v2415 = vld [vmem:[%s2401 + $0x34] sm:$0xf]
    %v2416 = vld [vmem:[%s2401 + $0x38] sm:$0xf]
    %v2417 = vld [vmem:[%s2401 + $0x3c] sm:$0xf]
    %v2418 = vld [vmem:[%s2401 + $0x40] sm:$0xf]
    %v2419 = vld [vmem:[%s2401 + $0x44] sm:$0xf]
    %v2420 = vld [vmem:[%s2401 + $0x48] sm:$0xf]
    %v2421 = vld [vmem:[%s2401 + $0x4c] sm:$0xf]
    %v2422 = vld [vmem:[%s2401 + $0x50] sm:$0xf]
    %v2423 = vld [vmem:[%s2401 + $0x54] sm:$0xf]
    %v2424 = vld [vmem:[%s2401 + $0x58] sm:$0xf]
    %v2425 = vld [vmem:[%s2401 + $0x5c] sm:$0xf]
    %v2426 = vld [vmem:[%s2401 + $0x60] sm:$0xf]
    %v2427 = vld [vmem:[%s2401 + $0x64] sm:$0xf]
    %v2428 = vld [vmem:[%s2401 + $0x68] sm:$0xf]
    %v2429 = vld [vmem:[%s2401 + $0x6c] sm:$0xf]
    %v2430 = vld [vmem:[%s2401 + $0x70] sm:$0xf]
    %v2431 = vld [vmem:[%s2401 + $0x74] sm:$0xf]
    %s2432 = scalar_lea.vmem [#allocation12], 1
    %v2433 = vld [vmem:[%s2432] sm:$0x1]
    %s2434 = scalar_lea.vmem [#allocation13], 1
    %v2435 = vld [vmem:[%s2434] sm:$0x1]
    %s2436 = scalar_lea.vmem [#allocation15], 1
    %v2437 = vld [vmem:[%s2436] sm:$0x1]
    %v2438 = vpack.c.bf16 %v2361, %v2360
    %v2439 = vpack.c.bf16 %v2363, %v2362
    %v2441 = vperm.slane %v2374, 0
    %v2442 = vperm.slane %v2374, 1
    %v2453 = vunpack.c.l.b16 %v2365
    %v2454 = vunpack.c.h.b16 %v2365
    %v2455 = vunpack.c.l.b16 %v2366
    %v2456 = vunpack.c.h.b16 %v2366
    %v2457 = vunpack.c.l.b16 %v2367
    %v2458 = vunpack.c.h.b16 %v2367
    %v2459 = vunpack.c.l.b16 %v2368
    %v2460 = vunpack.c.h.b16 %v2368
    %v2461 = vunpack.c.l.b16 %v2369
    %v2462 = vunpack.c.h.b16 %v2369
    %v2463 = vunpack.c.l.b16 %v2370
    %v2464 = vunpack.c.h.b16 %v2370
    %v2465 = vunpack.c.l.b16 %v2371
    %v2466 = vunpack.c.h.b16 %v2371
    %v2467 = vunpack.c.l.b16 %v2372
    %v2468 = vunpack.c.h.b16 %v2372
    %v2469 = vpack.c.b16 %v2455, %v2453
    %v2470 = vpack.c.b16 %v2456, %v2454
    %v2471 = vpack.c.b16 %v2459, %v2457
    %v2472 = vpack.c.b16 %v2460, %v2458
    %v2473 = vpack.c.b16 %v2463, %v2461
    %v2474 = vpack.c.b16 %v2464, %v2462
    %v2475 = vpack.c.b16 %v2467, %v2465
    %v2476 = vpack.c.b16 %v2468, %v2466
    %v2484 = vsel %vm529, %v2438, 0
    %v2487 = vsel %vm529, %v2439, 0
    %v2490 = vsel %vm755, %v2475, 0
    %v2493 = vsel %vm755, %v2476, 0
    %2495 = vmatpush.bf16.msra.mxu0 0
    %2496 = vmatpush.bf16.msra.mxu0 0
    %2497 = vmatpush.bf16.msra.mxu0 0
    %2498 = vmatpush.bf16.msra.mxu0 0
    %2499 = vmatpush.bf16.msra.mxu0 %v2490
    %2500 = vmatpush.bf16.msra.mxu0 %v2473
    %2501 = vmatpush.bf16.msra.mxu0 %v2471
    %2502 = vmatpush.bf16.msra.mxu0 %v2469
    %2503 = vmatmul.bf16.gmra.mxu0 %v2484
    %v2504 = vpop.f32.mrf.mxu0
    %v2505 = vadd.f32 %v2441, %v2504
    %v2506 = vpop.f32.mrf.mxu0
    %v2507 = vadd.f32 %v2441, %v2506
    %2508 = vmatmul.bf16.gmra.mxu0 %v2487
    %v2509 = vpop.f32.mrf.mxu0
    %v2510 = vadd.f32 %v2441, %v2509
    %v2511 = vpop.f32.mrf.mxu0
    %v2512 = vadd.f32 %v2441, %v2511
    %2513 = vdwg.mxu0
    %2514 = vmatpush.bf16.msra.mxu0 0
    %2515 = vmatpush.bf16.msra.mxu0 0
    %2516 = vmatpush.bf16.msra.mxu0 0
    %2517 = vmatpush.bf16.msra.mxu0 0
    %2518 = vmatpush.bf16.msra.mxu0 %v2493
    %2519 = vmatpush.bf16.msra.mxu0 %v2474
    %2520 = vmatpush.bf16.msra.mxu0 %v2472
    %2521 = vmatpush.bf16.msra.mxu0 %v2470
    %2522 = vmatmul.bf16.gmra.mxu0 %v2484
    %v2523 = vpop.f32.mrf.mxu0
    %v2524 = vadd.f32 %v2442, %v2523
    %v2525 = vpop.f32.mrf.mxu0
    %v2526 = vadd.f32 %v2442, %v2525
    %2527 = vmatmul.bf16.gmra.mxu0 %v2487
    %v2528 = vpop.f32.mrf.mxu0
    %v2529 = vadd.f32 %v2442, %v2528
    %v2530 = vpop.f32.mrf.mxu0
    %v2531 = vadd.f32 %v2442, %v2530
    %2532 = vdwg.mxu0
    %v2533 = vpack.c.bf16 %v2505, %v2505
    %v2534 = vpack.c.bf16 %v2507, %v2507
    %v2535 = vpack.c.bf16 %v2510, %v2510
    %v2536 = vpack.c.bf16 %v2512, %v2512
    %v2538 = vunpack.c.l.b16 %v2533
    %v2539 = vpack.c.b16 %v2538, %v2538
    %2540 = vrot.lane.b32.xlu0 %v2539, 64
    %v2541 = vpop.permute.xlu0 %2540
    %v2543 = vsel %vm821, %v2533, 0
    %v2546 = vsel %vm821, %v2541, 0
    %2548 = vmatpush.bf16.xpose.msra.mxu0 0
    %2549 = vmatpush.bf16.xpose.msra.mxu0 0
    %2550 = vmatpush.bf16.xpose.msra.mxu0 0
    %2551 = vmatpush.bf16.xpose.msra.mxu0 0
    %2552 = vmatpush.bf16.xpose.msra.mxu0 0
    %2553 = vmatpush.bf16.xpose.msra.mxu0 0
    %2554 = vmatpush.bf16.xpose.msra.mxu0 0
    %2555 = vmatpush.bf16.xpose.msra.mxu0 %v2546
    %2556 = vmatmul.bf16.gmra.mxu0 %v2543
    %v2557 = vpop.f32.mrf.mxu0
    %v2558 = vadd.f32 %v808, %v2557
    %v2559 = vpop.f32.mrf.mxu0
    %2560 = vdwg.mxu0
    %v2562 = vunpack.c.l.b16 %v2534
    %v2563 = vpack.c.b16 %v2562, %v2562
    %2564 = vrot.lane.b32.xlu0 %v2563, 64
    %v2565 = vpop.permute.xlu0 %2564
    %v2567 = vsel %vm821, %v2534, 0
    %v2570 = vsel %vm821, %v2565, 0
    %2572 = vmatpush.bf16.xpose.msra.mxu0 0
    %2573 = vmatpush.bf16.xpose.msra.mxu0 0
    %2574 = vmatpush.bf16.xpose.msra.mxu0 0
    %2575 = vmatpush.bf16.xpose.msra.mxu0 0
    %2576 = vmatpush.bf16.xpose.msra.mxu0 0
    %2577 = vmatpush.bf16.xpose.msra.mxu0 0
    %2578 = vmatpush.bf16.xpose.msra.mxu0 0
    %2579 = vmatpush.bf16.xpose.msra.mxu0 %v2570
    %2580 = vmatmul.bf16.gmra.mxu0 %v2567
    %v2581 = vpop.f32.mrf.mxu0
    %v2582 = vadd.f32 %v809, %v2581
    %v2583 = vpop.f32.mrf.mxu0
    %2584 = vdwg.mxu0
    %v2586 = vunpack.c.l.b16 %v2535
    %v2587 = vpack.c.b16 %v2586, %v2586
    %2588 = vrot.lane.b32.xlu0 %v2587, 64
    %v2589 = vpop.permute.xlu0 %2588
    %v2591 = vsel %vm821, %v2535, 0
    %v2594 = vsel %vm821, %v2589, 0
    %2596 = vmatpush.bf16.xpose.msra.mxu0 0
    %2597 = vmatpush.bf16.xpose.msra.mxu0 0
    %2598 = vmatpush.bf16.xpose.msra.mxu0 0
    %2599 = vmatpush.bf16.xpose.msra.mxu0 0
    %2600 = vmatpush.bf16.xpose.msra.mxu0 0
    %2601 = vmatpush.bf16.xpose.msra.mxu0 0
    %2602 = vmatpush.bf16.xpose.msra.mxu0 0
    %2603 = vmatpush.bf16.xpose.msra.mxu0 %v2594
    %2604 = vmatmul.bf16.gmra.mxu0 %v2591
    %v2605 = vpop.f32.mrf.mxu0
    %v2606 = vadd.f32 %v810, %v2605
    %v2607 = vpop.f32.mrf.mxu0
    %2608 = vdwg.mxu0
    %v2610 = vunpack.c.l.b16 %v2536
    %v2611 = vpack.c.b16 %v2610, %v2610
    %2612 = vrot.lane.b32.xlu0 %v2611, 64
    %v2613 = vpop.permute.xlu0 %2612
    %v2615 = vsel %vm821, %v2536, 0
    %v2618 = vsel %vm821, %v2613, 0
    %2620 = vmatpush.bf16.xpose.msra.mxu0 0
    %2621 = vmatpush.bf16.xpose.msra.mxu0 0
    %2622 = vmatpush.bf16.xpose.msra.mxu0 0
    %2623 = vmatpush.bf16.xpose.msra.mxu0 0
    %2624 = vmatpush.bf16.xpose.msra.mxu0 0
    %2625 = vmatpush.bf16.xpose.msra.mxu0 0
    %2626 = vmatpush.bf16.xpose.msra.mxu0 0
    %2627 = vmatpush.bf16.xpose.msra.mxu0 %v2618
    %2628 = vmatmul.bf16.gmra.mxu0 %v2615
    %v2629 = vpop.f32.mrf.mxu0
    %v2630 = vadd.f32 %v811, %v2629
    %v2631 = vpop.f32.mrf.mxu0
    %2632 = vdwg.mxu0
    %v2633 = vsel %vm913, %v2558, -inf
    %2634 = vmax.xlane.f32.xlu0 %v2633
    %v2635 = vpop.xlane.xlu0 %2634
    %v2636 = vsel %vm913, %v2582, -inf
    %2637 = vmax.xlane.f32.xlu0 %v2636
    %v2638 = vpop.xlane.xlu0 %2637
    %v2639 = vsel %vm913, %v2606, -inf
    %2640 = vmax.xlane.f32.xlu0 %v2639
    %v2641 = vpop.xlane.xlu0 %2640
    %v2642 = vsel %vm913, %v2630, -inf
    %2643 = vmax.xlane.f32.xlu0 %v2642
    %v2644 = vpop.xlane.xlu0 %2643
    %v2645 = vsub.f32 %v2558, %v2635
    %v2646 = vsub.f32 %v2582, %v2638
    %v2647 = vsub.f32 %v2606, %v2641
    %v2648 = vsub.f32 %v2630, %v2644
    %v2649 = vmul.f32 %v2645, 1.442695
    %v2650 = vpow.pop %v2649
    %v2651 = vmul.f32 %v2646, 1.442695
    %v2652 = vpow.pop %v2651
    %v2653 = vmul.f32 %v2647, 1.442695
    %v2654 = vpow.pop %v2653
    %v2655 = vmul.f32 %v2648, 1.442695
    %v2656 = vpow.pop %v2655
    %v2657 = vsel %vm913, %v2650, 0.0
    %2658 = vadd.xlane.f32.xlu0 %v2657
    %v2659 = vpop.xlane.xlu0 %2658
    %v2660 = vsel %vm913, %v2652, 0.0
    %2661 = vadd.xlane.f32.xlu0 %v2660
    %v2662 = vpop.xlane.xlu0 %2661
    %v2663 = vsel %vm913, %v2654, 0.0
    %2664 = vadd.xlane.f32.xlu0 %v2663
    %v2665 = vpop.xlane.xlu0 %2664
    %v2666 = vsel %vm913, %v2656, 0.0
    %2667 = vadd.xlane.f32.xlu0 %v2666
    %v2668 = vpop.xlane.xlu0 %2667
    %v2669 = vrcp.pop %v2659
    %v2670 = vrcp.pop %v2662
    %v2671 = vrcp.pop %v2665
    %v2672 = vrcp.pop %v2668
    %v2673 = vmul.f32 %v2650, %v2669
    %v2674 = vmul.f32 %v2652, %v2670
    %v2675 = vmul.f32 %v2654, %v2671
    %v2676 = vmul.f32 %v2656, %v2672
    %v2677 = vpack.c.bf16 %v2673, %v2673
    %v2678 = vpack.c.bf16 %v2674, %v2674
    %v2679 = vpack.c.bf16 %v2675, %v2675
    %v2680 = vpack.c.bf16 %v2676, %v2676
    %v2681 = vpack.c.bf16 %v2524, %v2524
    %v2682 = vpack.c.bf16 %v2526, %v2526
    %v2683 = vpack.c.bf16 %v2529, %v2529
    %v2684 = vpack.c.bf16 %v2531, %v2531
    %v2686 = vsel %vm913, %v2677, 0
    %v2689 = vsel %vm969, %v2681, 0
    %2691 = vmatpush.bf16.msra.mxu0 0
    %2692 = vmatpush.bf16.msra.mxu0 0
    %2693 = vmatpush.bf16.msra.mxu0 0
    %2694 = vmatpush.bf16.msra.mxu0 0
    %2695 = vmatpush.bf16.msra.mxu0 0
    %2696 = vmatpush.bf16.msra.mxu0 0
    %2697 = vmatpush.bf16.msra.mxu0 0
    %2698 = vmatpush.bf16.msra.mxu0 %v2689
    %2699 = vmatmul.bf16.gmra.mxu0 %v2686
    %v2700 = vpop.f32.mrf.mxu0
    %v2701 = vadd.f32 0.0, %v2700
    %v2702 = vpop.f32.mrf.mxu0
    %2703 = vdwg.mxu0
    %v2705 = vsel %vm913, %v2678, 0
    %v2708 = vsel %vm969, %v2682, 0
    %2710 = vmatpush.bf16.msra.mxu0 0
    %2711 = vmatpush.bf16.msra.mxu0 0
    %2712 = vmatpush.bf16.msra.mxu0 0
    %2713 = vmatpush.bf16.msra.mxu0 0
    %2714 = vmatpush.bf16.msra.mxu0 0
    %2715 = vmatpush.bf16.msra.mxu0 0
    %2716 = vmatpush.bf16.msra.mxu0 0
    %2717 = vmatpush.bf16.msra.mxu0 %v2708
    %2718 = vmatmul.bf16.gmra.mxu0 %v2705
    %v2719 = vpop.f32.mrf.mxu0
    %v2720 = vadd.f32 0.0, %v2719
    %v2721 = vpop.f32.mrf.mxu0
    %2722 = vdwg.mxu0
    %v2724 = vsel %vm913, %v2679, 0
    %v2727 = vsel %vm969, %v2683, 0
    %2729 = vmatpush.bf16.msra.mxu0 0
    %2730 = vmatpush.bf16.msra.mxu0 0
    %2731 = vmatpush.bf16.msra.mxu0 0
    %2732 = vmatpush.bf16.msra.mxu0 0
    %2733 = vmatpush.bf16.msra.mxu0 0
    %2734 = vmatpush.bf16.msra.mxu0 0
    %2735 = vmatpush.bf16.msra.mxu0 0
    %2736 = vmatpush.bf16.msra.mxu0 %v2727
    %2737 = vmatmul.bf16.gmra.mxu0 %v2724
    %v2738 = vpop.f32.mrf.mxu0
    %v2739 = vadd.f32 0.0, %v2738
    %v2740 = vpop.f32.mrf.mxu0
    %2741 = vdwg.mxu0
    %v2743 = vsel %vm913, %v2680, 0
    %v2746 = vsel %vm969, %v2684, 0
    %2748 = vmatpush.bf16.msra.mxu0 0
    %2749 = vmatpush.bf16.msra.mxu0 0
    %2750 = vmatpush.bf16.msra.mxu0 0
    %2751 = vmatpush.bf16.msra.mxu0 0
    %2752 = vmatpush.bf16.msra.mxu0 0
    %2753 = vmatpush.bf16.msra.mxu0 0
    %2754 = vmatpush.bf16.msra.mxu0 0
    %2755 = vmatpush.bf16.msra.mxu0 %v2746
    %2756 = vmatmul.bf16.gmra.mxu0 %v2743
    %v2757 = vpop.f32.mrf.mxu0
    %v2758 = vadd.f32 0.0, %v2757
    %v2759 = vpop.f32.mrf.mxu0
    %2760 = vdwg.mxu0
    %2761 = vrot.lane.b32.xlu0 %v2539, 112
    %v2762 = vpop.permute.xlu0 %2761
    %2763 = vrot.lane.b32.xlu0 %v2539, 48
    %v2764 = vpop.permute.xlu0 %2763
    %v2766 = vsel %vm821, %v2762, 0
    %v2769 = vsel %vm821, %v2764, 0
    %2771 = vmatpush.bf16.xpose.msra.mxu0 0
    %2772 = vmatpush.bf16.xpose.msra.mxu0 0
    %2773 = vmatpush.bf16.xpose.msra.mxu0 0
    %2774 = vmatpush.bf16.xpose.msra.mxu0 0
    %2775 = vmatpush.bf16.xpose.msra.mxu0 0
    %2776 = vmatpush.bf16.xpose.msra.mxu0 0
    %2777 = vmatpush.bf16.xpose.msra.mxu0 0
    %2778 = vmatpush.bf16.xpose.msra.mxu0 %v2769
    %2779 = vmatmul.bf16.gmra.mxu0 %v2766
    %v2780 = vpop.f32.mrf.mxu0
    %v2781 = vadd.f32 %v808, %v2780
    %v2782 = vpop.f32.mrf.mxu0
    %2783 = vdwg.mxu0
    %2784 = vrot.lane.b32.xlu0 %v2563, 112
    %v2785 = vpop.permute.xlu0 %2784
    %2786 = vrot.lane.b32.xlu0 %v2563, 48
    %v2787 = vpop.permute.xlu0 %2786
    %v2789 = vsel %vm821, %v2785, 0
    %v2792 = vsel %vm821, %v2787, 0
    %2794 = vmatpush.bf16.xpose.msra.mxu0 0
    %2795 = vmatpush.bf16.xpose.msra.mxu0 0
    %2796 = vmatpush.bf16.xpose.msra.mxu0 0
    %2797 = vmatpush.bf16.xpose.msra.mxu0 0
    %2798 = vmatpush.bf16.xpose.msra.mxu0 0
    %2799 = vmatpush.bf16.xpose.msra.mxu0 0
    %2800 = vmatpush.bf16.xpose.msra.mxu0 0
    %2801 = vmatpush.bf16.xpose.msra.mxu0 %v2792
    %2802 = vmatmul.bf16.gmra.mxu0 %v2789
    %v2803 = vpop.f32.mrf.mxu0
    %v2804 = vadd.f32 %v809, %v2803
    %v2805 = vpop.f32.mrf.mxu0
    %2806 = vdwg.mxu0
    %2807 = vrot.lane.b32.xlu0 %v2587, 112
    %v2808 = vpop.permute.xlu0 %2807
    %2809 = vrot.lane.b32.xlu0 %v2587, 48
    %v2810 = vpop.permute.xlu0 %2809
    %v2812 = vsel %vm821, %v2808, 0
    %v2815 = vsel %vm821, %v2810, 0
    %2817 = vmatpush.bf16.xpose.msra.mxu0 0
    %2818 = vmatpush.bf16.xpose.msra.mxu0 0
    %2819 = vmatpush.bf16.xpose.msra.mxu0 0
    %2820 = vmatpush.bf16.xpose.msra.mxu0 0
    %2821 = vmatpush.bf16.xpose.msra.mxu0 0
    %2822 = vmatpush.bf16.xpose.msra.mxu0 0
    %2823 = vmatpush.bf16.xpose.msra.mxu0 0
    %2824 = vmatpush.bf16.xpose.msra.mxu0 %v2815
    %2825 = vmatmul.bf16.gmra.mxu0 %v2812
    %v2826 = vpop.f32.mrf.mxu0
    %v2827 = vadd.f32 %v810, %v2826
    %v2828 = vpop.f32.mrf.mxu0
    %2829 = vdwg.mxu0
    %2830 = vrot.lane.b32.xlu0 %v2611, 112
    %v2831 = vpop.permute.xlu0 %2830
    %2832 = vrot.lane.b32.xlu0 %v2611, 48
    %v2833 = vpop.permute.xlu0 %2832
    %v2835 = vsel %vm821, %v2831, 0
    %v2838 = vsel %vm821, %v2833, 0
    %2840 = vmatpush.bf16.xpose.msra.mxu0 0
    %2841 = vmatpush.bf16.xpose.msra.mxu0 0
    %2842 = vmatpush.bf16.xpose.msra.mxu0 0
    %2843 = vmatpush.bf16.xpose.msra.mxu0 0
    %2844 = vmatpush.bf16.xpose.msra.mxu0 0
    %2845 = vmatpush.bf16.xpose.msra.mxu0 0
    %2846 = vmatpush.bf16.xpose.msra.mxu0 0
    %2847 = vmatpush.bf16.xpose.msra.mxu0 %v2838
    %2848 = vmatmul.bf16.gmra.mxu0 %v2835
    %v2849 = vpop.f32.mrf.mxu0
    %v2850 = vadd.f32 %v811, %v2849
    %v2851 = vpop.f32.mrf.mxu0
    %2852 = vdwg.mxu0
    %v2853 = vsel %vm913, %v2781, -inf
    %2854 = vmax.xlane.f32.xlu0 %v2853
    %v2855 = vpop.xlane.xlu0 %2854
    %v2856 = vsel %vm913, %v2804, -inf
    %2857 = vmax.xlane.f32.xlu0 %v2856
    %v2858 = vpop.xlane.xlu0 %2857
    %v2859 = vsel %vm913, %v2827, -inf
    %2860 = vmax.xlane.f32.xlu0 %v2859
    %v2861 = vpop.xlane.xlu0 %2860
    %v2862 = vsel %vm913, %v2850, -inf
    %2863 = vmax.xlane.f32.xlu0 %v2862
    %v2864 = vpop.xlane.xlu0 %2863
    %v2865 = vsub.f32 %v2781, %v2855
    %v2866 = vsub.f32 %v2804, %v2858
    %v2867 = vsub.f32 %v2827, %v2861
    %v2868 = vsub.f32 %v2850, %v2864
    %v2869 = vmul.f32 %v2865, 1.442695
    %v2870 = vpow.pop %v2869
    %v2871 = vmul.f32 %v2866, 1.442695
    %v2872 = vpow.pop %v2871
    %v2873 = vmul.f32 %v2867, 1.442695
    %v2874 = vpow.pop %v2873
    %v2875 = vmul.f32 %v2868, 1.442695
    %v2876 = vpow.pop %v2875
    %v2877 = vsel %vm913, %v2870, 0.0
    %2878 = vadd.xlane.f32.xlu0 %v2877
    %v2879 = vpop.xlane.xlu0 %2878
    %v2880 = vsel %vm913, %v2872, 0.0
    %2881 = vadd.xlane.f32.xlu0 %v2880
    %v2882 = vpop.xlane.xlu0 %2881
    %v2883 = vsel %vm913, %v2874, 0.0
    %2884 = vadd.xlane.f32.xlu0 %v2883
    %v2885 = vpop.xlane.xlu0 %2884
    %v2886 = vsel %vm913, %v2876, 0.0
    %2887 = vadd.xlane.f32.xlu0 %v2886
    %v2888 = vpop.xlane.xlu0 %2887
    %v2889 = vrcp.pop %v2879
    %v2890 = vrcp.pop %v2882
    %v2891 = vrcp.pop %v2885
    %v2892 = vrcp.pop %v2888
    %v2893 = vmul.f32 %v2870, %v2889
    %v2894 = vmul.f32 %v2872, %v2890
    %v2895 = vmul.f32 %v2874, %v2891
    %v2896 = vmul.f32 %v2876, %v2892
    %v2897 = vpack.c.bf16 %v2893, %v2893
    %v2898 = vpack.c.bf16 %v2894, %v2894
    %v2899 = vpack.c.bf16 %v2895, %v2895
    %v2900 = vpack.c.bf16 %v2896, %v2896
    %v2902 = vunpack.c.l.b16 %v2681
    %v2903 = vpack.c.b16 %v2902, %v2902
    %2904 = vrot.lane.b32.xlu0 %v2903, 112
    %v2905 = vpop.permute.xlu0 %2904
    %v2907 = vsel %vm913, %v2897, 0
    %v2910 = vsel %vm969, %v2905, 0
    %2912 = vmatpush.bf16.msra.mxu0 0
    %2913 = vmatpush.bf16.msra.mxu0 0
    %2914 = vmatpush.bf16.msra.mxu0 0
    %2915 = vmatpush.bf16.msra.mxu0 0
    %2916 = vmatpush.bf16.msra.mxu0 0
    %2917 = vmatpush.bf16.msra.mxu0 0
    %2918 = vmatpush.bf16.msra.mxu0 0
    %2919 = vmatpush.bf16.msra.mxu0 %v2910
    %2920 = vmatmul.bf16.gmra.mxu0 %v2907
    %v2921 = vpop.f32.mrf.mxu0
    %v2922 = vadd.f32 0.0, %v2921
    %v2923 = vpop.f32.mrf.mxu0
    %2924 = vdwg.mxu0
    %v2926 = vunpack.c.l.b16 %v2682
    %v2927 = vpack.c.b16 %v2926, %v2926
    %2928 = vrot.lane.b32.xlu0 %v2927, 112
    %v2929 = vpop.permute.xlu0 %2928
    %v2931 = vsel %vm913, %v2898, 0
    %v2934 = vsel %vm969, %v2929, 0
    %2936 = vmatpush.bf16.msra.mxu0 0
    %2937 = vmatpush.bf16.msra.mxu0 0
    %2938 = vmatpush.bf16.msra.mxu0 0
    %2939 = vmatpush.bf16.msra.mxu0 0
    %2940 = vmatpush.bf16.msra.mxu0 0
    %2941 = vmatpush.bf16.msra.mxu0 0
    %2942 = vmatpush.bf16.msra.mxu0 0
    %2943 = vmatpush.bf16.msra.mxu0 %v2934
    %2944 = vmatmul.bf16.gmra.mxu0 %v2931
    %v2945 = vpop.f32.mrf.mxu0
    %v2946 = vadd.f32 0.0, %v2945
    %v2947 = vpop.f32.mrf.mxu0
    %2948 = vdwg.mxu0
    %v2950 = vunpack.c.l.b16 %v2683
    %v2951 = vpack.c.b16 %v2950, %v2950
    %2952 = vrot.lane.b32.xlu0 %v2951, 112
    %v2953 = vpop.permute.xlu0 %2952
    %v2955 = vsel %vm913, %v2899, 0
    %v2958 = vsel %vm969, %v2953, 0
    %2960 = vmatpush.bf16.msra.mxu0 0
    %2961 = vmatpush.bf16.msra.mxu0 0
    %2962 = vmatpush.bf16.msra.mxu0 0
    %2963 = vmatpush.bf16.msra.mxu0 0
    %2964 = vmatpush.bf16.msra.mxu0 0
    %2965 = vmatpush.bf16.msra.mxu0 0
    %2966 = vmatpush.bf16.msra.mxu0 0
    %2967 = vmatpush.bf16.msra.mxu0 %v2958
    %2968 = vmatmul.bf16.gmra.mxu0 %v2955
    %v2969 = vpop.f32.mrf.mxu0
    %v2970 = vadd.f32 0.0, %v2969
    %v2971 = vpop.f32.mrf.mxu0
    %2972 = vdwg.mxu0
    %v2974 = vunpack.c.l.b16 %v2684
    %v2975 = vpack.c.b16 %v2974, %v2974
    %2976 = vrot.lane.b32.xlu0 %v2975, 112
    %v2977 = vpop.permute.xlu0 %2976
    %v2979 = vsel %vm913, %v2900, 0
    %v2982 = vsel %vm969, %v2977, 0
    %2984 = vmatpush.bf16.msra.mxu0 0
    %2985 = vmatpush.bf16.msra.mxu0 0
    %2986 = vmatpush.bf16.msra.mxu0 0
    %2987 = vmatpush.bf16.msra.mxu0 0
    %2988 = vmatpush.bf16.msra.mxu0 0
    %2989 = vmatpush.bf16.msra.mxu0 0
    %2990 = vmatpush.bf16.msra.mxu0 0
    %2991 = vmatpush.bf16.msra.mxu0 %v2982
    %2992 = vmatmul.bf16.gmra.mxu0 %v2979
    %v2993 = vpop.f32.mrf.mxu0
    %v2994 = vadd.f32 0.0, %v2993
    %v2995 = vpop.f32.mrf.mxu0
    %2996 = vdwg.mxu0
    %2997 = vrot.lane.b32.xlu0 %v2539, 96
    %v2998 = vpop.permute.xlu0 %2997
    %2999 = vrot.lane.b32.xlu0 %v2539, 32
    %v3000 = vpop.permute.xlu0 %2999
    %v3002 = vsel %vm821, %v2998, 0
    %v3005 = vsel %vm821, %v3000, 0
    %3007 = vmatpush.bf16.xpose.msra.mxu0 0
    %3008 = vmatpush.bf16.xpose.msra.mxu0 0
    %3009 = vmatpush.bf16.xpose.msra.mxu0 0
    %3010 = vmatpush.bf16.xpose.msra.mxu0 0
    %3011 = vmatpush.bf16.xpose.msra.mxu0 0
    %3012 = vmatpush.bf16.xpose.msra.mxu0 0
    %3013 = vmatpush.bf16.xpose.msra.mxu0 0
    %3014 = vmatpush.bf16.xpose.msra.mxu0 %v3005
    %3015 = vmatmul.bf16.gmra.mxu0 %v3002
    %v3016 = vpop.f32.mrf.mxu0
    %v3017 = vadd.f32 %v808, %v3016
    %v3018 = vpop.f32.mrf.mxu0
    %3019 = vdwg.mxu0
    %3020 = vrot.lane.b32.xlu0 %v2563, 96
    %v3021 = vpop.permute.xlu0 %3020
    %3022 = vrot.lane.b32.xlu0 %v2563, 32
    %v3023 = vpop.permute.xlu0 %3022
    %v3025 = vsel %vm821, %v3021, 0
    %v3028 = vsel %vm821, %v3023, 0
    %3030 = vmatpush.bf16.xpose.msra.mxu0 0
    %3031 = vmatpush.bf16.xpose.msra.mxu0 0
    %3032 = vmatpush.bf16.xpose.msra.mxu0 0
    %3033 = vmatpush.bf16.xpose.msra.mxu0 0
    %3034 = vmatpush.bf16.xpose.msra.mxu0 0
    %3035 = vmatpush.bf16.xpose.msra.mxu0 0
    %3036 = vmatpush.bf16.xpose.msra.mxu0 0
    %3037 = vmatpush.bf16.xpose.msra.mxu0 %v3028
    %3038 = vmatmul.bf16.gmra.mxu0 %v3025
    %v3039 = vpop.f32.mrf.mxu0
    %v3040 = vadd.f32 %v809, %v3039
    %v3041 = vpop.f32.mrf.mxu0
    %3042 = vdwg.mxu0
    %3043 = vrot.lane.b32.xlu0 %v2587, 96
    %v3044 = vpop.permute.xlu0 %3043
    %3045 = vrot.lane.b32.xlu0 %v2587, 32
    %v3046 = vpop.permute.xlu0 %3045
    %v3048 = vsel %vm821, %v3044, 0
    %v3051 = vsel %vm821, %v3046, 0
    %3053 = vmatpush.bf16.xpose.msra.mxu0 0
    %3054 = vmatpush.bf16.xpose.msra.mxu0 0
    %3055 = vmatpush.bf16.xpose.msra.mxu0 0
    %3056 = vmatpush.bf16.xpose.msra.mxu0 0
    %3057 = vmatpush.bf16.xpose.msra.mxu0 0
    %3058 = vmatpush.bf16.xpose.msra.mxu0 0
    %3059 = vmatpush.bf16.xpose.msra.mxu0 0
    %3060 = vmatpush.bf16.xpose.msra.mxu0 %v3051
    %3061 = vmatmul.bf16.gmra.mxu0 %v3048
    %v3062 = vpop.f32.mrf.mxu0
    %v3063 = vadd.f32 %v810, %v3062
    %v3064 = vpop.f32.mrf.mxu0
    %3065 = vdwg.mxu0
    %3066 = vrot.lane.b32.xlu0 %v2611, 96
    %v3067 = vpop.permute.xlu0 %3066
    %3068 = vrot.lane.b32.xlu0 %v2611, 32
    %v3069 = vpop.permute.xlu0 %3068
    %v3071 = vsel %vm821, %v3067, 0
    %v3074 = vsel %vm821, %v3069, 0
    %3076 = vmatpush.bf16.xpose.msra.mxu0 0
    %3077 = vmatpush.bf16.xpose.msra.mxu0 0
    %3078 = vmatpush.bf16.xpose.msra.mxu0 0
    %3079 = vmatpush.bf16.xpose.msra.mxu0 0
    %3080 = vmatpush.bf16.xpose.msra.mxu0 0
    %3081 = vmatpush.bf16.xpose.msra.mxu0 0
    %3082 = vmatpush.bf16.xpose.msra.mxu0 0
    %3083 = vmatpush.bf16.xpose.msra.mxu0 %v3074
    %3084 = vmatmul.bf16.gmra.mxu0 %v3071
    %v3085 = vpop.f32.mrf.mxu0
    %v3086 = vadd.f32 %v811, %v3085
    %v3087 = vpop.f32.mrf.mxu0
    %3088 = vdwg.mxu0
    %v3089 = vsel %vm913, %v3017, -inf
    %3090 = vmax.xlane.f32.xlu0 %v3089
    %v3091 = vpop.xlane.xlu0 %3090
    %v3092 = vsel %vm913, %v3040, -inf
    %3093 = vmax.xlane.f32.xlu0 %v3092
    %v3094 = vpop.xlane.xlu0 %3093
    %v3095 = vsel %vm913, %v3063, -inf
    %3096 = vmax.xlane.f32.xlu0 %v3095
    %v3097 = vpop.xlane.xlu0 %3096
    %v3098 = vsel %vm913, %v3086, -inf
    %3099 = vmax.xlane.f32.xlu0 %v3098
    %v3100 = vpop.xlane.xlu0 %3099
    %v3101 = vsub.f32 %v3017, %v3091
    %v3102 = vsub.f32 %v3040, %v3094
    %v3103 = vsub.f32 %v3063, %v3097
    %v3104 = vsub.f32 %v3086, %v3100
    %v3105 = vmul.f32 %v3101, 1.442695
    %v3106 = vpow.pop %v3105
    %v3107 = vmul.f32 %v3102, 1.442695
    %v3108 = vpow.pop %v3107
    %v3109 = vmul.f32 %v3103, 1.442695
    %v3110 = vpow.pop %v3109
    %v3111 = vmul.f32 %v3104, 1.442695
    %v3112 = vpow.pop %v3111
    %v3113 = vsel %vm913, %v3106, 0.0
    %3114 = vadd.xlane.f32.xlu0 %v3113
    %v3115 = vpop.xlane.xlu0 %3114
    %v3116 = vsel %vm913, %v3108, 0.0
    %3117 = vadd.xlane.f32.xlu0 %v3116
    %v3118 = vpop.xlane.xlu0 %3117
    %v3119 = vsel %vm913, %v3110, 0.0
    %3120 = vadd.xlane.f32.xlu0 %v3119
    %v3121 = vpop.xlane.xlu0 %3120
    %v3122 = vsel %vm913, %v3112, 0.0
    %3123 = vadd.xlane.f32.xlu0 %v3122
    %v3124 = vpop.xlane.xlu0 %3123
    %v3125 = vrcp.pop %v3115
    %v3126 = vrcp.pop %v3118
    %v3127 = vrcp.pop %v3121
    %v3128 = vrcp.pop %v3124
    %v3129 = vmul.f32 %v3106, %v3125
    %v3130 = vmul.f32 %v3108, %v3126
    %v3131 = vmul.f32 %v3110, %v3127
    %v3132 = vmul.f32 %v3112, %v3128
    %v3133 = vpack.c.bf16 %v3129, %v3129
    %v3134 = vpack.c.bf16 %v3130, %v3130
    %v3135 = vpack.c.bf16 %v3131, %v3131
    %v3136 = vpack.c.bf16 %v3132, %v3132
    %3137 = vrot.lane.b32.xlu0 %v2903, 96
    %v3138 = vpop.permute.xlu0 %3137
    %v3140 = vsel %vm913, %v3133, 0
    %v3143 = vsel %vm969, %v3138, 0
    %3145 = vmatpush.bf16.msra.mxu0 0
    %3146 = vmatpush.bf16.msra.mxu0 0
    %3147 = vmatpush.bf16.msra.mxu0 0
    %3148 = vmatpush.bf16.msra.mxu0 0
    %3149 = vmatpush.bf16.msra.mxu0 0
    %3150 = vmatpush.bf16.msra.mxu0 0
    %3151 = vmatpush.bf16.msra.mxu0 0
    %3152 = vmatpush.bf16.msra.mxu0 %v3143
    %3153 = vmatmul.bf16.gmra.mxu0 %v3140
    %v3154 = vpop.f32.mrf.mxu0
    %v3155 = vadd.f32 0.0, %v3154
    %v3156 = vpop.f32.mrf.mxu0
    %3157 = vdwg.mxu0
    %3158 = vrot.lane.b32.xlu0 %v2927, 96
    %v3159 = vpop.permute.xlu0 %3158
    %v3161 = vsel %vm913, %v3134, 0
    %v3164 = vsel %vm969, %v3159, 0
    %3166 = vmatpush.bf16.msra.mxu0 0
    %3167 = vmatpush.bf16.msra.mxu0 0
    %3168 = vmatpush.bf16.msra.mxu0 0
    %3169 = vmatpush.bf16.msra.mxu0 0
    %3170 = vmatpush.bf16.msra.mxu0 0
    %3171 = vmatpush.bf16.msra.mxu0 0
    %3172 = vmatpush.bf16.msra.mxu0 0
    %3173 = vmatpush.bf16.msra.mxu0 %v3164
    %3174 = vmatmul.bf16.gmra.mxu0 %v3161
    %v3175 = vpop.f32.mrf.mxu0
    %v3176 = vadd.f32 0.0, %v3175
    %v3177 = vpop.f32.mrf.mxu0
    %3178 = vdwg.mxu0
    %3179 = vrot.lane.b32.xlu0 %v2951, 96
    %v3180 = vpop.permute.xlu0 %3179
    %v3182 = vsel %vm913, %v3135, 0
    %v3185 = vsel %vm969, %v3180, 0
    %3187 = vmatpush.bf16.msra.mxu0 0
    %3188 = vmatpush.bf16.msra.mxu0 0
    %3189 = vmatpush.bf16.msra.mxu0 0
    %3190 = vmatpush.bf16.msra.mxu0 0
    %3191 = vmatpush.bf16.msra.mxu0 0
    %3192 = vmatpush.bf16.msra.mxu0 0
    %3193 = vmatpush.bf16.msra.mxu0 0
    %3194 = vmatpush.bf16.msra.mxu0 %v3185
    %3195 = vmatmul.bf16.gmra.mxu0 %v3182
    %v3196 = vpop.f32.mrf.mxu0
    %v3197 = vadd.f32 0.0, %v3196
    %v3198 = vpop.f32.mrf.mxu0
    %3199 = vdwg.mxu0
    %3200 = vrot.lane.b32.xlu0 %v2975, 96
    %v3201 = vpop.permute.xlu0 %3200
    %v3203 = vsel %vm913, %v3136, 0
    %v3206 = vsel %vm969, %v3201, 0
    %3208 = vmatpush.bf16.msra.mxu0 0
    %3209 = vmatpush.bf16.msra.mxu0 0
    %3210 = vmatpush.bf16.msra.mxu0 0
    %3211 = vmatpush.bf16.msra.mxu0 0
    %3212 = vmatpush.bf16.msra.mxu0 0
    %3213 = vmatpush.bf16.msra.mxu0 0
    %3214 = vmatpush.bf16.msra.mxu0 0
    %3215 = vmatpush.bf16.msra.mxu0 %v3206
    %3216 = vmatmul.bf16.gmra.mxu0 %v3203
    %v3217 = vpop.f32.mrf.mxu0
    %v3218 = vadd.f32 0.0, %v3217
    %v3219 = vpop.f32.mrf.mxu0
    %3220 = vdwg.mxu0
    %3221 = vrot.lane.b32.xlu0 %v2539, 80
    %v3222 = vpop.permute.xlu0 %3221
    %3223 = vrot.lane.b32.xlu0 %v2539, 16
    %v3224 = vpop.permute.xlu0 %3223
    %v3226 = vsel %vm821, %v3222, 0
    %v3229 = vsel %vm821, %v3224, 0
    %3231 = vmatpush.bf16.xpose.msra.mxu0 0
    %3232 = vmatpush.bf16.xpose.msra.mxu0 0
    %3233 = vmatpush.bf16.xpose.msra.mxu0 0
    %3234 = vmatpush.bf16.xpose.msra.mxu0 0
    %3235 = vmatpush.bf16.xpose.msra.mxu0 0
    %3236 = vmatpush.bf16.xpose.msra.mxu0 0
    %3237 = vmatpush.bf16.xpose.msra.mxu0 0
    %3238 = vmatpush.bf16.xpose.msra.mxu0 %v3229
    %3239 = vmatmul.bf16.gmra.mxu0 %v3226
    %v3240 = vpop.f32.mrf.mxu0
    %v3241 = vadd.f32 %v808, %v3240
    %v3242 = vpop.f32.mrf.mxu0
    %3243 = vdwg.mxu0
    %3244 = vrot.lane.b32.xlu0 %v2563, 80
    %v3245 = vpop.permute.xlu0 %3244
    %3246 = vrot.lane.b32.xlu0 %v2563, 16
    %v3247 = vpop.permute.xlu0 %3246
    %v3249 = vsel %vm821, %v3245, 0
    %v3252 = vsel %vm821, %v3247, 0
    %3254 = vmatpush.bf16.xpose.msra.mxu0 0
    %3255 = vmatpush.bf16.xpose.msra.mxu0 0
    %3256 = vmatpush.bf16.xpose.msra.mxu0 0
    %3257 = vmatpush.bf16.xpose.msra.mxu0 0
    %3258 = vmatpush.bf16.xpose.msra.mxu0 0
    %3259 = vmatpush.bf16.xpose.msra.mxu0 0
    %3260 = vmatpush.bf16.xpose.msra.mxu0 0
    %3261 = vmatpush.bf16.xpose.msra.mxu0 %v3252
    %3262 = vmatmul.bf16.gmra.mxu0 %v3249
    %v3263 = vpop.f32.mrf.mxu0
    %v3264 = vadd.f32 %v809, %v3263
    %v3265 = vpop.f32.mrf.mxu0
    %3266 = vdwg.mxu0
    %3267 = vrot.lane.b32.xlu0 %v2587, 80
    %v3268 = vpop.permute.xlu0 %3267
    %3269 = vrot.lane.b32.xlu0 %v2587, 16
    %v3270 = vpop.permute.xlu0 %3269
    %v3272 = vsel %vm821, %v3268, 0
    %v3275 = vsel %vm821, %v3270, 0
    %3277 = vmatpush.bf16.xpose.msra.mxu0 0
    %3278 = vmatpush.bf16.xpose.msra.mxu0 0
    %3279 = vmatpush.bf16.xpose.msra.mxu0 0
    %3280 = vmatpush.bf16.xpose.msra.mxu0 0
    %3281 = vmatpush.bf16.xpose.msra.mxu0 0
    %3282 = vmatpush.bf16.xpose.msra.mxu0 0
    %3283 = vmatpush.bf16.xpose.msra.mxu0 0
    %3284 = vmatpush.bf16.xpose.msra.mxu0 %v3275
    %3285 = vmatmul.bf16.gmra.mxu0 %v3272
    %v3286 = vpop.f32.mrf.mxu0
    %v3287 = vadd.f32 %v810, %v3286
    %v3288 = vpop.f32.mrf.mxu0
    %3289 = vdwg.mxu0
    %3290 = vrot.lane.b32.xlu0 %v2611, 80
    %v3291 = vpop.permute.xlu0 %3290
    %3292 = vrot.lane.b32.xlu0 %v2611, 16
    %v3293 = vpop.permute.xlu0 %3292
    %v3295 = vsel %vm821, %v3291, 0
    %v3298 = vsel %vm821, %v3293, 0
    %3300 = vmatpush.bf16.xpose.msra.mxu0 0
    %3301 = vmatpush.bf16.xpose.msra.mxu0 0
    %3302 = vmatpush.bf16.xpose.msra.mxu0 0
    %3303 = vmatpush.bf16.xpose.msra.mxu0 0
    %3304 = vmatpush.bf16.xpose.msra.mxu0 0
    %3305 = vmatpush.bf16.xpose.msra.mxu0 0
    %3306 = vmatpush.bf16.xpose.msra.mxu0 0
    %3307 = vmatpush.bf16.xpose.msra.mxu0 %v3298
    %3308 = vmatmul.bf16.gmra.mxu0 %v3295
    %v3309 = vpop.f32.mrf.mxu0
    %v3310 = vadd.f32 %v811, %v3309
    %v3311 = vpop.f32.mrf.mxu0
    %3312 = vdwg.mxu0
    %v3313 = vsel %vm913, %v3241, -inf
    %3314 = vmax.xlane.f32.xlu0 %v3313
    %v3315 = vpop.xlane.xlu0 %3314
    %v3316 = vsel %vm913, %v3264, -inf
    %3317 = vmax.xlane.f32.xlu0 %v3316
    %v3318 = vpop.xlane.xlu0 %3317
    %v3319 = vsel %vm913, %v3287, -inf
    %3320 = vmax.xlane.f32.xlu0 %v3319
    %v3321 = vpop.xlane.xlu0 %3320
    %v3322 = vsel %vm913, %v3310, -inf
    %3323 = vmax.xlane.f32.xlu0 %v3322
    %v3324 = vpop.xlane.xlu0 %3323
    %v3325 = vsub.f32 %v3241, %v3315
    %v3326 = vsub.f32 %v3264, %v3318
    %v3327 = vsub.f32 %v3287, %v3321
    %v3328 = vsub.f32 %v3310, %v3324
    %v3329 = vmul.f32 %v3325, 1.442695
    %v3330 = vpow.pop %v3329
    %v3331 = vmul.f32 %v3326, 1.442695
    %v3332 = vpow.pop %v3331
    %v3333 = vmul.f32 %v3327, 1.442695
    %v3334 = vpow.pop %v3333
    %v3335 = vmul.f32 %v3328, 1.442695
    %v3336 = vpow.pop %v3335
    %v3337 = vsel %vm913, %v3330, 0.0
    %3338 = vadd.xlane.f32.xlu0 %v3337
    %v3339 = vpop.xlane.xlu0 %3338
    %v3340 = vsel %vm913, %v3332, 0.0
    %3341 = vadd.xlane.f32.xlu0 %v3340
    %v3342 = vpop.xlane.xlu0 %3341
    %v3343 = vsel %vm913, %v3334, 0.0
    %3344 = vadd.xlane.f32.xlu0 %v3343
    %v3345 = vpop.xlane.xlu0 %3344
    %v3346 = vsel %vm913, %v3336, 0.0
    %3347 = vadd.xlane.f32.xlu0 %v3346
    %v3348 = vpop.xlane.xlu0 %3347
    %v3349 = vrcp.pop %v3339
    %v3350 = vrcp.pop %v3342
    %v3351 = vrcp.pop %v3345
    %v3352 = vrcp.pop %v3348
    %v3353 = vmul.f32 %v3330, %v3349
    %v3354 = vmul.f32 %v3332, %v3350
    %v3355 = vmul.f32 %v3334, %v3351
    %v3356 = vmul.f32 %v3336, %v3352
    %v3357 = vpack.c.bf16 %v3353, %v3353
    %v3358 = vpack.c.bf16 %v3354, %v3354
    %v3359 = vpack.c.bf16 %v3355, %v3355
    %v3360 = vpack.c.bf16 %v3356, %v3356
    %3361 = vrot.lane.b32.xlu0 %v2903, 80
    %v3362 = vpop.permute.xlu0 %3361
    %v3364 = vsel %vm913, %v3357, 0
    %v3367 = vsel %vm969, %v3362, 0
    %3369 = vmatpush.bf16.msra.mxu0 0
    %3370 = vmatpush.bf16.msra.mxu0 0
    %3371 = vmatpush.bf16.msra.mxu0 0
    %3372 = vmatpush.bf16.msra.mxu0 0
    %3373 = vmatpush.bf16.msra.mxu0 0
    %3374 = vmatpush.bf16.msra.mxu0 0
    %3375 = vmatpush.bf16.msra.mxu0 0
    %3376 = vmatpush.bf16.msra.mxu0 %v3367
    %3377 = vmatmul.bf16.gmra.mxu0 %v3364
    %v3378 = vpop.f32.mrf.mxu0
    %v3379 = vadd.f32 0.0, %v3378
    %v3380 = vpop.f32.mrf.mxu0
    %3381 = vdwg.mxu0
    %3382 = vrot.lane.b32.xlu0 %v2927, 80
    %v3383 = vpop.permute.xlu0 %3382
    %v3385 = vsel %vm913, %v3358, 0
    %v3388 = vsel %vm969, %v3383, 0
    %3390 = vmatpush.bf16.msra.mxu0 0
    %3391 = vmatpush.bf16.msra.mxu0 0
    %3392 = vmatpush.bf16.msra.mxu0 0
    %3393 = vmatpush.bf16.msra.mxu0 0
    %3394 = vmatpush.bf16.msra.mxu0 0
    %3395 = vmatpush.bf16.msra.mxu0 0
    %3396 = vmatpush.bf16.msra.mxu0 0
    %3397 = vmatpush.bf16.msra.mxu0 %v3388
    %3398 = vmatmul.bf16.gmra.mxu0 %v3385
    %v3399 = vpop.f32.mrf.mxu0
    %v3400 = vadd.f32 0.0, %v3399
    %v3401 = vpop.f32.mrf.mxu0
    %3402 = vdwg.mxu0
    %3403 = vrot.lane.b32.xlu0 %v2951, 80
    %v3404 = vpop.permute.xlu0 %3403
    %v3406 = vsel %vm913, %v3359, 0
    %v3409 = vsel %vm969, %v3404, 0
    %3411 = vmatpush.bf16.msra.mxu0 0
    %3412 = vmatpush.bf16.msra.mxu0 0
    %3413 = vmatpush.bf16.msra.mxu0 0
    %3414 = vmatpush.bf16.msra.mxu0 0
    %3415 = vmatpush.bf16.msra.mxu0 0
    %3416 = vmatpush.bf16.msra.mxu0 0
    %3417 = vmatpush.bf16.msra.mxu0 0
    %3418 = vmatpush.bf16.msra.mxu0 %v3409
    %3419 = vmatmul.bf16.gmra.mxu0 %v3406
    %v3420 = vpop.f32.mrf.mxu0
    %v3421 = vadd.f32 0.0, %v3420
    %v3422 = vpop.f32.mrf.mxu0
    %3423 = vdwg.mxu0
    %3424 = vrot.lane.b32.xlu0 %v2975, 80
    %v3425 = vpop.permute.xlu0 %3424
    %v3427 = vsel %vm913, %v3360, 0
    %v3430 = vsel %vm969, %v3425, 0
    %3432 = vmatpush.bf16.msra.mxu0 0
    %3433 = vmatpush.bf16.msra.mxu0 0
    %3434 = vmatpush.bf16.msra.mxu0 0
    %3435 = vmatpush.bf16.msra.mxu0 0
    %3436 = vmatpush.bf16.msra.mxu0 0
    %3437 = vmatpush.bf16.msra.mxu0 0
    %3438 = vmatpush.bf16.msra.mxu0 0
    %3439 = vmatpush.bf16.msra.mxu0 %v3430
    %3440 = vmatmul.bf16.gmra.mxu0 %v3427
    %v3441 = vpop.f32.mrf.mxu0
    %v3442 = vadd.f32 0.0, %v3441
    %v3443 = vpop.f32.mrf.mxu0
    %3444 = vdwg.mxu0
    %3449 = vrot.lane.b32.xlu0 %v2922, 16
    %v3450 = vpop.permute.xlu0 %3449
    %3451 = vrot.lane.b32.xlu0 %v2946, 16
    %v3452 = vpop.permute.xlu0 %3451
    %3453 = vrot.lane.b32.xlu0 %v2970, 16
    %v3454 = vpop.permute.xlu0 %3453
    %3455 = vrot.lane.b32.xlu0 %v2994, 16
    %v3456 = vpop.permute.xlu0 %3455
    %3465 = vrot.lane.b32.xlu0 %v3155, 32
    %v3466 = vpop.permute.xlu0 %3465
    %3467 = vrot.lane.b32.xlu0 %v3176, 32
    %v3468 = vpop.permute.xlu0 %3467
    %3469 = vrot.lane.b32.xlu0 %v3197, 32
    %v3470 = vpop.permute.xlu0 %3469
    %3471 = vrot.lane.b32.xlu0 %v3218, 32
    %v3472 = vpop.permute.xlu0 %3471
    %3481 = vrot.lane.b32.xlu0 %v3379, 48
    %v3482 = vpop.permute.xlu0 %3481
    %3483 = vrot.lane.b32.xlu0 %v3400, 48
    %v3484 = vpop.permute.xlu0 %3483
    %3485 = vrot.lane.b32.xlu0 %v3421, 48
    %v3486 = vpop.permute.xlu0 %3485
    %3487 = vrot.lane.b32.xlu0 %v3442, 48
    %v3488 = vpop.permute.xlu0 %3487
    %v3493 = vsel %vm821, %v2701, %v3450
    %v3494 = vsel %vm821, %v2720, %v3452
    %v3495 = vsel %vm821, %v2739, %v3454
    %v3496 = vsel %vm821, %v2758, %v3456
    %v3497 = vsel %vm1779, %v3493, %v3466
    %v3498 = vsel %vm1779, %v3494, %v3468
    %v3499 = vsel %vm1779, %v3495, %v3470
    %v3500 = vsel %vm1779, %v3496, %v3472
    %v3501 = vsel %vm1784, %v3497, %v3482
    %v3502 = vsel %vm1784, %v3498, %v3484
    %v3503 = vsel %vm1784, %v3499, %v3486
    %v3504 = vsel %vm1784, %v3500, %v3488
    %v3505 = vpack.c.bf16 %v3502, %v3501
    %v3506 = vpack.c.bf16 %v3504, %v3503
    %v3508 = vperm.slane %v2385, 0
    %v3518 = vunpack.c.l.b16 %v2376
    %v3519 = vunpack.c.l.b16 %v2377
    %v3520 = vunpack.c.l.b16 %v2378
    %v3521 = vunpack.c.l.b16 %v2379
    %v3522 = vunpack.c.l.b16 %v2380
    %v3523 = vunpack.c.l.b16 %v2381
    %v3524 = vunpack.c.l.b16 %v2382
    %v3525 = vunpack.c.l.b16 %v2383
    %v3526 = vpack.c.b16 %v3519, %v3518
    %v3527 = vpack.c.b16 %v3521, %v3520
    %v3528 = vpack.c.b16 %v3523, %v3522
    %v3529 = vpack.c.b16 %v3525, %v3524
    %v3535 = vsel %vm480, %v3505, 0
    %v3538 = vsel %vm480, %v3506, 0
    %3540 = vmatpush.bf16.msra.mxu0 0
    %3541 = vmatpush.bf16.msra.mxu0 0
    %3542 = vmatpush.bf16.msra.mxu0 0
    %3543 = vmatpush.bf16.msra.mxu0 0
    %3544 = vmatpush.bf16.msra.mxu0 %v3529
    %3545 = vmatpush.bf16.msra.mxu0 %v3528
    %3546 = vmatpush.bf16.msra.mxu0 %v3527
    %3547 = vmatpush.bf16.msra.mxu0 %v3526
    %3548 = vmatmul.bf16.gmra.mxu0 %v3535
    %v3549 = vpop.f32.mrf.mxu0
    %v3550 = vadd.f32 %v3508, %v3549
    %v3551 = vpop.f32.mrf.mxu0
    %v3552 = vadd.f32 %v3508, %v3551
    %3553 = vmatmul.bf16.gmra.mxu0 %v3538
    %v3554 = vpop.f32.mrf.mxu0
    %v3555 = vadd.f32 %v3508, %v3554
    %v3556 = vpop.f32.mrf.mxu0
    %v3557 = vadd.f32 %v3508, %v3556
    %3558 = vdwg.mxu0
    %v3559 = vadd.f32 %v2360, %v3550
    %v3560 = vadd.f32 %v2361, %v3552
    %v3561 = vadd.f32 %v2362, %v3555
    %v3562 = vadd.f32 %v2363, %v3557
    %v3563 = vsel %vm529, %v3559, 0.0
    %3564 = vadd.xlane.f32.xlu0 %v3563
    %v3565 = vpop.xlane.xlu0 %3564
    %v3566 = vsel %vm529, %v3560, 0.0
    %3567 = vadd.xlane.f32.xlu0 %v3566
    %v3568 = vpop.xlane.xlu0 %3567
    %v3569 = vsel %vm529, %v3561, 0.0
    %3570 = vadd.xlane.f32.xlu0 %v3569
    %v3571 = vpop.xlane.xlu0 %3570
    %v3572 = vsel %vm529, %v3562, 0.0
    %3573 = vadd.xlane.f32.xlu0 %v3572
    %v3574 = vpop.xlane.xlu0 %3573
    %v3575 = vmul.f32 %v3565, %v548
    %v3576 = vmul.f32 %v3568, %v548
    %v3577 = vmul.f32 %v3571, %v548
    %v3578 = vmul.f32 %v3574, %v548
    %v3579 = vsub.f32 %v3559, %v3575
    %v3580 = vsub.f32 %v3560, %v3576
    %v3581 = vsub.f32 %v3561, %v3577
    %v3582 = vsub.f32 %v3562, %v3578
    %v3583 = vmul.f32 %v3579, %v3579
    %v3584 = vmul.f32 %v3580, %v3580
    %v3585 = vmul.f32 %v3581, %v3581
    %v3586 = vmul.f32 %v3582, %v3582
    %v3587 = vsel %vm529, %v3583, 0.0
    %3588 = vadd.xlane.f32.xlu0 %v3587
    %v3589 = vpop.xlane.xlu0 %3588
    %v3590 = vsel %vm529, %v3584, 0.0
    %3591 = vadd.xlane.f32.xlu0 %v3590
    %v3592 = vpop.xlane.xlu0 %3591
    %v3593 = vsel %vm529, %v3585, 0.0
    %3594 = vadd.xlane.f32.xlu0 %v3593
    %v3595 = vpop.xlane.xlu0 %3594
    %v3596 = vsel %vm529, %v3586, 0.0
    %3597 = vadd.xlane.f32.xlu0 %v3596
    %v3598 = vpop.xlane.xlu0 %3597
    %v3599 = vmul.f32 %v3589, %v548
    %v3600 = vmul.f32 %v3592, %v548
    %v3601 = vmul.f32 %v3595, %v548
    %v3602 = vmul.f32 %v3598, %v548
    %v3603 = vadd.f32 %v3599, 1e-05
    %v3604 = vadd.f32 %v3600, 1e-05
    %v3605 = vadd.f32 %v3601, 1e-05
    %v3606 = vadd.f32 %v3602, 1e-05
    %v3607 = vrsqrt.pop %v3603
    %v3608 = vmul.f32 %v3607, %v3603
    %v3609 = vmul.f32 %v3608, %v3607
    %v3610 = vmul.f32 0.5, %v3609
    %v3611 = vsub.f32 1.5, %v3610
    %v3612 = vmul.f32 %v3607, %v3611
    %vm3613 = vweird.f32 %v3603
    %vm3614 = vweird.f32 %v3607
    %vm3615 = vmor %vm3613, %vm3614
    %v3616 = vsel %vm3615, %v3607, %v3612
    %v3617 = vrsqrt.pop %v3604
    %v3618 = vmul.f32 %v3617, %v3604
    %v3619 = vmul.f32 %v3618, %v3617
    %v3620 = vmul.f32 0.5, %v3619
    %v3621 = vsub.f32 1.5, %v3620
    %v3622 = vmul.f32 %v3617, %v3621
    %vm3623 = vweird.f32 %v3604
    %vm3624 = vweird.f32 %v3617
    %vm3625 = vmor %vm3623, %vm3624
    %v3626 = vsel %vm3625, %v3617, %v3622
    %v3627 = vrsqrt.pop %v3605
    %v3628 = vmul.f32 %v3627, %v3605
    %v3629 = vmul.f32 %v3628, %v3627
    %v3630 = vmul.f32 0.5, %v3629
    %v3631 = vsub.f32 1.5, %v3630
    %v3632 = vmul.f32 %v3627, %v3631
    %vm3633 = vweird.f32 %v3605
    %vm3634 = vweird.f32 %v3627
    %vm3635 = vmor %vm3633, %vm3634
    %v3636 = vsel %vm3635, %v3627, %v3632
    %v3637 = vrsqrt.pop %v3606
    %v3638 = vmul.f32 %v3637, %v3606
    %v3639 = vmul.f32 %v3638, %v3637
    %v3640 = vmul.f32 0.5, %v3639
    %v3641 = vsub.f32 1.5, %v3640
    %v3642 = vmul.f32 %v3637, %v3641
    %vm3643 = vweird.f32 %v3606
    %vm3644 = vweird.f32 %v3637
    %vm3645 = vmor %vm3643, %vm3644
    %v3646 = vsel %vm3645, %v3637, %v3642
    %v3647 = vmul.f32 %v3579, %v3616
    %v3648 = vmul.f32 %v3580, %v3626
    %v3649 = vmul.f32 %v3581, %v3636
    %v3650 = vmul.f32 %v3582, %v3646
    %v3652 = vperm.slane %v2387, 0
    %v3654 = vmul.f32 %v3647, %v3652
    %v3655 = vmul.f32 %v3648, %v3652
    %v3656 = vmul.f32 %v3649, %v3652
    %v3657 = vmul.f32 %v3650, %v3652
    %v3659 = vperm.slane %v2389, 0
    %v3661 = vadd.f32 %v3654, %v3659
    %v3662 = vadd.f32 %v3655, %v3659
    %v3663 = vadd.f32 %v3656, %v3659
    %v3664 = vadd.f32 %v3657, %v3659
    %v3665 = vpack.c.bf16 %v3662, %v3661
    %v3666 = vpack.c.bf16 %v3664, %v3663
    %v3668 = vperm.slane %v2400, 0
    %v3669 = vperm.slane %v2400, 1
    %v3680 = vunpack.c.l.b16 %v2391
    %v3681 = vunpack.c.h.b16 %v2391
    %v3682 = vunpack.c.l.b16 %v2392
    %v3683 = vunpack.c.h.b16 %v2392
    %v3684 = vunpack.c.l.b16 %v2393
    %v3685 = vunpack.c.h.b16 %v2393
    %v3686 = vunpack.c.l.b16 %v2394
    %v3687 = vunpack.c.h.b16 %v2394
    %v3688 = vunpack.c.l.b16 %v2395
    %v3689 = vunpack.c.h.b16 %v2395
    %v3690 = vunpack.c.l.b16 %v2396
    %v3691 = vunpack.c.h.b16 %v2396
    %v3692 = vunpack.c.l.b16 %v2397
    %v3693 = vunpack.c.h.b16 %v2397
    %v3694 = vunpack.c.l.b16 %v2398
    %v3695 = vunpack.c.h.b16 %v2398
    %v3696 = vpack.c.b16 %v3682, %v3680
    %v3697 = vpack.c.b16 %v3683, %v3681
    %v3698 = vpack.c.b16 %v3686, %v3684
    %v3699 = vpack.c.b16 %v3687, %v3685
    %v3700 = vpack.c.b16 %v3690, %v3688
    %v3701 = vpack.c.b16 %v3691, %v3689
    %v3702 = vpack.c.b16 %v3694, %v3692
    %v3703 = vpack.c.b16 %v3695, %v3693
    %v3711 = vsel %vm529, %v3665, 0
    %v3714 = vsel %vm529, %v3666, 0
    %v3717 = vsel %vm755, %v3702, 0
    %v3720 = vsel %vm755, %v3703, 0
    %3722 = vmatpush.bf16.msra.mxu0 0
    %3723 = vmatpush.bf16.msra.mxu0 0
    %3724 = vmatpush.bf16.msra.mxu0 0
    %3725 = vmatpush.bf16.msra.mxu0 0
    %3726 = vmatpush.bf16.msra.mxu0 %v3717
    %3727 = vmatpush.bf16.msra.mxu0 %v3700
    %3728 = vmatpush.bf16.msra.mxu0 %v3698
    %3729 = vmatpush.bf16.msra.mxu0 %v3696
    %3730 = vmatmul.bf16.gmra.mxu0 %v3711
    %v3731 = vpop.f32.mrf.mxu0
    %v3732 = vadd.f32 %v3668, %v3731
    %v3733 = vpop.f32.mrf.mxu0
    %v3734 = vadd.f32 %v3668, %v3733
    %3735 = vmatmul.bf16.gmra.mxu0 %v3714
    %v3736 = vpop.f32.mrf.mxu0
    %v3737 = vadd.f32 %v3668, %v3736
    %v3738 = vpop.f32.mrf.mxu0
    %v3739 = vadd.f32 %v3668, %v3738
    %3740 = vdwg.mxu0
    %3741 = vmatpush.bf16.msra.mxu0 0
    %3742 = vmatpush.bf16.msra.mxu0 0
    %3743 = vmatpush.bf16.msra.mxu0 0
    %3744 = vmatpush.bf16.msra.mxu0 0
    %3745 = vmatpush.bf16.msra.mxu0 %v3720
    %3746 = vmatpush.bf16.msra.mxu0 %v3701
    %3747 = vmatpush.bf16.msra.mxu0 %v3699
    %3748 = vmatpush.bf16.msra.mxu0 %v3697
    %3749 = vmatmul.bf16.gmra.mxu0 %v3711
    %v3750 = vpop.f32.mrf.mxu0
    %v3751 = vadd.f32 %v3669, %v3750
    %v3752 = vpop.f32.mrf.mxu0
    %v3753 = vadd.f32 %v3669, %v3752
    %3754 = vmatmul.bf16.gmra.mxu0 %v3714
    %v3755 = vpop.f32.mrf.mxu0
    %v3756 = vadd.f32 %v3669, %v3755
    %v3757 = vpop.f32.mrf.mxu0
    %v3758 = vadd.f32 %v3669, %v3757
    %3759 = vdwg.mxu0
    %v3760 = vmul.f32 %v3732, %v3732
    %v3761 = vmul.f32 %v3751, %v3751
    %v3762 = vmul.f32 %v3734, %v3734
    %v3763 = vmul.f32 %v3753, %v3753
    %v3764 = vmul.f32 %v3737, %v3737
    %v3765 = vmul.f32 %v3756, %v3756
    %v3766 = vmul.f32 %v3739, %v3739
    %v3767 = vmul.f32 %v3758, %v3758
    %v3768 = vmul.f32 %v3732, %v3760
    %v3769 = vmul.f32 %v3751, %v3761
    %v3770 = vmul.f32 %v3734, %v3762
    %v3771 = vmul.f32 %v3753, %v3763
    %v3772 = vmul.f32 %v3737, %v3764
    %v3773 = vmul.f32 %v3756, %v3765
    %v3774 = vmul.f32 %v3739, %v3766
    %v3775 = vmul.f32 %v3758, %v3767
    %v3776 = vmul.f32 %v3768, 0.044715
    %v3777 = vmul.f32 %v3769, 0.044715
    %v3778 = vmul.f32 %v3770, 0.044715
    %v3779 = vmul.f32 %v3771, 0.044715
    %v3780 = vmul.f32 %v3772, 0.044715
    %v3781 = vmul.f32 %v3773, 0.044715
    %v3782 = vmul.f32 %v3774, 0.044715
    %v3783 = vmul.f32 %v3775, 0.044715
    %v3784 = vadd.f32 %v3732, %v3776
    %v3785 = vadd.f32 %v3751, %v3777
    %v3786 = vadd.f32 %v3734, %v3778
    %v3787 = vadd.f32 %v3753, %v3779
    %v3788 = vadd.f32 %v3737, %v3780
    %v3789 = vadd.f32 %v3756, %v3781
    %v3790 = vadd.f32 %v3739, %v3782
    %v3791 = vadd.f32 %v3758, %v3783
    %v3792 = vmul.f32 %v3784, 0.7978846
    %v3793 = vmul.f32 %v3785, 0.7978846
    %v3794 = vmul.f32 %v3786, 0.7978846
    %v3795 = vmul.f32 %v3787, 0.7978846
    %v3796 = vmul.f32 %v3788, 0.7978846
    %v3797 = vmul.f32 %v3789, 0.7978846
    %v3798 = vmul.f32 %v3790, 0.7978846
    %v3799 = vmul.f32 %v3791, 0.7978846
    %v3800 = vtanh.pop %v3792
    %v3801 = vtanh.pop %v3793
    %v3802 = vtanh.pop %v3794
    %v3803 = vtanh.pop %v3795
    %v3804 = vtanh.pop %v3796
    %v3805 = vtanh.pop %v3797
    %v3806 = vtanh.pop %v3798
    %v3807 = vtanh.pop %v3799
    %v3808 = vadd.f32 %v3800, 1.0
    %v3809 = vadd.f32 %v3801, 1.0
    %v3810 = vadd.f32 %v3802, 1.0
    %v3811 = vadd.f32 %v3803, 1.0
    %v3812 = vadd.f32 %v3804, 1.0
    %v3813 = vadd.f32 %v3805, 1.0
    %v3814 = vadd.f32 %v3806, 1.0
    %v3815 = vadd.f32 %v3807, 1.0
    %v3816 = vmul.f32 %v3808, 0.5
    %v3817 = vmul.f32 %v3809, 0.5
    %v3818 = vmul.f32 %v3810, 0.5
    %v3819 = vmul.f32 %v3811, 0.5
    %v3820 = vmul.f32 %v3812, 0.5
    %v3821 = vmul.f32 %v3813, 0.5
    %v3822 = vmul.f32 %v3814, 0.5
    %v3823 = vmul.f32 %v3815, 0.5
    %v3824 = vmul.f32 %v3732, %v3816
    %v3825 = vmul.f32 %v3751, %v3817
    %v3826 = vmul.f32 %v3734, %v3818
    %v3827 = vmul.f32 %v3753, %v3819
    %v3828 = vmul.f32 %v3737, %v3820
    %v3829 = vmul.f32 %v3756, %v3821
    %v3830 = vmul.f32 %v3739, %v3822
    %v3831 = vmul.f32 %v3758, %v3823
    %v3832 = vpack.c.bf16 %v3826, %v3824
    %v3833 = vpack.c.bf16 %v3827, %v3825
    %v3834 = vpack.c.bf16 %v3830, %v3828
    %v3835 = vpack.c.bf16 %v3831, %v3829
    %v3837 = vperm.slane %v2433, 0
    %v3869 = vunpack.c.l.b16 %v2402
    %v3870 = vunpack.c.l.b16 %v2403
    %v3871 = vunpack.c.l.b16 %v2404
    %v3872 = vunpack.c.l.b16 %v2405
    %v3873 = vunpack.c.l.b16 %v2406
    %v3874 = vunpack.c.l.b16 %v2407
    %v3875 = vunpack.c.l.b16 %v2408
    %v3876 = vunpack.c.l.b16 %v2409
    %v3877 = vunpack.c.l.b16 %v2410
    %v3878 = vunpack.c.l.b16 %v2411
    %v3879 = vunpack.c.l.b16 %v2412
    %v3880 = vunpack.c.l.b16 %v2413
    %v3881 = vunpack.c.l.b16 %v2414
    %v3882 = vunpack.c.l.b16 %v2415
    %v3883 = vunpack.c.l.b16 %v2416
    %v3884 = vunpack.c.l.b16 %v2417
    %v3885 = vunpack.c.l.b16 %v2418
    %v3886 = vunpack.c.l.b16 %v2419
    %v3887 = vunpack.c.l.b16 %v2420
    %v3888 = vunpack.c.l.b16 %v2421
    %v3889 = vunpack.c.l.b16 %v2422
    %v3890 = vunpack.c.l.b16 %v2423
    %v3891 = vunpack.c.l.b16 %v2424
    %v3892 = vunpack.c.l.b16 %v2425
    %v3893 = vunpack.c.l.b16 %v2426
    %v3894 = vunpack.c.l.b16 %v2427
    %v3895 = vunpack.c.l.b16 %v2428
    %v3896 = vunpack.c.l.b16 %v2429
    %v3897 = vunpack.c.l.b16 %v2430
    %v3898 = vunpack.c.l.b16 %v2431
    %v3899 = vpack.c.b16 %v3870, %v3869
    %v3900 = vpack.c.b16 %v3872, %v3871
    %v3901 = vpack.c.b16 %v3874, %v3873
    %v3902 = vpack.c.b16 %v3876, %v3875
    %v3903 = vpack.c.b16 %v3878, %v3877
    %v3904 = vpack.c.b16 %v3880, %v3879
    %v3905 = vpack.c.b16 %v3882, %v3881
    %v3906 = vpack.c.b16 %v3884, %v3883
    %v3907 = vpack.c.b16 %v3886, %v3885
    %v3908 = vpack.c.b16 %v3888, %v3887
    %v3909 = vpack.c.b16 %v3890, %v3889
    %v3910 = vpack.c.b16 %v3892, %v3891
    %v3911 = vpack.c.b16 %v3894, %v3893
    %v3912 = vpack.c.b16 %v3896, %v3895
    %v3913 = vpack.c.b16 %v3898, %v3897
    %v3930 = vsel %vm2213, %v3833, 0
    %v3933 = vsel %vm2213, %v3835, 0
    %3935 = vmatpush.bf16.msra.mxu0 %v3906
    %3936 = vmatpush.bf16.msra.mxu0 %v3905
    %3937 = vmatpush.bf16.msra.mxu0 %v3904
    %3938 = vmatpush.bf16.msra.mxu0 %v3903
    %3939 = vmatpush.bf16.msra.mxu0 %v3902
    %3940 = vmatpush.bf16.msra.mxu0 %v3901
    %3941 = vmatpush.bf16.msra.mxu0 %v3900
    %3942 = vmatpush.bf16.msra.mxu0 %v3899
    %3943 = vmatmul.bf16.gmra.mxu0 %v3832
    %v3944 = vpop.f32.mrf.mxu0
    %v3945 = vadd.f32 %v3837, %v3944
    %v3946 = vpop.f32.mrf.mxu0
    %v3947 = vadd.f32 %v3837, %v3946
    %3948 = vmatmul.bf16.gmra.mxu0 %v3834
    %v3949 = vpop.f32.mrf.mxu0
    %v3950 = vadd.f32 %v3837, %v3949
    %v3951 = vpop.f32.mrf.mxu0
    %v3952 = vadd.f32 %v3837, %v3951
    %3953 = vdwg.mxu0
    %3954 = vmatpush.bf16.msra.mxu0 0
    %3955 = vmatpush.bf16.msra.mxu0 %v3913
    %3956 = vmatpush.bf16.msra.mxu0 %v3912
    %3957 = vmatpush.bf16.msra.mxu0 %v3911
    %3958 = vmatpush.bf16.msra.mxu0 %v3910
    %3959 = vmatpush.bf16.msra.mxu0 %v3909
    %3960 = vmatpush.bf16.msra.mxu0 %v3908
    %3961 = vmatpush.bf16.msra.mxu0 %v3907
    %3962 = vmatmul.bf16.gmra.mxu0 %v3930
    %v3963 = vpop.f32.mrf.mxu0
    %v3964 = vadd.f32 %v3945, %v3963
    %v3965 = vpop.f32.mrf.mxu0
    %v3966 = vadd.f32 %v3947, %v3965
    %3967 = vmatmul.bf16.gmra.mxu0 %v3933
    %v3968 = vpop.f32.mrf.mxu0
    %v3969 = vadd.f32 %v3950, %v3968
    %v3970 = vpop.f32.mrf.mxu0
    %v3971 = vadd.f32 %v3952, %v3970
    %3972 = vdwg.mxu0
    %v3973 = vadd.f32 %v3661, %v3964
    %v3974 = vadd.f32 %v3662, %v3966
    %v3975 = vadd.f32 %v3663, %v3969
    %v3976 = vadd.f32 %v3664, %v3971
    %v3977 = vsel %vm529, %v3973, 0.0
    %3978 = vadd.xlane.f32.xlu0 %v3977
    %v3979 = vpop.xlane.xlu0 %3978
    %v3980 = vsel %vm529, %v3974, 0.0
    %3981 = vadd.xlane.f32.xlu0 %v3980
    %v3982 = vpop.xlane.xlu0 %3981
    %v3983 = vsel %vm529, %v3975, 0.0
    %3984 = vadd.xlane.f32.xlu0 %v3983
    %v3985 = vpop.xlane.xlu0 %3984
    %v3986 = vsel %vm529, %v3976, 0.0
    %3987 = vadd.xlane.f32.xlu0 %v3986
    %v3988 = vpop.xlane.xlu0 %3987
    %v3989 = vmul.f32 %v3979, %v548
    %v3990 = vmul.f32 %v3982, %v548
    %v3991 = vmul.f32 %v3985, %v548
    %v3992 = vmul.f32 %v3988, %v548
    %v3993 = vsub.f32 %v3973, %v3989
    %v3994 = vsub.f32 %v3974, %v3990
    %v3995 = vsub.f32 %v3975, %v3991
    %v3996 = vsub.f32 %v3976, %v3992
    %v3997 = vmul.f32 %v3993, %v3993
    %v3998 = vmul.f32 %v3994, %v3994
    %v3999 = vmul.f32 %v3995, %v3995
    %v4000 = vmul.f32 %v3996, %v3996
    %v4001 = vsel %vm529, %v3997, 0.0
    %4002 = vadd.xlane.f32.xlu0 %v4001
    %v4003 = vpop.xlane.xlu0 %4002
    %v4004 = vsel %vm529, %v3998, 0.0
    %4005 = vadd.xlane.f32.xlu0 %v4004
    %v4006 = vpop.xlane.xlu0 %4005
    %v4007 = vsel %vm529, %v3999, 0.0
    %4008 = vadd.xlane.f32.xlu0 %v4007
    %v4009 = vpop.xlane.xlu0 %4008
    %v4010 = vsel %vm529, %v4000, 0.0
    %4011 = vadd.xlane.f32.xlu0 %v4010
    %v4012 = vpop.xlane.xlu0 %4011
    %v4013 = vmul.f32 %v4003, %v548
    %v4014 = vmul.f32 %v4006, %v548
    %v4015 = vmul.f32 %v4009, %v548
    %v4016 = vmul.f32 %v4012, %v548
    %v4017 = vadd.f32 %v4013, 1e-05
    %v4018 = vadd.f32 %v4014, 1e-05
    %v4019 = vadd.f32 %v4015, 1e-05
    %v4020 = vadd.f32 %v4016, 1e-05
    %v4021 = vrsqrt.pop %v4017
    %v4022 = vmul.f32 %v4021, %v4017
    %v4023 = vmul.f32 %v4022, %v4021
    %v4024 = vmul.f32 0.5, %v4023
    %v4025 = vsub.f32 1.5, %v4024
    %v4026 = vmul.f32 %v4021, %v4025
    %vm4027 = vweird.f32 %v4017
    %vm4028 = vweird.f32 %v4021
    %vm4029 = vmor %vm4027, %vm4028
    %v4030 = vsel %vm4029, %v4021, %v4026
    %v4031 = vrsqrt.pop %v4018
    %v4032 = vmul.f32 %v4031, %v4018
    %v4033 = vmul.f32 %v4032, %v4031
    %v4034 = vmul.f32 0.5, %v4033
    %v4035 = vsub.f32 1.5, %v4034
    %v4036 = vmul.f32 %v4031, %v4035
    %vm4037 = vweird.f32 %v4018
    %vm4038 = vweird.f32 %v4031
    %vm4039 = vmor %vm4037, %vm4038
    %v4040 = vsel %vm4039, %v4031, %v4036
    %v4041 = vrsqrt.pop %v4019
    %v4042 = vmul.f32 %v4041, %v4019
    %v4043 = vmul.f32 %v4042, %v4041
    %v4044 = vmul.f32 0.5, %v4043
    %v4045 = vsub.f32 1.5, %v4044
    %v4046 = vmul.f32 %v4041, %v4045
    %vm4047 = vweird.f32 %v4019
    %vm4048 = vweird.f32 %v4041
    %vm4049 = vmor %vm4047, %vm4048
    %v4050 = vsel %vm4049, %v4041, %v4046
    %v4051 = vrsqrt.pop %v4020
    %v4052 = vmul.f32 %v4051, %v4020
    %v4053 = vmul.f32 %v4052, %v4051
    %v4054 = vmul.f32 0.5, %v4053
    %v4055 = vsub.f32 1.5, %v4054
    %v4056 = vmul.f32 %v4051, %v4055
    %vm4057 = vweird.f32 %v4020
    %vm4058 = vweird.f32 %v4051
    %vm4059 = vmor %vm4057, %vm4058
    %v4060 = vsel %vm4059, %v4051, %v4056
    %v4061 = vmul.f32 %v3993, %v4030
    %v4062 = vmul.f32 %v3994, %v4040
    %v4063 = vmul.f32 %v3995, %v4050
    %v4064 = vmul.f32 %v3996, %v4060
    %v4066 = vperm.slane %v2435, 0
    %v4068 = vmul.f32 %v4061, %v4066
    %v4069 = vmul.f32 %v4062, %v4066
    %v4070 = vmul.f32 %v4063, %v4066
    %v4071 = vmul.f32 %v4064, %v4066
    %v4073 = vperm.slane %v2437, 0
    %v4075 = vadd.f32 %v4068, %v4073
    %v4076 = vadd.f32 %v4069, %v4073
    %v4077 = vadd.f32 %v4070, %v4073
    %v4078 = vadd.f32 %v4071, %v4073
    %v4079 = vpack.c.bf16 %v4075, %v4075
    %v4080 = vpack.c.bf16 %v4076, %v4076
    %v4081 = vpack.c.bf16 %v4077, %v4077
    %v4082 = vpack.c.bf16 %v4078, %v4078
    %v4083 = vld [vmem:[%s43] sm:$0xf]
    %v4084 = vld [vmem:[%s43 + $0x4] sm:$0xf]
    %v4085 = vld [vmem:[%s43 + $0x8] sm:$0xf]
    %v4086 = vld [vmem:[%s43 + $0xc] sm:$0xf]
    %v4087 = vld [vmem:[%s43 + $0x10] sm:$0xf]
    %v4088 = vld [vmem:[%s43 + $0x14] sm:$0xf]
    %v4089 = vld [vmem:[%s43 + $0x18] sm:$0xf]
    %v4090 = vld [vmem:[%s43 + $0x1c] sm:$0x3]
    %v4091 = vld [vmem:[#allocation16] sm:$0x1]
    %v4093 = vperm.slane %v4091, 0
    %v4099 = vunpack.c.l.b16 %v4079
    %v4100 = vunpack.c.l.b16 %v4080
    %v4101 = vunpack.c.l.b16 %v4081
    %v4102 = vunpack.c.l.b16 %v4082
    %v4103 = vrot.slane %v4100, 7
    %vm4104 = vcmask 1041409
    %v4105 = vsel %vm4104, %v4103, %v4099
    %v4106 = vrot.slane %v4101, 6
    %vm4107 = vcmask 1042434
    %v4108 = vsel %vm4107, %v4106, %v4105
    %v4109 = vrot.slane %v4102, 5
    %vm4110 = vcmask 1043459
    %v4111 = vsel %vm4110, %v4109, %v4108
    %v4112 = vpack.c.b16 %v4111, %v4111
    %v4121 = vunpack.c.l.b16 %v4083
    %v4122 = vunpack.c.l.b16 %v4084
    %v4123 = vunpack.c.l.b16 %v4085
    %v4124 = vunpack.c.l.b16 %v4086
    %v4125 = vunpack.c.l.b16 %v4087
    %v4126 = vunpack.c.l.b16 %v4088
    %v4127 = vunpack.c.l.b16 %v4089
    %v4128 = vunpack.c.l.b16 %v4090
    %v4129 = vpack.c.b16 %v4122, %v4121
    %v4130 = vpack.c.b16 %v4124, %v4123
    %v4131 = vpack.c.b16 %v4126, %v4125
    %v4132 = vpack.c.b16 %v4128, %v4127
    %v4137 = vsel %vm529, %v4112, 0
    %v4140 = vsel %vm755, %v4132, 0
    %4142 = vmatpush.bf16.msra.mxu0 0
    %4143 = vmatpush.bf16.msra.mxu0 0
    %4144 = vmatpush.bf16.msra.mxu0 0
    %4145 = vmatpush.bf16.msra.mxu0 0
    %4146 = vmatpush.bf16.msra.mxu0 %v4140
    %4147 = vmatpush.bf16.msra.mxu0 %v4131
    %4148 = vmatpush.bf16.msra.mxu0 %v4130
    %4149 = vmatpush.bf16.msra.mxu0 %v4129
    %4150 = vmatmul.bf16.gmra.mxu0 %v4137
    %v4151 = vpop.f32.mrf.mxu0
    %v4152 = vadd.f32 %v4093, %v4151
    %v4153 = vpop.f32.mrf.mxu0
    %4154 = vdwg.mxu0
    %v4155 = vtanh.pop %v4152
    %v4156 = vld [vmem:[%s5] sm:$0x3]
    %v4157 = vld [vmem:[%s7] sm:$0x3]
    %v4158 = vld [vmem:[%s9] sm:$0x3]
    %v4160 = vrot.slane %v4155, 2
    %4161 = vrot.lane.b32.xlu0 %v4160, 60
    %v4162 = vpop.permute.xlu0 %4161
    %4165 = vrot.lane.b32.xlu0 %v4156, 120
    %v4166 = vpop.permute.xlu0 %4165
    %4169 = vrot.lane.b32.xlu0 %v4157, 121
    %v4170 = vpop.permute.xlu0 %4169
    %4173 = vrot.lane.b32.xlu0 %v4158, 122
    %v4174 = vpop.permute.xlu0 %4173
    %v4176 = vsel %vm529, %v4155, %v4162
    %vm4177 = vcmask 982016
    %v4178 = vsel %vm4177, %v4176, %v4166
    %vm4179 = vcmask 990208
    %v4180 = vsel %vm4179, %v4178, %v4170
    %vm4181 = vcmask 998400
    %v4182 = vsel %vm4181, %v4180, %v4174
    %vm4183 = vcmask 1006592
    %v4184 = vsel %vm4183, %v4182, 0.0
    %v4185 = vld [vmem:[#allocation18] sm:$0xff]
    %v4186 = vld [vmem:[#allocation18 + $0x8] sm:$0xf]
    %v4187 = vld [vmem:[#allocation18 + $0xc] sm:$0xff]
    %v4188 = vld [vmem:[#allocation18 + $0x14] sm:$0xf]
    %v4189 = vld [vmem:[#allocation18 + $0x18] sm:$0xff]
    %v4190 = vld [vmem:[#allocation18 + $0x20] sm:$0xf]
    %v4191 = vld [vmem:[#allocation18 + $0x24] sm:$0xff]
    %v4192 = vld [vmem:[#allocation18 + $0x2c] sm:$0xf]
    %v4193 = vld [vmem:[#allocation18 + $0x30] sm:$0xff]
    %v4194 = vld [vmem:[#allocation18 + $0x38] sm:$0xf]
    %v4195 = vld [vmem:[#allocation18 + $0x3c] sm:$0xff]
    %v4196 = vld [vmem:[#allocation18 + $0x44] sm:$0xf]
    %v4197 = vld [vmem:[#allocation18 + $0x48] sm:$0xff]
    %v4198 = vld [vmem:[#allocation18 + $0x50] sm:$0xf]
    %v4199 = vld [vmem:[#allocation18 + $0x54] sm:$0xff]
    %v4200 = vld [vmem:[#allocation18 + $0x5c] sm:$0xf]
    %v4201 = vld [vmem:[#allocation18 + $0x60] sm:$0xff]
    %v4202 = vld [vmem:[#allocation18 + $0x68] sm:$0xf]
    %v4203 = vld [vmem:[#allocation18 + $0x6c] sm:$0xff]
    %v4204 = vld [vmem:[#allocation18 + $0x74] sm:$0xf]
    %v4205 = vld [vmem:[#allocation18 + $0x78] sm:$0xff]
    %v4206 = vld [vmem:[#allocation18 + $0x80] sm:$0xf]
    %v4207 = vld [vmem:[#allocation18 + $0x84] sm:$0xff]
    %v4208 = vld [vmem:[#allocation18 + $0x8c] sm:$0xf]
    %v4209 = vld [vmem:[#allocation18 + $0x90] sm:$0xff]
    %v4210 = vld [vmem:[#allocation18 + $0x98] sm:$0xf]
    %v4211 = vld [vmem:[#allocation18 + $0x9c] sm:$0xff]
    %v4212 = vld [vmem:[#allocation18 + $0xa4] sm:$0xf]
    %v4213 = vld [vmem:[#allocation18 + $0xa8] sm:$0xff]
    %v4214 = vld [vmem:[#allocation18 + $0xb0] sm:$0xf]
    %v4215 = vld [vmem:[#allocation18 + $0xb4] sm:$0xff]
    %v4216 = vld [vmem:[#allocation18 + $0xbc] sm:$0xf]
    %v4217 = vld [vmem:[%s49] sm:$0x7]
    %v4218 = vld [vmem:[%s51] sm:$0xf]
    %v4219 = vld [vmem:[%s51 + $0x4] sm:$0xf]
    %v4220 = vld [vmem:[%s51 + $0x8] sm:$0xf]
    %v4221 = vld [vmem:[%s51 + $0xc] sm:$0xf]
    %v4222 = vld [vmem:[%s51 + $0x10] sm:$0xf]
    %v4223 = vld [vmem:[%s51 + $0x14] sm:$0xf]
    %v4224 = vld [vmem:[%s51 + $0x18] sm:$0xf]
    %v4225 = vld [vmem:[%s51 + $0x1c] sm:$0xf]
    %v4226 = vld [vmem:[%s51 + $0x20] sm:$0xf]
    %v4227 = vld [vmem:[%s51 + $0x24] sm:$0xf]
    %v4228 = vld [vmem:[%s51 + $0x28] sm:$0xf]
    %v4229 = vld [vmem:[%s51 + $0x2c] sm:$0xf]
    %v4230 = vld [vmem:[%s51 + $0x30] sm:$0xf]
    %v4231 = vld [vmem:[%s51 + $0x34] sm:$0xf]
    %v4232 = vld [vmem:[%s51 + $0x38] sm:$0xf]
    %v4233 = vld [vmem:[%s51 + $0x3c] sm:$0xf]
    %v4234 = vld [vmem:[#allocation19] sm:$0x1]
    %v4235 = vld [vmem:[#allocation21] sm:$0x1]
    %v4236 = vld [vmem:[#allocation22] sm:$0x1]
    %v4237 = vld [vmem:[%s59] sm:$0xff]
    %v4238 = vld [vmem:[%s59 + $0x8] sm:$0xff]
    %v4239 = vld [vmem:[%s59 + $0x10] sm:$0xff]
    %v4240 = vld [vmem:[%s59 + $0x18] sm:$0xff]
    %v4241 = vld [vmem:[%s59 + $0x20] sm:$0xff]
    %v4242 = vld [vmem:[%s59 + $0x28] sm:$0xff]
    %v4243 = vld [vmem:[%s59 + $0x30] sm:$0xff]
    %v4244 = vld [vmem:[%s59 + $0x38] sm:$0xff]
    %v4245 = vld [vmem:[%s59 + $0x40] sm:$0xff]
    %v4246 = vld [vmem:[%s59 + $0x48] sm:$0xff]
    %v4247 = vld [vmem:[%s59 + $0x50] sm:$0xff]
    %v4248 = vld [vmem:[%s59 + $0x58] sm:$0xff]
    %v4249 = vld [vmem:[%s59 + $0x60] sm:$0xff]
    %v4250 = vld [vmem:[%s59 + $0x68] sm:$0xff]
    %v4251 = vld [vmem:[%s59 + $0x70] sm:$0xff]
    %v4252 = vld [vmem:[%s59 + $0x78] sm:$0xff]
    %v4253 = vld [vmem:[#allocation24] sm:$0x3]
    %v4254 = vld [vmem:[%s63] sm:$0xf]
    %v4255 = vld [vmem:[%s63 + $0x4] sm:$0xf]
    %v4256 = vld [vmem:[%s63 + $0x8] sm:$0xf]
    %v4257 = vld [vmem:[%s63 + $0xc] sm:$0xf]
    %v4258 = vld [vmem:[%s63 + $0x10] sm:$0xf]
    %v4259 = vld [vmem:[%s63 + $0x14] sm:$0xf]
    %v4260 = vld [vmem:[%s63 + $0x18] sm:$0xf]
    %v4261 = vld [vmem:[%s63 + $0x1c] sm:$0xf]
    %v4262 = vld [vmem:[%s63 + $0x20] sm:$0xf]
    %v4263 = vld [vmem:[%s63 + $0x24] sm:$0xf]
    %v4264 = vld [vmem:[%s63 + $0x28] sm:$0xf]
    %v4265 = vld [vmem:[%s63 + $0x2c] sm:$0xf]
    %v4266 = vld [vmem:[%s63 + $0x30] sm:$0xf]
    %v4267 = vld [vmem:[%s63 + $0x34] sm:$0xf]
    %v4268 = vld [vmem:[%s63 + $0x38] sm:$0xf]
    %v4269 = vld [vmem:[%s63 + $0x3c] sm:$0xf]
    %v4270 = vld [vmem:[%s63 + $0x40] sm:$0xf]
    %v4271 = vld [vmem:[%s63 + $0x44] sm:$0xf]
    %v4272 = vld [vmem:[%s63 + $0x48] sm:$0xf]
    %v4273 = vld [vmem:[%s63 + $0x4c] sm:$0xf]
    %v4274 = vld [vmem:[%s63 + $0x50] sm:$0xf]
    %v4275 = vld [vmem:[%s63 + $0x54] sm:$0xf]
    %v4276 = vld [vmem:[%s63 + $0x58] sm:$0xf]
    %v4277 = vld [vmem:[%s63 + $0x5c] sm:$0xf]
    %v4278 = vld [vmem:[%s63 + $0x60] sm:$0xf]
    %v4279 = vld [vmem:[%s63 + $0x64] sm:$0xf]
    %v4280 = vld [vmem:[%s63 + $0x68] sm:$0xf]
    %v4281 = vld [vmem:[%s63 + $0x6c] sm:$0xf]
    %v4282 = vld [vmem:[%s63 + $0x70] sm:$0xf]
    %v4283 = vld [vmem:[%s63 + $0x74] sm:$0xf]
    %v4284 = vld [vmem:[%s63 + $0x78] sm:$0xf]
    %v4285 = vld [vmem:[%s63 + $0x7c] sm:$0xf]
    %v4286 = vld [vmem:[#allocation25] sm:$0x1]
    %v4287 = vld [vmem:[#allocation27] sm:$0x1]
    %v4288 = vld [vmem:[#allocation28] sm:$0x1]
    %v4289 = vpack.c.bf16 %v4184, %v4184
    %v4291 = vperm.slane %v4217, 0
    %v4292 = vperm.slane %v4217, 1
    %v4293 = vperm.slane %v4217, 2
    %v4329 = vunpack.c.l.b16 %v4185
    %v4330 = vunpack.c.h.b16 %v4185
    %v4331 = vunpack.c.l.b16 %v4186
    %v4332 = vunpack.c.l.b16 %v4187
    %v4333 = vunpack.c.h.b16 %v4187
    %v4334 = vunpack.c.l.b16 %v4188
    %v4335 = vunpack.c.l.b16 %v4189
    %v4336 = vunpack.c.h.b16 %v4189
    %v4337 = vunpack.c.l.b16 %v4190
    %v4338 = vunpack.c.l.b16 %v4191
    %v4339 = vunpack.c.h.b16 %v4191
    %v4340 = vunpack.c.l.b16 %v4192
    %v4341 = vunpack.c.l.b16 %v4193
    %v4342 = vunpack.c.h.b16 %v4193
    %v4343 = vunpack.c.l.b16 %v4194
    %v4344 = vunpack.c.l.b16 %v4195
    %v4345 = vunpack.c.h.b16 %v4195
    %v4346 = vunpack.c.l.b16 %v4196
    %v4347 = vunpack.c.l.b16 %v4197
    %v4348 = vunpack.c.h.b16 %v4197
    %v4349 = vunpack.c.l.b16 %v4198
    %v4350 = vunpack.c.l.b16 %v4199
    %v4351 = vunpack.c.h.b16 %v4199
    %v4352 = vunpack.c.l.b16 %v4200
    %v4353 = vunpack.c.l.b16 %v4201
    %v4354 = vunpack.c.h.b16 %v4201
    %v4355 = vunpack.c.l.b16 %v4202
    %v4356 = vunpack.c.l.b16 %v4203
    %v4357 = vunpack.c.h.b16 %v4203
    %v4358 = vunpack.c.l.b16 %v4204
    %v4359 = vunpack.c.l.b16 %v4205
    %v4360 = vunpack.c.h.b16 %v4205
    %v4361 = vunpack.c.l.b16 %v4206
    %v4362 = vunpack.c.l.b16 %v4207
    %v4363 = vunpack.c.h.b16 %v4207
    %v4364 = vunpack.c.l.b16 %v4208
    %v4365 = vunpack.c.l.b16 %v4209
    %v4366 = vunpack.c.h.b16 %v4209
    %v4367 = vunpack.c.l.b16 %v4210
    %v4368 = vunpack.c.l.b16 %v4211
    %v4369 = vunpack.c.h.b16 %v4211
    %v4370 = vunpack.c.l.b16 %v4212
    %v4371 = vunpack.c.l.b16 %v4213
    %v4372 = vunpack.c.h.b16 %v4213
    %v4373 = vunpack.c.l.b16 %v4214
    %v4374 = vunpack.c.l.b16 %v4215
    %v4375 = vunpack.c.h.b16 %v4215
    %v4376 = vunpack.c.l.b16 %v4216
    %v4377 = vpack.c.b16 %v4332, %v4329
    %v4378 = vpack.c.b16 %v4333, %v4330
    %v4379 = vpack.c.b16 %v4334, %v4331
    %v4380 = vpack.c.b16 %v4338, %v4335
    %v4381 = vpack.c.b16 %v4339, %v4336
    %v4382 = vpack.c.b16 %v4340, %v4337
    %v4383 = vpack.c.b16 %v4344, %v4341
    %v4384 = vpack.c.b16 %v4345, %v4342
    %v4385 = vpack.c.b16 %v4346, %v4343
    %v4386 = vpack.c.b16 %v4350, %v4347
    %v4387 = vpack.c.b16 %v4351, %v4348
    %v4388 = vpack.c.b16 %v4352, %v4349
    %v4389 = vpack.c.b16 %v4356, %v4353
    %v4390 = vpack.c.b16 %v4357, %v4354
    %v4391 = vpack.c.b16 %v4358, %v4355
    %v4392 = vpack.c.b16 %v4362, %v4359
    %v4393 = vpack.c.b16 %v4363, %v4360
    %v4394 = vpack.c.b16 %v4364, %v4361
    %v4395 = vpack.c.b16 %v4368, %v4365
    %v4396 = vpack.c.b16 %v4369, %v4366
    %v4397 = vpack.c.b16 %v4370, %v4367
    %v4398 = vpack.c.b16 %v4374, %v4371
    %v4399 = vpack.c.b16 %v4375, %v4372
    %v4400 = vpack.c.b16 %v4376, %v4373
    %4425 = vmatpush.bf16.msra.mxu0 %v4398
    %4426 = vmatpush.bf16.msra.mxu0 %v4395
    %4427 = vmatpush.bf16.msra.mxu0 %v4392
    %4428 = vmatpush.bf16.msra.mxu0 %v4389
    %4429 = vmatpush.bf16.msra.mxu0 %v4386
    %4430 = vmatpush.bf16.msra.mxu0 %v4383
    %4431 = vmatpush.bf16.msra.mxu0 %v4380
    %4432 = vmatpush.bf16.msra.mxu0 %v4377
    %4433 = vmatmul.bf16.gmra.mxu0 %v4289
    %v4434 = vpop.f32.mrf.mxu0
    %v4435 = vadd.f32 %v4291, %v4434
    %v4436 = vpop.f32.mrf.mxu0
    %4437 = vdwg.mxu0
    %4438 = vmatpush.bf16.msra.mxu0 %v4399
    %4439 = vmatpush.bf16.msra.mxu0 %v4396
    %4440 = vmatpush.bf16.msra.mxu0 %v4393
    %4441 = vmatpush.bf16.msra.mxu0 %v4390
    %4442 = vmatpush.bf16.msra.mxu0 %v4387
    %4443 = vmatpush.bf16.msra.mxu0 %v4384
    %4444 = vmatpush.bf16.msra.mxu0 %v4381
    %4445 = vmatpush.bf16.msra.mxu0 %v4378
    %4446 = vmatmul.bf16.gmra.mxu0 %v4289
    %v4447 = vpop.f32.mrf.mxu0
    %v4448 = vadd.f32 %v4292, %v4447
    %v4449 = vpop.f32.mrf.mxu0
    %4450 = vdwg.mxu0
    %4451 = vmatpush.bf16.msra.mxu0 %v4400
    %4452 = vmatpush.bf16.msra.mxu0 %v4397
    %4453 = vmatpush.bf16.msra.mxu0 %v4394
    %4454 = vmatpush.bf16.msra.mxu0 %v4391
    %4455 = vmatpush.bf16.msra.mxu0 %v4388
    %4456 = vmatpush.bf16.msra.mxu0 %v4385
    %4457 = vmatpush.bf16.msra.mxu0 %v4382
    %4458 = vmatpush.bf16.msra.mxu0 %v4379
    %4459 = vmatmul.bf16.gmra.mxu0 %v4289
    %v4460 = vpop.f32.mrf.mxu0
    %v4461 = vadd.f32 %v4293, %v4460
    %v4462 = vpop.f32.mrf.mxu0
    %4463 = vdwg.mxu0
    %v4464 = vpack.c.bf16 %v4435, %v4435
    %v4465 = vpack.c.bf16 %v4448, %v4448
    %v4467 = vsel %vm821, %v4464, 0
    %v4470 = vsel %vm821, %v4465, 0
    %4472 = vmatpush.bf16.xpose.msra.mxu0 0
    %4473 = vmatpush.bf16.xpose.msra.mxu0 0
    %4474 = vmatpush.bf16.xpose.msra.mxu0 0
    %4475 = vmatpush.bf16.xpose.msra.mxu0 0
    %4476 = vmatpush.bf16.xpose.msra.mxu0 0
    %4477 = vmatpush.bf16.xpose.msra.mxu0 0
    %4478 = vmatpush.bf16.xpose.msra.mxu0 0
    %4479 = vmatpush.bf16.xpose.msra.mxu0 %v4470
    %4480 = vmatmul.bf16.gmra.mxu0 %v4467
    %v4481 = vpop.f32.mrf.mxu0
    %v4482 = vadd.f32 0.0, %v4481
    %v4483 = vpop.f32.mrf.mxu0
    %4484 = vdwg.mxu0
    %vm4485 = vcmask 9216
    %v4486 = vsel %vm4485, %v4482, -inf
    %4487 = vmax.xlane.f32.xlu0 %v4486
    %v4488 = vpop.xlane.xlu0 %4487
    %v4489 = vsub.f32 %v4482, %v4488
    %v4490 = vmul.f32 %v4489, 1.442695
    %v4491 = vpow.pop %v4490
    %v4492 = vsel %vm4485, %v4491, 0.0
    %4493 = vadd.xlane.f32.xlu0 %v4492
    %v4494 = vpop.xlane.xlu0 %4493
    %v4495 = vrcp.pop %v4494
    %v4496 = vmul.f32 %v4491, %v4495
    %v4497 = vpack.c.bf16 %v4496, %v4496
    %v4498 = vpack.c.bf16 %v4461, %v4461
    %vm4499 = vcmask 15360
    %v4501 = vsel %vm4499, %v4497, 0
    %vm4503 = vcmask 1040384
    %v4505 = vsel %vm4503, %v4498, 0
    %4507 = vmatpush.bf16.msra.mxu0 0
    %4508 = vmatpush.bf16.msra.mxu0 0
    %4509 = vmatpush.bf16.msra.mxu0 0
    %4510 = vmatpush.bf16.msra.mxu0 0
    %4511 = vmatpush.bf16.msra.mxu0 0
    %4512 = vmatpush.bf16.msra.mxu0 0
    %4513 = vmatpush.bf16.msra.mxu0 0
    %4514 = vmatpush.bf16.msra.mxu0 %v4505
    %4515 = vmatmul.bf16.gmra.mxu0 %v4501
    %v4516 = vpop.f32.mrf.mxu0
    %v4517 = vadd.f32 0.0, %v4516
    %v4518 = vpop.f32.mrf.mxu0
    %4519 = vdwg.mxu0
    %v4521 = vunpack.c.l.b16 %v4464
    %v4522 = vpack.c.b16 %v4521, %v4521
    %4523 = vrot.lane.b32.xlu0 %v4522, 112
    %v4524 = vpop.permute.xlu0 %4523
    %v4526 = vunpack.c.l.b16 %v4465
    %v4527 = vpack.c.b16 %v4526, %v4526
    %4528 = vrot.lane.b32.xlu0 %v4527, 112
    %v4529 = vpop.permute.xlu0 %4528
    %v4531 = vsel %vm821, %v4524, 0
    %v4534 = vsel %vm821, %v4529, 0
    %4536 = vmatpush.bf16.xpose.msra.mxu0 0
    %4537 = vmatpush.bf16.xpose.msra.mxu0 0
    %4538 = vmatpush.bf16.xpose.msra.mxu0 0
    %4539 = vmatpush.bf16.xpose.msra.mxu0 0
    %4540 = vmatpush.bf16.xpose.msra.mxu0 0
    %4541 = vmatpush.bf16.xpose.msra.mxu0 0
    %4542 = vmatpush.bf16.xpose.msra.mxu0 0
    %4543 = vmatpush.bf16.xpose.msra.mxu0 %v4534
    %4544 = vmatmul.bf16.gmra.mxu0 %v4531
    %v4545 = vpop.f32.mrf.mxu0
    %v4546 = vadd.f32 0.0, %v4545
    %v4547 = vpop.f32.mrf.mxu0
    %4548 = vdwg.mxu0
    %v4549 = vsel %vm4485, %v4546, -inf
    %4550 = vmax.xlane.f32.xlu0 %v4549
    %v4551 = vpop.xlane.xlu0 %4550
    %v4552 = vsub.f32 %v4546, %v4551
    %v4553 = vmul.f32 %v4552, 1.442695
    %v4554 = vpow.pop %v4553
    %v4555 = vsel %vm4485, %v4554, 0.0
    %4556 = vadd.xlane.f32.xlu0 %v4555
    %v4557 = vpop.xlane.xlu0 %4556
    %v4558 = vrcp.pop %v4557
    %v4559 = vmul.f32 %v4554, %v4558
    %v4560 = vpack.c.bf16 %v4559, %v4559
    %v4562 = vunpack.c.l.b16 %v4498
    %v4563 = vpack.c.b16 %v4562, %v4562
    %4564 = vrot.lane.b32.xlu0 %v4563, 112
    %v4565 = vpop.permute.xlu0 %4564
    %v4567 = vsel %vm4499, %v4560, 0
    %v4570 = vsel %vm4503, %v4565, 0
    %4572 = vmatpush.bf16.msra.mxu0 0
    %4573 = vmatpush.bf16.msra.mxu0 0
    %4574 = vmatpush.bf16.msra.mxu0 0
    %4575 = vmatpush.bf16.msra.mxu0 0
    %4576 = vmatpush.bf16.msra.mxu0 0
    %4577 = vmatpush.bf16.msra.mxu0 0
    %4578 = vmatpush.bf16.msra.mxu0 0
    %4579 = vmatpush.bf16.msra.mxu0 %v4570
    %4580 = vmatmul.bf16.gmra.mxu0 %v4567
    %v4581 = vpop.f32.mrf.mxu0
    %v4582 = vadd.f32 0.0, %v4581
    %v4583 = vpop.f32.mrf.mxu0
    %4584 = vdwg.mxu0
    %4585 = vrot.lane.b32.xlu0 %v4522, 96
    %v4586 = vpop.permute.xlu0 %4585
    %4587 = vrot.lane.b32.xlu0 %v4527, 96
    %v4588 = vpop.permute.xlu0 %4587
    %v4590 = vsel %vm821, %v4586, 0
    %v4593 = vsel %vm821, %v4588, 0
    %4595 = vmatpush.bf16.xpose.msra.mxu0 0
    %4596 = vmatpush.bf16.xpose.msra.mxu0 0
    %4597 = vmatpush.bf16.xpose.msra.mxu0 0
    %4598 = vmatpush.bf16.xpose.msra.mxu0 0
    %4599 = vmatpush.bf16.xpose.msra.mxu0 0
    %4600 = vmatpush.bf16.xpose.msra.mxu0 0
    %4601 = vmatpush.bf16.xpose.msra.mxu0 0
    %4602 = vmatpush.bf16.xpose.msra.mxu0 %v4593
    %4603 = vmatmul.bf16.gmra.mxu0 %v4590
    %v4604 = vpop.f32.mrf.mxu0
    %v4605 = vadd.f32 0.0, %v4604
    %v4606 = vpop.f32.mrf.mxu0
    %4607 = vdwg.mxu0
    %v4608 = vsel %vm4485, %v4605, -inf
    %4609 = vmax.xlane.f32.xlu0 %v4608
    %v4610 = vpop.xlane.xlu0 %4609
    %v4611 = vsub.f32 %v4605, %v4610
    %v4612 = vmul.f32 %v4611, 1.442695
    %v4613 = vpow.pop %v4612
    %v4614 = vsel %vm4485, %v4613, 0.0
    %4615 = vadd.xlane.f32.xlu0 %v4614
    %v4616 = vpop.xlane.xlu0 %4615
    %v4617 = vrcp.pop %v4616
    %v4618 = vmul.f32 %v4613, %v4617
    %v4619 = vpack.c.bf16 %v4618, %v4618
    %4620 = vrot.lane.b32.xlu0 %v4563, 96
    %v4621 = vpop.permute.xlu0 %4620
    %v4623 = vsel %vm4499, %v4619, 0
    %v4626 = vsel %vm4503, %v4621, 0
    %4628 = vmatpush.bf16.msra.mxu0 0
    %4629 = vmatpush.bf16.msra.mxu0 0
    %4630 = vmatpush.bf16.msra.mxu0 0
    %4631 = vmatpush.bf16.msra.mxu0 0
    %4632 = vmatpush.bf16.msra.mxu0 0
    %4633 = vmatpush.bf16.msra.mxu0 0
    %4634 = vmatpush.bf16.msra.mxu0 0
    %4635 = vmatpush.bf16.msra.mxu0 %v4626
    %4636 = vmatmul.bf16.gmra.mxu0 %v4623
    %v4637 = vpop.f32.mrf.mxu0
    %v4638 = vadd.f32 0.0, %v4637
    %v4639 = vpop.f32.mrf.mxu0
    %4640 = vdwg.mxu0
    %4641 = vrot.lane.b32.xlu0 %v4522, 80
    %v4642 = vpop.permute.xlu0 %4641
    %4643 = vrot.lane.b32.xlu0 %v4527, 80
    %v4644 = vpop.permute.xlu0 %4643
    %v4646 = vsel %vm821, %v4642, 0
    %v4649 = vsel %vm821, %v4644, 0
    %4651 = vmatpush.bf16.xpose.msra.mxu0 0
    %4652 = vmatpush.bf16.xpose.msra.mxu0 0
    %4653 = vmatpush.bf16.xpose.msra.mxu0 0
    %4654 = vmatpush.bf16.xpose.msra.mxu0 0
    %4655 = vmatpush.bf16.xpose.msra.mxu0 0
    %4656 = vmatpush.bf16.xpose.msra.mxu0 0
    %4657 = vmatpush.bf16.xpose.msra.mxu0 0
    %4658 = vmatpush.bf16.xpose.msra.mxu0 %v4649
    %4659 = vmatmul.bf16.gmra.mxu0 %v4646
    %v4660 = vpop.f32.mrf.mxu0
    %v4661 = vadd.f32 0.0, %v4660
    %v4662 = vpop.f32.mrf.mxu0
    %4663 = vdwg.mxu0
    %v4664 = vsel %vm4485, %v4661, -inf
    %4665 = vmax.xlane.f32.xlu0 %v4664
    %v4666 = vpop.xlane.xlu0 %4665
    %v4667 = vsub.f32 %v4661, %v4666
    %v4668 = vmul.f32 %v4667, 1.442695
    %v4669 = vpow.pop %v4668
    %v4670 = vsel %vm4485, %v4669, 0.0
    %4671 = vadd.xlane.f32.xlu0 %v4670
    %v4672 = vpop.xlane.xlu0 %4671
    %v4673 = vrcp.pop %v4672
    %v4674 = vmul.f32 %v4669, %v4673
    %v4675 = vpack.c.bf16 %v4674, %v4674
    %4676 = vrot.lane.b32.xlu0 %v4563, 80
    %v4677 = vpop.permute.xlu0 %4676
    %v4679 = vsel %vm4499, %v4675, 0
    %v4682 = vsel %vm4503, %v4677, 0
    %4684 = vmatpush.bf16.msra.mxu0 0
    %4685 = vmatpush.bf16.msra.mxu0 0
    %4686 = vmatpush.bf16.msra.mxu0 0
    %4687 = vmatpush.bf16.msra.mxu0 0
    %4688 = vmatpush.bf16.msra.mxu0 0
    %4689 = vmatpush.bf16.msra.mxu0 0
    %4690 = vmatpush.bf16.msra.mxu0 0
    %4691 = vmatpush.bf16.msra.mxu0 %v4682
    %4692 = vmatmul.bf16.gmra.mxu0 %v4679
    %v4693 = vpop.f32.mrf.mxu0
    %v4694 = vadd.f32 0.0, %v4693
    %v4695 = vpop.f32.mrf.mxu0
    %4696 = vdwg.mxu0
    %4697 = vrot.lane.b32.xlu0 %v4522, 64
    %v4698 = vpop.permute.xlu0 %4697
    %4699 = vrot.lane.b32.xlu0 %v4527, 64
    %v4700 = vpop.permute.xlu0 %4699
    %v4702 = vsel %vm821, %v4698, 0
    %v4705 = vsel %vm821, %v4700, 0
    %4707 = vmatpush.bf16.xpose.msra.mxu0 0
    %4708 = vmatpush.bf16.xpose.msra.mxu0 0
    %4709 = vmatpush.bf16.xpose.msra.mxu0 0
    %4710 = vmatpush.bf16.xpose.msra.mxu0 0
    %4711 = vmatpush.bf16.xpose.msra.mxu0 0
    %4712 = vmatpush.bf16.xpose.msra.mxu0 0
    %4713 = vmatpush.bf16.xpose.msra.mxu0 0
    %4714 = vmatpush.bf16.xpose.msra.mxu0 %v4705
    %4715 = vmatmul.bf16.gmra.mxu0 %v4702
    %v4716 = vpop.f32.mrf.mxu0
    %v4717 = vadd.f32 0.0, %v4716
    %v4718 = vpop.f32.mrf.mxu0
    %4719 = vdwg.mxu0
    %v4720 = vsel %vm4485, %v4717, -inf
    %4721 = vmax.xlane.f32.xlu0 %v4720
    %v4722 = vpop.xlane.xlu0 %4721
    %v4723 = vsub.f32 %v4717, %v4722
    %v4724 = vmul.f32 %v4723, 1.442695
    %v4725 = vpow.pop %v4724
    %v4726 = vsel %vm4485, %v4725, 0.0
    %4727 = vadd.xlane.f32.xlu0 %v4726
    %v4728 = vpop.xlane.xlu0 %4727
    %v4729 = vrcp.pop %v4728
    %v4730 = vmul.f32 %v4725, %v4729
    %v4731 = vpack.c.bf16 %v4730, %v4730
    %4732 = vrot.lane.b32.xlu0 %v4563, 64
    %v4733 = vpop.permute.xlu0 %4732
    %v4735 = vsel %vm4499, %v4731, 0
    %v4738 = vsel %vm4503, %v4733, 0
    %4740 = vmatpush.bf16.msra.mxu0 0
    %4741 = vmatpush.bf16.msra.mxu0 0
    %4742 = vmatpush.bf16.msra.mxu0 0
    %4743 = vmatpush.bf16.msra.mxu0 0
    %4744 = vmatpush.bf16.msra.mxu0 0
    %4745 = vmatpush.bf16.msra.mxu0 0
    %4746 = vmatpush.bf16.msra.mxu0 0
    %4747 = vmatpush.bf16.msra.mxu0 %v4738
    %4748 = vmatmul.bf16.gmra.mxu0 %v4735
    %v4749 = vpop.f32.mrf.mxu0
    %v4750 = vadd.f32 0.0, %v4749
    %v4751 = vpop.f32.mrf.mxu0
    %4752 = vdwg.mxu0
    %4753 = vrot.lane.b32.xlu0 %v4522, 48
    %v4754 = vpop.permute.xlu0 %4753
    %4755 = vrot.lane.b32.xlu0 %v4527, 48
    %v4756 = vpop.permute.xlu0 %4755
    %v4758 = vsel %vm821, %v4754, 0
    %v4761 = vsel %vm821, %v4756, 0
    %4763 = vmatpush.bf16.xpose.msra.mxu0 0
    %4764 = vmatpush.bf16.xpose.msra.mxu0 0
    %4765 = vmatpush.bf16.xpose.msra.mxu0 0
    %4766 = vmatpush.bf16.xpose.msra.mxu0 0
    %4767 = vmatpush.bf16.xpose.msra.mxu0 0
    %4768 = vmatpush.bf16.xpose.msra.mxu0 0
    %4769 = vmatpush.bf16.xpose.msra.mxu0 0
    %4770 = vmatpush.bf16.xpose.msra.mxu0 %v4761
    %4771 = vmatmul.bf16.gmra.mxu0 %v4758
    %v4772 = vpop.f32.mrf.mxu0
    %v4773 = vadd.f32 0.0, %v4772
    %v4774 = vpop.f32.mrf.mxu0
    %4775 = vdwg.mxu0
    %v4776 = vsel %vm4485, %v4773, -inf
    %4777 = vmax.xlane.f32.xlu0 %v4776
    %v4778 = vpop.xlane.xlu0 %4777
    %v4779 = vsub.f32 %v4773, %v4778
    %v4780 = vmul.f32 %v4779, 1.442695
    %v4781 = vpow.pop %v4780
    %v4782 = vsel %vm4485, %v4781, 0.0
    %4783 = vadd.xlane.f32.xlu0 %v4782
    %v4784 = vpop.xlane.xlu0 %4783
    %v4785 = vrcp.pop %v4784
    %v4786 = vmul.f32 %v4781, %v4785
    %v4787 = vpack.c.bf16 %v4786, %v4786
    %4788 = vrot.lane.b32.xlu0 %v4563, 48
    %v4789 = vpop.permute.xlu0 %4788
    %v4791 = vsel %vm4499, %v4787, 0
    %v4794 = vsel %vm4503, %v4789, 0
    %4796 = vmatpush.bf16.msra.mxu0 0
    %4797 = vmatpush.bf16.msra.mxu0 0
    %4798 = vmatpush.bf16.msra.mxu0 0
    %4799 = vmatpush.bf16.msra.mxu0 0
    %4800 = vmatpush.bf16.msra.mxu0 0
    %4801 = vmatpush.bf16.msra.mxu0 0
    %4802 = vmatpush.bf16.msra.mxu0 0
    %4803 = vmatpush.bf16.msra.mxu0 %v4794
    %4804 = vmatmul.bf16.gmra.mxu0 %v4791
    %v4805 = vpop.f32.mrf.mxu0
    %v4806 = vadd.f32 0.0, %v4805
    %v4807 = vpop.f32.mrf.mxu0
    %4808 = vdwg.mxu0
    %4809 = vrot.lane.b32.xlu0 %v4522, 32
    %v4810 = vpop.permute.xlu0 %4809
    %4811 = vrot.lane.b32.xlu0 %v4527, 32
    %v4812 = vpop.permute.xlu0 %4811
    %v4814 = vsel %vm821, %v4810, 0
    %v4817 = vsel %vm821, %v4812, 0
    %4819 = vmatpush.bf16.xpose.msra.mxu0 0
    %4820 = vmatpush.bf16.xpose.msra.mxu0 0
    %4821 = vmatpush.bf16.xpose.msra.mxu0 0
    %4822 = vmatpush.bf16.xpose.msra.mxu0 0
    %4823 = vmatpush.bf16.xpose.msra.mxu0 0
    %4824 = vmatpush.bf16.xpose.msra.mxu0 0
    %4825 = vmatpush.bf16.xpose.msra.mxu0 0
    %4826 = vmatpush.bf16.xpose.msra.mxu0 %v4817
    %4827 = vmatmul.bf16.gmra.mxu0 %v4814
    %v4828 = vpop.f32.mrf.mxu0
    %v4829 = vadd.f32 0.0, %v4828
    %v4830 = vpop.f32.mrf.mxu0
    %4831 = vdwg.mxu0
    %v4832 = vsel %vm4485, %v4829, -inf
    %4833 = vmax.xlane.f32.xlu0 %v4832
    %v4834 = vpop.xlane.xlu0 %4833
    %v4835 = vsub.f32 %v4829, %v4834
    %v4836 = vmul.f32 %v4835, 1.442695
    %v4837 = vpow.pop %v4836
    %v4838 = vsel %vm4485, %v4837, 0.0
    %4839 = vadd.xlane.f32.xlu0 %v4838
    %v4840 = vpop.xlane.xlu0 %4839
    %v4841 = vrcp.pop %v4840
    %v4842 = vmul.f32 %v4837, %v4841
    %v4843 = vpack.c.bf16 %v4842, %v4842
    %4844 = vrot.lane.b32.xlu0 %v4563, 32
    %v4845 = vpop.permute.xlu0 %4844
    %v4847 = vsel %vm4499, %v4843, 0
    %v4850 = vsel %vm4503, %v4845, 0
    %4852 = vmatpush.bf16.msra.mxu0 0
    %4853 = vmatpush.bf16.msra.mxu0 0
    %4854 = vmatpush.bf16.msra.mxu0 0
    %4855 = vmatpush.bf16.msra.mxu0 0
    %4856 = vmatpush.bf16.msra.mxu0 0
    %4857 = vmatpush.bf16.msra.mxu0 0
    %4858 = vmatpush.bf16.msra.mxu0 0
    %4859 = vmatpush.bf16.msra.mxu0 %v4850
    %4860 = vmatmul.bf16.gmra.mxu0 %v4847
    %v4861 = vpop.f32.mrf.mxu0
    %v4862 = vadd.f32 0.0, %v4861
    %v4863 = vpop.f32.mrf.mxu0
    %4864 = vdwg.mxu0
    %4865 = vrot.lane.b32.xlu0 %v4522, 16
    %v4866 = vpop.permute.xlu0 %4865
    %4867 = vrot.lane.b32.xlu0 %v4527, 16
    %v4868 = vpop.permute.xlu0 %4867
    %v4870 = vsel %vm821, %v4866, 0
    %v4873 = vsel %vm821, %v4868, 0
    %4875 = vmatpush.bf16.xpose.msra.mxu0 0
    %4876 = vmatpush.bf16.xpose.msra.mxu0 0
    %4877 = vmatpush.bf16.xpose.msra.mxu0 0
    %4878 = vmatpush.bf16.xpose.msra.mxu0 0
    %4879 = vmatpush.bf16.xpose.msra.mxu0 0
    %4880 = vmatpush.bf16.xpose.msra.mxu0 0
    %4881 = vmatpush.bf16.xpose.msra.mxu0 0
    %4882 = vmatpush.bf16.xpose.msra.mxu0 %v4873
    %4883 = vmatmul.bf16.gmra.mxu0 %v4870
    %v4884 = vpop.f32.mrf.mxu0
    %v4885 = vadd.f32 0.0, %v4884
    %v4886 = vpop.f32.mrf.mxu0
    %4887 = vdwg.mxu0
    %v4888 = vsel %vm4485, %v4885, -inf
    %4889 = vmax.xlane.f32.xlu0 %v4888
    %v4890 = vpop.xlane.xlu0 %4889
    %v4891 = vsub.f32 %v4885, %v4890
    %v4892 = vmul.f32 %v4891, 1.442695
    %v4893 = vpow.pop %v4892
    %v4894 = vsel %vm4485, %v4893, 0.0
    %4895 = vadd.xlane.f32.xlu0 %v4894
    %v4896 = vpop.xlane.xlu0 %4895
    %v4897 = vrcp.pop %v4896
    %v4898 = vmul.f32 %v4893, %v4897
    %v4899 = vpack.c.bf16 %v4898, %v4898
    %4900 = vrot.lane.b32.xlu0 %v4563, 16
    %v4901 = vpop.permute.xlu0 %4900
    %v4903 = vsel %vm4499, %v4899, 0
    %v4906 = vsel %vm4503, %v4901, 0
    %4908 = vmatpush.bf16.msra.mxu0 0
    %4909 = vmatpush.bf16.msra.mxu0 0
    %4910 = vmatpush.bf16.msra.mxu0 0
    %4911 = vmatpush.bf16.msra.mxu0 0
    %4912 = vmatpush.bf16.msra.mxu0 0
    %4913 = vmatpush.bf16.msra.mxu0 0
    %4914 = vmatpush.bf16.msra.mxu0 0
    %4915 = vmatpush.bf16.msra.mxu0 %v4906
    %4916 = vmatmul.bf16.gmra.mxu0 %v4903
    %v4917 = vpop.f32.mrf.mxu0
    %v4918 = vadd.f32 0.0, %v4917
    %v4919 = vpop.f32.mrf.mxu0
    %4920 = vdwg.mxu0
    %4922 = vrot.lane.b32.xlu0 %v4582, 16
    %v4923 = vpop.permute.xlu0 %4922
    %4926 = vrot.lane.b32.xlu0 %v4638, 32
    %v4927 = vpop.permute.xlu0 %4926
    %4930 = vrot.lane.b32.xlu0 %v4694, 48
    %v4931 = vpop.permute.xlu0 %4930
    %4934 = vrot.lane.b32.xlu0 %v4750, 64
    %v4935 = vpop.permute.xlu0 %4934
    %4938 = vrot.lane.b32.xlu0 %v4806, 80
    %v4939 = vpop.permute.xlu0 %4938
    %4942 = vrot.lane.b32.xlu0 %v4862, 96
    %v4943 = vpop.permute.xlu0 %4942
    %4946 = vrot.lane.b32.xlu0 %v4918, 112
    %v4947 = vpop.permute.xlu0 %4946
    %v4949 = vsel %vm821, %v4517, %v4923
    %v4950 = vsel %vm1779, %v4949, %v4927
    %v4951 = vsel %vm1784, %v4950, %v4931
    %v4952 = vsel %vm480, %v4951, %v4935
    %vm4953 = vcmask 654336
    %v4954 = vsel %vm4953, %v4952, %v4939
    %vm4955 = vcmask 785408
    %v4956 = vsel %vm4955, %v4954, %v4943
    %v4957 = vsel %vm2213, %v4956, %v4947
    %v4958 = vpack.c.bf16 %v4957, %v4957
    %v4960 = vperm.slane %v4234, 0
    %v4978 = vunpack.c.l.b16 %v4218
    %v4979 = vunpack.c.l.b16 %v4219
    %v4980 = vunpack.c.l.b16 %v4220
    %v4981 = vunpack.c.l.b16 %v4221
    %v4982 = vunpack.c.l.b16 %v4222
    %v4983 = vunpack.c.l.b16 %v4223
    %v4984 = vunpack.c.l.b16 %v4224
    %v4985 = vunpack.c.l.b16 %v4225
    %v4986 = vunpack.c.l.b16 %v4226
    %v4987 = vunpack.c.l.b16 %v4227
    %v4988 = vunpack.c.l.b16 %v4228
    %v4989 = vunpack.c.l.b16 %v4229
    %v4990 = vunpack.c.l.b16 %v4230
    %v4991 = vunpack.c.l.b16 %v4231
    %v4992 = vunpack.c.l.b16 %v4232
    %v4993 = vunpack.c.l.b16 %v4233
    %v4994 = vpack.c.b16 %v4979, %v4978
    %v4995 = vpack.c.b16 %v4981, %v4980
    %v4996 = vpack.c.b16 %v4983, %v4982
    %v4997 = vpack.c.b16 %v4985, %v4984
    %v4998 = vpack.c.b16 %v4987, %v4986
    %v4999 = vpack.c.b16 %v4989, %v4988
    %v5000 = vpack.c.b16 %v4991, %v4990
    %v5001 = vpack.c.b16 %v4993, %v4992
    %5010 = vmatpush.bf16.msra.mxu0 %v5001
    %5011 = vmatpush.bf16.msra.mxu0 %v5000
    %5012 = vmatpush.bf16.msra.mxu0 %v4999
    %5013 = vmatpush.bf16.msra.mxu0 %v4998
    %5014 = vmatpush.bf16.msra.mxu0 %v4997
    %5015 = vmatpush.bf16.msra.mxu0 %v4996
    %5016 = vmatpush.bf16.msra.mxu0 %v4995
    %5017 = vmatpush.bf16.msra.mxu0 %v4994
    %5018 = vmatmul.bf16.gmra.mxu0 %v4958
    %v5019 = vpop.f32.mrf.mxu0
    %v5020 = vadd.f32 %v4960, %v5019
    %v5021 = vpop.f32.mrf.mxu0
    %5022 = vdwg.mxu0
    %v5023 = vadd.f32 %v4184, %v5020
    %vm5024 = vcmask 1041408
    %v5025 = vsel %vm5024, %v5023, 0.0
    %5026 = vadd.xlane.f32.xlu0 %v5025
    %v5027 = vpop.xlane.xlu0 %5026
    %v5028 = vrcp.pop 128.0
    %v5029 = vmul.f32 128.0, %v5028
    %v5030 = vsub.f32 1.0, %v5029
    %v5031 = vmul.f32 %v5028, %v5030
    %v5032 = vadd.f32 %v5028, %v5031
    %vm5033 = vweird.f32 %v5028
    %v5034 = vsel %vm5033, %v5028, %v5032
    %v5035 = vmul.f32 %v5027, %v5034
    %v5036 = vsub.f32 %v5023, %v5035
    %v5037 = vmul.f32 %v5036, %v5036
    %v5038 = vsel %vm5024, %v5037, 0.0
    %5039 = vadd.xlane.f32.xlu0 %v5038
    %v5040 = vpop.xlane.xlu0 %5039
    %v5041 = vmul.f32 %v5040, %v5034
    %v5042 = vadd.f32 %v5041, 1e-05
    %v5043 = vrsqrt.pop %v5042
    %v5044 = vmul.f32 %v5043, %v5042
    %v5045 = vmul.f32 %v5044, %v5043
    %v5046 = vmul.f32 0.5, %v5045
    %v5047 = vsub.f32 1.5, %v5046
    %v5048 = vmul.f32 %v5043, %v5047
    %vm5049 = vweird.f32 %v5042
    %vm5050 = vweird.f32 %v5043
    %vm5051 = vmor %vm5049, %vm5050
    %v5052 = vsel %vm5051, %v5043, %v5048
    %v5053 = vmul.f32 %v5036, %v5052
    %v5055 = vperm.slane %v4235, 0
    %v5057 = vmul.f32 %v5053, %v5055
    %v5059 = vperm.slane %v4236, 0
    %v5061 = vadd.f32 %v5057, %v5059
    %v5062 = vpack.c.bf16 %v5061, %v5061
    %v5064 = vperm.slane %v4253, 0
    %v5065 = vperm.slane %v4253, 1
    %v5084 = vunpack.c.l.b16 %v4237
    %v5085 = vunpack.c.h.b16 %v4237
    %v5086 = vunpack.c.l.b16 %v4238
    %v5087 = vunpack.c.h.b16 %v4238
    %v5088 = vunpack.c.l.b16 %v4239
    %v5089 = vunpack.c.h.b16 %v4239
    %v5090 = vunpack.c.l.b16 %v4240
    %v5091 = vunpack.c.h.b16 %v4240
    %v5092 = vunpack.c.l.b16 %v4241
    %v5093 = vunpack.c.h.b16 %v4241
    %v5094 = vunpack.c.l.b16 %v4242
    %v5095 = vunpack.c.h.b16 %v4242
    %v5096 = vunpack.c.l.b16 %v4243
    %v5097 = vunpack.c.h.b16 %v4243
    %v5098 = vunpack.c.l.b16 %v4244
    %v5099 = vunpack.c.h.b16 %v4244
    %v5100 = vunpack.c.l.b16 %v4245
    %v5101 = vunpack.c.h.b16 %v4245
    %v5102 = vunpack.c.l.b16 %v4246
    %v5103 = vunpack.c.h.b16 %v4246
    %v5104 = vunpack.c.l.b16 %v4247
    %v5105 = vunpack.c.h.b16 %v4247
    %v5106 = vunpack.c.l.b16 %v4248
    %v5107 = vunpack.c.h.b16 %v4248
    %v5108 = vunpack.c.l.b16 %v4249
    %v5109 = vunpack.c.h.b16 %v4249
    %v5110 = vunpack.c.l.b16 %v4250
    %v5111 = vunpack.c.h.b16 %v4250
    %v5112 = vunpack.c.l.b16 %v4251
    %v5113 = vunpack.c.h.b16 %v4251
    %v5114 = vunpack.c.l.b16 %v4252
    %v5115 = vunpack.c.h.b16 %v4252
    %v5116 = vpack.c.b16 %v5086, %v5084
    %v5117 = vpack.c.b16 %v5087, %v5085
    %v5118 = vpack.c.b16 %v5090, %v5088
    %v5119 = vpack.c.b16 %v5091, %v5089
    %v5120 = vpack.c.b16 %v5094, %v5092
    %v5121 = vpack.c.b16 %v5095, %v5093
    %v5122 = vpack.c.b16 %v5098, %v5096
    %v5123 = vpack.c.b16 %v5099, %v5097
    %v5124 = vpack.c.b16 %v5102, %v5100
    %v5125 = vpack.c.b16 %v5103, %v5101
    %v5126 = vpack.c.b16 %v5106, %v5104
    %v5127 = vpack.c.b16 %v5107, %v5105
    %v5128 = vpack.c.b16 %v5110, %v5108
    %v5129 = vpack.c.b16 %v5111, %v5109
    %v5130 = vpack.c.b16 %v5114, %v5112
    %v5131 = vpack.c.b16 %v5115, %v5113
    %5148 = vmatpush.bf16.msra.mxu0 %v5130
    %5149 = vmatpush.bf16.msra.mxu0 %v5128
    %5150 = vmatpush.bf16.msra.mxu0 %v5126
    %5151 = vmatpush.bf16.msra.mxu0 %v5124
    %5152 = vmatpush.bf16.msra.mxu0 %v5122
    %5153 = vmatpush.bf16.msra.mxu0 %v5120
    %5154 = vmatpush.bf16.msra.mxu0 %v5118
    %5155 = vmatpush.bf16.msra.mxu0 %v5116
    %5156 = vmatmul.bf16.gmra.mxu0 %v5062
    %v5157 = vpop.f32.mrf.mxu0
    %v5158 = vadd.f32 %v5064, %v5157
    %v5159 = vpop.f32.mrf.mxu0
    %5160 = vdwg.mxu0
    %5161 = vmatpush.bf16.msra.mxu0 %v5131
    %5162 = vmatpush.bf16.msra.mxu0 %v5129
    %5163 = vmatpush.bf16.msra.mxu0 %v5127
    %5164 = vmatpush.bf16.msra.mxu0 %v5125
    %5165 = vmatpush.bf16.msra.mxu0 %v5123
    %5166 = vmatpush.bf16.msra.mxu0 %v5121
    %5167 = vmatpush.bf16.msra.mxu0 %v5119
    %5168 = vmatpush.bf16.msra.mxu0 %v5117
    %5169 = vmatmul.bf16.gmra.mxu0 %v5062
    %v5170 = vpop.f32.mrf.mxu0
    %v5171 = vadd.f32 %v5065, %v5170
    %v5172 = vpop.f32.mrf.mxu0
    %5173 = vdwg.mxu0
    %v5174 = vmax.f32 %v5158, 0.0
    %v5175 = vmax.f32 %v5171, 0.0
    %v5176 = vpack.c.bf16 %v5174, %v5174
    %v5177 = vpack.c.bf16 %v5175, %v5175
    %v5179 = vperm.slane %v4286, 0
    %v5213 = vunpack.c.l.b16 %v4254
    %v5214 = vunpack.c.l.b16 %v4255
    %v5215 = vunpack.c.l.b16 %v4256
    %v5216 = vunpack.c.l.b16 %v4257
    %v5217 = vunpack.c.l.b16 %v4258
    %v5218 = vunpack.c.l.b16 %v4259
    %v5219 = vunpack.c.l.b16 %v4260
    %v5220 = vunpack.c.l.b16 %v4261
    %v5221 = vunpack.c.l.b16 %v4262
    %v5222 = vunpack.c.l.b16 %v4263
    %v5223 = vunpack.c.l.b16 %v4264
    %v5224 = vunpack.c.l.b16 %v4265
    %v5225 = vunpack.c.l.b16 %v4266
    %v5226 = vunpack.c.l.b16 %v4267
    %v5227 = vunpack.c.l.b16 %v4268
    %v5228 = vunpack.c.l.b16 %v4269
    %v5229 = vunpack.c.l.b16 %v4270
    %v5230 = vunpack.c.l.b16 %v4271
    %v5231 = vunpack.c.l.b16 %v4272
    %v5232 = vunpack.c.l.b16 %v4273
    %v5233 = vunpack.c.l.b16 %v4274
    %v5234 = vunpack.c.l.b16 %v4275
    %v5235 = vunpack.c.l.b16 %v4276
    %v5236 = vunpack.c.l.b16 %v4277
    %v5237 = vunpack.c.l.b16 %v4278
    %v5238 = vunpack.c.l.b16 %v4279
    %v5239 = vunpack.c.l.b16 %v4280
    %v5240 = vunpack.c.l.b16 %v4281
    %v5241 = vunpack.c.l.b16 %v4282
    %v5242 = vunpack.c.l.b16 %v4283
    %v5243 = vunpack.c.l.b16 %v4284
    %v5244 = vunpack.c.l.b16 %v4285
    %v5245 = vpack.c.b16 %v5214, %v5213
    %v5246 = vpack.c.b16 %v5216, %v5215
    %v5247 = vpack.c.b16 %v5218, %v5217
    %v5248 = vpack.c.b16 %v5220, %v5219
    %v5249 = vpack.c.b16 %v5222, %v5221
    %v5250 = vpack.c.b16 %v5224, %v5223
    %v5251 = vpack.c.b16 %v5226, %v5225
    %v5252 = vpack.c.b16 %v5228, %v5227
    %v5253 = vpack.c.b16 %v5230, %v5229
    %v5254 = vpack.c.b16 %v5232, %v5231
    %v5255 = vpack.c.b16 %v5234, %v5233
    %v5256 = vpack.c.b16 %v5236, %v5235
    %v5257 = vpack.c.b16 %v5238, %v5237
    %v5258 = vpack.c.b16 %v5240, %v5239
    %v5259 = vpack.c.b16 %v5242, %v5241
    %v5260 = vpack.c.b16 %v5244, %v5243
    %5277 = vmatpush.bf16.msra.mxu0 %v5252
    %5278 = vmatpush.bf16.msra.mxu0 %v5251
    %5279 = vmatpush.bf16.msra.mxu0 %v5250
    %5280 = vmatpush.bf16.msra.mxu0 %v5249
    %5281 = vmatpush.bf16.msra.mxu0 %v5248
    %5282 = vmatpush.bf16.msra.mxu0 %v5247
    %5283 = vmatpush.bf16.msra.mxu0 %v5246
    %5284 = vmatpush.bf16.msra.mxu0 %v5245
    %5285 = vmatmul.bf16.gmra.mxu0 %v5176
    %v5286 = vpop.f32.mrf.mxu0
    %v5287 = vadd.f32 %v5179, %v5286
    %v5288 = vpop.f32.mrf.mxu0
    %5289 = vdwg.mxu0
    %5290 = vmatpush.bf16.msra.mxu0 %v5260
    %5291 = vmatpush.bf16.msra.mxu0 %v5259
    %5292 = vmatpush.bf16.msra.mxu0 %v5258
    %5293 = vmatpush.bf16.msra.mxu0 %v5257
    %5294 = vmatpush.bf16.msra.mxu0 %v5256
    %5295 = vmatpush.bf16.msra.mxu0 %v5255
    %5296 = vmatpush.bf16.msra.mxu0 %v5254
    %5297 = vmatpush.bf16.msra.mxu0 %v5253
    %5298 = vmatmul.bf16.gmra.mxu0 %v5177
    %v5299 = vpop.f32.mrf.mxu0
    %v5300 = vadd.f32 %v5287, %v5299
    %v5301 = vpop.f32.mrf.mxu0
    %5302 = vdwg.mxu0
    %v5303 = vadd.f32 %v5061, %v5300
    %v5304 = vsel %vm5024, %v5303, 0.0
    %5305 = vadd.xlane.f32.xlu0 %v5304
    %v5306 = vpop.xlane.xlu0 %5305
    %v5307 = vmul.f32 %v5306, %v5034
    %v5308 = vsub.f32 %v5303, %v5307
    %v5309 = vmul.f32 %v5308, %v5308
    %v5310 = vsel %vm5024, %v5309, 0.0
    %5311 = vadd.xlane.f32.xlu0 %v5310
    %v5312 = vpop.xlane.xlu0 %5311
    %v5313 = vmul.f32 %v5312, %v5034
    %v5314 = vadd.f32 %v5313, 1e-05
    %v5315 = vrsqrt.pop %v5314
    %v5316 = vmul.f32 %v5315, %v5314
    %v5317 = vmul.f32 %v5316, %v5315
    %v5318 = vmul.f32 0.5, %v5317
    %v5319 = vsub.f32 1.5, %v5318
    %v5320 = vmul.f32 %v5315, %v5319
    %vm5321 = vweird.f32 %v5314
    %vm5322 = vweird.f32 %v5315
    %vm5323 = vmor %vm5321, %vm5322
    %v5324 = vsel %vm5323, %v5315, %v5320
    %v5325 = vmul.f32 %v5308, %v5324
    %v5327 = vperm.slane %v4287, 0
    %v5329 = vmul.f32 %v5325, %v5327
    %v5331 = vperm.slane %v4288, 0
    %v5333 = vadd.f32 %v5329, %v5331
    %s5334 = scalar_lea.vmem [#allocation18], 192
    %v5335 = vld [vmem:[%s5334] sm:$0xff]
    %v5336 = vld [vmem:[%s5334 + $0x8] sm:$0xf]
    %v5337 = vld [vmem:[%s5334 + $0xc] sm:$0xff]
    %v5338 = vld [vmem:[%s5334 + $0x14] sm:$0xf]
    %v5339 = vld [vmem:[%s5334 + $0x18] sm:$0xff]
    %v5340 = vld [vmem:[%s5334 + $0x20] sm:$0xf]
    %v5341 = vld [vmem:[%s5334 + $0x24] sm:$0xff]
    %v5342 = vld [vmem:[%s5334 + $0x2c] sm:$0xf]
    %v5343 = vld [vmem:[%s5334 + $0x30] sm:$0xff]
    %v5344 = vld [vmem:[%s5334 + $0x38] sm:$0xf]
    %v5345 = vld [vmem:[%s5334 + $0x3c] sm:$0xff]
    %v5346 = vld [vmem:[%s5334 + $0x44] sm:$0xf]
    %v5347 = vld [vmem:[%s5334 + $0x48] sm:$0xff]
    %v5348 = vld [vmem:[%s5334 + $0x50] sm:$0xf]
    %v5349 = vld [vmem:[%s5334 + $0x54] sm:$0xff]
    %v5350 = vld [vmem:[%s5334 + $0x5c] sm:$0xf]
    %v5351 = vld [vmem:[%s5334 + $0x60] sm:$0xff]
    %v5352 = vld [vmem:[%s5334 + $0x68] sm:$0xf]
    %v5353 = vld [vmem:[%s5334 + $0x6c] sm:$0xff]
    %v5354 = vld [vmem:[%s5334 + $0x74] sm:$0xf]
    %v5355 = vld [vmem:[%s5334 + $0x78] sm:$0xff]
    %v5356 = vld [vmem:[%s5334 + $0x80] sm:$0xf]
    %v5357 = vld [vmem:[%s5334 + $0x84] sm:$0xff]
    %v5358 = vld [vmem:[%s5334 + $0x8c] sm:$0xf]
    %v5359 = vld [vmem:[%s5334 + $0x90] sm:$0xff]
    %v5360 = vld [vmem:[%s5334 + $0x98] sm:$0xf]
    %v5361 = vld [vmem:[%s5334 + $0x9c] sm:$0xff]
    %v5362 = vld [vmem:[%s5334 + $0xa4] sm:$0xf]
    %v5363 = vld [vmem:[%s5334 + $0xa8] sm:$0xff]
    %v5364 = vld [vmem:[%s5334 + $0xb0] sm:$0xf]
    %v5365 = vld [vmem:[%s5334 + $0xb4] sm:$0xff]
    %v5366 = vld [vmem:[%s5334 + $0xbc] sm:$0xf]
    %s5367 = scalar_lea.vmem %s49, 3
    %v5368 = vld [vmem:[%s5367] sm:$0x7]
    %s5369 = scalar_lea.vmem %s51, 64
    %v5370 = vld [vmem:[%s5369] sm:$0xf]
    %v5371 = vld [vmem:[%s5369 + $0x4] sm:$0xf]
    %v5372 = vld [vmem:[%s5369 + $0x8] sm:$0xf]
    %v5373 = vld [vmem:[%s5369 + $0xc] sm:$0xf]
    %v5374 = vld [vmem:[%s5369 + $0x10] sm:$0xf]
    %v5375 = vld [vmem:[%s5369 + $0x14] sm:$0xf]
    %v5376 = vld [vmem:[%s5369 + $0x18] sm:$0xf]
    %v5377 = vld [vmem:[%s5369 + $0x1c] sm:$0xf]
    %v5378 = vld [vmem:[%s5369 + $0x20] sm:$0xf]
    %v5379 = vld [vmem:[%s5369 + $0x24] sm:$0xf]
    %v5380 = vld [vmem:[%s5369 + $0x28] sm:$0xf]
    %v5381 = vld [vmem:[%s5369 + $0x2c] sm:$0xf]
    %v5382 = vld [vmem:[%s5369 + $0x30] sm:$0xf]
    %v5383 = vld [vmem:[%s5369 + $0x34] sm:$0xf]
    %v5384 = vld [vmem:[%s5369 + $0x38] sm:$0xf]
    %v5385 = vld [vmem:[%s5369 + $0x3c] sm:$0xf]
    %s5386 = scalar_lea.vmem [#allocation19], 1
    %v5387 = vld [vmem:[%s5386] sm:$0x1]
    %s5388 = scalar_lea.vmem [#allocation21], 1
    %v5389 = vld [vmem:[%s5388] sm:$0x1]
    %s5390 = scalar_lea.vmem [#allocation22], 1
    %v5391 = vld [vmem:[%s5390] sm:$0x1]
    %s5392 = scalar_lea.vmem %s59, 128
    %v5393 = vld [vmem:[%s5392] sm:$0xff]
    %v5394 = vld [vmem:[%s5392 + $0x8] sm:$0xff]
    %v5395 = vld [vmem:[%s5392 + $0x10] sm:$0xff]
    %v5396 = vld [vmem:[%s5392 + $0x18] sm:$0xff]
    %v5397 = vld [vmem:[%s5392 + $0x20] sm:$0xff]
    %v5398 = vld [vmem:[%s5392 + $0x28] sm:$0xff]
    %v5399 = vld [vmem:[%s5392 + $0x30] sm:$0xff]
    %v5400 = vld [vmem:[%s5392 + $0x38] sm:$0xff]
    %v5401 = vld [vmem:[%s5392 + $0x40] sm:$0xff]
    %v5402 = vld [vmem:[%s5392 + $0x48] sm:$0xff]
    %v5403 = vld [vmem:[%s5392 + $0x50] sm:$0xff]
    %v5404 = vld [vmem:[%s5392 + $0x58] sm:$0xff]
    %v5405 = vld [vmem:[%s5392 + $0x60] sm:$0xff]
    %v5406 = vld [vmem:[%s5392 + $0x68] sm:$0xff]
    %v5407 = vld [vmem:[%s5392 + $0x70] sm:$0xff]
    %v5408 = vld [vmem:[%s5392 + $0x78] sm:$0xff]
    %s5409 = scalar_lea.vmem [#allocation24], 2
    %v5410 = vld [vmem:[%s5409] sm:$0x3]
    %s5411 = scalar_lea.vmem %s63, 128
    %v5412 = vld [vmem:[%s5411] sm:$0xf]
    %v5413 = vld [vmem:[%s5411 + $0x4] sm:$0xf]
    %v5414 = vld [vmem:[%s5411 + $0x8] sm:$0xf]
    %v5415 = vld [vmem:[%s5411 + $0xc] sm:$0xf]
    %v5416 = vld [vmem:[%s5411 + $0x10] sm:$0xf]
    %v5417 = vld [vmem:[%s5411 + $0x14] sm:$0xf]
    %v5418 = vld [vmem:[%s5411 + $0x18] sm:$0xf]
    %v5419 = vld [vmem:[%s5411 + $0x1c] sm:$0xf]
    %v5420 = vld [vmem:[%s5411 + $0x20] sm:$0xf]
    %v5421 = vld [vmem:[%s5411 + $0x24] sm:$0xf]
    %v5422 = vld [vmem:[%s5411 + $0x28] sm:$0xf]
    %v5423 = vld [vmem:[%s5411 + $0x2c] sm:$0xf]
    %v5424 = vld [vmem:[%s5411 + $0x30] sm:$0xf]
    %v5425 = vld [vmem:[%s5411 + $0x34] sm:$0xf]
    %v5426 = vld [vmem:[%s5411 + $0x38] sm:$0xf]
    %v5427 = vld [vmem:[%s5411 + $0x3c] sm:$0xf]
    %v5428 = vld [vmem:[%s5411 + $0x40] sm:$0xf]
    %v5429 = vld [vmem:[%s5411 + $0x44] sm:$0xf]
    %v5430 = vld [vmem:[%s5411 + $0x48] sm:$0xf]
    %v5431 = vld [vmem:[%s5411 + $0x4c] sm:$0xf]
    %v5432 = vld [vmem:[%s5411 + $0x50] sm:$0xf]
    %v5433 = vld [vmem:[%s5411 + $0x54] sm:$0xf]
    %v5434 = vld [vmem:[%s5411 + $0x58] sm:$0xf]
    %v5435 = vld [vmem:[%s5411 + $0x5c] sm:$0xf]
    %v5436 = vld [vmem:[%s5411 + $0x60] sm:$0xf]
    %v5437 = vld [vmem:[%s5411 + $0x64] sm:$0xf]
    %v5438 = vld [vmem:[%s5411 + $0x68] sm:$0xf]
    %v5439 = vld [vmem:[%s5411 + $0x6c] sm:$0xf]
    %v5440 = vld [vmem:[%s5411 + $0x70] sm:$0xf]
    %v5441 = vld [vmem:[%s5411 + $0x74] sm:$0xf]
    %v5442 = vld [vmem:[%s5411 + $0x78] sm:$0xf]
    %v5443 = vld [vmem:[%s5411 + $0x7c] sm:$0xf]
    %s5444 = scalar_lea.vmem [#allocation25], 1
    %v5445 = vld [vmem:[%s5444] sm:$0x1]
    %s5446 = scalar_lea.vmem [#allocation27], 1
    %v5447 = vld [vmem:[%s5446] sm:$0x1]
    %s5448 = scalar_lea.vmem [#allocation28], 1
    %v5449 = vld [vmem:[%s5448] sm:$0x1]
    %v5450 = vpack.c.bf16 %v5333, %v5333
    %v5452 = vperm.slane %v5368, 0
    %v5453 = vperm.slane %v5368, 1
    %v5454 = vperm.slane %v5368, 2
    %v5490 = vunpack.c.l.b16 %v5335
    %v5491 = vunpack.c.h.b16 %v5335
    %v5492 = vunpack.c.l.b16 %v5336
    %v5493 = vunpack.c.l.b16 %v5337
    %v5494 = vunpack.c.h.b16 %v5337
    %v5495 = vunpack.c.l.b16 %v5338
    %v5496 = vunpack.c.l.b16 %v5339
    %v5497 = vunpack.c.h.b16 %v5339
    %v5498 = vunpack.c.l.b16 %v5340
    %v5499 = vunpack.c.l.b16 %v5341
    %v5500 = vunpack.c.h.b16 %v5341
    %v5501 = vunpack.c.l.b16 %v5342
    %v5502 = vunpack.c.l.b16 %v5343
    %v5503 = vunpack.c.h.b16 %v5343
    %v5504 = vunpack.c.l.b16 %v5344
    %v5505 = vunpack.c.l.b16 %v5345
    %v5506 = vunpack.c.h.b16 %v5345
    %v5507 = vunpack.c.l.b16 %v5346
    %v5508 = vunpack.c.l.b16 %v5347
    %v5509 = vunpack.c.h.b16 %v5347
    %v5510 = vunpack.c.l.b16 %v5348
    %v5511 = vunpack.c.l.b16 %v5349
    %v5512 = vunpack.c.h.b16 %v5349
    %v5513 = vunpack.c.l.b16 %v5350
    %v5514 = vunpack.c.l.b16 %v5351
    %v5515 = vunpack.c.h.b16 %v5351
    %v5516 = vunpack.c.l.b16 %v5352
    %v5517 = vunpack.c.l.b16 %v5353
    %v5518 = vunpack.c.h.b16 %v5353
    %v5519 = vunpack.c.l.b16 %v5354
    %v5520 = vunpack.c.l.b16 %v5355
    %v5521 = vunpack.c.h.b16 %v5355
    %v5522 = vunpack.c.l.b16 %v5356
    %v5523 = vunpack.c.l.b16 %v5357
    %v5524 = vunpack.c.h.b16 %v5357
    %v5525 = vunpack.c.l.b16 %v5358
    %v5526 = vunpack.c.l.b16 %v5359
    %v5527 = vunpack.c.h.b16 %v5359
    %v5528 = vunpack.c.l.b16 %v5360
    %v5529 = vunpack.c.l.b16 %v5361
    %v5530 = vunpack.c.h.b16 %v5361
    %v5531 = vunpack.c.l.b16 %v5362
    %v5532 = vunpack.c.l.b16 %v5363
    %v5533 = vunpack.c.h.b16 %v5363
    %v5534 = vunpack.c.l.b16 %v5364
    %v5535 = vunpack.c.l.b16 %v5365
    %v5536 = vunpack.c.h.b16 %v5365
    %v5537 = vunpack.c.l.b16 %v5366
    %v5538 = vpack.c.b16 %v5493, %v5490
    %v5539 = vpack.c.b16 %v5494, %v5491
    %v5540 = vpack.c.b16 %v5495, %v5492
    %v5541 = vpack.c.b16 %v5499, %v5496
    %v5542 = vpack.c.b16 %v5500, %v5497
    %v5543 = vpack.c.b16 %v5501, %v5498
    %v5544 = vpack.c.b16 %v5505, %v5502
    %v5545 = vpack.c.b16 %v5506, %v5503
    %v5546 = vpack.c.b16 %v5507, %v5504
    %v5547 = vpack.c.b16 %v5511, %v5508
    %v5548 = vpack.c.b16 %v5512, %v5509
    %v5549 = vpack.c.b16 %v5513, %v5510
    %v5550 = vpack.c.b16 %v5517, %v5514
    %v5551 = vpack.c.b16 %v5518, %v5515
    %v5552 = vpack.c.b16 %v5519, %v5516
    %v5553 = vpack.c.b16 %v5523, %v5520
    %v5554 = vpack.c.b16 %v5524, %v5521
    %v5555 = vpack.c.b16 %v5525, %v5522
    %v5556 = vpack.c.b16 %v5529, %v5526
    %v5557 = vpack.c.b16 %v5530, %v5527
    %v5558 = vpack.c.b16 %v5531, %v5528
    %v5559 = vpack.c.b16 %v5535, %v5532
    %v5560 = vpack.c.b16 %v5536, %v5533
    %v5561 = vpack.c.b16 %v5537, %v5534
    %5586 = vmatpush.bf16.msra.mxu0 %v5559
    %5587 = vmatpush.bf16.msra.mxu0 %v5556
    %5588 = vmatpush.bf16.msra.mxu0 %v5553
    %5589 = vmatpush.bf16.msra.mxu0 %v5550
    %5590 = vmatpush.bf16.msra.mxu0 %v5547
    %5591 = vmatpush.bf16.msra.mxu0 %v5544
    %5592 = vmatpush.bf16.msra.mxu0 %v5541
    %5593 = vmatpush.bf16.msra.mxu0 %v5538
    %5594 = vmatmul.bf16.gmra.mxu0 %v5450
    %v5595 = vpop.f32.mrf.mxu0
    %v5596 = vadd.f32 %v5452, %v5595
    %v5597 = vpop.f32.mrf.mxu0
    %5598 = vdwg.mxu0
    %5599 = vmatpush.bf16.msra.mxu0 %v5560
    %5600 = vmatpush.bf16.msra.mxu0 %v5557
    %5601 = vmatpush.bf16.msra.mxu0 %v5554
    %5602 = vmatpush.bf16.msra.mxu0 %v5551
    %5603 = vmatpush.bf16.msra.mxu0 %v5548
    %5604 = vmatpush.bf16.msra.mxu0 %v5545
    %5605 = vmatpush.bf16.msra.mxu0 %v5542
    %5606 = vmatpush.bf16.msra.mxu0 %v5539
    %5607 = vmatmul.bf16.gmra.mxu0 %v5450
    %v5608 = vpop.f32.mrf.mxu0
    %v5609 = vadd.f32 %v5453, %v5608
    %v5610 = vpop.f32.mrf.mxu0
    %5611 = vdwg.mxu0
    %5612 = vmatpush.bf16.msra.mxu0 %v5561
    %5613 = vmatpush.bf16.msra.mxu0 %v5558
    %5614 = vmatpush.bf16.msra.mxu0 %v5555
    %5615 = vmatpush.bf16.msra.mxu0 %v5552
    %5616 = vmatpush.bf16.msra.mxu0 %v5549
    %5617 = vmatpush.bf16.msra.mxu0 %v5546
    %5618 = vmatpush.bf16.msra.mxu0 %v5543
    %5619 = vmatpush.bf16.msra.mxu0 %v5540
    %5620 = vmatmul.bf16.gmra.mxu0 %v5450
    %v5621 = vpop.f32.mrf.mxu0
    %v5622 = vadd.f32 %v5454, %v5621
    %v5623 = vpop.f32.mrf.mxu0
    %5624 = vdwg.mxu0
    %v5625 = vpack.c.bf16 %v5596, %v5596
    %v5626 = vpack.c.bf16 %v5609, %v5609
    %v5628 = vsel %vm821, %v5625, 0
    %v5631 = vsel %vm821, %v5626, 0
    %5633 = vmatpush.bf16.xpose.msra.mxu0 0
    %5634 = vmatpush.bf16.xpose.msra.mxu0 0
    %5635 = vmatpush.bf16.xpose.msra.mxu0 0
    %5636 = vmatpush.bf16.xpose.msra.mxu0 0
    %5637 = vmatpush.bf16.xpose.msra.mxu0 0
    %5638 = vmatpush.bf16.xpose.msra.mxu0 0
    %5639 = vmatpush.bf16.xpose.msra.mxu0 0
    %5640 = vmatpush.bf16.xpose.msra.mxu0 %v5631
    %5641 = vmatmul.bf16.gmra.mxu0 %v5628
    %v5642 = vpop.f32.mrf.mxu0
    %v5643 = vadd.f32 0.0, %v5642
    %v5644 = vpop.f32.mrf.mxu0
    %5645 = vdwg.mxu0
    %v5646 = vsel %vm4485, %v5643, -inf
    %5647 = vmax.xlane.f32.xlu0 %v5646
    %v5648 = vpop.xlane.xlu0 %5647
    %v5649 = vsub.f32 %v5643, %v5648
    %v5650 = vmul.f32 %v5649, 1.442695
    %v5651 = vpow.pop %v5650
    %v5652 = vsel %vm4485, %v5651, 0.0
    %5653 = vadd.xlane.f32.xlu0 %v5652
    %v5654 = vpop.xlane.xlu0 %5653
    %v5655 = vrcp.pop %v5654
    %v5656 = vmul.f32 %v5651, %v5655
    %v5657 = vpack.c.bf16 %v5656, %v5656
    %v5658 = vpack.c.bf16 %v5622, %v5622
    %v5660 = vsel %vm4499, %v5657, 0
    %v5663 = vsel %vm4503, %v5658, 0
    %5665 = vmatpush.bf16.msra.mxu0 0
    %5666 = vmatpush.bf16.msra.mxu0 0
    %5667 = vmatpush.bf16.msra.mxu0 0
    %5668 = vmatpush.bf16.msra.mxu0 0
    %5669 = vmatpush.bf16.msra.mxu0 0
    %5670 = vmatpush.bf16.msra.mxu0 0
    %5671 = vmatpush.bf16.msra.mxu0 0
    %5672 = vmatpush.bf16.msra.mxu0 %v5663
    %5673 = vmatmul.bf16.gmra.mxu0 %v5660
    %v5674 = vpop.f32.mrf.mxu0
    %v5675 = vadd.f32 0.0, %v5674
    %v5676 = vpop.f32.mrf.mxu0
    %5677 = vdwg.mxu0
    %v5679 = vunpack.c.l.b16 %v5625
    %v5680 = vpack.c.b16 %v5679, %v5679
    %5681 = vrot.lane.b32.xlu0 %v5680, 112
    %v5682 = vpop.permute.xlu0 %5681
    %v5684 = vunpack.c.l.b16 %v5626
    %v5685 = vpack.c.b16 %v5684, %v5684
    %5686 = vrot.lane.b32.xlu0 %v5685, 112
    %v5687 = vpop.permute.xlu0 %5686
    %v5689 = vsel %vm821, %v5682, 0
    %v5692 = vsel %vm821, %v5687, 0
    %5694 = vmatpush.bf16.xpose.msra.mxu0 0
    %5695 = vmatpush.bf16.xpose.msra.mxu0 0
    %5696 = vmatpush.bf16.xpose.msra.mxu0 0
    %5697 = vmatpush.bf16.xpose.msra.mxu0 0
    %5698 = vmatpush.bf16.xpose.msra.mxu0 0
    %5699 = vmatpush.bf16.xpose.msra.mxu0 0
    %5700 = vmatpush.bf16.xpose.msra.mxu0 0
    %5701 = vmatpush.bf16.xpose.msra.mxu0 %v5692
    %5702 = vmatmul.bf16.gmra.mxu0 %v5689
    %v5703 = vpop.f32.mrf.mxu0
    %v5704 = vadd.f32 0.0, %v5703
    %v5705 = vpop.f32.mrf.mxu0
    %5706 = vdwg.mxu0
    %v5707 = vsel %vm4485, %v5704, -inf
    %5708 = vmax.xlane.f32.xlu0 %v5707
    %v5709 = vpop.xlane.xlu0 %5708
    %v5710 = vsub.f32 %v5704, %v5709
    %v5711 = vmul.f32 %v5710, 1.442695
    %v5712 = vpow.pop %v5711
    %v5713 = vsel %vm4485, %v5712, 0.0
    %5714 = vadd.xlane.f32.xlu0 %v5713
    %v5715 = vpop.xlane.xlu0 %5714
    %v5716 = vrcp.pop %v5715
    %v5717 = vmul.f32 %v5712, %v5716
    %v5718 = vpack.c.bf16 %v5717, %v5717
    %v5720 = vunpack.c.l.b16 %v5658
    %v5721 = vpack.c.b16 %v5720, %v5720
    %5722 = vrot.lane.b32.xlu0 %v5721, 112
    %v5723 = vpop.permute.xlu0 %5722
    %v5725 = vsel %vm4499, %v5718, 0
    %v5728 = vsel %vm4503, %v5723, 0
    %5730 = vmatpush.bf16.msra.mxu0 0
    %5731 = vmatpush.bf16.msra.mxu0 0
    %5732 = vmatpush.bf16.msra.mxu0 0
    %5733 = vmatpush.bf16.msra.mxu0 0
    %5734 = vmatpush.bf16.msra.mxu0 0
    %5735 = vmatpush.bf16.msra.mxu0 0
    %5736 = vmatpush.bf16.msra.mxu0 0
    %5737 = vmatpush.bf16.msra.mxu0 %v5728
    %5738 = vmatmul.bf16.gmra.mxu0 %v5725
    %v5739 = vpop.f32.mrf.mxu0
    %v5740 = vadd.f32 0.0, %v5739
    %v5741 = vpop.f32.mrf.mxu0
    %5742 = vdwg.mxu0
    %5743 = vrot.lane.b32.xlu0 %v5680, 96
    %v5744 = vpop.permute.xlu0 %5743
    %5745 = vrot.lane.b32.xlu0 %v5685, 96
    %v5746 = vpop.permute.xlu0 %5745
    %v5748 = vsel %vm821, %v5744, 0
    %v5751 = vsel %vm821, %v5746, 0
    %5753 = vmatpush.bf16.xpose.msra.mxu0 0
    %5754 = vmatpush.bf16.xpose.msra.mxu0 0
    %5755 = vmatpush.bf16.xpose.msra.mxu0 0
    %5756 = vmatpush.bf16.xpose.msra.mxu0 0
    %5757 = vmatpush.bf16.xpose.msra.mxu0 0
    %5758 = vmatpush.bf16.xpose.msra.mxu0 0
    %5759 = vmatpush.bf16.xpose.msra.mxu0 0
    %5760 = vmatpush.bf16.xpose.msra.mxu0 %v5751
    %5761 = vmatmul.bf16.gmra.mxu0 %v5748
    %v5762 = vpop.f32.mrf.mxu0
    %v5763 = vadd.f32 0.0, %v5762
    %v5764 = vpop.f32.mrf.mxu0
    %5765 = vdwg.mxu0
    %v5766 = vsel %vm4485, %v5763, -inf
    %5767 = vmax.xlane.f32.xlu0 %v5766
    %v5768 = vpop.xlane.xlu0 %5767
    %v5769 = vsub.f32 %v5763, %v5768
    %v5770 = vmul.f32 %v5769, 1.442695
    %v5771 = vpow.pop %v5770
    %v5772 = vsel %vm4485, %v5771, 0.0
    %5773 = vadd.xlane.f32.xlu0 %v5772
    %v5774 = vpop.xlane.xlu0 %5773
    %v5775 = vrcp.pop %v5774
    %v5776 = vmul.f32 %v5771, %v5775
    %v5777 = vpack.c.bf16 %v5776, %v5776
    %5778 = vrot.lane.b32.xlu0 %v5721, 96
    %v5779 = vpop.permute.xlu0 %5778
    %v5781 = vsel %vm4499, %v5777, 0
    %v5784 = vsel %vm4503, %v5779, 0
    %5786 = vmatpush.bf16.msra.mxu0 0
    %5787 = vmatpush.bf16.msra.mxu0 0
    %5788 = vmatpush.bf16.msra.mxu0 0
    %5789 = vmatpush.bf16.msra.mxu0 0
    %5790 = vmatpush.bf16.msra.mxu0 0
    %5791 = vmatpush.bf16.msra.mxu0 0
    %5792 = vmatpush.bf16.msra.mxu0 0
    %5793 = vmatpush.bf16.msra.mxu0 %v5784
    %5794 = vmatmul.bf16.gmra.mxu0 %v5781
    %v5795 = vpop.f32.mrf.mxu0
    %v5796 = vadd.f32 0.0, %v5795
    %v5797 = vpop.f32.mrf.mxu0
    %5798 = vdwg.mxu0
    %5799 = vrot.lane.b32.xlu0 %v5680, 80
    %v5800 = vpop.permute.xlu0 %5799
    %5801 = vrot.lane.b32.xlu0 %v5685, 80
    %v5802 = vpop.permute.xlu0 %5801
    %v5804 = vsel %vm821, %v5800, 0
    %v5807 = vsel %vm821, %v5802, 0
    %5809 = vmatpush.bf16.xpose.msra.mxu0 0
    %5810 = vmatpush.bf16.xpose.msra.mxu0 0
    %5811 = vmatpush.bf16.xpose.msra.mxu0 0
    %5812 = vmatpush.bf16.xpose.msra.mxu0 0
    %5813 = vmatpush.bf16.xpose.msra.mxu0 0
    %5814 = vmatpush.bf16.xpose.msra.mxu0 0
    %5815 = vmatpush.bf16.xpose.msra.mxu0 0
    %5816 = vmatpush.bf16.xpose.msra.mxu0 %v5807
    %5817 = vmatmul.bf16.gmra.mxu0 %v5804
    %v5818 = vpop.f32.mrf.mxu0
    %v5819 = vadd.f32 0.0, %v5818
    %v5820 = vpop.f32.mrf.mxu0
    %5821 = vdwg.mxu0
    %v5822 = vsel %vm4485, %v5819, -inf
    %5823 = vmax.xlane.f32.xlu0 %v5822
    %v5824 = vpop.xlane.xlu0 %5823
    %v5825 = vsub.f32 %v5819, %v5824
    %v5826 = vmul.f32 %v5825, 1.442695
    %v5827 = vpow.pop %v5826
    %v5828 = vsel %vm4485, %v5827, 0.0
    %5829 = vadd.xlane.f32.xlu0 %v5828
    %v5830 = vpop.xlane.xlu0 %5829
    %v5831 = vrcp.pop %v5830
    %v5832 = vmul.f32 %v5827, %v5831
    %v5833 = vpack.c.bf16 %v5832, %v5832
    %5834 = vrot.lane.b32.xlu0 %v5721, 80
    %v5835 = vpop.permute.xlu0 %5834
    %v5837 = vsel %vm4499, %v5833, 0
    %v5840 = vsel %vm4503, %v5835, 0
    %5842 = vmatpush.bf16.msra.mxu0 0
    %5843 = vmatpush.bf16.msra.mxu0 0
    %5844 = vmatpush.bf16.msra.mxu0 0
    %5845 = vmatpush.bf16.msra.mxu0 0
    %5846 = vmatpush.bf16.msra.mxu0 0
    %5847 = vmatpush.bf16.msra.mxu0 0
    %5848 = vmatpush.bf16.msra.mxu0 0
    %5849 = vmatpush.bf16.msra.mxu0 %v5840
    %5850 = vmatmul.bf16.gmra.mxu0 %v5837
    %v5851 = vpop.f32.mrf.mxu0
    %v5852 = vadd.f32 0.0, %v5851
    %v5853 = vpop.f32.mrf.mxu0
    %5854 = vdwg.mxu0
    %5855 = vrot.lane.b32.xlu0 %v5680, 64
    %v5856 = vpop.permute.xlu0 %5855
    %5857 = vrot.lane.b32.xlu0 %v5685, 64
    %v5858 = vpop.permute.xlu0 %5857
    %v5860 = vsel %vm821, %v5856, 0
    %v5863 = vsel %vm821, %v5858, 0
    %5865 = vmatpush.bf16.xpose.msra.mxu0 0
    %5866 = vmatpush.bf16.xpose.msra.mxu0 0
    %5867 = vmatpush.bf16.xpose.msra.mxu0 0
    %5868 = vmatpush.bf16.xpose.msra.mxu0 0
    %5869 = vmatpush.bf16.xpose.msra.mxu0 0
    %5870 = vmatpush.bf16.xpose.msra.mxu0 0
    %5871 = vmatpush.bf16.xpose.msra.mxu0 0
    %5872 = vmatpush.bf16.xpose.msra.mxu0 %v5863
    %5873 = vmatmul.bf16.gmra.mxu0 %v5860
    %v5874 = vpop.f32.mrf.mxu0
    %v5875 = vadd.f32 0.0, %v5874
    %v5876 = vpop.f32.mrf.mxu0
    %5877 = vdwg.mxu0
    %v5878 = vsel %vm4485, %v5875, -inf
    %5879 = vmax.xlane.f32.xlu0 %v5878
    %v5880 = vpop.xlane.xlu0 %5879
    %v5881 = vsub.f32 %v5875, %v5880
    %v5882 = vmul.f32 %v5881, 1.442695
    %v5883 = vpow.pop %v5882
    %v5884 = vsel %vm4485, %v5883, 0.0
    %5885 = vadd.xlane.f32.xlu0 %v5884
    %v5886 = vpop.xlane.xlu0 %5885
    %v5887 = vrcp.pop %v5886
    %v5888 = vmul.f32 %v5883, %v5887
    %v5889 = vpack.c.bf16 %v5888, %v5888
    %5890 = vrot.lane.b32.xlu0 %v5721, 64
    %v5891 = vpop.permute.xlu0 %5890
    %v5893 = vsel %vm4499, %v5889, 0
    %v5896 = vsel %vm4503, %v5891, 0
    %5898 = vmatpush.bf16.msra.mxu0 0
    %5899 = vmatpush.bf16.msra.mxu0 0
    %5900 = vmatpush.bf16.msra.mxu0 0
    %5901 = vmatpush.bf16.msra.mxu0 0
    %5902 = vmatpush.bf16.msra.mxu0 0
    %5903 = vmatpush.bf16.msra.mxu0 0
    %5904 = vmatpush.bf16.msra.mxu0 0
    %5905 = vmatpush.bf16.msra.mxu0 %v5896
    %5906 = vmatmul.bf16.gmra.mxu0 %v5893
    %v5907 = vpop.f32.mrf.mxu0
    %v5908 = vadd.f32 0.0, %v5907
    %v5909 = vpop.f32.mrf.mxu0
    %5910 = vdwg.mxu0
    %5911 = vrot.lane.b32.xlu0 %v5680, 48
    %v5912 = vpop.permute.xlu0 %5911
    %5913 = vrot.lane.b32.xlu0 %v5685, 48
    %v5914 = vpop.permute.xlu0 %5913
    %v5916 = vsel %vm821, %v5912, 0
    %v5919 = vsel %vm821, %v5914, 0
    %5921 = vmatpush.bf16.xpose.msra.mxu0 0
    %5922 = vmatpush.bf16.xpose.msra.mxu0 0
    %5923 = vmatpush.bf16.xpose.msra.mxu0 0
    %5924 = vmatpush.bf16.xpose.msra.mxu0 0
    %5925 = vmatpush.bf16.xpose.msra.mxu0 0
    %5926 = vmatpush.bf16.xpose.msra.mxu0 0
    %5927 = vmatpush.bf16.xpose.msra.mxu0 0
    %5928 = vmatpush.bf16.xpose.msra.mxu0 %v5919
    %5929 = vmatmul.bf16.gmra.mxu0 %v5916
    %v5930 = vpop.f32.mrf.mxu0
    %v5931 = vadd.f32 0.0, %v5930
    %v5932 = vpop.f32.mrf.mxu0
    %5933 = vdwg.mxu0
    %v5934 = vsel %vm4485, %v5931, -inf
    %5935 = vmax.xlane.f32.xlu0 %v5934
    %v5936 = vpop.xlane.xlu0 %5935
    %v5937 = vsub.f32 %v5931, %v5936
    %v5938 = vmul.f32 %v5937, 1.442695
    %v5939 = vpow.pop %v5938
    %v5940 = vsel %vm4485, %v5939, 0.0
    %5941 = vadd.xlane.f32.xlu0 %v5940
    %v5942 = vpop.xlane.xlu0 %5941
    %v5943 = vrcp.pop %v5942
    %v5944 = vmul.f32 %v5939, %v5943
    %v5945 = vpack.c.bf16 %v5944, %v5944
    %5946 = vrot.lane.b32.xlu0 %v5721, 48
    %v5947 = vpop.permute.xlu0 %5946
    %v5949 = vsel %vm4499, %v5945, 0
    %v5952 = vsel %vm4503, %v5947, 0
    %5954 = vmatpush.bf16.msra.mxu0 0
    %5955 = vmatpush.bf16.msra.mxu0 0
    %5956 = vmatpush.bf16.msra.mxu0 0
    %5957 = vmatpush.bf16.msra.mxu0 0
    %5958 = vmatpush.bf16.msra.mxu0 0
    %5959 = vmatpush.bf16.msra.mxu0 0
    %5960 = vmatpush.bf16.msra.mxu0 0
    %5961 = vmatpush.bf16.msra.mxu0 %v5952
    %5962 = vmatmul.bf16.gmra.mxu0 %v5949
    %v5963 = vpop.f32.mrf.mxu0
    %v5964 = vadd.f32 0.0, %v5963
    %v5965 = vpop.f32.mrf.mxu0
    %5966 = vdwg.mxu0
    %5967 = vrot.lane.b32.xlu0 %v5680, 32
    %v5968 = vpop.permute.xlu0 %5967
    %5969 = vrot.lane.b32.xlu0 %v5685, 32
    %v5970 = vpop.permute.xlu0 %5969
    %v5972 = vsel %vm821, %v5968, 0
    %v5975 = vsel %vm821, %v5970, 0
    %5977 = vmatpush.bf16.xpose.msra.mxu0 0
    %5978 = vmatpush.bf16.xpose.msra.mxu0 0
    %5979 = vmatpush.bf16.xpose.msra.mxu0 0
    %5980 = vmatpush.bf16.xpose.msra.mxu0 0
    %5981 = vmatpush.bf16.xpose.msra.mxu0 0
    %5982 = vmatpush.bf16.xpose.msra.mxu0 0
    %5983 = vmatpush.bf16.xpose.msra.mxu0 0
    %5984 = vmatpush.bf16.xpose.msra.mxu0 %v5975
    %5985 = vmatmul.bf16.gmra.mxu0 %v5972
    %v5986 = vpop.f32.mrf.mxu0
    %v5987 = vadd.f32 0.0, %v5986
    %v5988 = vpop.f32.mrf.mxu0
    %5989 = vdwg.mxu0
    %v5990 = vsel %vm4485, %v5987, -inf
    %5991 = vmax.xlane.f32.xlu0 %v5990
    %v5992 = vpop.xlane.xlu0 %5991
    %v5993 = vsub.f32 %v5987, %v5992
    %v5994 = vmul.f32 %v5993, 1.442695
    %v5995 = vpow.pop %v5994
    %v5996 = vsel %vm4485, %v5995, 0.0
    %5997 = vadd.xlane.f32.xlu0 %v5996
    %v5998 = vpop.xlane.xlu0 %5997
    %v5999 = vrcp.pop %v5998
    %v6000 = vmul.f32 %v5995, %v5999
    %v6001 = vpack.c.bf16 %v6000, %v6000
    %6002 = vrot.lane.b32.xlu0 %v5721, 32
    %v6003 = vpop.permute.xlu0 %6002
    %v6005 = vsel %vm4499, %v6001, 0
    %v6008 = vsel %vm4503, %v6003, 0
    %6010 = vmatpush.bf16.msra.mxu0 0
    %6011 = vmatpush.bf16.msra.mxu0 0
    %6012 = vmatpush.bf16.msra.mxu0 0
    %6013 = vmatpush.bf16.msra.mxu0 0
    %6014 = vmatpush.bf16.msra.mxu0 0
    %6015 = vmatpush.bf16.msra.mxu0 0
    %6016 = vmatpush.bf16.msra.mxu0 0
    %6017 = vmatpush.bf16.msra.mxu0 %v6008
    %6018 = vmatmul.bf16.gmra.mxu0 %v6005
    %v6019 = vpop.f32.mrf.mxu0
    %v6020 = vadd.f32 0.0, %v6019
    %v6021 = vpop.f32.mrf.mxu0
    %6022 = vdwg.mxu0
    %6023 = vrot.lane.b32.xlu0 %v5680, 16
    %v6024 = vpop.permute.xlu0 %6023
    %6025 = vrot.lane.b32.xlu0 %v5685, 16
    %v6026 = vpop.permute.xlu0 %6025
    %v6028 = vsel %vm821, %v6024, 0
    %v6031 = vsel %vm821, %v6026, 0
    %6033 = vmatpush.bf16.xpose.msra.mxu0 0
    %6034 = vmatpush.bf16.xpose.msra.mxu0 0
    %6035 = vmatpush.bf16.xpose.msra.mxu0 0
    %6036 = vmatpush.bf16.xpose.msra.mxu0 0
    %6037 = vmatpush.bf16.xpose.msra.mxu0 0
    %6038 = vmatpush.bf16.xpose.msra.mxu0 0
    %6039 = vmatpush.bf16.xpose.msra.mxu0 0
    %6040 = vmatpush.bf16.xpose.msra.mxu0 %v6031
    %6041 = vmatmul.bf16.gmra.mxu0 %v6028
    %v6042 = vpop.f32.mrf.mxu0
    %v6043 = vadd.f32 0.0, %v6042
    %v6044 = vpop.f32.mrf.mxu0
    %6045 = vdwg.mxu0
    %v6046 = vsel %vm4485, %v6043, -inf
    %6047 = vmax.xlane.f32.xlu0 %v6046
    %v6048 = vpop.xlane.xlu0 %6047
    %v6049 = vsub.f32 %v6043, %v6048
    %v6050 = vmul.f32 %v6049, 1.442695
    %v6051 = vpow.pop %v6050
    %v6052 = vsel %vm4485, %v6051, 0.0
    %6053 = vadd.xlane.f32.xlu0 %v6052
    %v6054 = vpop.xlane.xlu0 %6053
    %v6055 = vrcp.pop %v6054
    %v6056 = vmul.f32 %v6051, %v6055
    %v6057 = vpack.c.bf16 %v6056, %v6056
    %6058 = vrot.lane.b32.xlu0 %v5721, 16
    %v6059 = vpop.permute.xlu0 %6058
    %v6061 = vsel %vm4499, %v6057, 0
    %v6064 = vsel %vm4503, %v6059, 0
    %6066 = vmatpush.bf16.msra.mxu0 0
    %6067 = vmatpush.bf16.msra.mxu0 0
    %6068 = vmatpush.bf16.msra.mxu0 0
    %6069 = vmatpush.bf16.msra.mxu0 0
    %6070 = vmatpush.bf16.msra.mxu0 0
    %6071 = vmatpush.bf16.msra.mxu0 0
    %6072 = vmatpush.bf16.msra.mxu0 0
    %6073 = vmatpush.bf16.msra.mxu0 %v6064
    %6074 = vmatmul.bf16.gmra.mxu0 %v6061
    %v6075 = vpop.f32.mrf.mxu0
    %v6076 = vadd.f32 0.0, %v6075
    %v6077 = vpop.f32.mrf.mxu0
    %6078 = vdwg.mxu0
    %6080 = vrot.lane.b32.xlu0 %v5740, 16
    %v6081 = vpop.permute.xlu0 %6080
    %6084 = vrot.lane.b32.xlu0 %v5796, 32
    %v6085 = vpop.permute.xlu0 %6084
    %6088 = vrot.lane.b32.xlu0 %v5852, 48
    %v6089 = vpop.permute.xlu0 %6088
    %6092 = vrot.lane.b32.xlu0 %v5908, 64
    %v6093 = vpop.permute.xlu0 %6092
    %6096 = vrot.lane.b32.xlu0 %v5964, 80
    %v6097 = vpop.permute.xlu0 %6096
    %6100 = vrot.lane.b32.xlu0 %v6020, 96
    %v6101 = vpop.permute.xlu0 %6100
    %6104 = vrot.lane.b32.xlu0 %v6076, 112
    %v6105 = vpop.permute.xlu0 %6104
    %v6107 = vsel %vm821, %v5675, %v6081
    %v6108 = vsel %vm1779, %v6107, %v6085
    %v6109 = vsel %vm1784, %v6108, %v6089
    %v6110 = vsel %vm480, %v6109, %v6093
    %v6111 = vsel %vm4953, %v6110, %v6097
    %v6112 = vsel %vm4955, %v6111, %v6101
    %v6113 = vsel %vm2213, %v6112, %v6105
    %v6114 = vpack.c.bf16 %v6113, %v6113
    %v6116 = vperm.slane %v5387, 0
    %v6134 = vunpack.c.l.b16 %v5370
    %v6135 = vunpack.c.l.b16 %v5371
    %v6136 = vunpack.c.l.b16 %v5372
    %v6137 = vunpack.c.l.b16 %v5373
    %v6138 = vunpack.c.l.b16 %v5374
    %v6139 = vunpack.c.l.b16 %v5375
    %v6140 = vunpack.c.l.b16 %v5376
    %v6141 = vunpack.c.l.b16 %v5377
    %v6142 = vunpack.c.l.b16 %v5378
    %v6143 = vunpack.c.l.b16 %v5379
    %v6144 = vunpack.c.l.b16 %v5380
    %v6145 = vunpack.c.l.b16 %v5381
    %v6146 = vunpack.c.l.b16 %v5382
    %v6147 = vunpack.c.l.b16 %v5383
    %v6148 = vunpack.c.l.b16 %v5384
    %v6149 = vunpack.c.l.b16 %v5385
    %v6150 = vpack.c.b16 %v6135, %v6134
    %v6151 = vpack.c.b16 %v6137, %v6136
    %v6152 = vpack.c.b16 %v6139, %v6138
    %v6153 = vpack.c.b16 %v6141, %v6140
    %v6154 = vpack.c.b16 %v6143, %v6142
    %v6155 = vpack.c.b16 %v6145, %v6144
    %v6156 = vpack.c.b16 %v6147, %v6146
    %v6157 = vpack.c.b16 %v6149, %v6148
    %6166 = vmatpush.bf16.msra.mxu0 %v6157
    %6167 = vmatpush.bf16.msra.mxu0 %v6156
    %6168 = vmatpush.bf16.msra.mxu0 %v6155
    %6169 = vmatpush.bf16.msra.mxu0 %v6154
    %6170 = vmatpush.bf16.msra.mxu0 %v6153
    %6171 = vmatpush.bf16.msra.mxu0 %v6152
    %6172 = vmatpush.bf16.msra.mxu0 %v6151
    %6173 = vmatpush.bf16.msra.mxu0 %v6150
    %6174 = vmatmul.bf16.gmra.mxu0 %v6114
    %v6175 = vpop.f32.mrf.mxu0
    %v6176 = vadd.f32 %v6116, %v6175
    %v6177 = vpop.f32.mrf.mxu0
    %6178 = vdwg.mxu0
    %v6179 = vadd.f32 %v5333, %v6176
    %v6180 = vsel %vm5024, %v6179, 0.0
    %6181 = vadd.xlane.f32.xlu0 %v6180
    %v6182 = vpop.xlane.xlu0 %6181
    %v6183 = vmul.f32 %v6182, %v5034
    %v6184 = vsub.f32 %v6179, %v6183
    %v6185 = vmul.f32 %v6184, %v6184
    %v6186 = vsel %vm5024, %v6185, 0.0
    %6187 = vadd.xlane.f32.xlu0 %v6186
    %v6188 = vpop.xlane.xlu0 %6187
    %v6189 = vmul.f32 %v6188, %v5034
    %v6190 = vadd.f32 %v6189, 1e-05
    %v6191 = vrsqrt.pop %v6190
    %v6192 = vmul.f32 %v6191, %v6190
    %v6193 = vmul.f32 %v6192, %v6191
    %v6194 = vmul.f32 0.5, %v6193
    %v6195 = vsub.f32 1.5, %v6194
    %v6196 = vmul.f32 %v6191, %v6195
    %vm6197 = vweird.f32 %v6190
    %vm6198 = vweird.f32 %v6191
    %vm6199 = vmor %vm6197, %vm6198
    %v6200 = vsel %vm6199, %v6191, %v6196
    %v6201 = vmul.f32 %v6184, %v6200
    %v6203 = vperm.slane %v5389, 0
    %v6205 = vmul.f32 %v6201, %v6203
    %v6207 = vperm.slane %v5391, 0
    %v6209 = vadd.f32 %v6205, %v6207
    %v6210 = vpack.c.bf16 %v6209, %v6209
    %v6212 = vperm.slane %v5410, 0
    %v6213 = vperm.slane %v5410, 1
    %v6232 = vunpack.c.l.b16 %v5393
    %v6233 = vunpack.c.h.b16 %v5393
    %v6234 = vunpack.c.l.b16 %v5394
    %v6235 = vunpack.c.h.b16 %v5394
    %v6236 = vunpack.c.l.b16 %v5395
    %v6237 = vunpack.c.h.b16 %v5395
    %v6238 = vunpack.c.l.b16 %v5396
    %v6239 = vunpack.c.h.b16 %v5396
    %v6240 = vunpack.c.l.b16 %v5397
    %v6241 = vunpack.c.h.b16 %v5397
    %v6242 = vunpack.c.l.b16 %v5398
    %v6243 = vunpack.c.h.b16 %v5398
    %v6244 = vunpack.c.l.b16 %v5399
    %v6245 = vunpack.c.h.b16 %v5399
    %v6246 = vunpack.c.l.b16 %v5400
    %v6247 = vunpack.c.h.b16 %v5400
    %v6248 = vunpack.c.l.b16 %v5401
    %v6249 = vunpack.c.h.b16 %v5401
    %v6250 = vunpack.c.l.b16 %v5402
    %v6251 = vunpack.c.h.b16 %v5402
    %v6252 = vunpack.c.l.b16 %v5403
    %v6253 = vunpack.c.h.b16 %v5403
    %v6254 = vunpack.c.l.b16 %v5404
    %v6255 = vunpack.c.h.b16 %v5404
    %v6256 = vunpack.c.l.b16 %v5405
    %v6257 = vunpack.c.h.b16 %v5405
    %v6258 = vunpack.c.l.b16 %v5406
    %v6259 = vunpack.c.h.b16 %v5406
    %v6260 = vunpack.c.l.b16 %v5407
    %v6261 = vunpack.c.h.b16 %v5407
    %v6262 = vunpack.c.l.b16 %v5408
    %v6263 = vunpack.c.h.b16 %v5408
    %v6264 = vpack.c.b16 %v6234, %v6232
    %v6265 = vpack.c.b16 %v6235, %v6233
    %v6266 = vpack.c.b16 %v6238, %v6236
    %v6267 = vpack.c.b16 %v6239, %v6237
    %v6268 = vpack.c.b16 %v6242, %v6240
    %v6269 = vpack.c.b16 %v6243, %v6241
    %v6270 = vpack.c.b16 %v6246, %v6244
    %v6271 = vpack.c.b16 %v6247, %v6245
    %v6272 = vpack.c.b16 %v6250, %v6248
    %v6273 = vpack.c.b16 %v6251, %v6249
    %v6274 = vpack.c.b16 %v6254, %v6252
    %v6275 = vpack.c.b16 %v6255, %v6253
    %v6276 = vpack.c.b16 %v6258, %v6256
    %v6277 = vpack.c.b16 %v6259, %v6257
    %v6278 = vpack.c.b16 %v6262, %v6260
    %v6279 = vpack.c.b16 %v6263, %v6261
    %6296 = vmatpush.bf16.msra.mxu0 %v6278
    %6297 = vmatpush.bf16.msra.mxu0 %v6276
    %6298 = vmatpush.bf16.msra.mxu0 %v6274
    %6299 = vmatpush.bf16.msra.mxu0 %v6272
    %6300 = vmatpush.bf16.msra.mxu0 %v6270
    %6301 = vmatpush.bf16.msra.mxu0 %v6268
    %6302 = vmatpush.bf16.msra.mxu0 %v6266
    %6303 = vmatpush.bf16.msra.mxu0 %v6264
    %6304 = vmatmul.bf16.gmra.mxu0 %v6210
    %v6305 = vpop.f32.mrf.mxu0
    %v6306 = vadd.f32 %v6212, %v6305
    %v6307 = vpop.f32.mrf.mxu0
    %6308 = vdwg.mxu0
    %6309 = vmatpush.bf16.msra.mxu0 %v6279
    %6310 = vmatpush.bf16.msra.mxu0 %v6277
    %6311 = vmatpush.bf16.msra.mxu0 %v6275
    %6312 = vmatpush.bf16.msra.mxu0 %v6273
    %6313 = vmatpush.bf16.msra.mxu0 %v6271
    %6314 = vmatpush.bf16.msra.mxu0 %v6269
    %6315 = vmatpush.bf16.msra.mxu0 %v6267
    %6316 = vmatpush.bf16.msra.mxu0 %v6265
    %6317 = vmatmul.bf16.gmra.mxu0 %v6210
    %v6318 = vpop.f32.mrf.mxu0
    %v6319 = vadd.f32 %v6213, %v6318
    %v6320 = vpop.f32.mrf.mxu0
    %6321 = vdwg.mxu0
    %v6322 = vmax.f32 %v6306, 0.0
    %v6323 = vmax.f32 %v6319, 0.0
    %v6324 = vpack.c.bf16 %v6322, %v6322
    %v6325 = vpack.c.bf16 %v6323, %v6323
    %v6327 = vperm.slane %v5445, 0
    %v6361 = vunpack.c.l.b16 %v5412
    %v6362 = vunpack.c.l.b16 %v5413
    %v6363 = vunpack.c.l.b16 %v5414
    %v6364 = vunpack.c.l.b16 %v5415
    %v6365 = vunpack.c.l.b16 %v5416
    %v6366 = vunpack.c.l.b16 %v5417
    %v6367 = vunpack.c.l.b16 %v5418
    %v6368 = vunpack.c.l.b16 %v5419
    %v6369 = vunpack.c.l.b16 %v5420
    %v6370 = vunpack.c.l.b16 %v5421
    %v6371 = vunpack.c.l.b16 %v5422
    %v6372 = vunpack.c.l.b16 %v5423
    %v6373 = vunpack.c.l.b16 %v5424
    %v6374 = vunpack.c.l.b16 %v5425
    %v6375 = vunpack.c.l.b16 %v5426
    %v6376 = vunpack.c.l.b16 %v5427
    %v6377 = vunpack.c.l.b16 %v5428
    %v6378 = vunpack.c.l.b16 %v5429
    %v6379 = vunpack.c.l.b16 %v5430
    %v6380 = vunpack.c.l.b16 %v5431
    %v6381 = vunpack.c.l.b16 %v5432
    %v6382 = vunpack.c.l.b16 %v5433
    %v6383 = vunpack.c.l.b16 %v5434
    %v6384 = vunpack.c.l.b16 %v5435
    %v6385 = vunpack.c.l.b16 %v5436
    %v6386 = vunpack.c.l.b16 %v5437
    %v6387 = vunpack.c.l.b16 %v5438
    %v6388 = vunpack.c.l.b16 %v5439
    %v6389 = vunpack.c.l.b16 %v5440
    %v6390 = vunpack.c.l.b16 %v5441
    %v6391 = vunpack.c.l.b16 %v5442
    %v6392 = vunpack.c.l.b16 %v5443
    %v6393 = vpack.c.b16 %v6362, %v6361
    %v6394 = vpack.c.b16 %v6364, %v6363
    %v6395 = vpack.c.b16 %v6366, %v6365
    %v6396 = vpack.c.b16 %v6368, %v6367
    %v6397 = vpack.c.b16 %v6370, %v6369
    %v6398 = vpack.c.b16 %v6372, %v6371
    %v6399 = vpack.c.b16 %v6374, %v6373
    %v6400 = vpack.c.b16 %v6376, %v6375
    %v6401 = vpack.c.b16 %v6378, %v6377
    %v6402 = vpack.c.b16 %v6380, %v6379
    %v6403 = vpack.c.b16 %v6382, %v6381
    %v6404 = vpack.c.b16 %v6384, %v6383
    %v6405 = vpack.c.b16 %v6386, %v6385
    %v6406 = vpack.c.b16 %v6388, %v6387
    %v6407 = vpack.c.b16 %v6390, %v6389
    %v6408 = vpack.c.b16 %v6392, %v6391
    %6425 = vmatpush.bf16.msra.mxu0 %v6400
    %6426 = vmatpush.bf16.msra.mxu0 %v6399
    %6427 = vmatpush.bf16.msra.mxu0 %v6398
    %6428 = vmatpush.bf16.msra.mxu0 %v6397
    %6429 = vmatpush.bf16.msra.mxu0 %v6396
    %6430 = vmatpush.bf16.msra.mxu0 %v6395
    %6431 = vmatpush.bf16.msra.mxu0 %v6394
    %6432 = vmatpush.bf16.msra.mxu0 %v6393
    %6433 = vmatmul.bf16.gmra.mxu0 %v6324
    %v6434 = vpop.f32.mrf.mxu0
    %v6435 = vadd.f32 %v6327, %v6434
    %v6436 = vpop.f32.mrf.mxu0
    %6437 = vdwg.mxu0
    %6438 = vmatpush.bf16.msra.mxu0 %v6408
    %6439 = vmatpush.bf16.msra.mxu0 %v6407
    %6440 = vmatpush.bf16.msra.mxu0 %v6406
    %6441 = vmatpush.bf16.msra.mxu0 %v6405
    %6442 = vmatpush.bf16.msra.mxu0 %v6404
    %6443 = vmatpush.bf16.msra.mxu0 %v6403
    %6444 = vmatpush.bf16.msra.mxu0 %v6402
    %6445 = vmatpush.bf16.msra.mxu0 %v6401
    %6446 = vmatmul.bf16.gmra.mxu0 %v6325
    %v6447 = vpop.f32.mrf.mxu0
    %v6448 = vadd.f32 %v6435, %v6447
    %v6449 = vpop.f32.mrf.mxu0
    %6450 = vdwg.mxu0
    %v6451 = vadd.f32 %v6209, %v6448
    %v6452 = vsel %vm5024, %v6451, 0.0
    %6453 = vadd.xlane.f32.xlu0 %v6452
    %v6454 = vpop.xlane.xlu0 %6453
    %v6455 = vmul.f32 %v6454, %v5034
    %v6456 = vsub.f32 %v6451, %v6455
    %v6457 = vmul.f32 %v6456, %v6456
    %v6458 = vsel %vm5024, %v6457, 0.0
    %6459 = vadd.xlane.f32.xlu0 %v6458
    %v6460 = vpop.xlane.xlu0 %6459
    %v6461 = vmul.f32 %v6460, %v5034
    %v6462 = vadd.f32 %v6461, 1e-05
    %v6463 = vrsqrt.pop %v6462
    %v6464 = vmul.f32 %v6463, %v6462
    %v6465 = vmul.f32 %v6464, %v6463
    %v6466 = vmul.f32 0.5, %v6465
    %v6467 = vsub.f32 1.5, %v6466
    %v6468 = vmul.f32 %v6463, %v6467
    %vm6469 = vweird.f32 %v6462
    %vm6470 = vweird.f32 %v6463
    %vm6471 = vmor %vm6469, %vm6470
    %v6472 = vsel %vm6471, %v6463, %v6468
    %v6473 = vmul.f32 %v6456, %v6472
    %v6475 = vperm.slane %v5447, 0
    %v6477 = vmul.f32 %v6473, %v6475
    %v6479 = vperm.slane %v5449, 0
    %v6481 = vadd.f32 %v6477, %v6479
    %v6482 = vld [vmem:[%s71] sm:$0xff]
    %v6483 = vld [vmem:[%s71 + $0x8] sm:$0xff]
    %v6484 = vld [vmem:[%s71 + $0x10] sm:$0xff]
    %v6485 = vld [vmem:[%s71 + $0x18] sm:$0xff]
    %v6486 = vld [vmem:[%s71 + $0x20] sm:$0xff]
    %v6487 = vld [vmem:[%s71 + $0x28] sm:$0xff]
    %v6488 = vld [vmem:[%s71 + $0x30] sm:$0xff]
    %v6489 = vld [vmem:[%s71 + $0x38] sm:$0xff]
    %v6490 = vld [vmem:[%s71 + $0x40] sm:$0xff]
    %v6491 = vld [vmem:[%s71 + $0x48] sm:$0xff]
    %v6492 = vld [vmem:[%s71 + $0x50] sm:$0xff]
    %v6493 = vld [vmem:[%s71 + $0x58] sm:$0xff]
    %v6494 = vld [vmem:[%s71 + $0x60] sm:$0xff]
    %v6495 = vld [vmem:[%s71 + $0x68] sm:$0xff]
    %v6496 = vld [vmem:[%s71 + $0x70] sm:$0xff]
    %v6497 = vld [vmem:[%s71 + $0x78] sm:$0xff]
    %v6498 = vld [vmem:[#allocation30] sm:$0x1]
    %v6500 = vperm.slane %v6498, 0
    %6502 = vmatpush.msra.mxu0 %v6497
    %6503 = vmatpush.msra.mxu0 %v6496
    %6504 = vmatpush.msra.mxu0 %v6495
    %6505 = vmatpush.msra.mxu0 %v6494
    %6506 = vmatpush.msra.mxu0 %v6493
    %6507 = vmatpush.msra.mxu0 %v6492
    %6508 = vmatpush.msra.mxu0 %v6491
    %6509 = vmatpush.msra.mxu0 %v6490
    %6510 = vmatpush.msra.mxu0 %v6489
    %6511 = vmatpush.msra.mxu0 %v6488
    %6512 = vmatpush.msra.mxu0 %v6487
    %6513 = vmatpush.msra.mxu0 %v6486
    %6514 = vmatpush.msra.mxu0 %v6485
    %6515 = vmatpush.msra.mxu0 %v6484
    %6516 = vmatpush.msra.mxu0 %v6483
    %6517 = vmatpush.msra.mxu0 %v6482
    %6518 = vmatmul.f32.gmra.mxu0 %v6481
    %v6519 = vpop.f32.mrf.mxu0
    %v6520 = vadd.f32 %v6500, %v6519
    %6521 = vdwg.mxu0
    %vm6522 = vcmask 41984
    %6523 = vst.msk [vmem:[%s75] sm:$0x3] %vm6522, %v6520
    // Predicated region
    $region226: #{mtt_bertweet3_forward.1} parent=1 // pred_check
      _
    $region227: #{mtt_bertweet3_forward.1} parent=1 // pred_check_branch
      %6525 = sbr.rel (0) target = $region229
    $region228: #{mtt_bertweet3_forward.1} parent=1 // pred_region
      _
    $region229: #{mtt_bertweet3_forward.1} parent=1 // pred_fallthru
      _
    // Predicated region
    $region230: #{mtt_bertweet3_forward.1} parent=1 // pred_check
      _
    $region231: #{mtt_bertweet3_forward.1} parent=1 // pred_check_branch
      %6527 = sbr.rel (0) target = $region233
    $region232: #{mtt_bertweet3_forward.1} parent=1 // pred_region
      _
    $region233: #{mtt_bertweet3_forward.1} parent=1 // pred_fallthru
      _
    %6528 = vsyncpa [#allocation3], 1
    %6529 = vsyncpa [#allocation5], 1
    %6530 = vsyncpa [#allocation8], 1
    %6531 = vsyncpa [#allocation11], 1
    %6532 = vsyncpa [#allocation14], 1
    %6533 = vsyncpa [#allocation17], 1
    %6534 = vsyncpa [#allocation20], 1
    %6535 = vsyncpa [#allocation23], 1
    %6536 = vsyncpa [#allocation26], 1
    %6537 = vsyncpa [#allocation29], 1

</llo_original>
